<compile_context>
chip_gen: v7x
topology: tpu7x:2x2x1
jax: 0.10.0
libtpu: 0.0.40
codegen_flags: <defaults>
</compile_context>

<pallas_src>
import functools

import jax
import jax.numpy as jnp
import numpy as np
from jax import lax
from jax.experimental import pallas as pl
from jax.experimental.pallas import tpu as pltpu

# --- MultiBoxLoss config (matches the module's __init__ arguments) -----------
NUM_CLASSES = 8
OVERLAP_THRESH = 0.5
NEGPOS_RATIO = 3
VARIANCE = (0.1, 0.2)   # cfg['variance']

# Images per grid step: one full f32 sublane group (keep a multiple of 8).
BATCH_TILE = 8
# Class-logit streaming dtype (bf16 halves the dominant HBM stream).
CONF_DTYPE = jnp.bfloat16


# =============================================================================
# Pallas kernel: per-image loss statistics (the hot path)
# =============================================================================
def _multibox_loss_kernel(loc_ref, conf_ref, tgt_ref, out_ref, *,
                          num_priors, negpos_ratio):
    # loc_ref  : (Bt, 8, P)   f32   rows 0:4 loc preds, rows 4:8 loc targets
    # conf_ref : (Bt, C, P)   bf16  class logits
    # tgt_ref  : (Bt, 1, P)   i32   matched class ids (0 = background, -1 = pad)
    # out_ref  : (Bt, 8, 128) f32   rows 0..3 = n_pos, loss_l_sum, loss_c_sum,
    #                               sample_loss (lane-broadcast); rows 4..7 = 0
    Bt, C, P = conf_ref.shape

    locs = loc_ref[...]                                   # (Bt, 8, P)
    tgt = tgt_ref[...][:, 0, :]                           # (Bt, P) int32

    pos = tgt > 0                                         # (Bt, P)
    valid = tgt >= 0                                      # padding -> False

    # ---- Smooth L1 localization loss, summed over the 4 coords -> (Bt, P)
    d = locs[:, 0:4, :] - locs[:, 4:8, :]
    ad = jnp.abs(d)
    sl1 = jnp.where(ad < 1.0, 0.5 * d * d, ad - 0.5)
    loss_l = jnp.sum(sl1, axis=1)                         # (Bt, P)

    # ---- Cross entropy per prior -> (Bt, P)
    # Static class loop: intermediates stay at (Bt, P); no (Bt, C, P) int32
    # iota/one-hot, and the target-logit gather is plain VPU selects + adds.
    conf = conf_ref[...].astype(jnp.float32)              # (Bt, C, P)
    m = conf[:, 0, :]
    for c in range(1, C):
        m = jnp.maximum(m, conf[:, c, :])
    s = jnp.zeros((Bt, P), jnp.float32)
    tgt_logit = jnp.zeros((Bt, P), jnp.float32)
    for c in range(C):
        row = conf[:, c, :]
        s = s + jnp.exp(row - m)
        tgt_logit = tgt_logit + jnp.where(tgt == c, row, 0.0)
    loss_c = m + jnp.log(s) - tgt_logit                   # (Bt, P)

    # ---- Per-image reductions
    n_pos_i = jnp.sum(pos.astype(jnp.int32), axis=-1, keepdims=True)           # (Bt,1)
    n_pos_f = n_pos_i.astype(jnp.float32)
    loss_l_sum = jnp.sum(jnp.where(pos, loss_l, 0.0), axis=-1, keepdims=True)   # (Bt,1)

    # ---- Hard negative mining: exact top-k (k = num_neg) threshold selection.
    # lcn = loss_c with positives (and padding) zeroed => lcn >= 0, so float
    # ordering equals int32 bit-pattern ordering and a 31-step bisection over
    # bit patterns finds the exact k-th largest value.  Comparisons are done in
    # the float domain against bitcast(mid): no (Bt, P) int32 copy.
    # NOTE: assumes finite logits (NaN/Inf bit patterns would break the
    # monotone-ordering assumption).  jnp.maximum(., 0.0) also maps any -0.0
    # to +0.0 so bit pattern 0 == value 0 (keep this if refactoring).
    lcn = jnp.where(jnp.logical_or(pos, jnp.logical_not(valid)), 0.0, loss_c)
    lcn = jnp.maximum(lcn, 0.0)                                                 # (Bt,P)
    num_neg = jnp.minimum(negpos_ratio * n_pos_i, num_priors - 1)               # (Bt,1)

    lo = jnp.zeros((Bt, 1), jnp.int32)
    hi = pltpu.bitcast(jnp.max(lcn, axis=-1, keepdims=True), jnp.int32)         # (Bt,1)
    for _ in range(31):   # bit range < 2^31 -> 31 halvings converge exactly
        mid = lo + jnp.right_shift(hi - lo + 1, 1)
        thr_f = pltpu.bitcast(mid, jnp.float32)                                 # (Bt,1)
        cnt = jnp.sum((lcn >= thr_f).astype(jnp.int32), axis=-1, keepdims=True)
        ok = cnt >= num_neg
        lo = jnp.where(ok, mid, lo)
        hi = jnp.where(ok, hi, mid - 1)
    thr = pltpu.bitcast(lo, jnp.float32)                                        # (Bt,1) = v_k

    # sum of top-k values of lcn = sum(lcn > v_k) + v_k * (k - count(lcn > v_k))
    gt_mask = lcn > thr
    m_cnt = jnp.sum(gt_mask.astype(jnp.float32), axis=-1, keepdims=True)        # (Bt,1)
    sum_gt = jnp.sum(jnp.where(gt_mask, lcn, 0.0), axis=-1, keepdims=True)      # (Bt,1)
    neg_sum = sum_gt + thr * (num_neg.astype(jnp.float32) - m_cnt)

    # sel = pos | neg; tied negatives contribute their (equal) values via the
    # formula above, positives contribute their true loss_c.
    pos_sum = jnp.sum(jnp.where(pos, loss_c, 0.0), axis=-1, keepdims=True)
    loss_c_sum = pos_sum + neg_sum

    # Guarded division (PyTorch would produce inf/nan for images with zero
    # positives; we emit 0 for those images instead -- documented deviation).
    inv_n = pl.reciprocal(jnp.maximum(n_pos_f, 1.0), approx=True)
    sample_loss = jnp.where(n_pos_f > 0.0, (loss_l_sum + loss_c_sum) * inv_n, 0.0)

    # ---- Single sublane-dense stat block: unmasked stores, one writeback DMA.
    stats = jnp.concatenate(
        [n_pos_f, loss_l_sum, loss_c_sum, sample_loss,
         jnp.zeros((Bt, 4), jnp.float32)], axis=1)        # (Bt, 8)
    out_ref[...] = jnp.broadcast_to(stats[:, :, None], (Bt, 8, 128))


def multibox_loss_stats(loc_data, loc_t, conf_data, conf_t, *, batch_tile=BATCH_TILE):
    """Run the Pallas kernel. Inputs in PyTorch layout:
       loc_data/loc_t (N, P, 4), conf_data (N, P, C), conf_t (N, P) int."""
    N, P, _ = loc_data.shape
    C = conf_data.shape[-1]

    Bt = batch_tile
    N_pad = ((N + Bt - 1) // Bt) * Bt
    P_pad = ((P + 127) // 128) * 128

    # TODO(synk): these priors-last transposes / pad / concat are an extra HBM
    # pass in XLA; a class-major (N, C, P) producer layout would remove it.
    loc_pack = jnp.concatenate(
        [jnp.transpose(loc_data, (0, 2, 1)).astype(jnp.float32),
         jnp.transpose(loc_t, (0, 2, 1)).astype(jnp.float32)], axis=1)       # (N, 8, P)
    conf_k = jnp.transpose(conf_data.astype(CONF_DTYPE), (0, 2, 1))          # (N, C, P) bf16
    tgt_k = conf_t[:, None, :].astype(jnp.int32)                             # (N, 1, P)

    if (P_pad != P) or (N_pad != N):
        loc_pack = jnp.pad(loc_pack, ((0, N_pad - N), (0, 0), (0, P_pad - P)))
        conf_k = jnp.pad(conf_k, ((0, N_pad - N), (0, 0), (0, P_pad - P)))
        # Padded priors / padded images get target -1 -> fully masked in-kernel.
        tgt_k = jnp.pad(tgt_k, ((0, N_pad - N), (0, 0), (0, P_pad - P)),
                        constant_values=-1)

    kernel = functools.partial(_multibox_loss_kernel,
                               num_priors=P, negpos_ratio=NEGPOS_RATIO)

    stats = pl.pallas_call(
        kernel,
        out_shape=jax.ShapeDtypeStruct((N_pad, 8, 128), jnp.float32),
        grid_spec=pltpu.PrefetchScalarGridSpec(
            num_scalar_prefetch=0,
            grid=(N_pad // Bt,),
            in_specs=[
                pl.BlockSpec((Bt, 8, P_pad), lambda b: (b, 0, 0)),
                pl.BlockSpec((Bt, C, P_pad), lambda b: (b, 0, 0)),
                pl.BlockSpec((Bt, 1, P_pad), lambda b: (b, 0, 0)),
            ],
            out_specs=pl.BlockSpec((Bt, 8, 128), lambda b: (b, 0, 0)),
        ),
        compiler_params=pltpu.CompilerParams(
            dimension_semantics=("parallel",)),
    )(loc_pack, conf_k, tgt_k)

    return (stats[:N, 0, 0], stats[:N, 1, 0], stats[:N, 2, 0], stats[:N, 3, 0])


# =============================================================================
# Plain-JAX glue: SSD "match" (jaccard + argmax assignment + encode).
# Data-dependent gather/scatter -> not in the kernel.
# =============================================================================
def _match_single(truths, labels, priors):
    # truths (A, 4) xyxy, labels (A,) int, priors (P, 4) cxcywh
    A = truths.shape[0]
    priors_pf = jnp.concatenate(
        [priors[:, :2] - priors[:, 2:] / 2.0,
         priors[:, :2] + priors[:, 2:] / 2.0], axis=1)                 # point form

    max_xy = jnp.minimum(truths[:, None, 2:], priors_pf[None, :, 2:])
    min_xy = jnp.maximum(truths[:, None, :2], priors_pf[None, :, :2])
    inter_wh = jnp.maximum(max_xy - min_xy, 0.0)
    inter = inter_wh[..., 0] * inter_wh[..., 1]
    area_a = ((truths[:, 2] - truths[:, 0]) * (truths[:, 3] - truths[:, 1]))[:, None]
    area_b = ((priors_pf[:, 2] - priors_pf[:, 0]) *
              (priors_pf[:, 3] - priors_pf[:, 1]))[None, :]
    overlaps = inter / (area_a + area_b - inter)                       # (A, P)

    best_prior_idx = jnp.argmax(overlaps, axis=1)                      # (A,)
    best_truth_overlap = jnp.max(overlaps, axis=0)                     # (P,)
    best_truth_idx = jnp.argmax(overlaps, axis=0)                      # (P,)

    best_truth_overlap = best_truth_overlap.at[best_prior_idx].set(2.0)
    for j in range(A):  # faithful to the sequential loop in box_utils.match
        best_truth_idx = best_truth_idx.at[best_prior_idx[j]].set(j)

    matches = truths[best_truth_idx]                                   # (P, 4)
    conf = labels[best_truth_idx] + 1
    conf = jnp.where(best_truth_overlap < OVERLAP_THRESH, 0, conf)

    g_cxcy = (matches[:, :2] + matches[:, 2:]) / 2.0 - priors[:, :2]
    g_cxcy = g_cxcy / (VARIANCE[0] * priors[:, 2:])
    g_wh = jnp.log((matches[:, 2:] - matches[:, :2]) / priors[:, 2:]) / VARIANCE[1]
    loc = jnp.concatenate([g_cxcy, g_wh], axis=1)                      # (P, 4)
    return loc, conf.astype(jnp.int32)


@jax.jit
def multibox_loss(loc_data, conf_data, priors, truths, labels):
    """Equivalent of MultiBoxLoss.forward((loc, conf, priors), targets)."""
    loc_t, conf_t = jax.vmap(lambda t, l: _match_single(t, l, priors))(truths, labels)
    n_pos, ll_sum, lc_sum, sample_loss = multibox_loss_stats(
        loc_data, loc_t, conf_data, conf_t)
    total_pos = jnp.maximum(jnp.sum(n_pos), 1.0)   # guard (matches PyTorch when >0)
    loss_l = jnp.sum(ll_sum) / total_pos           # loss_l[pos].mean()
    loss_c = jnp.sum(lc_sum) / total_pos           # loss_c.sum() / pos.sum()
    return loss_l, loss_c, sample_loss, loc_t, conf_t


# =============================================================================
# Pure-JAX reference of the loss (sort-rank semantics, no Pallas) for validation.
# =============================================================================
def _reference(loc_data, conf_data, loc_t, conf_t):
    N, P, C = conf_data.shape
    pos = conf_t > 0
    d = loc_data - loc_t
    ad = jnp.abs(d)
    sl1 = jnp.sum(jnp.where(ad < 1.0, 0.5 * d * d, ad - 0.5), axis=-1)
    loss_l = jnp.where(pos, sl1, 0.0)

    lse = jax.scipy.special.logsumexp(conf_data, axis=-1)
    tgt_logit = jnp.take_along_axis(conf_data, conf_t[..., None], axis=-1)[..., 0]
    loss_c = lse - tgt_logit

    lcn = jnp.where(pos, 0.0, loss_c)
    i_idx = jnp.arange(P)[None, :, None]
    j_idx = jnp.arange(P)[None, None, :]
    gt = lcn[:, :, None] > lcn[:, None, :]
    eq = (lcn[:, :, None] == lcn[:, None, :]) & (i_idx < j_idx)
    rank = jnp.sum((gt | eq).astype(jnp.int32), axis=1)

    n_pos = jnp.sum(pos.astype(jnp.int32), axis=1)
    num_neg = jnp.minimum(NEGPOS_RATIO * n_pos, P - 1)
    neg = rank < num_neg[:, None]
    sel = pos | neg
    loss_c_sel = jnp.where(sel, loss_c, 0.0)

    sample_loss = (jnp.sum(loss_l, axis=1) + jnp.sum(loss_c_sel, axis=1)) / n_pos
    loss_l_s = jnp.sum(loss_l) / jnp.sum(n_pos)
    loss_c_s = jnp.sum(loss_c_sel) / jnp.sum(n_pos)
    return loss_l_s, loss_c_s, sample_loss


# =============================================================================
if __name__ == "__main__":
    key = jax.random.PRNGKey(0)
    N, P, C, A = 4, 256, NUM_CLASSES, 4   # batch, num_priors, num_classes, num_objs

    k1, k2, k3, k4, k5, k6, k7 = jax.random.split(key, 7)

    # Ground-truth boxes (xyxy in [0,1]) and labels in [0, C-2]
    ctr = jax.random.uniform(k1, (N, A, 2), minval=0.25, maxval=0.75)
    wh = jax.random.uniform(k2, (N, A, 2), minval=0.10, maxval=0.35)
    truths = jnp.concatenate([ctr - wh / 2.0, ctr + wh / 2.0], axis=-1)
    labels = jax.random.randint(k3, (N, A), 0, C - 1)

    # Priors in center-size form (cx, cy, w, h)
    p_ctr = jax.random.uniform(k4, (P, 2), minval=0.1, maxval=0.9)
    p_wh = jax.random.uniform(k5, (P, 2), minval=0.1, maxval=0.4)
    priors = jnp.concatenate([p_ctr, p_wh], axis=-1)

    # Network predictions
    loc_data = 0.1 * jax.random.normal(k6, (N, P, 4), dtype=jnp.float32)
    conf_data = jax.random.normal(k7, (N, P, C), dtype=jnp.float32)

    loss_l, loss_c, sample_loss, loc_t, conf_t = multibox_loss(
        loc_data, conf_data, priors, truths, labels)
    jax.block_until_ready((loss_l, loss_c, sample_loss))

    # Validate the Pallas kernel against a pure-JAX reference of the same math.
    # The reference sees the same bf16-rounded logits the kernel consumes.
    conf_ref_in = conf_data.astype(CONF_DTYPE).astype(jnp.float32)
    ref_l, ref_c, ref_sample = _reference(loc_data, conf_ref_in, loc_t, conf_t)
    np.testing.assert_allclose(np.asarray(loss_l), np.asarray(ref_l), rtol=2e-4, atol=1e-4)
    np.testing.assert_allclose(np.asarray(loss_c), np.asarray(ref_c), rtol=2e-4, atol=1e-4)
    # sample_loss uses the in-kernel approx reciprocal (EUP) -> slightly looser.
    np.testing.assert_allclose(np.asarray(sample_loss), np.asarray(ref_sample),
                               rtol=2e-3, atol=2e-3)

    print("KERNEL_OK")
</pallas_src>

<mosaic_0001>
module attributes {stable_mosaic.version = 11 : i64} {
  func.func @_multibox_loss_kernel(%arg0: i32, %arg1: memref<8x8x256xf32, #tpu.memory_space<vmem>>, %arg2: memref<8x8x256xbf16, #tpu.memory_space<vmem>>, %arg3: memref<8x1x256xi32, #tpu.memory_space<vmem>>, %arg4: memref<8x8x128xf32, #tpu.memory_space<vmem>>) attributes {dimension_semantics = [#tpu.dimension_semantics<parallel>], iteration_bounds = array<i64: 1>, scalar_prefetch = 0 : i64, scratch_operands = 0 : i64, tpu.core_type = #tpu.core_type<tc>, window_params = [{transform_indices = @transform_0, window_bounds = array<i64: 8, 8, 256>}, {transform_indices = @transform_1, window_bounds = array<i64: 8, 8, 256>}, {transform_indices = @transform_2, window_bounds = array<i64: 8, 1, 256>}, {transform_indices = @transform_3, window_bounds = array<i64: 8, 8, 128>}]} {
    %c0 = arith.constant 0 : index
    %c0_0 = arith.constant 0 : index
    %c0_1 = arith.constant 0 : index
    %0 = vector.load %arg1[%c0, %c0_0, %c0_1] : memref<8x8x256xf32, #tpu.memory_space<vmem>>, vector<8x8x256xf32>
    %c0_2 = arith.constant 0 : index
    %c0_3 = arith.constant 0 : index
    %c0_4 = arith.constant 0 : index
    %1 = vector.load %arg3[%c0_2, %c0_3, %c0_4] : memref<8x1x256xi32, #tpu.memory_space<vmem>>, vector<8x1x256xi32>
    %2 = vector.shape_cast %1 : vector<8x1x256xi32> to vector<8x256xi32>
    %c0_i32 = arith.constant 0 : i32
    %3 = vector.broadcast %c0_i32 : i32 to vector<8x256xi32>
    %4 = arith.cmpi sgt, %2, %3 : vector<8x256xi32>
    %c0_i32_5 = arith.constant 0 : i32
    %5 = vector.broadcast %c0_i32_5 : i32 to vector<8x256xi32>
    %6 = arith.cmpi sge, %2, %5 : vector<8x256xi32>
    %7 = vector.extract_strided_slice %0 {offsets = [0, 0, 0], sizes = [8, 4, 256], strides = [1, 1, 1]} : vector<8x8x256xf32> to vector<8x4x256xf32>
    %8 = vector.extract_strided_slice %0 {offsets = [0, 4, 0], sizes = [8, 4, 256], strides = [1, 1, 1]} : vector<8x8x256xf32> to vector<8x4x256xf32>
    %9 = arith.subf %7, %8 : vector<8x4x256xf32>
    %10 = math.absf %9 : vector<8x4x256xf32>
    %cst = arith.constant 1.000000e+00 : f32
    %11 = vector.broadcast %cst : f32 to vector<8x4x256xf32>
    %12 = arith.cmpf olt, %10, %11 : vector<8x4x256xf32>
    %cst_6 = arith.constant 5.000000e-01 : f32
    %13 = vector.broadcast %cst_6 : f32 to vector<8x4x256xf32>
    %14 = arith.mulf %13, %9 : vector<8x4x256xf32>
    %15 = arith.mulf %14, %9 : vector<8x4x256xf32>
    %cst_7 = arith.constant 5.000000e-01 : f32
    %16 = vector.broadcast %cst_7 : f32 to vector<8x4x256xf32>
    %17 = arith.subf %10, %16 : vector<8x4x256xf32>
    %18 = arith.select %12, %15, %17 : vector<8x4x256xi1>, vector<8x4x256xf32>
    %cst_8 = arith.constant dense<0.000000e+00> : vector<8x256xf32>
    %19 = vector.multi_reduction <add>, %18, %cst_8 [1] : vector<8x4x256xf32> to vector<8x256xf32>
    %c0_9 = arith.constant 0 : index
    %c0_10 = arith.constant 0 : index
    %c0_11 = arith.constant 0 : index
    %20 = vector.load %arg2[%c0_9, %c0_10, %c0_11] : memref<8x8x256xbf16, #tpu.memory_space<vmem>>, vector<8x8x256xbf16>
    %21 = arith.extf %20 : vector<8x8x256xbf16> to vector<8x8x256xf32>
    %22 = vector.extract_strided_slice %21 {offsets = [0, 0, 0], sizes = [8, 1, 256], strides = [1, 1, 1]} : vector<8x8x256xf32> to vector<8x1x256xf32>
    %23 = vector.shape_cast %22 : vector<8x1x256xf32> to vector<8x256xf32>
    %24 = vector.extract_strided_slice %21 {offsets = [0, 1, 0], sizes = [8, 1, 256], strides = [1, 1, 1]} : vector<8x8x256xf32> to vector<8x1x256xf32>
    %25 = vector.shape_cast %24 : vector<8x1x256xf32> to vector<8x256xf32>
    %26 = arith.maximumf %23, %25 : vector<8x256xf32>
    %27 = vector.extract_strided_slice %21 {offsets = [0, 2, 0], sizes = [8, 1, 256], strides = [1, 1, 1]} : vector<8x8x256xf32> to vector<8x1x256xf32>
    %28 = vector.shape_cast %27 : vector<8x1x256xf32> to vector<8x256xf32>
    %29 = arith.maximumf %26, %28 : vector<8x256xf32>
    %30 = vector.extract_strided_slice %21 {offsets = [0, 3, 0], sizes = [8, 1, 256], strides = [1, 1, 1]} : vector<8x8x256xf32> to vector<8x1x256xf32>
    %31 = vector.shape_cast %30 : vector<8x1x256xf32> to vector<8x256xf32>
    %32 = arith.maximumf %29, %31 : vector<8x256xf32>
    %33 = vector.extract_strided_slice %21 {offsets = [0, 4, 0], sizes = [8, 1, 256], strides = [1, 1, 1]} : vector<8x8x256xf32> to vector<8x1x256xf32>
    %34 = vector.shape_cast %33 : vector<8x1x256xf32> to vector<8x256xf32>
    %35 = arith.maximumf %32, %34 : vector<8x256xf32>
    %36 = vector.extract_strided_slice %21 {offsets = [0, 5, 0], sizes = [8, 1, 256], strides = [1, 1, 1]} : vector<8x8x256xf32> to vector<8x1x256xf32>
    %37 = vector.shape_cast %36 : vector<8x1x256xf32> to vector<8x256xf32>
    %38 = arith.maximumf %35, %37 : vector<8x256xf32>
    %39 = vector.extract_strided_slice %21 {offsets = [0, 6, 0], sizes = [8, 1, 256], strides = [1, 1, 1]} : vector<8x8x256xf32> to vector<8x1x256xf32>
    %40 = vector.shape_cast %39 : vector<8x1x256xf32> to vector<8x256xf32>
    %41 = arith.maximumf %38, %40 : vector<8x256xf32>
    %42 = vector.extract_strided_slice %21 {offsets = [0, 7, 0], sizes = [8, 1, 256], strides = [1, 1, 1]} : vector<8x8x256xf32> to vector<8x1x256xf32>
    %43 = vector.shape_cast %42 : vector<8x1x256xf32> to vector<8x256xf32>
    %44 = arith.maximumf %41, %43 : vector<8x256xf32>
    %cst_12 = arith.constant 0.000000e+00 : f32
    %45 = vector.broadcast %cst_12 : f32 to vector<8x256xf32>
    %cst_13 = arith.constant 0.000000e+00 : f32
    %46 = vector.broadcast %cst_13 : f32 to vector<8x256xf32>
    %47 = vector.extract_strided_slice %21 {offsets = [0, 0, 0], sizes = [8, 1, 256], strides = [1, 1, 1]} : vector<8x8x256xf32> to vector<8x1x256xf32>
    %48 = vector.shape_cast %47 : vector<8x1x256xf32> to vector<8x256xf32>
    %49 = arith.subf %48, %44 : vector<8x256xf32>
    %50 = math.exp %49 : vector<8x256xf32>
    %51 = arith.addf %45, %50 : vector<8x256xf32>
    %c0_i32_14 = arith.constant 0 : i32
    %52 = vector.broadcast %c0_i32_14 : i32 to vector<8x256xi32>
    %53 = arith.cmpi eq, %2, %52 : vector<8x256xi32>
    %cst_15 = arith.constant 0.000000e+00 : f32
    %54 = vector.broadcast %cst_15 : f32 to vector<8x256xf32>
    %55 = arith.select %53, %48, %54 : vector<8x256xi1>, vector<8x256xf32>
    %56 = arith.addf %46, %55 : vector<8x256xf32>
    %57 = vector.extract_strided_slice %21 {offsets = [0, 1, 0], sizes = [8, 1, 256], strides = [1, 1, 1]} : vector<8x8x256xf32> to vector<8x1x256xf32>
    %58 = vector.shape_cast %57 : vector<8x1x256xf32> to vector<8x256xf32>
    %59 = arith.subf %58, %44 : vector<8x256xf32>
    %60 = math.exp %59 : vector<8x256xf32>
    %61 = arith.addf %51, %60 : vector<8x256xf32>
    %c1_i32 = arith.constant 1 : i32
    %62 = vector.broadcast %c1_i32 : i32 to vector<8x256xi32>
    %63 = arith.cmpi eq, %2, %62 : vector<8x256xi32>
    %cst_16 = arith.constant 0.000000e+00 : f32
    %64 = vector.broadcast %cst_16 : f32 to vector<8x256xf32>
    %65 = arith.select %63, %58, %64 : vector<8x256xi1>, vector<8x256xf32>
    %66 = arith.addf %56, %65 : vector<8x256xf32>
    %67 = vector.extract_strided_slice %21 {offsets = [0, 2, 0], sizes = [8, 1, 256], strides = [1, 1, 1]} : vector<8x8x256xf32> to vector<8x1x256xf32>
    %68 = vector.shape_cast %67 : vector<8x1x256xf32> to vector<8x256xf32>
    %69 = arith.subf %68, %44 : vector<8x256xf32>
    %70 = math.exp %69 : vector<8x256xf32>
    %71 = arith.addf %61, %70 : vector<8x256xf32>
    %c2_i32 = arith.constant 2 : i32
    %72 = vector.broadcast %c2_i32 : i32 to vector<8x256xi32>
    %73 = arith.cmpi eq, %2, %72 : vector<8x256xi32>
    %cst_17 = arith.constant 0.000000e+00 : f32
    %74 = vector.broadcast %cst_17 : f32 to vector<8x256xf32>
    %75 = arith.select %73, %68, %74 : vector<8x256xi1>, vector<8x256xf32>
    %76 = arith.addf %66, %75 : vector<8x256xf32>
    %77 = vector.extract_strided_slice %21 {offsets = [0, 3, 0], sizes = [8, 1, 256], strides = [1, 1, 1]} : vector<8x8x256xf32> to vector<8x1x256xf32>
    %78 = vector.shape_cast %77 : vector<8x1x256xf32> to vector<8x256xf32>
    %79 = arith.subf %78, %44 : vector<8x256xf32>
    %80 = math.exp %79 : vector<8x256xf32>
    %81 = arith.addf %71, %80 : vector<8x256xf32>
    %c3_i32 = arith.constant 3 : i32
    %82 = vector.broadcast %c3_i32 : i32 to vector<8x256xi32>
    %83 = arith.cmpi eq, %2, %82 : vector<8x256xi32>
    %cst_18 = arith.constant 0.000000e+00 : f32
    %84 = vector.broadcast %cst_18 : f32 to vector<8x256xf32>
    %85 = arith.select %83, %78, %84 : vector<8x256xi1>, vector<8x256xf32>
    %86 = arith.addf %76, %85 : vector<8x256xf32>
    %87 = vector.extract_strided_slice %21 {offsets = [0, 4, 0], sizes = [8, 1, 256], strides = [1, 1, 1]} : vector<8x8x256xf32> to vector<8x1x256xf32>
    %88 = vector.shape_cast %87 : vector<8x1x256xf32> to vector<8x256xf32>
    %89 = arith.subf %88, %44 : vector<8x256xf32>
    %90 = math.exp %89 : vector<8x256xf32>
    %91 = arith.addf %81, %90 : vector<8x256xf32>
    %c4_i32 = arith.constant 4 : i32
    %92 = vector.broadcast %c4_i32 : i32 to vector<8x256xi32>
    %93 = arith.cmpi eq, %2, %92 : vector<8x256xi32>
    %cst_19 = arith.constant 0.000000e+00 : f32
    %94 = vector.broadcast %cst_19 : f32 to vector<8x256xf32>
    %95 = arith.select %93, %88, %94 : vector<8x256xi1>, vector<8x256xf32>
    %96 = arith.addf %86, %95 : vector<8x256xf32>
    %97 = vector.extract_strided_slice %21 {offsets = [0, 5, 0], sizes = [8, 1, 256], strides = [1, 1, 1]} : vector<8x8x256xf32> to vector<8x1x256xf32>
    %98 = vector.shape_cast %97 : vector<8x1x256xf32> to vector<8x256xf32>
    %99 = arith.subf %98, %44 : vector<8x256xf32>
    %100 = math.exp %99 : vector<8x256xf32>
    %101 = arith.addf %91, %100 : vector<8x256xf32>
    %c5_i32 = arith.constant 5 : i32
    %102 = vector.broadcast %c5_i32 : i32 to vector<8x256xi32>
    %103 = arith.cmpi eq, %2, %102 : vector<8x256xi32>
    %cst_20 = arith.constant 0.000000e+00 : f32
    %104 = vector.broadcast %cst_20 : f32 to vector<8x256xf32>
    %105 = arith.select %103, %98, %104 : vector<8x256xi1>, vector<8x256xf32>
    %106 = arith.addf %96, %105 : vector<8x256xf32>
    %107 = vector.extract_strided_slice %21 {offsets = [0, 6, 0], sizes = [8, 1, 256], strides = [1, 1, 1]} : vector<8x8x256xf32> to vector<8x1x256xf32>
    %108 = vector.shape_cast %107 : vector<8x1x256xf32> to vector<8x256xf32>
    %109 = arith.subf %108, %44 : vector<8x256xf32>
    %110 = math.exp %109 : vector<8x256xf32>
    %111 = arith.addf %101, %110 : vector<8x256xf32>
    %c6_i32 = arith.constant 6 : i32
    %112 = vector.broadcast %c6_i32 : i32 to vector<8x256xi32>
    %113 = arith.cmpi eq, %2, %112 : vector<8x256xi32>
    %cst_21 = arith.constant 0.000000e+00 : f32
    %114 = vector.broadcast %cst_21 : f32 to vector<8x256xf32>
    %115 = arith.select %113, %108, %114 : vector<8x256xi1>, vector<8x256xf32>
    %116 = arith.addf %106, %115 : vector<8x256xf32>
    %117 = vector.extract_strided_slice %21 {offsets = [0, 7, 0], sizes = [8, 1, 256], strides = [1, 1, 1]} : vector<8x8x256xf32> to vector<8x1x256xf32>
    %118 = vector.shape_cast %117 : vector<8x1x256xf32> to vector<8x256xf32>
    %119 = arith.subf %118, %44 : vector<8x256xf32>
    %120 = math.exp %119 : vector<8x256xf32>
    %121 = arith.addf %111, %120 : vector<8x256xf32>
    %c7_i32 = arith.constant 7 : i32
    %122 = vector.broadcast %c7_i32 : i32 to vector<8x256xi32>
    %123 = arith.cmpi eq, %2, %122 : vector<8x256xi32>
    %cst_22 = arith.constant 0.000000e+00 : f32
    %124 = vector.broadcast %cst_22 : f32 to vector<8x256xf32>
    %125 = arith.select %123, %118, %124 : vector<8x256xi1>, vector<8x256xf32>
    %126 = arith.addf %116, %125 : vector<8x256xf32>
    %127 = math.log %121 : vector<8x256xf32>
    %128 = arith.addf %44, %127 : vector<8x256xf32>
    %129 = arith.subf %128, %126 : vector<8x256xf32>
    %130 = arith.extui %4 : vector<8x256xi1> to vector<8x256xi32>
    %cst_23 = arith.constant dense<0> : vector<8xi32>
    %131 = vector.multi_reduction <add>, %130, %cst_23 [1] : vector<8x256xi32> to vector<8xi32>
    %132 = vector.shape_cast %131 : vector<8xi32> to vector<8x1xi32>
    %133 = arith.sitofp %132 : vector<8x1xi32> to vector<8x1xf32>
    %cst_24 = arith.constant 0.000000e+00 : f32
    %134 = vector.broadcast %cst_24 : f32 to vector<8x256xf32>
    %135 = arith.select %4, %19, %134 : vector<8x256xi1>, vector<8x256xf32>
    %cst_25 = arith.constant dense<0.000000e+00> : vector<8xf32>
    %136 = vector.multi_reduction <add>, %135, %cst_25 [1] : vector<8x256xf32> to vector<8xf32>
    %137 = vector.shape_cast %136 : vector<8xf32> to vector<8x1xf32>
    %cst_26 = arith.constant dense<true> : vector<8x256xi1>
    %138 = arith.xori %6, %cst_26 : vector<8x256xi1>
    %139 = arith.ori %4, %138 : vector<8x256xi1>
    %cst_27 = arith.constant 0.000000e+00 : f32
    %140 = vector.broadcast %cst_27 : f32 to vector<8x256xf32>
    %141 = arith.select %139, %140, %129 : vector<8x256xi1>, vector<8x256xf32>
    %cst_28 = arith.constant 0.000000e+00 : f32
    %142 = vector.broadcast %cst_28 : f32 to vector<8x256xf32>
    %143 = arith.maximumf %141, %142 : vector<8x256xf32>
    %c3_i32_29 = arith.constant 3 : i32
    %144 = vector.broadcast %c3_i32_29 : i32 to vector<8x1xi32>
    %145 = arith.muli %144, %132 : vector<8x1xi32>
    %c255_i32 = arith.constant 255 : i32
    %146 = vector.broadcast %c255_i32 : i32 to vector<8x1xi32>
    %147 = arith.minsi %145, %146 : vector<8x1xi32>
    %c0_i32_30 = arith.constant 0 : i32
    %148 = vector.broadcast %c0_i32_30 : i32 to vector<8x1xi32>
    %cst_31 = arith.constant dense<0xFF800000> : vector<8xf32>
    %149 = vector.multi_reduction <maximumf>, %143, %cst_31 [1] : vector<8x256xf32> to vector<8xf32>
    %150 = vector.shape_cast %149 : vector<8xf32> to vector<8x1xf32>
    %151 = tpu.bitcast %150 : vector<8x1xf32> -> vector<8x1xi32>
    %152 = arith.subi %151, %148 : vector<8x1xi32>
    %c1_i32_32 = arith.constant 1 : i32
    %153 = vector.broadcast %c1_i32_32 : i32 to vector<8x1xi32>
    %154 = arith.addi %152, %153 : vector<8x1xi32>
    %c1_i32_33 = arith.constant 1 : i32
    %155 = vector.broadcast %c1_i32_33 : i32 to vector<8x1xi32>
    %156 = arith.shrsi %154, %155 : vector<8x1xi32>
    %157 = arith.addi %148, %156 : vector<8x1xi32>
    %158 = tpu.bitcast %157 : vector<8x1xi32> -> vector<8x1xf32>
    %159 = vector.broadcast %158 : vector<8x1xf32> to vector<8x256xf32>
    %160 = arith.cmpf oge, %143, %159 : vector<8x256xf32>
    %161 = arith.extui %160 : vector<8x256xi1> to vector<8x256xi32>
    %cst_34 = arith.constant dense<0> : vector<8xi32>
    %162 = vector.multi_reduction <add>, %161, %cst_34 [1] : vector<8x256xi32> to vector<8xi32>
    %163 = vector.shape_cast %162 : vector<8xi32> to vector<8x1xi32>
    %164 = arith.cmpi sge, %163, %147 : vector<8x1xi32>
    %165 = arith.select %164, %157, %148 : vector<8x1xi1>, vector<8x1xi32>
    %c1_i32_35 = arith.constant 1 : i32
    %166 = vector.broadcast %c1_i32_35 : i32 to vector<8x1xi32>
    %167 = arith.subi %157, %166 : vector<8x1xi32>
    %168 = arith.select %164, %151, %167 : vector<8x1xi1>, vector<8x1xi32>
    %169 = arith.subi %168, %165 : vector<8x1xi32>
    %c1_i32_36 = arith.constant 1 : i32
    %170 = vector.broadcast %c1_i32_36 : i32 to vector<8x1xi32>
    %171 = arith.addi %169, %170 : vector<8x1xi32>
    %c1_i32_37 = arith.constant 1 : i32
    %172 = vector.broadcast %c1_i32_37 : i32 to vector<8x1xi32>
    %173 = arith.shrsi %171, %172 : vector<8x1xi32>
    %174 = arith.addi %165, %173 : vector<8x1xi32>
    %175 = tpu.bitcast %174 : vector<8x1xi32> -> vector<8x1xf32>
    %176 = vector.broadcast %175 : vector<8x1xf32> to vector<8x256xf32>
    %177 = arith.cmpf oge, %143, %176 : vector<8x256xf32>
    %178 = arith.extui %177 : vector<8x256xi1> to vector<8x256xi32>
    %cst_38 = arith.constant dense<0> : vector<8xi32>
    %179 = vector.multi_reduction <add>, %178, %cst_38 [1] : vector<8x256xi32> to vector<8xi32>
    %180 = vector.shape_cast %179 : vector<8xi32> to vector<8x1xi32>
    %181 = arith.cmpi sge, %180, %147 : vector<8x1xi32>
    %182 = arith.select %181, %174, %165 : vector<8x1xi1>, vector<8x1xi32>
    %c1_i32_39 = arith.constant 1 : i32
    %183 = vector.broadcast %c1_i32_39 : i32 to vector<8x1xi32>
    %184 = arith.subi %174, %183 : vector<8x1xi32>
    %185 = arith.select %181, %168, %184 : vector<8x1xi1>, vector<8x1xi32>
    %186 = arith.subi %185, %182 : vector<8x1xi32>
    %c1_i32_40 = arith.constant 1 : i32
    %187 = vector.broadcast %c1_i32_40 : i32 to vector<8x1xi32>
    %188 = arith.addi %186, %187 : vector<8x1xi32>
    %c1_i32_41 = arith.constant 1 : i32
    %189 = vector.broadcast %c1_i32_41 : i32 to vector<8x1xi32>
    %190 = arith.shrsi %188, %189 : vector<8x1xi32>
    %191 = arith.addi %182, %190 : vector<8x1xi32>
    %192 = tpu.bitcast %191 : vector<8x1xi32> -> vector<8x1xf32>
    %193 = vector.broadcast %192 : vector<8x1xf32> to vector<8x256xf32>
    %194 = arith.cmpf oge, %143, %193 : vector<8x256xf32>
    %195 = arith.extui %194 : vector<8x256xi1> to vector<8x256xi32>
    %cst_42 = arith.constant dense<0> : vector<8xi32>
    %196 = vector.multi_reduction <add>, %195, %cst_42 [1] : vector<8x256xi32> to vector<8xi32>
    %197 = vector.shape_cast %196 : vector<8xi32> to vector<8x1xi32>
    %198 = arith.cmpi sge, %197, %147 : vector<8x1xi32>
    %199 = arith.select %198, %191, %182 : vector<8x1xi1>, vector<8x1xi32>
    %c1_i32_43 = arith.constant 1 : i32
    %200 = vector.broadcast %c1_i32_43 : i32 to vector<8x1xi32>
    %201 = arith.subi %191, %200 : vector<8x1xi32>
    %202 = arith.select %198, %185, %201 : vector<8x1xi1>, vector<8x1xi32>
    %203 = arith.subi %202, %199 : vector<8x1xi32>
    %c1_i32_44 = arith.constant 1 : i32
    %204 = vector.broadcast %c1_i32_44 : i32 to vector<8x1xi32>
    %205 = arith.addi %203, %204 : vector<8x1xi32>
    %c1_i32_45 = arith.constant 1 : i32
    %206 = vector.broadcast %c1_i32_45 : i32 to vector<8x1xi32>
    %207 = arith.shrsi %205, %206 : vector<8x1xi32>
    %208 = arith.addi %199, %207 : vector<8x1xi32>
    %209 = tpu.bitcast %208 : vector<8x1xi32> -> vector<8x1xf32>
    %210 = vector.broadcast %209 : vector<8x1xf32> to vector<8x256xf32>
    %211 = arith.cmpf oge, %143, %210 : vector<8x256xf32>
    %212 = arith.extui %211 : vector<8x256xi1> to vector<8x256xi32>
    %cst_46 = arith.constant dense<0> : vector<8xi32>
    %213 = vector.multi_reduction <add>, %212, %cst_46 [1] : vector<8x256xi32> to vector<8xi32>
    %214 = vector.shape_cast %213 : vector<8xi32> to vector<8x1xi32>
    %215 = arith.cmpi sge, %214, %147 : vector<8x1xi32>
    %216 = arith.select %215, %208, %199 : vector<8x1xi1>, vector<8x1xi32>
    %c1_i32_47 = arith.constant 1 : i32
    %217 = vector.broadcast %c1_i32_47 : i32 to vector<8x1xi32>
    %218 = arith.subi %208, %217 : vector<8x1xi32>
    %219 = arith.select %215, %202, %218 : vector<8x1xi1>, vector<8x1xi32>
    %220 = arith.subi %219, %216 : vector<8x1xi32>
    %c1_i32_48 = arith.constant 1 : i32
    %221 = vector.broadcast %c1_i32_48 : i32 to vector<8x1xi32>
    %222 = arith.addi %220, %221 : vector<8x1xi32>
    %c1_i32_49 = arith.constant 1 : i32
    %223 = vector.broadcast %c1_i32_49 : i32 to vector<8x1xi32>
    %224 = arith.shrsi %222, %223 : vector<8x1xi32>
    %225 = arith.addi %216, %224 : vector<8x1xi32>
    %226 = tpu.bitcast %225 : vector<8x1xi32> -> vector<8x1xf32>
    %227 = vector.broadcast %226 : vector<8x1xf32> to vector<8x256xf32>
    %228 = arith.cmpf oge, %143, %227 : vector<8x256xf32>
    %229 = arith.extui %228 : vector<8x256xi1> to vector<8x256xi32>
    %cst_50 = arith.constant dense<0> : vector<8xi32>
    %230 = vector.multi_reduction <add>, %229, %cst_50 [1] : vector<8x256xi32> to vector<8xi32>
    %231 = vector.shape_cast %230 : vector<8xi32> to vector<8x1xi32>
    %232 = arith.cmpi sge, %231, %147 : vector<8x1xi32>
    %233 = arith.select %232, %225, %216 : vector<8x1xi1>, vector<8x1xi32>
    %c1_i32_51 = arith.constant 1 : i32
    %234 = vector.broadcast %c1_i32_51 : i32 to vector<8x1xi32>
    %235 = arith.subi %225, %234 : vector<8x1xi32>
    %236 = arith.select %232, %219, %235 : vector<8x1xi1>, vector<8x1xi32>
    %237 = arith.subi %236, %233 : vector<8x1xi32>
    %c1_i32_52 = arith.constant 1 : i32
    %238 = vector.broadcast %c1_i32_52 : i32 to vector<8x1xi32>
    %239 = arith.addi %237, %238 : vector<8x1xi32>
    %c1_i32_53 = arith.constant 1 : i32
    %240 = vector.broadcast %c1_i32_53 : i32 to vector<8x1xi32>
    %241 = arith.shrsi %239, %240 : vector<8x1xi32>
    %242 = arith.addi %233, %241 : vector<8x1xi32>
    %243 = tpu.bitcast %242 : vector<8x1xi32> -> vector<8x1xf32>
    %244 = vector.broadcast %243 : vector<8x1xf32> to vector<8x256xf32>
    %245 = arith.cmpf oge, %143, %244 : vector<8x256xf32>
    %246 = arith.extui %245 : vector<8x256xi1> to vector<8x256xi32>
    %cst_54 = arith.constant dense<0> : vector<8xi32>
    %247 = vector.multi_reduction <add>, %246, %cst_54 [1] : vector<8x256xi32> to vector<8xi32>
    %248 = vector.shape_cast %247 : vector<8xi32> to vector<8x1xi32>
    %249 = arith.cmpi sge, %248, %147 : vector<8x1xi32>
    %250 = arith.select %249, %242, %233 : vector<8x1xi1>, vector<8x1xi32>
    %c1_i32_55 = arith.constant 1 : i32
    %251 = vector.broadcast %c1_i32_55 : i32 to vector<8x1xi32>
    %252 = arith.subi %242, %251 : vector<8x1xi32>
    %253 = arith.select %249, %236, %252 : vector<8x1xi1>, vector<8x1xi32>
    %254 = arith.subi %253, %250 : vector<8x1xi32>
    %c1_i32_56 = arith.constant 1 : i32
    %255 = vector.broadcast %c1_i32_56 : i32 to vector<8x1xi32>
    %256 = arith.addi %254, %255 : vector<8x1xi32>
    %c1_i32_57 = arith.constant 1 : i32
    %257 = vector.broadcast %c1_i32_57 : i32 to vector<8x1xi32>
    %258 = arith.shrsi %256, %257 : vector<8x1xi32>
    %259 = arith.addi %250, %258 : vector<8x1xi32>
    %260 = tpu.bitcast %259 : vector<8x1xi32> -> vector<8x1xf32>
    %261 = vector.broadcast %260 : vector<8x1xf32> to vector<8x256xf32>
    %262 = arith.cmpf oge, %143, %261 : vector<8x256xf32>
    %263 = arith.extui %262 : vector<8x256xi1> to vector<8x256xi32>
    %cst_58 = arith.constant dense<0> : vector<8xi32>
    %264 = vector.multi_reduction <add>, %263, %cst_58 [1] : vector<8x256xi32> to vector<8xi32>
    %265 = vector.shape_cast %264 : vector<8xi32> to vector<8x1xi32>
    %266 = arith.cmpi sge, %265, %147 : vector<8x1xi32>
    %267 = arith.select %266, %259, %250 : vector<8x1xi1>, vector<8x1xi32>
    %c1_i32_59 = arith.constant 1 : i32
    %268 = vector.broadcast %c1_i32_59 : i32 to vector<8x1xi32>
    %269 = arith.subi %259, %268 : vector<8x1xi32>
    %270 = arith.select %266, %253, %269 : vector<8x1xi1>, vector<8x1xi32>
    %271 = arith.subi %270, %267 : vector<8x1xi32>
    %c1_i32_60 = arith.constant 1 : i32
    %272 = vector.broadcast %c1_i32_60 : i32 to vector<8x1xi32>
    %273 = arith.addi %271, %272 : vector<8x1xi32>
    %c1_i32_61 = arith.constant 1 : i32
    %274 = vector.broadcast %c1_i32_61 : i32 to vector<8x1xi32>
    %275 = arith.shrsi %273, %274 : vector<8x1xi32>
    %276 = arith.addi %267, %275 : vector<8x1xi32>
    %277 = tpu.bitcast %276 : vector<8x1xi32> -> vector<8x1xf32>
    %278 = vector.broadcast %277 : vector<8x1xf32> to vector<8x256xf32>
    %279 = arith.cmpf oge, %143, %278 : vector<8x256xf32>
    %280 = arith.extui %279 : vector<8x256xi1> to vector<8x256xi32>
    %cst_62 = arith.constant dense<0> : vector<8xi32>
    %281 = vector.multi_reduction <add>, %280, %cst_62 [1] : vector<8x256xi32> to vector<8xi32>
    %282 = vector.shape_cast %281 : vector<8xi32> to vector<8x1xi32>
    %283 = arith.cmpi sge, %282, %147 : vector<8x1xi32>
    %284 = arith.select %283, %276, %267 : vector<8x1xi1>, vector<8x1xi32>
    %c1_i32_63 = arith.constant 1 : i32
    %285 = vector.broadcast %c1_i32_63 : i32 to vector<8x1xi32>
    %286 = arith.subi %276, %285 : vector<8x1xi32>
    %287 = arith.select %283, %270, %286 : vector<8x1xi1>, vector<8x1xi32>
    %288 = arith.subi %287, %284 : vector<8x1xi32>
    %c1_i32_64 = arith.constant 1 : i32
    %289 = vector.broadcast %c1_i32_64 : i32 to vector<8x1xi32>
    %290 = arith.addi %288, %289 : vector<8x1xi32>
    %c1_i32_65 = arith.constant 1 : i32
    %291 = vector.broadcast %c1_i32_65 : i32 to vector<8x1xi32>
    %292 = arith.shrsi %290, %291 : vector<8x1xi32>
    %293 = arith.addi %284, %292 : vector<8x1xi32>
    %294 = tpu.bitcast %293 : vector<8x1xi32> -> vector<8x1xf32>
    %295 = vector.broadcast %294 : vector<8x1xf32> to vector<8x256xf32>
    %296 = arith.cmpf oge, %143, %295 : vector<8x256xf32>
    %297 = arith.extui %296 : vector<8x256xi1> to vector<8x256xi32>
    %cst_66 = arith.constant dense<0> : vector<8xi32>
    %298 = vector.multi_reduction <add>, %297, %cst_66 [1] : vector<8x256xi32> to vector<8xi32>
    %299 = vector.shape_cast %298 : vector<8xi32> to vector<8x1xi32>
    %300 = arith.cmpi sge, %299, %147 : vector<8x1xi32>
    %301 = arith.select %300, %293, %284 : vector<8x1xi1>, vector<8x1xi32>
    %c1_i32_67 = arith.constant 1 : i32
    %302 = vector.broadcast %c1_i32_67 : i32 to vector<8x1xi32>
    %303 = arith.subi %293, %302 : vector<8x1xi32>
    %304 = arith.select %300, %287, %303 : vector<8x1xi1>, vector<8x1xi32>
    %305 = arith.subi %304, %301 : vector<8x1xi32>
    %c1_i32_68 = arith.constant 1 : i32
    %306 = vector.broadcast %c1_i32_68 : i32 to vector<8x1xi32>
    %307 = arith.addi %305, %306 : vector<8x1xi32>
    %c1_i32_69 = arith.constant 1 : i32
    %308 = vector.broadcast %c1_i32_69 : i32 to vector<8x1xi32>
    %309 = arith.shrsi %307, %308 : vector<8x1xi32>
    %310 = arith.addi %301, %309 : vector<8x1xi32>
    %311 = tpu.bitcast %310 : vector<8x1xi32> -> vector<8x1xf32>
    %312 = vector.broadcast %311 : vector<8x1xf32> to vector<8x256xf32>
    %313 = arith.cmpf oge, %143, %312 : vector<8x256xf32>
    %314 = arith.extui %313 : vector<8x256xi1> to vector<8x256xi32>
    %cst_70 = arith.constant dense<0> : vector<8xi32>
    %315 = vector.multi_reduction <add>, %314, %cst_70 [1] : vector<8x256xi32> to vector<8xi32>
    %316 = vector.shape_cast %315 : vector<8xi32> to vector<8x1xi32>
    %317 = arith.cmpi sge, %316, %147 : vector<8x1xi32>
    %318 = arith.select %317, %310, %301 : vector<8x1xi1>, vector<8x1xi32>
    %c1_i32_71 = arith.constant 1 : i32
    %319 = vector.broadcast %c1_i32_71 : i32 to vector<8x1xi32>
    %320 = arith.subi %310, %319 : vector<8x1xi32>
    %321 = arith.select %317, %304, %320 : vector<8x1xi1>, vector<8x1xi32>
    %322 = arith.subi %321, %318 : vector<8x1xi32>
    %c1_i32_72 = arith.constant 1 : i32
    %323 = vector.broadcast %c1_i32_72 : i32 to vector<8x1xi32>
    %324 = arith.addi %322, %323 : vector<8x1xi32>
    %c1_i32_73 = arith.constant 1 : i32
    %325 = vector.broadcast %c1_i32_73 : i32 to vector<8x1xi32>
    %326 = arith.shrsi %324, %325 : vector<8x1xi32>
    %327 = arith.addi %318, %326 : vector<8x1xi32>
    %328 = tpu.bitcast %327 : vector<8x1xi32> -> vector<8x1xf32>
    %329 = vector.broadcast %328 : vector<8x1xf32> to vector<8x256xf32>
    %330 = arith.cmpf oge, %143, %329 : vector<8x256xf32>
    %331 = arith.extui %330 : vector<8x256xi1> to vector<8x256xi32>
    %cst_74 = arith.constant dense<0> : vector<8xi32>
    %332 = vector.multi_reduction <add>, %331, %cst_74 [1] : vector<8x256xi32> to vector<8xi32>
    %333 = vector.shape_cast %332 : vector<8xi32> to vector<8x1xi32>
    %334 = arith.cmpi sge, %333, %147 : vector<8x1xi32>
    %335 = arith.select %334, %327, %318 : vector<8x1xi1>, vector<8x1xi32>
    %c1_i32_75 = arith.constant 1 : i32
    %336 = vector.broadcast %c1_i32_75 : i32 to vector<8x1xi32>
    %337 = arith.subi %327, %336 : vector<8x1xi32>
    %338 = arith.select %334, %321, %337 : vector<8x1xi1>, vector<8x1xi32>
    %339 = arith.subi %338, %335 : vector<8x1xi32>
    %c1_i32_76 = arith.constant 1 : i32
    %340 = vector.broadcast %c1_i32_76 : i32 to vector<8x1xi32>
    %341 = arith.addi %339, %340 : vector<8x1xi32>
    %c1_i32_77 = arith.constant 1 : i32
    %342 = vector.broadcast %c1_i32_77 : i32 to vector<8x1xi32>
    %343 = arith.shrsi %341, %342 : vector<8x1xi32>
    %344 = arith.addi %335, %343 : vector<8x1xi32>
    %345 = tpu.bitcast %344 : vector<8x1xi32> -> vector<8x1xf32>
    %346 = vector.broadcast %345 : vector<8x1xf32> to vector<8x256xf32>
    %347 = arith.cmpf oge, %143, %346 : vector<8x256xf32>
    %348 = arith.extui %347 : vector<8x256xi1> to vector<8x256xi32>
    %cst_78 = arith.constant dense<0> : vector<8xi32>
    %349 = vector.multi_reduction <add>, %348, %cst_78 [1] : vector<8x256xi32> to vector<8xi32>
    %350 = vector.shape_cast %349 : vector<8xi32> to vector<8x1xi32>
    %351 = arith.cmpi sge, %350, %147 : vector<8x1xi32>
    %352 = arith.select %351, %344, %335 : vector<8x1xi1>, vector<8x1xi32>
    %c1_i32_79 = arith.constant 1 : i32
    %353 = vector.broadcast %c1_i32_79 : i32 to vector<8x1xi32>
    %354 = arith.subi %344, %353 : vector<8x1xi32>
    %355 = arith.select %351, %338, %354 : vector<8x1xi1>, vector<8x1xi32>
    %356 = arith.subi %355, %352 : vector<8x1xi32>
    %c1_i32_80 = arith.constant 1 : i32
    %357 = vector.broadcast %c1_i32_80 : i32 to vector<8x1xi32>
    %358 = arith.addi %356, %357 : vector<8x1xi32>
    %c1_i32_81 = arith.constant 1 : i32
    %359 = vector.broadcast %c1_i32_81 : i32 to vector<8x1xi32>
    %360 = arith.shrsi %358, %359 : vector<8x1xi32>
    %361 = arith.addi %352, %360 : vector<8x1xi32>
    %362 = tpu.bitcast %361 : vector<8x1xi32> -> vector<8x1xf32>
    %363 = vector.broadcast %362 : vector<8x1xf32> to vector<8x256xf32>
    %364 = arith.cmpf oge, %143, %363 : vector<8x256xf32>
    %365 = arith.extui %364 : vector<8x256xi1> to vector<8x256xi32>
    %cst_82 = arith.constant dense<0> : vector<8xi32>
    %366 = vector.multi_reduction <add>, %365, %cst_82 [1] : vector<8x256xi32> to vector<8xi32>
    %367 = vector.shape_cast %366 : vector<8xi32> to vector<8x1xi32>
    %368 = arith.cmpi sge, %367, %147 : vector<8x1xi32>
    %369 = arith.select %368, %361, %352 : vector<8x1xi1>, vector<8x1xi32>
    %c1_i32_83 = arith.constant 1 : i32
    %370 = vector.broadcast %c1_i32_83 : i32 to vector<8x1xi32>
    %371 = arith.subi %361, %370 : vector<8x1xi32>
    %372 = arith.select %368, %355, %371 : vector<8x1xi1>, vector<8x1xi32>
    %373 = arith.subi %372, %369 : vector<8x1xi32>
    %c1_i32_84 = arith.constant 1 : i32
    %374 = vector.broadcast %c1_i32_84 : i32 to vector<8x1xi32>
    %375 = arith.addi %373, %374 : vector<8x1xi32>
    %c1_i32_85 = arith.constant 1 : i32
    %376 = vector.broadcast %c1_i32_85 : i32 to vector<8x1xi32>
    %377 = arith.shrsi %375, %376 : vector<8x1xi32>
    %378 = arith.addi %369, %377 : vector<8x1xi32>
    %379 = tpu.bitcast %378 : vector<8x1xi32> -> vector<8x1xf32>
    %380 = vector.broadcast %379 : vector<8x1xf32> to vector<8x256xf32>
    %381 = arith.cmpf oge, %143, %380 : vector<8x256xf32>
    %382 = arith.extui %381 : vector<8x256xi1> to vector<8x256xi32>
    %cst_86 = arith.constant dense<0> : vector<8xi32>
    %383 = vector.multi_reduction <add>, %382, %cst_86 [1] : vector<8x256xi32> to vector<8xi32>
    %384 = vector.shape_cast %383 : vector<8xi32> to vector<8x1xi32>
    %385 = arith.cmpi sge, %384, %147 : vector<8x1xi32>
    %386 = arith.select %385, %378, %369 : vector<8x1xi1>, vector<8x1xi32>
    %c1_i32_87 = arith.constant 1 : i32
    %387 = vector.broadcast %c1_i32_87 : i32 to vector<8x1xi32>
    %388 = arith.subi %378, %387 : vector<8x1xi32>
    %389 = arith.select %385, %372, %388 : vector<8x1xi1>, vector<8x1xi32>
    %390 = arith.subi %389, %386 : vector<8x1xi32>
    %c1_i32_88 = arith.constant 1 : i32
    %391 = vector.broadcast %c1_i32_88 : i32 to vector<8x1xi32>
    %392 = arith.addi %390, %391 : vector<8x1xi32>
    %c1_i32_89 = arith.constant 1 : i32
    %393 = vector.broadcast %c1_i32_89 : i32 to vector<8x1xi32>
    %394 = arith.shrsi %392, %393 : vector<8x1xi32>
    %395 = arith.addi %386, %394 : vector<8x1xi32>
    %396 = tpu.bitcast %395 : vector<8x1xi32> -> vector<8x1xf32>
    %397 = vector.broadcast %396 : vector<8x1xf32> to vector<8x256xf32>
    %398 = arith.cmpf oge, %143, %397 : vector<8x256xf32>
    %399 = arith.extui %398 : vector<8x256xi1> to vector<8x256xi32>
    %cst_90 = arith.constant dense<0> : vector<8xi32>
    %400 = vector.multi_reduction <add>, %399, %cst_90 [1] : vector<8x256xi32> to vector<8xi32>
    %401 = vector.shape_cast %400 : vector<8xi32> to vector<8x1xi32>
    %402 = arith.cmpi sge, %401, %147 : vector<8x1xi32>
    %403 = arith.select %402, %395, %386 : vector<8x1xi1>, vector<8x1xi32>
    %c1_i32_91 = arith.constant 1 : i32
    %404 = vector.broadcast %c1_i32_91 : i32 to vector<8x1xi32>
    %405 = arith.subi %395, %404 : vector<8x1xi32>
    %406 = arith.select %402, %389, %405 : vector<8x1xi1>, vector<8x1xi32>
    %407 = arith.subi %406, %403 : vector<8x1xi32>
    %c1_i32_92 = arith.constant 1 : i32
    %408 = vector.broadcast %c1_i32_92 : i32 to vector<8x1xi32>
    %409 = arith.addi %407, %408 : vector<8x1xi32>
    %c1_i32_93 = arith.constant 1 : i32
    %410 = vector.broadcast %c1_i32_93 : i32 to vector<8x1xi32>
    %411 = arith.shrsi %409, %410 : vector<8x1xi32>
    %412 = arith.addi %403, %411 : vector<8x1xi32>
    %413 = tpu.bitcast %412 : vector<8x1xi32> -> vector<8x1xf32>
    %414 = vector.broadcast %413 : vector<8x1xf32> to vector<8x256xf32>
    %415 = arith.cmpf oge, %143, %414 : vector<8x256xf32>
    %416 = arith.extui %415 : vector<8x256xi1> to vector<8x256xi32>
    %cst_94 = arith.constant dense<0> : vector<8xi32>
    %417 = vector.multi_reduction <add>, %416, %cst_94 [1] : vector<8x256xi32> to vector<8xi32>
    %418 = vector.shape_cast %417 : vector<8xi32> to vector<8x1xi32>
    %419 = arith.cmpi sge, %418, %147 : vector<8x1xi32>
    %420 = arith.select %419, %412, %403 : vector<8x1xi1>, vector<8x1xi32>
    %c1_i32_95 = arith.constant 1 : i32
    %421 = vector.broadcast %c1_i32_95 : i32 to vector<8x1xi32>
    %422 = arith.subi %412, %421 : vector<8x1xi32>
    %423 = arith.select %419, %406, %422 : vector<8x1xi1>, vector<8x1xi32>
    %424 = arith.subi %423, %420 : vector<8x1xi32>
    %c1_i32_96 = arith.constant 1 : i32
    %425 = vector.broadcast %c1_i32_96 : i32 to vector<8x1xi32>
    %426 = arith.addi %424, %425 : vector<8x1xi32>
    %c1_i32_97 = arith.constant 1 : i32
    %427 = vector.broadcast %c1_i32_97 : i32 to vector<8x1xi32>
    %428 = arith.shrsi %426, %427 : vector<8x1xi32>
    %429 = arith.addi %420, %428 : vector<8x1xi32>
    %430 = tpu.bitcast %429 : vector<8x1xi32> -> vector<8x1xf32>
    %431 = vector.broadcast %430 : vector<8x1xf32> to vector<8x256xf32>
    %432 = arith.cmpf oge, %143, %431 : vector<8x256xf32>
    %433 = arith.extui %432 : vector<8x256xi1> to vector<8x256xi32>
    %cst_98 = arith.constant dense<0> : vector<8xi32>
    %434 = vector.multi_reduction <add>, %433, %cst_98 [1] : vector<8x256xi32> to vector<8xi32>
    %435 = vector.shape_cast %434 : vector<8xi32> to vector<8x1xi32>
    %436 = arith.cmpi sge, %435, %147 : vector<8x1xi32>
    %437 = arith.select %436, %429, %420 : vector<8x1xi1>, vector<8x1xi32>
    %c1_i32_99 = arith.constant 1 : i32
    %438 = vector.broadcast %c1_i32_99 : i32 to vector<8x1xi32>
    %439 = arith.subi %429, %438 : vector<8x1xi32>
    %440 = arith.select %436, %423, %439 : vector<8x1xi1>, vector<8x1xi32>
    %441 = arith.subi %440, %437 : vector<8x1xi32>
    %c1_i32_100 = arith.constant 1 : i32
    %442 = vector.broadcast %c1_i32_100 : i32 to vector<8x1xi32>
    %443 = arith.addi %441, %442 : vector<8x1xi32>
    %c1_i32_101 = arith.constant 1 : i32
    %444 = vector.broadcast %c1_i32_101 : i32 to vector<8x1xi32>
    %445 = arith.shrsi %443, %444 : vector<8x1xi32>
    %446 = arith.addi %437, %445 : vector<8x1xi32>
    %447 = tpu.bitcast %446 : vector<8x1xi32> -> vector<8x1xf32>
    %448 = vector.broadcast %447 : vector<8x1xf32> to vector<8x256xf32>
    %449 = arith.cmpf oge, %143, %448 : vector<8x256xf32>
    %450 = arith.extui %449 : vector<8x256xi1> to vector<8x256xi32>
    %cst_102 = arith.constant dense<0> : vector<8xi32>
    %451 = vector.multi_reduction <add>, %450, %cst_102 [1] : vector<8x256xi32> to vector<8xi32>
    %452 = vector.shape_cast %451 : vector<8xi32> to vector<8x1xi32>
    %453 = arith.cmpi sge, %452, %147 : vector<8x1xi32>
    %454 = arith.select %453, %446, %437 : vector<8x1xi1>, vector<8x1xi32>
    %c1_i32_103 = arith.constant 1 : i32
    %455 = vector.broadcast %c1_i32_103 : i32 to vector<8x1xi32>
    %456 = arith.subi %446, %455 : vector<8x1xi32>
    %457 = arith.select %453, %440, %456 : vector<8x1xi1>, vector<8x1xi32>
    %458 = arith.subi %457, %454 : vector<8x1xi32>
    %c1_i32_104 = arith.constant 1 : i32
    %459 = vector.broadcast %c1_i32_104 : i32 to vector<8x1xi32>
    %460 = arith.addi %458, %459 : vector<8x1xi32>
    %c1_i32_105 = arith.constant 1 : i32
    %461 = vector.broadcast %c1_i32_105 : i32 to vector<8x1xi32>
    %462 = arith.shrsi %460, %461 : vector<8x1xi32>
    %463 = arith.addi %454, %462 : vector<8x1xi32>
    %464 = tpu.bitcast %463 : vector<8x1xi32> -> vector<8x1xf32>
    %465 = vector.broadcast %464 : vector<8x1xf32> to vector<8x256xf32>
    %466 = arith.cmpf oge, %143, %465 : vector<8x256xf32>
    %467 = arith.extui %466 : vector<8x256xi1> to vector<8x256xi32>
    %cst_106 = arith.constant dense<0> : vector<8xi32>
    %468 = vector.multi_reduction <add>, %467, %cst_106 [1] : vector<8x256xi32> to vector<8xi32>
    %469 = vector.shape_cast %468 : vector<8xi32> to vector<8x1xi32>
    %470 = arith.cmpi sge, %469, %147 : vector<8x1xi32>
    %471 = arith.select %470, %463, %454 : vector<8x1xi1>, vector<8x1xi32>
    %c1_i32_107 = arith.constant 1 : i32
    %472 = vector.broadcast %c1_i32_107 : i32 to vector<8x1xi32>
    %473 = arith.subi %463, %472 : vector<8x1xi32>
    %474 = arith.select %470, %457, %473 : vector<8x1xi1>, vector<8x1xi32>
    %475 = arith.subi %474, %471 : vector<8x1xi32>
    %c1_i32_108 = arith.constant 1 : i32
    %476 = vector.broadcast %c1_i32_108 : i32 to vector<8x1xi32>
    %477 = arith.addi %475, %476 : vector<8x1xi32>
    %c1_i32_109 = arith.constant 1 : i32
    %478 = vector.broadcast %c1_i32_109 : i32 to vector<8x1xi32>
    %479 = arith.shrsi %477, %478 : vector<8x1xi32>
    %480 = arith.addi %471, %479 : vector<8x1xi32>
    %481 = tpu.bitcast %480 : vector<8x1xi32> -> vector<8x1xf32>
    %482 = vector.broadcast %481 : vector<8x1xf32> to vector<8x256xf32>
    %483 = arith.cmpf oge, %143, %482 : vector<8x256xf32>
    %484 = arith.extui %483 : vector<8x256xi1> to vector<8x256xi32>
    %cst_110 = arith.constant dense<0> : vector<8xi32>
    %485 = vector.multi_reduction <add>, %484, %cst_110 [1] : vector<8x256xi32> to vector<8xi32>
    %486 = vector.shape_cast %485 : vector<8xi32> to vector<8x1xi32>
    %487 = arith.cmpi sge, %486, %147 : vector<8x1xi32>
    %488 = arith.select %487, %480, %471 : vector<8x1xi1>, vector<8x1xi32>
    %c1_i32_111 = arith.constant 1 : i32
    %489 = vector.broadcast %c1_i32_111 : i32 to vector<8x1xi32>
    %490 = arith.subi %480, %489 : vector<8x1xi32>
    %491 = arith.select %487, %474, %490 : vector<8x1xi1>, vector<8x1xi32>
    %492 = arith.subi %491, %488 : vector<8x1xi32>
    %c1_i32_112 = arith.constant 1 : i32
    %493 = vector.broadcast %c1_i32_112 : i32 to vector<8x1xi32>
    %494 = arith.addi %492, %493 : vector<8x1xi32>
    %c1_i32_113 = arith.constant 1 : i32
    %495 = vector.broadcast %c1_i32_113 : i32 to vector<8x1xi32>
    %496 = arith.shrsi %494, %495 : vector<8x1xi32>
    %497 = arith.addi %488, %496 : vector<8x1xi32>
    %498 = tpu.bitcast %497 : vector<8x1xi32> -> vector<8x1xf32>
    %499 = vector.broadcast %498 : vector<8x1xf32> to vector<8x256xf32>
    %500 = arith.cmpf oge, %143, %499 : vector<8x256xf32>
    %501 = arith.extui %500 : vector<8x256xi1> to vector<8x256xi32>
    %cst_114 = arith.constant dense<0> : vector<8xi32>
    %502 = vector.multi_reduction <add>, %501, %cst_114 [1] : vector<8x256xi32> to vector<8xi32>
    %503 = vector.shape_cast %502 : vector<8xi32> to vector<8x1xi32>
    %504 = arith.cmpi sge, %503, %147 : vector<8x1xi32>
    %505 = arith.select %504, %497, %488 : vector<8x1xi1>, vector<8x1xi32>
    %c1_i32_115 = arith.constant 1 : i32
    %506 = vector.broadcast %c1_i32_115 : i32 to vector<8x1xi32>
    %507 = arith.subi %497, %506 : vector<8x1xi32>
    %508 = arith.select %504, %491, %507 : vector<8x1xi1>, vector<8x1xi32>
    %509 = arith.subi %508, %505 : vector<8x1xi32>
    %c1_i32_116 = arith.constant 1 : i32
    %510 = vector.broadcast %c1_i32_116 : i32 to vector<8x1xi32>
    %511 = arith.addi %509, %510 : vector<8x1xi32>
    %c1_i32_117 = arith.constant 1 : i32
    %512 = vector.broadcast %c1_i32_117 : i32 to vector<8x1xi32>
    %513 = arith.shrsi %511, %512 : vector<8x1xi32>
    %514 = arith.addi %505, %513 : vector<8x1xi32>
    %515 = tpu.bitcast %514 : vector<8x1xi32> -> vector<8x1xf32>
    %516 = vector.broadcast %515 : vector<8x1xf32> to vector<8x256xf32>
    %517 = arith.cmpf oge, %143, %516 : vector<8x256xf32>
    %518 = arith.extui %517 : vector<8x256xi1> to vector<8x256xi32>
    %cst_118 = arith.constant dense<0> : vector<8xi32>
    %519 = vector.multi_reduction <add>, %518, %cst_118 [1] : vector<8x256xi32> to vector<8xi32>
    %520 = vector.shape_cast %519 : vector<8xi32> to vector<8x1xi32>
    %521 = arith.cmpi sge, %520, %147 : vector<8x1xi32>
    %522 = arith.select %521, %514, %505 : vector<8x1xi1>, vector<8x1xi32>
    %c1_i32_119 = arith.constant 1 : i32
    %523 = vector.broadcast %c1_i32_119 : i32 to vector<8x1xi32>
    %524 = arith.subi %514, %523 : vector<8x1xi32>
    %525 = arith.select %521, %508, %524 : vector<8x1xi1>, vector<8x1xi32>
    %526 = arith.subi %525, %522 : vector<8x1xi32>
    %c1_i32_120 = arith.constant 1 : i32
    %527 = vector.broadcast %c1_i32_120 : i32 to vector<8x1xi32>
    %528 = arith.addi %526, %527 : vector<8x1xi32>
    %c1_i32_121 = arith.constant 1 : i32
    %529 = vector.broadcast %c1_i32_121 : i32 to vector<8x1xi32>
    %530 = arith.shrsi %528, %529 : vector<8x1xi32>
    %531 = arith.addi %522, %530 : vector<8x1xi32>
    %532 = tpu.bitcast %531 : vector<8x1xi32> -> vector<8x1xf32>
    %533 = vector.broadcast %532 : vector<8x1xf32> to vector<8x256xf32>
    %534 = arith.cmpf oge, %143, %533 : vector<8x256xf32>
    %535 = arith.extui %534 : vector<8x256xi1> to vector<8x256xi32>
    %cst_122 = arith.constant dense<0> : vector<8xi32>
    %536 = vector.multi_reduction <add>, %535, %cst_122 [1] : vector<8x256xi32> to vector<8xi32>
    %537 = vector.shape_cast %536 : vector<8xi32> to vector<8x1xi32>
    %538 = arith.cmpi sge, %537, %147 : vector<8x1xi32>
    %539 = arith.select %538, %531, %522 : vector<8x1xi1>, vector<8x1xi32>
    %c1_i32_123 = arith.constant 1 : i32
    %540 = vector.broadcast %c1_i32_123 : i32 to vector<8x1xi32>
    %541 = arith.subi %531, %540 : vector<8x1xi32>
    %542 = arith.select %538, %525, %541 : vector<8x1xi1>, vector<8x1xi32>
    %543 = arith.subi %542, %539 : vector<8x1xi32>
    %c1_i32_124 = arith.constant 1 : i32
    %544 = vector.broadcast %c1_i32_124 : i32 to vector<8x1xi32>
    %545 = arith.addi %543, %544 : vector<8x1xi32>
    %c1_i32_125 = arith.constant 1 : i32
    %546 = vector.broadcast %c1_i32_125 : i32 to vector<8x1xi32>
    %547 = arith.shrsi %545, %546 : vector<8x1xi32>
    %548 = arith.addi %539, %547 : vector<8x1xi32>
    %549 = tpu.bitcast %548 : vector<8x1xi32> -> vector<8x1xf32>
    %550 = vector.broadcast %549 : vector<8x1xf32> to vector<8x256xf32>
    %551 = arith.cmpf oge, %143, %550 : vector<8x256xf32>
    %552 = arith.extui %551 : vector<8x256xi1> to vector<8x256xi32>
    %cst_126 = arith.constant dense<0> : vector<8xi32>
    %553 = vector.multi_reduction <add>, %552, %cst_126 [1] : vector<8x256xi32> to vector<8xi32>
    %554 = vector.shape_cast %553 : vector<8xi32> to vector<8x1xi32>
    %555 = arith.cmpi sge, %554, %147 : vector<8x1xi32>
    %556 = arith.select %555, %548, %539 : vector<8x1xi1>, vector<8x1xi32>
    %c1_i32_127 = arith.constant 1 : i32
    %557 = vector.broadcast %c1_i32_127 : i32 to vector<8x1xi32>
    %558 = arith.subi %548, %557 : vector<8x1xi32>
    %559 = arith.select %555, %542, %558 : vector<8x1xi1>, vector<8x1xi32>
    %560 = arith.subi %559, %556 : vector<8x1xi32>
    %c1_i32_128 = arith.constant 1 : i32
    %561 = vector.broadcast %c1_i32_128 : i32 to vector<8x1xi32>
    %562 = arith.addi %560, %561 : vector<8x1xi32>
    %c1_i32_129 = arith.constant 1 : i32
    %563 = vector.broadcast %c1_i32_129 : i32 to vector<8x1xi32>
    %564 = arith.shrsi %562, %563 : vector<8x1xi32>
    %565 = arith.addi %556, %564 : vector<8x1xi32>
    %566 = tpu.bitcast %565 : vector<8x1xi32> -> vector<8x1xf32>
    %567 = vector.broadcast %566 : vector<8x1xf32> to vector<8x256xf32>
    %568 = arith.cmpf oge, %143, %567 : vector<8x256xf32>
    %569 = arith.extui %568 : vector<8x256xi1> to vector<8x256xi32>
    %cst_130 = arith.constant dense<0> : vector<8xi32>
    %570 = vector.multi_reduction <add>, %569, %cst_130 [1] : vector<8x256xi32> to vector<8xi32>
    %571 = vector.shape_cast %570 : vector<8xi32> to vector<8x1xi32>
    %572 = arith.cmpi sge, %571, %147 : vector<8x1xi32>
    %573 = arith.select %572, %565, %556 : vector<8x1xi1>, vector<8x1xi32>
    %c1_i32_131 = arith.constant 1 : i32
    %574 = vector.broadcast %c1_i32_131 : i32 to vector<8x1xi32>
    %575 = arith.subi %565, %574 : vector<8x1xi32>
    %576 = arith.select %572, %559, %575 : vector<8x1xi1>, vector<8x1xi32>
    %577 = arith.subi %576, %573 : vector<8x1xi32>
    %c1_i32_132 = arith.constant 1 : i32
    %578 = vector.broadcast %c1_i32_132 : i32 to vector<8x1xi32>
    %579 = arith.addi %577, %578 : vector<8x1xi32>
    %c1_i32_133 = arith.constant 1 : i32
    %580 = vector.broadcast %c1_i32_133 : i32 to vector<8x1xi32>
    %581 = arith.shrsi %579, %580 : vector<8x1xi32>
    %582 = arith.addi %573, %581 : vector<8x1xi32>
    %583 = tpu.bitcast %582 : vector<8x1xi32> -> vector<8x1xf32>
    %584 = vector.broadcast %583 : vector<8x1xf32> to vector<8x256xf32>
    %585 = arith.cmpf oge, %143, %584 : vector<8x256xf32>
    %586 = arith.extui %585 : vector<8x256xi1> to vector<8x256xi32>
    %cst_134 = arith.constant dense<0> : vector<8xi32>
    %587 = vector.multi_reduction <add>, %586, %cst_134 [1] : vector<8x256xi32> to vector<8xi32>
    %588 = vector.shape_cast %587 : vector<8xi32> to vector<8x1xi32>
    %589 = arith.cmpi sge, %588, %147 : vector<8x1xi32>
    %590 = arith.select %589, %582, %573 : vector<8x1xi1>, vector<8x1xi32>
    %c1_i32_135 = arith.constant 1 : i32
    %591 = vector.broadcast %c1_i32_135 : i32 to vector<8x1xi32>
    %592 = arith.subi %582, %591 : vector<8x1xi32>
    %593 = arith.select %589, %576, %592 : vector<8x1xi1>, vector<8x1xi32>
    %594 = arith.subi %593, %590 : vector<8x1xi32>
    %c1_i32_136 = arith.constant 1 : i32
    %595 = vector.broadcast %c1_i32_136 : i32 to vector<8x1xi32>
    %596 = arith.addi %594, %595 : vector<8x1xi32>
    %c1_i32_137 = arith.constant 1 : i32
    %597 = vector.broadcast %c1_i32_137 : i32 to vector<8x1xi32>
    %598 = arith.shrsi %596, %597 : vector<8x1xi32>
    %599 = arith.addi %590, %598 : vector<8x1xi32>
    %600 = tpu.bitcast %599 : vector<8x1xi32> -> vector<8x1xf32>
    %601 = vector.broadcast %600 : vector<8x1xf32> to vector<8x256xf32>
    %602 = arith.cmpf oge, %143, %601 : vector<8x256xf32>
    %603 = arith.extui %602 : vector<8x256xi1> to vector<8x256xi32>
    %cst_138 = arith.constant dense<0> : vector<8xi32>
    %604 = vector.multi_reduction <add>, %603, %cst_138 [1] : vector<8x256xi32> to vector<8xi32>
    %605 = vector.shape_cast %604 : vector<8xi32> to vector<8x1xi32>
    %606 = arith.cmpi sge, %605, %147 : vector<8x1xi32>
    %607 = arith.select %606, %599, %590 : vector<8x1xi1>, vector<8x1xi32>
    %c1_i32_139 = arith.constant 1 : i32
    %608 = vector.broadcast %c1_i32_139 : i32 to vector<8x1xi32>
    %609 = arith.subi %599, %608 : vector<8x1xi32>
    %610 = arith.select %606, %593, %609 : vector<8x1xi1>, vector<8x1xi32>
    %611 = arith.subi %610, %607 : vector<8x1xi32>
    %c1_i32_140 = arith.constant 1 : i32
    %612 = vector.broadcast %c1_i32_140 : i32 to vector<8x1xi32>
    %613 = arith.addi %611, %612 : vector<8x1xi32>
    %c1_i32_141 = arith.constant 1 : i32
    %614 = vector.broadcast %c1_i32_141 : i32 to vector<8x1xi32>
    %615 = arith.shrsi %613, %614 : vector<8x1xi32>
    %616 = arith.addi %607, %615 : vector<8x1xi32>
    %617 = tpu.bitcast %616 : vector<8x1xi32> -> vector<8x1xf32>
    %618 = vector.broadcast %617 : vector<8x1xf32> to vector<8x256xf32>
    %619 = arith.cmpf oge, %143, %618 : vector<8x256xf32>
    %620 = arith.extui %619 : vector<8x256xi1> to vector<8x256xi32>
    %cst_142 = arith.constant dense<0> : vector<8xi32>
    %621 = vector.multi_reduction <add>, %620, %cst_142 [1] : vector<8x256xi32> to vector<8xi32>
    %622 = vector.shape_cast %621 : vector<8xi32> to vector<8x1xi32>
    %623 = arith.cmpi sge, %622, %147 : vector<8x1xi32>
    %624 = arith.select %623, %616, %607 : vector<8x1xi1>, vector<8x1xi32>
    %c1_i32_143 = arith.constant 1 : i32
    %625 = vector.broadcast %c1_i32_143 : i32 to vector<8x1xi32>
    %626 = arith.subi %616, %625 : vector<8x1xi32>
    %627 = arith.select %623, %610, %626 : vector<8x1xi1>, vector<8x1xi32>
    %628 = arith.subi %627, %624 : vector<8x1xi32>
    %c1_i32_144 = arith.constant 1 : i32
    %629 = vector.broadcast %c1_i32_144 : i32 to vector<8x1xi32>
    %630 = arith.addi %628, %629 : vector<8x1xi32>
    %c1_i32_145 = arith.constant 1 : i32
    %631 = vector.broadcast %c1_i32_145 : i32 to vector<8x1xi32>
    %632 = arith.shrsi %630, %631 : vector<8x1xi32>
    %633 = arith.addi %624, %632 : vector<8x1xi32>
    %634 = tpu.bitcast %633 : vector<8x1xi32> -> vector<8x1xf32>
    %635 = vector.broadcast %634 : vector<8x1xf32> to vector<8x256xf32>
    %636 = arith.cmpf oge, %143, %635 : vector<8x256xf32>
    %637 = arith.extui %636 : vector<8x256xi1> to vector<8x256xi32>
    %cst_146 = arith.constant dense<0> : vector<8xi32>
    %638 = vector.multi_reduction <add>, %637, %cst_146 [1] : vector<8x256xi32> to vector<8xi32>
    %639 = vector.shape_cast %638 : vector<8xi32> to vector<8x1xi32>
    %640 = arith.cmpi sge, %639, %147 : vector<8x1xi32>
    %641 = arith.select %640, %633, %624 : vector<8x1xi1>, vector<8x1xi32>
    %c1_i32_147 = arith.constant 1 : i32
    %642 = vector.broadcast %c1_i32_147 : i32 to vector<8x1xi32>
    %643 = arith.subi %633, %642 : vector<8x1xi32>
    %644 = arith.select %640, %627, %643 : vector<8x1xi1>, vector<8x1xi32>
    %645 = arith.subi %644, %641 : vector<8x1xi32>
    %c1_i32_148 = arith.constant 1 : i32
    %646 = vector.broadcast %c1_i32_148 : i32 to vector<8x1xi32>
    %647 = arith.addi %645, %646 : vector<8x1xi32>
    %c1_i32_149 = arith.constant 1 : i32
    %648 = vector.broadcast %c1_i32_149 : i32 to vector<8x1xi32>
    %649 = arith.shrsi %647, %648 : vector<8x1xi32>
    %650 = arith.addi %641, %649 : vector<8x1xi32>
    %651 = tpu.bitcast %650 : vector<8x1xi32> -> vector<8x1xf32>
    %652 = vector.broadcast %651 : vector<8x1xf32> to vector<8x256xf32>
    %653 = arith.cmpf oge, %143, %652 : vector<8x256xf32>
    %654 = arith.extui %653 : vector<8x256xi1> to vector<8x256xi32>
    %cst_150 = arith.constant dense<0> : vector<8xi32>
    %655 = vector.multi_reduction <add>, %654, %cst_150 [1] : vector<8x256xi32> to vector<8xi32>
    %656 = vector.shape_cast %655 : vector<8xi32> to vector<8x1xi32>
    %657 = arith.cmpi sge, %656, %147 : vector<8x1xi32>
    %658 = arith.select %657, %650, %641 : vector<8x1xi1>, vector<8x1xi32>
    %c1_i32_151 = arith.constant 1 : i32
    %659 = vector.broadcast %c1_i32_151 : i32 to vector<8x1xi32>
    %660 = arith.subi %650, %659 : vector<8x1xi32>
    %661 = arith.select %657, %644, %660 : vector<8x1xi1>, vector<8x1xi32>
    %662 = arith.subi %661, %658 : vector<8x1xi32>
    %c1_i32_152 = arith.constant 1 : i32
    %663 = vector.broadcast %c1_i32_152 : i32 to vector<8x1xi32>
    %664 = arith.addi %662, %663 : vector<8x1xi32>
    %c1_i32_153 = arith.constant 1 : i32
    %665 = vector.broadcast %c1_i32_153 : i32 to vector<8x1xi32>
    %666 = arith.shrsi %664, %665 : vector<8x1xi32>
    %667 = arith.addi %658, %666 : vector<8x1xi32>
    %668 = tpu.bitcast %667 : vector<8x1xi32> -> vector<8x1xf32>
    %669 = vector.broadcast %668 : vector<8x1xf32> to vector<8x256xf32>
    %670 = arith.cmpf oge, %143, %669 : vector<8x256xf32>
    %671 = arith.extui %670 : vector<8x256xi1> to vector<8x256xi32>
    %cst_154 = arith.constant dense<0> : vector<8xi32>
    %672 = vector.multi_reduction <add>, %671, %cst_154 [1] : vector<8x256xi32> to vector<8xi32>
    %673 = vector.shape_cast %672 : vector<8xi32> to vector<8x1xi32>
    %674 = arith.cmpi sge, %673, %147 : vector<8x1xi32>
    %675 = arith.select %674, %667, %658 : vector<8x1xi1>, vector<8x1xi32>
    %676 = tpu.bitcast %675 : vector<8x1xi32> -> vector<8x1xf32>
    %677 = vector.broadcast %676 : vector<8x1xf32> to vector<8x256xf32>
    %678 = arith.cmpf ogt, %143, %677 : vector<8x256xf32>
    %679 = arith.extui %678 : vector<8x256xi1> to vector<8x256xi32>
    %680 = arith.sitofp %679 : vector<8x256xi32> to vector<8x256xf32>
    %cst_155 = arith.constant dense<0.000000e+00> : vector<8xf32>
    %681 = vector.multi_reduction <add>, %680, %cst_155 [1] : vector<8x256xf32> to vector<8xf32>
    %682 = vector.shape_cast %681 : vector<8xf32> to vector<8x1xf32>
    %cst_156 = arith.constant 0.000000e+00 : f32
    %683 = vector.broadcast %cst_156 : f32 to vector<8x256xf32>
    %684 = arith.select %678, %143, %683 : vector<8x256xi1>, vector<8x256xf32>
    %cst_157 = arith.constant dense<0.000000e+00> : vector<8xf32>
    %685 = vector.multi_reduction <add>, %684, %cst_157 [1] : vector<8x256xf32> to vector<8xf32>
    %686 = vector.shape_cast %685 : vector<8xf32> to vector<8x1xf32>
    %687 = arith.sitofp %147 : vector<8x1xi32> to vector<8x1xf32>
    %688 = arith.subf %687, %682 : vector<8x1xf32>
    %689 = arith.mulf %676, %688 : vector<8x1xf32>
    %690 = arith.addf %686, %689 : vector<8x1xf32>
    %cst_158 = arith.constant 0.000000e+00 : f32
    %691 = vector.broadcast %cst_158 : f32 to vector<8x256xf32>
    %692 = arith.select %4, %129, %691 : vector<8x256xi1>, vector<8x256xf32>
    %cst_159 = arith.constant dense<0.000000e+00> : vector<8xf32>
    %693 = vector.multi_reduction <add>, %692, %cst_159 [1] : vector<8x256xf32> to vector<8xf32>
    %694 = vector.shape_cast %693 : vector<8xf32> to vector<8x1xf32>
    %695 = arith.addf %694, %690 : vector<8x1xf32>
    %cst_160 = arith.constant 1.000000e+00 : f32
    %696 = vector.broadcast %cst_160 : f32 to vector<8x1xf32>
    %697 = arith.maximumf %133, %696 : vector<8x1xf32>
    %698 = tpu.reciprocal %697 {approx = true} : vector<8x1xf32> -> vector<8x1xf32>
    %cst_161 = arith.constant 0.000000e+00 : f32
    %699 = vector.broadcast %cst_161 : f32 to vector<8x1xf32>
    %700 = arith.cmpf ogt, %133, %699 : vector<8x1xf32>
    %701 = arith.addf %137, %695 : vector<8x1xf32>
    %702 = arith.mulf %701, %698 : vector<8x1xf32>
    %cst_162 = arith.constant 0.000000e+00 : f32
    %703 = vector.broadcast %cst_162 : f32 to vector<8x1xf32>
    %704 = arith.select %700, %702, %703 : vector<8x1xi1>, vector<8x1xf32>
    %cst_163 = arith.constant 0.000000e+00 : f32
    %705 = vector.broadcast %cst_163 : f32 to vector<8x4xf32>
    %706 = tpu.concatenate %133, %137, %695, %704, %705 in 1 : vector<8x1xf32>, vector<8x1xf32>, vector<8x1xf32>, vector<8x1xf32>, vector<8x4xf32> -> vector<8x8xf32>
    %707 = vector.shape_cast %706 : vector<8x8xf32> to vector<8x8x1xf32>
    %708 = vector.shape_cast %707 : vector<8x8x1xf32> to vector<8x8x1xf32>
    %709 = vector.broadcast %708 : vector<8x8x1xf32> to vector<8x8x128xf32>
    %c0_164 = arith.constant 0 : index
    %c0_165 = arith.constant 0 : index
    %c0_166 = arith.constant 0 : index
    %710 = vector.load %arg4[%c0_164, %c0_165, %c0_166] : memref<8x8x128xf32, #tpu.memory_space<vmem>>, vector<8x8x128xf32>
    tpu.vector_store %arg4[%c0_164, %c0_165, %c0_166], %709 {strides = array<i32>} : memref<8x8x128xf32, #tpu.memory_space<vmem>>, vector<8x8x128xf32>,
    return
  }
  func.func @transform_0(%arg0: i32) -> (i32, i32, i32) {
    %c0_i32 = arith.constant 0 : i32
    %c0_i32_0 = arith.constant 0 : i32
    %c0_i32_1 = arith.constant 0 : i32
    return %arg0, %c0_i32, %c0_i32_0 : i32, i32, i32
  }
  func.func @transform_1(%arg0: i32) -> (i32, i32, i32) {
    %c0_i32 = arith.constant 0 : i32
    %c0_i32_0 = arith.constant 0 : i32
    %c0_i32_1 = arith.constant 0 : i32
    return %arg0, %c0_i32, %c0_i32_0 : i32, i32, i32
  }
  func.func @transform_2(%arg0: i32) -> (i32, i32, i32) {
    %c0_i32 = arith.constant 0 : i32
    %c0_i32_0 = arith.constant 0 : i32
    %c0_i32_1 = arith.constant 0 : i32
    return %arg0, %c0_i32, %c0_i32_0 : i32, i32, i32
  }
  func.func @transform_3(%arg0: i32) -> (i32, i32, i32) {
    %c0_i32 = arith.constant 0 : i32
    %c0_i32_0 = arith.constant 0 : i32
    %c0_i32_1 = arith.constant 0 : i32
    return %arg0, %c0_i32, %c0_i32_0 : i32, i32, i32
  }
}

</mosaic_0001>

<llo_original>
// kernel: multibox_loss.1
$region0: #{multibox_loss.1}
  #allocation0 [shape = 'u32[]', space=smem, size = 0x4, offset = 0x4, fixed_abs, tag = 'smem constant byte address 0x4 - core index']
  #allocation1 [shape = 'u32[144,128]{1,0:T(1,128)}', space=vmem, size = 0x12000, scoped, tag = 'internal scratch']
  %s0 = inlined_call_operand.vmem [shape: f32[8,8,256], index: 0, kind: input, shape index: {}]
  %s1 = inlined_call_operand.vmem [shape: bf16[8,8,256], index: 1, kind: input, shape index: {}]
  %s2 = inlined_call_operand.vmem [shape: s32[8,1,256], index: 2, kind: input, shape index: {}]
  %s3 = inlined_call_operand.vmem [shape: f32[8,8,128], index: 3, kind: output, shape index: {}]
  %s4 = sld [smem:[#allocation0]]
  $region22: #{multibox_loss.1} parent=0
    _
  %s6 = ssub.s32 1, %s4
  %s7 = scalar_select 0, %s6, %s4
  // Predicated region
  $region2: #{multibox_loss.1} parent=0 // pred_check
    _
  $region3: #{multibox_loss.1} parent=0 // pred_check_branch
    %9 = sbr.rel (0) target = $region5
  $region4: #{multibox_loss.1} parent=0 // pred_region
    _
  $region5: #{multibox_loss.1} parent=0 // pred_fallthru
    _
  // Predicated region
  $region6: #{multibox_loss.1} parent=0 // pred_check
    _
  $region7: #{multibox_loss.1} parent=0 // pred_check_branch
    %11 = sbr.rel (0) target = $region9
  $region8: #{multibox_loss.1} parent=0 // pred_region
    _
  $region9: #{multibox_loss.1} parent=0 // pred_fallthru
    _
  // Predicated region
  $region10: #{multibox_loss.1} parent=0 // pred_check
    _
  $region11: #{multibox_loss.1} parent=0 // pred_check_branch
    %13 = sbr.rel (0) target = $region13
  $region12: #{multibox_loss.1} parent=0 // pred_region
    _
  $region13: #{multibox_loss.1} parent=0 // pred_fallthru
    _
  %v14 = vld [vmem:[%s0] sm:$0xff]
  %v15 = vld [vmem:[%s0 + $0x8] sm:$0xff]
  %v16 = vld [vmem:[%s0 + $0x10] sm:$0xff]
  %v17 = vld [vmem:[%s0 + $0x18] sm:$0xff]
  %v18 = vld [vmem:[%s0 + $0x20] sm:$0xff]
  %v19 = vld [vmem:[%s0 + $0x28] sm:$0xff]
  %v20 = vld [vmem:[%s0 + $0x30] sm:$0xff]
  %v21 = vld [vmem:[%s0 + $0x38] sm:$0xff]
  %v22 = vld [vmem:[%s0 + $0x40] sm:$0xff]
  %v23 = vld [vmem:[%s0 + $0x48] sm:$0xff]
  %v24 = vld [vmem:[%s0 + $0x50] sm:$0xff]
  %v25 = vld [vmem:[%s0 + $0x58] sm:$0xff]
  %v26 = vld [vmem:[%s0 + $0x60] sm:$0xff]
  %v27 = vld [vmem:[%s0 + $0x68] sm:$0xff]
  %v28 = vld [vmem:[%s0 + $0x70] sm:$0xff]
  %v29 = vld [vmem:[%s0 + $0x78] sm:$0xff]
  %v30 = vld [vmem:[%s2] sm:$0x3]
  %v31 = vld [vmem:[%s2 + $0x2] sm:$0x3]
  %v32 = vld [vmem:[%s2 + $0x4] sm:$0x3]
  %v33 = vld [vmem:[%s2 + $0x6] sm:$0x3]
  %v34 = vld [vmem:[%s2 + $0x8] sm:$0x3]
  %v35 = vld [vmem:[%s2 + $0xa] sm:$0x3]
  %v36 = vld [vmem:[%s2 + $0xc] sm:$0x3]
  %v37 = vld [vmem:[%s2 + $0xe] sm:$0x3]
  %vm38 = vcmp.gt.s32.totalorder %v30, 0
  %vm39 = vcmp.gt.s32.totalorder %v31, 0
  %vm40 = vcmp.gt.s32.totalorder %v32, 0
  %vm41 = vcmp.gt.s32.totalorder %v33, 0
  %vm42 = vcmp.gt.s32.totalorder %v34, 0
  %vm43 = vcmp.gt.s32.totalorder %v35, 0
  %vm44 = vcmp.gt.s32.totalorder %v36, 0
  %vm45 = vcmp.gt.s32.totalorder %v37, 0
  %vm46 = vcmp.ge.s32.totalorder %v30, 0
  %vm47 = vcmp.ge.s32.totalorder %v31, 0
  %vm48 = vcmp.ge.s32.totalorder %v32, 0
  %vm49 = vcmp.ge.s32.totalorder %v33, 0
  %vm50 = vcmp.ge.s32.totalorder %v34, 0
  %vm51 = vcmp.ge.s32.totalorder %v35, 0
  %vm52 = vcmp.ge.s32.totalorder %v36, 0
  %vm53 = vcmp.ge.s32.totalorder %v37, 0
  %v70 = vrot.slane %v14, 4
  %v71 = vrot.slane %v15, 4
  %v72 = vrot.slane %v16, 4
  %v73 = vrot.slane %v17, 4
  %v74 = vrot.slane %v18, 4
  %v75 = vrot.slane %v19, 4
  %v76 = vrot.slane %v20, 4
  %v77 = vrot.slane %v21, 4
  %v78 = vrot.slane %v22, 4
  %v79 = vrot.slane %v23, 4
  %v80 = vrot.slane %v24, 4
  %v81 = vrot.slane %v25, 4
  %v82 = vrot.slane %v26, 4
  %v83 = vrot.slane %v27, 4
  %v84 = vrot.slane %v28, 4
  %v85 = vrot.slane %v29, 4
  %v102 = vsub.f32 %v14, %v70
  %v103 = vsub.f32 %v15, %v71
  %v104 = vsub.f32 %v16, %v72
  %v105 = vsub.f32 %v17, %v73
  %v106 = vsub.f32 %v18, %v74
  %v107 = vsub.f32 %v19, %v75
  %v108 = vsub.f32 %v20, %v76
  %v109 = vsub.f32 %v21, %v77
  %v110 = vsub.f32 %v22, %v78
  %v111 = vsub.f32 %v23, %v79
  %v112 = vsub.f32 %v24, %v80
  %v113 = vsub.f32 %v25, %v81
  %v114 = vsub.f32 %v26, %v82
  %v115 = vsub.f32 %v27, %v83
  %v116 = vsub.f32 %v28, %v84
  %v117 = vsub.f32 %v29, %v85
  %v118 = vand.u32 2147483647, %v102
  %v119 = vand.u32 2147483647, %v103
  %v120 = vand.u32 2147483647, %v104
  %v121 = vand.u32 2147483647, %v105
  %v122 = vand.u32 2147483647, %v106
  %v123 = vand.u32 2147483647, %v107
  %v124 = vand.u32 2147483647, %v108
  %v125 = vand.u32 2147483647, %v109
  %v126 = vand.u32 2147483647, %v110
  %v127 = vand.u32 2147483647, %v111
  %v128 = vand.u32 2147483647, %v112
  %v129 = vand.u32 2147483647, %v113
  %v130 = vand.u32 2147483647, %v114
  %v131 = vand.u32 2147483647, %v115
  %v132 = vand.u32 2147483647, %v116
  %v133 = vand.u32 2147483647, %v117
  %vm134 = vcmp.lt.f32.partialorder %v118, 1.0
  %vm135 = vcmp.lt.f32.partialorder %v119, 1.0
  %vm136 = vcmp.lt.f32.partialorder %v120, 1.0
  %vm137 = vcmp.lt.f32.partialorder %v121, 1.0
  %vm138 = vcmp.lt.f32.partialorder %v122, 1.0
  %vm139 = vcmp.lt.f32.partialorder %v123, 1.0
  %vm140 = vcmp.lt.f32.partialorder %v124, 1.0
  %vm141 = vcmp.lt.f32.partialorder %v125, 1.0
  %vm142 = vcmp.lt.f32.partialorder %v126, 1.0
  %vm143 = vcmp.lt.f32.partialorder %v127, 1.0
  %vm144 = vcmp.lt.f32.partialorder %v128, 1.0
  %vm145 = vcmp.lt.f32.partialorder %v129, 1.0
  %vm146 = vcmp.lt.f32.partialorder %v130, 1.0
  %vm147 = vcmp.lt.f32.partialorder %v131, 1.0
  %vm148 = vcmp.lt.f32.partialorder %v132, 1.0
  %vm149 = vcmp.lt.f32.partialorder %v133, 1.0
  %v150 = vmul.f32 %v102, 0.5
  %v151 = vmul.f32 %v103, 0.5
  %v152 = vmul.f32 %v104, 0.5
  %v153 = vmul.f32 %v105, 0.5
  %v154 = vmul.f32 %v106, 0.5
  %v155 = vmul.f32 %v107, 0.5
  %v156 = vmul.f32 %v108, 0.5
  %v157 = vmul.f32 %v109, 0.5
  %v158 = vmul.f32 %v110, 0.5
  %v159 = vmul.f32 %v111, 0.5
  %v160 = vmul.f32 %v112, 0.5
  %v161 = vmul.f32 %v113, 0.5
  %v162 = vmul.f32 %v114, 0.5
  %v163 = vmul.f32 %v115, 0.5
  %v164 = vmul.f32 %v116, 0.5
  %v165 = vmul.f32 %v117, 0.5
  %v166 = vmul.f32 %v150, %v102
  %v167 = vmul.f32 %v151, %v103
  %v168 = vmul.f32 %v152, %v104
  %v169 = vmul.f32 %v153, %v105
  %v170 = vmul.f32 %v154, %v106
  %v171 = vmul.f32 %v155, %v107
  %v172 = vmul.f32 %v156, %v108
  %v173 = vmul.f32 %v157, %v109
  %v174 = vmul.f32 %v158, %v110
  %v175 = vmul.f32 %v159, %v111
  %v176 = vmul.f32 %v160, %v112
  %v177 = vmul.f32 %v161, %v113
  %v178 = vmul.f32 %v162, %v114
  %v179 = vmul.f32 %v163, %v115
  %v180 = vmul.f32 %v164, %v116
  %v181 = vmul.f32 %v165, %v117
  %v182 = vsub.f32 %v118, 0.5
  %v183 = vsub.f32 %v119, 0.5
  %v184 = vsub.f32 %v120, 0.5
  %v185 = vsub.f32 %v121, 0.5
  %v186 = vsub.f32 %v122, 0.5
  %v187 = vsub.f32 %v123, 0.5
  %v188 = vsub.f32 %v124, 0.5
  %v189 = vsub.f32 %v125, 0.5
  %v190 = vsub.f32 %v126, 0.5
  %v191 = vsub.f32 %v127, 0.5
  %v192 = vsub.f32 %v128, 0.5
  %v193 = vsub.f32 %v129, 0.5
  %v194 = vsub.f32 %v130, 0.5
  %v195 = vsub.f32 %v131, 0.5
  %v196 = vsub.f32 %v132, 0.5
  %v197 = vsub.f32 %v133, 0.5
  %v198 = vsel %vm134, %v166, %v182
  %v199 = vsel %vm135, %v167, %v183
  %v200 = vsel %vm136, %v168, %v184
  %v201 = vsel %vm137, %v169, %v185
  %v202 = vsel %vm138, %v170, %v186
  %v203 = vsel %vm139, %v171, %v187
  %v204 = vsel %vm140, %v172, %v188
  %v205 = vsel %vm141, %v173, %v189
  %v206 = vsel %vm142, %v174, %v190
  %v207 = vsel %vm143, %v175, %v191
  %v208 = vsel %vm144, %v176, %v192
  %v209 = vsel %vm145, %v177, %v193
  %v210 = vsel %vm146, %v178, %v194
  %v211 = vsel %vm147, %v179, %v195
  %v212 = vsel %vm148, %v180, %v196
  %v213 = vsel %vm149, %v181, %v197
  %vm214 = vcmask 1043456
  %v215 = vsel %vm214, %v198, 0.0
  %v216 = vrot.slane %v215, 4
  %v217 = vadd.f32 %v215, %v216
  %v218 = vrot.slane %v217, 2
  %v219 = vadd.f32 %v217, %v218
  %v220 = vrot.slane %v219, 1
  %v221 = vadd.f32 %v219, %v220
  %v222 = vsel %vm214, %v199, 0.0
  %v223 = vrot.slane %v222, 4
  %v224 = vadd.f32 %v222, %v223
  %v225 = vrot.slane %v224, 2
  %v226 = vadd.f32 %v224, %v225
  %v227 = vrot.slane %v226, 1
  %v228 = vadd.f32 %v226, %v227
  %v229 = vsel %vm214, %v200, 0.0
  %v230 = vrot.slane %v229, 4
  %v231 = vadd.f32 %v229, %v230
  %v232 = vrot.slane %v231, 2
  %v233 = vadd.f32 %v231, %v232
  %v234 = vrot.slane %v233, 1
  %v235 = vadd.f32 %v233, %v234
  %v236 = vsel %vm214, %v201, 0.0
  %v237 = vrot.slane %v236, 4
  %v238 = vadd.f32 %v236, %v237
  %v239 = vrot.slane %v238, 2
  %v240 = vadd.f32 %v238, %v239
  %v241 = vrot.slane %v240, 1
  %v242 = vadd.f32 %v240, %v241
  %v243 = vsel %vm214, %v202, 0.0
  %v244 = vrot.slane %v243, 4
  %v245 = vadd.f32 %v243, %v244
  %v246 = vrot.slane %v245, 2
  %v247 = vadd.f32 %v245, %v246
  %v248 = vrot.slane %v247, 1
  %v249 = vadd.f32 %v247, %v248
  %v250 = vsel %vm214, %v203, 0.0
  %v251 = vrot.slane %v250, 4
  %v252 = vadd.f32 %v250, %v251
  %v253 = vrot.slane %v252, 2
  %v254 = vadd.f32 %v252, %v253
  %v255 = vrot.slane %v254, 1
  %v256 = vadd.f32 %v254, %v255
  %v257 = vsel %vm214, %v204, 0.0
  %v258 = vrot.slane %v257, 4
  %v259 = vadd.f32 %v257, %v258
  %v260 = vrot.slane %v259, 2
  %v261 = vadd.f32 %v259, %v260
  %v262 = vrot.slane %v261, 1
  %v263 = vadd.f32 %v261, %v262
  %v264 = vsel %vm214, %v205, 0.0
  %v265 = vrot.slane %v264, 4
  %v266 = vadd.f32 %v264, %v265
  %v267 = vrot.slane %v266, 2
  %v268 = vadd.f32 %v266, %v267
  %v269 = vrot.slane %v268, 1
  %v270 = vadd.f32 %v268, %v269
  %v271 = vsel %vm214, %v206, 0.0
  %v272 = vrot.slane %v271, 4
  %v273 = vadd.f32 %v271, %v272
  %v274 = vrot.slane %v273, 2
  %v275 = vadd.f32 %v273, %v274
  %v276 = vrot.slane %v275, 1
  %v277 = vadd.f32 %v275, %v276
  %v278 = vsel %vm214, %v207, 0.0
  %v279 = vrot.slane %v278, 4
  %v280 = vadd.f32 %v278, %v279
  %v281 = vrot.slane %v280, 2
  %v282 = vadd.f32 %v280, %v281
  %v283 = vrot.slane %v282, 1
  %v284 = vadd.f32 %v282, %v283
  %v285 = vsel %vm214, %v208, 0.0
  %v286 = vrot.slane %v285, 4
  %v287 = vadd.f32 %v285, %v286
  %v288 = vrot.slane %v287, 2
  %v289 = vadd.f32 %v287, %v288
  %v290 = vrot.slane %v289, 1
  %v291 = vadd.f32 %v289, %v290
  %v292 = vsel %vm214, %v209, 0.0
  %v293 = vrot.slane %v292, 4
  %v294 = vadd.f32 %v292, %v293
  %v295 = vrot.slane %v294, 2
  %v296 = vadd.f32 %v294, %v295
  %v297 = vrot.slane %v296, 1
  %v298 = vadd.f32 %v296, %v297
  %v299 = vsel %vm214, %v210, 0.0
  %v300 = vrot.slane %v299, 4
  %v301 = vadd.f32 %v299, %v300
  %v302 = vrot.slane %v301, 2
  %v303 = vadd.f32 %v301, %v302
  %v304 = vrot.slane %v303, 1
  %v305 = vadd.f32 %v303, %v304
  %v306 = vsel %vm214, %v211, 0.0
  %v307 = vrot.slane %v306, 4
  %v308 = vadd.f32 %v306, %v307
  %v309 = vrot.slane %v308, 2
  %v310 = vadd.f32 %v308, %v309
  %v311 = vrot.slane %v310, 1
  %v312 = vadd.f32 %v310, %v311
  %v313 = vsel %vm214, %v212, 0.0
  %v314 = vrot.slane %v313, 4
  %v315 = vadd.f32 %v313, %v314
  %v316 = vrot.slane %v315, 2
  %v317 = vadd.f32 %v315, %v316
  %v318 = vrot.slane %v317, 1
  %v319 = vadd.f32 %v317, %v318
  %v320 = vsel %vm214, %v213, 0.0
  %v321 = vrot.slane %v320, 4
  %v322 = vadd.f32 %v320, %v321
  %v323 = vrot.slane %v322, 2
  %v324 = vadd.f32 %v322, %v323
  %v325 = vrot.slane %v324, 1
  %v326 = vadd.f32 %v324, %v325
  %v327 = vld [vmem:[%s1] sm:$0xff]
  %v328 = vld [vmem:[%s1 + $0x8] sm:$0xff]
  %v329 = vld [vmem:[%s1 + $0x10] sm:$0xff]
  %v330 = vld [vmem:[%s1 + $0x18] sm:$0xff]
  %v331 = vld [vmem:[%s1 + $0x20] sm:$0xff]
  %v332 = vld [vmem:[%s1 + $0x28] sm:$0xff]
  %v333 = vld [vmem:[%s1 + $0x30] sm:$0xff]
  %v334 = vld [vmem:[%s1 + $0x38] sm:$0xff]
  %v335 = vunpack.c.l.bf16 %v327
  %v336 = vunpack.c.h.bf16 %v327
  %v337 = vunpack.c.l.bf16 %v328
  %v338 = vunpack.c.h.bf16 %v328
  %v339 = vunpack.c.l.bf16 %v329
  %v340 = vunpack.c.h.bf16 %v329
  %v341 = vunpack.c.l.bf16 %v330
  %v342 = vunpack.c.h.bf16 %v330
  %v343 = vunpack.c.l.bf16 %v331
  %v344 = vunpack.c.h.bf16 %v331
  %v345 = vunpack.c.l.bf16 %v332
  %v346 = vunpack.c.h.bf16 %v332
  %v347 = vunpack.c.l.bf16 %v333
  %v348 = vunpack.c.h.bf16 %v333
  %v349 = vunpack.c.l.bf16 %v334
  %v350 = vunpack.c.h.bf16 %v334
  %v367 = vrot.slane %v335, 1
  %v368 = vrot.slane %v336, 1
  %v369 = vrot.slane %v337, 1
  %v370 = vrot.slane %v338, 1
  %v371 = vrot.slane %v339, 1
  %v372 = vrot.slane %v340, 1
  %v373 = vrot.slane %v341, 1
  %v374 = vrot.slane %v342, 1
  %v375 = vrot.slane %v343, 1
  %v376 = vrot.slane %v344, 1
  %v377 = vrot.slane %v345, 1
  %v378 = vrot.slane %v346, 1
  %v379 = vrot.slane %v347, 1
  %v380 = vrot.slane %v348, 1
  %v381 = vrot.slane %v349, 1
  %v382 = vrot.slane %v350, 1
  %v399 = vmax.f32 %v335, %v367
  %v400 = vmax.f32 %v336, %v368
  %v401 = vmax.f32 %v337, %v369
  %v402 = vmax.f32 %v338, %v370
  %v403 = vmax.f32 %v339, %v371
  %v404 = vmax.f32 %v340, %v372
  %v405 = vmax.f32 %v341, %v373
  %v406 = vmax.f32 %v342, %v374
  %v407 = vmax.f32 %v343, %v375
  %v408 = vmax.f32 %v344, %v376
  %v409 = vmax.f32 %v345, %v377
  %v410 = vmax.f32 %v346, %v378
  %v411 = vmax.f32 %v347, %v379
  %v412 = vmax.f32 %v348, %v380
  %v413 = vmax.f32 %v349, %v381
  %v414 = vmax.f32 %v350, %v382
  %v415 = vrot.slane %v335, 2
  %v416 = vrot.slane %v336, 2
  %v417 = vrot.slane %v337, 2
  %v418 = vrot.slane %v338, 2
  %v419 = vrot.slane %v339, 2
  %v420 = vrot.slane %v340, 2
  %v421 = vrot.slane %v341, 2
  %v422 = vrot.slane %v342, 2
  %v423 = vrot.slane %v343, 2
  %v424 = vrot.slane %v344, 2
  %v425 = vrot.slane %v345, 2
  %v426 = vrot.slane %v346, 2
  %v427 = vrot.slane %v347, 2
  %v428 = vrot.slane %v348, 2
  %v429 = vrot.slane %v349, 2
  %v430 = vrot.slane %v350, 2
  %v447 = vmax.f32 %v399, %v415
  %v448 = vmax.f32 %v400, %v416
  %v449 = vmax.f32 %v401, %v417
  %v450 = vmax.f32 %v402, %v418
  %v451 = vmax.f32 %v403, %v419
  %v452 = vmax.f32 %v404, %v420
  %v453 = vmax.f32 %v405, %v421
  %v454 = vmax.f32 %v406, %v422
  %v455 = vmax.f32 %v407, %v423
  %v456 = vmax.f32 %v408, %v424
  %v457 = vmax.f32 %v409, %v425
  %v458 = vmax.f32 %v410, %v426
  %v459 = vmax.f32 %v411, %v427
  %v460 = vmax.f32 %v412, %v428
  %v461 = vmax.f32 %v413, %v429
  %v462 = vmax.f32 %v414, %v430
  %v463 = vrot.slane %v335, 3
  %v464 = vrot.slane %v336, 3
  %v465 = vrot.slane %v337, 3
  %v466 = vrot.slane %v338, 3
  %v467 = vrot.slane %v339, 3
  %v468 = vrot.slane %v340, 3
  %v469 = vrot.slane %v341, 3
  %v470 = vrot.slane %v342, 3
  %v471 = vrot.slane %v343, 3
  %v472 = vrot.slane %v344, 3
  %v473 = vrot.slane %v345, 3
  %v474 = vrot.slane %v346, 3
  %v475 = vrot.slane %v347, 3
  %v476 = vrot.slane %v348, 3
  %v477 = vrot.slane %v349, 3
  %v478 = vrot.slane %v350, 3
  %v495 = vmax.f32 %v447, %v463
  %v496 = vmax.f32 %v448, %v464
  %v497 = vmax.f32 %v449, %v465
  %v498 = vmax.f32 %v450, %v466
  %v499 = vmax.f32 %v451, %v467
  %v500 = vmax.f32 %v452, %v468
  %v501 = vmax.f32 %v453, %v469
  %v502 = vmax.f32 %v454, %v470
  %v503 = vmax.f32 %v455, %v471
  %v504 = vmax.f32 %v456, %v472
  %v505 = vmax.f32 %v457, %v473
  %v506 = vmax.f32 %v458, %v474
  %v507 = vmax.f32 %v459, %v475
  %v508 = vmax.f32 %v460, %v476
  %v509 = vmax.f32 %v461, %v477
  %v510 = vmax.f32 %v462, %v478
  %v511 = vrot.slane %v335, 4
  %v512 = vrot.slane %v336, 4
  %v513 = vrot.slane %v337, 4
  %v514 = vrot.slane %v338, 4
  %v515 = vrot.slane %v339, 4
  %v516 = vrot.slane %v340, 4
  %v517 = vrot.slane %v341, 4
  %v518 = vrot.slane %v342, 4
  %v519 = vrot.slane %v343, 4
  %v520 = vrot.slane %v344, 4
  %v521 = vrot.slane %v345, 4
  %v522 = vrot.slane %v346, 4
  %v523 = vrot.slane %v347, 4
  %v524 = vrot.slane %v348, 4
  %v525 = vrot.slane %v349, 4
  %v526 = vrot.slane %v350, 4
  %v543 = vmax.f32 %v495, %v511
  %v544 = vmax.f32 %v496, %v512
  %v545 = vmax.f32 %v497, %v513
  %v546 = vmax.f32 %v498, %v514
  %v547 = vmax.f32 %v499, %v515
  %v548 = vmax.f32 %v500, %v516
  %v549 = vmax.f32 %v501, %v517
  %v550 = vmax.f32 %v502, %v518
  %v551 = vmax.f32 %v503, %v519
  %v552 = vmax.f32 %v504, %v520
  %v553 = vmax.f32 %v505, %v521
  %v554 = vmax.f32 %v506, %v522
  %v555 = vmax.f32 %v507, %v523
  %v556 = vmax.f32 %v508, %v524
  %v557 = vmax.f32 %v509, %v525
  %v558 = vmax.f32 %v510, %v526
  %v559 = vrot.slane %v335, 5
  %v560 = vrot.slane %v336, 5
  %v561 = vrot.slane %v337, 5
  %v562 = vrot.slane %v338, 5
  %v563 = vrot.slane %v339, 5
  %v564 = vrot.slane %v340, 5
  %v565 = vrot.slane %v341, 5
  %v566 = vrot.slane %v342, 5
  %v567 = vrot.slane %v343, 5
  %v568 = vrot.slane %v344, 5
  %v569 = vrot.slane %v345, 5
  %v570 = vrot.slane %v346, 5
  %v571 = vrot.slane %v347, 5
  %v572 = vrot.slane %v348, 5
  %v573 = vrot.slane %v349, 5
  %v574 = vrot.slane %v350, 5
  %v591 = vmax.f32 %v543, %v559
  %v592 = vmax.f32 %v544, %v560
  %v593 = vmax.f32 %v545, %v561
  %v594 = vmax.f32 %v546, %v562
  %v595 = vmax.f32 %v547, %v563
  %v596 = vmax.f32 %v548, %v564
  %v597 = vmax.f32 %v549, %v565
  %v598 = vmax.f32 %v550, %v566
  %v599 = vmax.f32 %v551, %v567
  %v600 = vmax.f32 %v552, %v568
  %v601 = vmax.f32 %v553, %v569
  %v602 = vmax.f32 %v554, %v570
  %v603 = vmax.f32 %v555, %v571
  %v604 = vmax.f32 %v556, %v572
  %v605 = vmax.f32 %v557, %v573
  %v606 = vmax.f32 %v558, %v574
  %v607 = vrot.slane %v335, 6
  %v608 = vrot.slane %v336, 6
  %v609 = vrot.slane %v337, 6
  %v610 = vrot.slane %v338, 6
  %v611 = vrot.slane %v339, 6
  %v612 = vrot.slane %v340, 6
  %v613 = vrot.slane %v341, 6
  %v614 = vrot.slane %v342, 6
  %v615 = vrot.slane %v343, 6
  %v616 = vrot.slane %v344, 6
  %v617 = vrot.slane %v345, 6
  %v618 = vrot.slane %v346, 6
  %v619 = vrot.slane %v347, 6
  %v620 = vrot.slane %v348, 6
  %v621 = vrot.slane %v349, 6
  %v622 = vrot.slane %v350, 6
  %v639 = vmax.f32 %v591, %v607
  %v640 = vmax.f32 %v592, %v608
  %v641 = vmax.f32 %v593, %v609
  %v642 = vmax.f32 %v594, %v610
  %v643 = vmax.f32 %v595, %v611
  %v644 = vmax.f32 %v596, %v612
  %v645 = vmax.f32 %v597, %v613
  %v646 = vmax.f32 %v598, %v614
  %v647 = vmax.f32 %v599, %v615
  %v648 = vmax.f32 %v600, %v616
  %v649 = vmax.f32 %v601, %v617
  %v650 = vmax.f32 %v602, %v618
  %v651 = vmax.f32 %v603, %v619
  %v652 = vmax.f32 %v604, %v620
  %v653 = vmax.f32 %v605, %v621
  %v654 = vmax.f32 %v606, %v622
  %v655 = vrot.slane %v335, 7
  %v656 = vrot.slane %v336, 7
  %v657 = vrot.slane %v337, 7
  %v658 = vrot.slane %v338, 7
  %v659 = vrot.slane %v339, 7
  %v660 = vrot.slane %v340, 7
  %v661 = vrot.slane %v341, 7
  %v662 = vrot.slane %v342, 7
  %v663 = vrot.slane %v343, 7
  %v664 = vrot.slane %v344, 7
  %v665 = vrot.slane %v345, 7
  %v666 = vrot.slane %v346, 7
  %v667 = vrot.slane %v347, 7
  %v668 = vrot.slane %v348, 7
  %v669 = vrot.slane %v349, 7
  %v670 = vrot.slane %v350, 7
  %v687 = vmax.f32 %v639, %v655
  %v688 = vmax.f32 %v640, %v656
  %v689 = vmax.f32 %v641, %v657
  %v690 = vmax.f32 %v642, %v658
  %v691 = vmax.f32 %v643, %v659
  %v692 = vmax.f32 %v644, %v660
  %v693 = vmax.f32 %v645, %v661
  %v694 = vmax.f32 %v646, %v662
  %v695 = vmax.f32 %v647, %v663
  %v696 = vmax.f32 %v648, %v664
  %v697 = vmax.f32 %v649, %v665
  %v698 = vmax.f32 %v650, %v666
  %v699 = vmax.f32 %v651, %v667
  %v700 = vmax.f32 %v652, %v668
  %v701 = vmax.f32 %v653, %v669
  %v702 = vmax.f32 %v654, %v670
  %v703 = vsub.f32 %v335, %v687
  %v704 = vsub.f32 %v336, %v688
  %v705 = vsub.f32 %v337, %v689
  %v706 = vsub.f32 %v338, %v690
  %v707 = vsub.f32 %v339, %v691
  %v708 = vsub.f32 %v340, %v692
  %v709 = vsub.f32 %v341, %v693
  %v710 = vsub.f32 %v342, %v694
  %v711 = vsub.f32 %v343, %v695
  %v712 = vsub.f32 %v344, %v696
  %v713 = vsub.f32 %v345, %v697
  %v714 = vsub.f32 %v346, %v698
  %v715 = vsub.f32 %v347, %v699
  %v716 = vsub.f32 %v348, %v700
  %v717 = vsub.f32 %v349, %v701
  %v718 = vsub.f32 %v350, %v702
  %v719 = vmul.f32 %v703, 1.442695
  %v720 = vpow.pop %v719
  %v721 = vmul.f32 %v704, 1.442695
  %v722 = vpow.pop %v721
  %v723 = vmul.f32 %v705, 1.442695
  %v724 = vpow.pop %v723
  %v725 = vmul.f32 %v706, 1.442695
  %v726 = vpow.pop %v725
  %v727 = vmul.f32 %v707, 1.442695
  %v728 = vpow.pop %v727
  %v729 = vmul.f32 %v708, 1.442695
  %v730 = vpow.pop %v729
  %v731 = vmul.f32 %v709, 1.442695
  %v732 = vpow.pop %v731
  %v733 = vmul.f32 %v710, 1.442695
  %v734 = vpow.pop %v733
  %v735 = vmul.f32 %v711, 1.442695
  %v736 = vpow.pop %v735
  %v737 = vmul.f32 %v712, 1.442695
  %v738 = vpow.pop %v737
  %v739 = vmul.f32 %v713, 1.442695
  %v740 = vpow.pop %v739
  %v741 = vmul.f32 %v714, 1.442695
  %v742 = vpow.pop %v741
  %v743 = vmul.f32 %v715, 1.442695
  %v744 = vpow.pop %v743
  %v745 = vmul.f32 %v716, 1.442695
  %v746 = vpow.pop %v745
  %v747 = vmul.f32 %v717, 1.442695
  %v748 = vpow.pop %v747
  %v749 = vmul.f32 %v718, 1.442695
  %v750 = vpow.pop %v749
  %v751 = vadd.f32 %v720, 0.0
  %v752 = vadd.f32 %v722, 0.0
  %v753 = vadd.f32 %v724, 0.0
  %v754 = vadd.f32 %v726, 0.0
  %v755 = vadd.f32 %v728, 0.0
  %v756 = vadd.f32 %v730, 0.0
  %v757 = vadd.f32 %v732, 0.0
  %v758 = vadd.f32 %v734, 0.0
  %v759 = vadd.f32 %v736, 0.0
  %v760 = vadd.f32 %v738, 0.0
  %v761 = vadd.f32 %v740, 0.0
  %v762 = vadd.f32 %v742, 0.0
  %v763 = vadd.f32 %v744, 0.0
  %v764 = vadd.f32 %v746, 0.0
  %v765 = vadd.f32 %v748, 0.0
  %v766 = vadd.f32 %v750, 0.0
  %vm767 = vcmp.eq.s32.totalorder %v30, 0
  %vm768 = vcmp.eq.s32.totalorder %v31, 0
  %vm769 = vcmp.eq.s32.totalorder %v32, 0
  %vm770 = vcmp.eq.s32.totalorder %v33, 0
  %vm771 = vcmp.eq.s32.totalorder %v34, 0
  %vm772 = vcmp.eq.s32.totalorder %v35, 0
  %vm773 = vcmp.eq.s32.totalorder %v36, 0
  %vm774 = vcmp.eq.s32.totalorder %v37, 0
  %v775 = vcombine.low %v335, %v336
  %v777 = vunpack.c.l.s4 1966171168
  %v778 = vunpack.c.0.s8 %v777
  %v779 = vlaneseq
  %v780 = vshrl.u32 %v779, 7
  %v781 = vsub.s32 %v778, %v780
  %v782 = vrot.slane %v775, %v781
  %v784 = vunpack.c.l.s4 1966171168
  %v785 = vunpack.c.0.s8 %v784
  %v786 = vlaneseq
  %v787 = vshrl.u32 %v786, 7
  %v788 = vsub.s32 %v785, %v787
  %v789 = vrot.slane %v782, %v788
  %v790 = vcombine.low %v337, %v338
  %v792 = vunpack.c.l.s4 1966171168
  %v793 = vunpack.c.0.s8 %v792
  %v794 = vlaneseq
  %v795 = vshrl.u32 %v794, 7
  %v796 = vsub.s32 %v793, %v795
  %v797 = vrot.slane %v790, %v796
  %v799 = vunpack.c.l.s4 1966171168
  %v800 = vunpack.c.0.s8 %v799
  %v801 = vlaneseq
  %v802 = vshrl.u32 %v801, 7
  %v803 = vsub.s32 %v800, %v802
  %v804 = vrot.slane %v797, %v803
  %v805 = vcombine.low %v339, %v340
  %v807 = vunpack.c.l.s4 1966171168
  %v808 = vunpack.c.0.s8 %v807
  %v809 = vlaneseq
  %v810 = vshrl.u32 %v809, 7
  %v811 = vsub.s32 %v808, %v810
  %v812 = vrot.slane %v805, %v811
  %v814 = vunpack.c.l.s4 1966171168
  %v815 = vunpack.c.0.s8 %v814
  %v816 = vlaneseq
  %v817 = vshrl.u32 %v816, 7
  %v818 = vsub.s32 %v815, %v817
  %v819 = vrot.slane %v812, %v818
  %v820 = vcombine.low %v341, %v342
  %v822 = vunpack.c.l.s4 1966171168
  %v823 = vunpack.c.0.s8 %v822
  %v824 = vlaneseq
  %v825 = vshrl.u32 %v824, 7
  %v826 = vsub.s32 %v823, %v825
  %v827 = vrot.slane %v820, %v826
  %v829 = vunpack.c.l.s4 1966171168
  %v830 = vunpack.c.0.s8 %v829
  %v831 = vlaneseq
  %v832 = vshrl.u32 %v831, 7
  %v833 = vsub.s32 %v830, %v832
  %v834 = vrot.slane %v827, %v833
  %v835 = vcombine.low %v343, %v344
  %v837 = vunpack.c.l.s4 1966171168
  %v838 = vunpack.c.0.s8 %v837
  %v839 = vlaneseq
  %v840 = vshrl.u32 %v839, 7
  %v841 = vsub.s32 %v838, %v840
  %v842 = vrot.slane %v835, %v841
  %v844 = vunpack.c.l.s4 1966171168
  %v845 = vunpack.c.0.s8 %v844
  %v846 = vlaneseq
  %v847 = vshrl.u32 %v846, 7
  %v848 = vsub.s32 %v845, %v847
  %v849 = vrot.slane %v842, %v848
  %v850 = vcombine.low %v345, %v346
  %v852 = vunpack.c.l.s4 1966171168
  %v853 = vunpack.c.0.s8 %v852
  %v854 = vlaneseq
  %v855 = vshrl.u32 %v854, 7
  %v856 = vsub.s32 %v853, %v855
  %v857 = vrot.slane %v850, %v856
  %v859 = vunpack.c.l.s4 1966171168
  %v860 = vunpack.c.0.s8 %v859
  %v861 = vlaneseq
  %v862 = vshrl.u32 %v861, 7
  %v863 = vsub.s32 %v860, %v862
  %v864 = vrot.slane %v857, %v863
  %v865 = vcombine.low %v347, %v348
  %v867 = vunpack.c.l.s4 1966171168
  %v868 = vunpack.c.0.s8 %v867
  %v869 = vlaneseq
  %v870 = vshrl.u32 %v869, 7
  %v871 = vsub.s32 %v868, %v870
  %v872 = vrot.slane %v865, %v871
  %v874 = vunpack.c.l.s4 1966171168
  %v875 = vunpack.c.0.s8 %v874
  %v876 = vlaneseq
  %v877 = vshrl.u32 %v876, 7
  %v878 = vsub.s32 %v875, %v877
  %v879 = vrot.slane %v872, %v878
  %v880 = vcombine.low %v349, %v350
  %v882 = vunpack.c.l.s4 1966171168
  %v883 = vunpack.c.0.s8 %v882
  %v884 = vlaneseq
  %v885 = vshrl.u32 %v884, 7
  %v886 = vsub.s32 %v883, %v885
  %v887 = vrot.slane %v880, %v886
  %v889 = vunpack.c.l.s4 1966171168
  %v890 = vunpack.c.0.s8 %v889
  %v891 = vlaneseq
  %v892 = vshrl.u32 %v891, 7
  %v893 = vsub.s32 %v890, %v892
  %v894 = vrot.slane %v887, %v893
  %v903 = vsel %vm767, %v789, 0.0
  %v904 = vsel %vm768, %v804, 0.0
  %v905 = vsel %vm769, %v819, 0.0
  %v906 = vsel %vm770, %v834, 0.0
  %v907 = vsel %vm771, %v849, 0.0
  %v908 = vsel %vm772, %v864, 0.0
  %v909 = vsel %vm773, %v879, 0.0
  %v910 = vsel %vm774, %v894, 0.0
  %v911 = vadd.f32 %v903, 0.0
  %v912 = vadd.f32 %v904, 0.0
  %v913 = vadd.f32 %v905, 0.0
  %v914 = vadd.f32 %v906, 0.0
  %v915 = vadd.f32 %v907, 0.0
  %v916 = vadd.f32 %v908, 0.0
  %v917 = vadd.f32 %v909, 0.0
  %v918 = vadd.f32 %v910, 0.0
  %v935 = vrot.slane %v687, 7
  %v936 = vrot.slane %v688, 7
  %v937 = vrot.slane %v689, 7
  %v938 = vrot.slane %v690, 7
  %v939 = vrot.slane %v691, 7
  %v940 = vrot.slane %v692, 7
  %v941 = vrot.slane %v693, 7
  %v942 = vrot.slane %v694, 7
  %v943 = vrot.slane %v695, 7
  %v944 = vrot.slane %v696, 7
  %v945 = vrot.slane %v697, 7
  %v946 = vrot.slane %v698, 7
  %v947 = vrot.slane %v699, 7
  %v948 = vrot.slane %v700, 7
  %v949 = vrot.slane %v701, 7
  %v950 = vrot.slane %v702, 7
  %v967 = vsub.f32 %v335, %v935
  %v968 = vsub.f32 %v336, %v936
  %v969 = vsub.f32 %v337, %v937
  %v970 = vsub.f32 %v338, %v938
  %v971 = vsub.f32 %v339, %v939
  %v972 = vsub.f32 %v340, %v940
  %v973 = vsub.f32 %v341, %v941
  %v974 = vsub.f32 %v342, %v942
  %v975 = vsub.f32 %v343, %v943
  %v976 = vsub.f32 %v344, %v944
  %v977 = vsub.f32 %v345, %v945
  %v978 = vsub.f32 %v346, %v946
  %v979 = vsub.f32 %v347, %v947
  %v980 = vsub.f32 %v348, %v948
  %v981 = vsub.f32 %v349, %v949
  %v982 = vsub.f32 %v350, %v950
  %v983 = vmul.f32 %v967, 1.442695
  %v984 = vpow.pop %v983
  %v985 = vmul.f32 %v968, 1.442695
  %v986 = vpow.pop %v985
  %v987 = vmul.f32 %v969, 1.442695
  %v988 = vpow.pop %v987
  %v989 = vmul.f32 %v970, 1.442695
  %v990 = vpow.pop %v989
  %v991 = vmul.f32 %v971, 1.442695
  %v992 = vpow.pop %v991
  %v993 = vmul.f32 %v972, 1.442695
  %v994 = vpow.pop %v993
  %v995 = vmul.f32 %v973, 1.442695
  %v996 = vpow.pop %v995
  %v997 = vmul.f32 %v974, 1.442695
  %v998 = vpow.pop %v997
  %v999 = vmul.f32 %v975, 1.442695
  %v1000 = vpow.pop %v999
  %v1001 = vmul.f32 %v976, 1.442695
  %v1002 = vpow.pop %v1001
  %v1003 = vmul.f32 %v977, 1.442695
  %v1004 = vpow.pop %v1003
  %v1005 = vmul.f32 %v978, 1.442695
  %v1006 = vpow.pop %v1005
  %v1007 = vmul.f32 %v979, 1.442695
  %v1008 = vpow.pop %v1007
  %v1009 = vmul.f32 %v980, 1.442695
  %v1010 = vpow.pop %v1009
  %v1011 = vmul.f32 %v981, 1.442695
  %v1012 = vpow.pop %v1011
  %v1013 = vmul.f32 %v982, 1.442695
  %v1014 = vpow.pop %v1013
  %v1031 = vrot.slane %v984, 1
  %v1032 = vrot.slane %v986, 1
  %v1033 = vrot.slane %v988, 1
  %v1034 = vrot.slane %v990, 1
  %v1035 = vrot.slane %v992, 1
  %v1036 = vrot.slane %v994, 1
  %v1037 = vrot.slane %v996, 1
  %v1038 = vrot.slane %v998, 1
  %v1039 = vrot.slane %v1000, 1
  %v1040 = vrot.slane %v1002, 1
  %v1041 = vrot.slane %v1004, 1
  %v1042 = vrot.slane %v1006, 1
  %v1043 = vrot.slane %v1008, 1
  %v1044 = vrot.slane %v1010, 1
  %v1045 = vrot.slane %v1012, 1
  %v1046 = vrot.slane %v1014, 1
  %v1063 = vadd.f32 %v751, %v1031
  %v1064 = vadd.f32 %v752, %v1032
  %v1065 = vadd.f32 %v753, %v1033
  %v1066 = vadd.f32 %v754, %v1034
  %v1067 = vadd.f32 %v755, %v1035
  %v1068 = vadd.f32 %v756, %v1036
  %v1069 = vadd.f32 %v757, %v1037
  %v1070 = vadd.f32 %v758, %v1038
  %v1071 = vadd.f32 %v759, %v1039
  %v1072 = vadd.f32 %v760, %v1040
  %v1073 = vadd.f32 %v761, %v1041
  %v1074 = vadd.f32 %v762, %v1042
  %v1075 = vadd.f32 %v763, %v1043
  %v1076 = vadd.f32 %v764, %v1044
  %v1077 = vadd.f32 %v765, %v1045
  %v1078 = vadd.f32 %v766, %v1046
  %vm1079 = vcmp.eq.s32.totalorder %v30, 1
  %vm1080 = vcmp.eq.s32.totalorder %v31, 1
  %vm1081 = vcmp.eq.s32.totalorder %v32, 1
  %vm1082 = vcmp.eq.s32.totalorder %v33, 1
  %vm1083 = vcmp.eq.s32.totalorder %v34, 1
  %vm1084 = vcmp.eq.s32.totalorder %v35, 1
  %vm1085 = vcmp.eq.s32.totalorder %v36, 1
  %vm1086 = vcmp.eq.s32.totalorder %v37, 1
  %v1087 = vcombine.high %v782, %v782
  %v1089 = vunpack.c.l.s4 1966171168
  %v1090 = vunpack.c.0.s8 %v1089
  %v1091 = vlaneseq
  %v1092 = vshrl.u32 %v1091, 7
  %v1093 = vsub.s32 %v1090, %v1092
  %v1094 = vrot.slane %v1087, %v1093
  %v1095 = vcombine.high %v797, %v797
  %v1097 = vunpack.c.l.s4 1966171168
  %v1098 = vunpack.c.0.s8 %v1097
  %v1099 = vlaneseq
  %v1100 = vshrl.u32 %v1099, 7
  %v1101 = vsub.s32 %v1098, %v1100
  %v1102 = vrot.slane %v1095, %v1101
  %v1103 = vcombine.high %v812, %v812
  %v1105 = vunpack.c.l.s4 1966171168
  %v1106 = vunpack.c.0.s8 %v1105
  %v1107 = vlaneseq
  %v1108 = vshrl.u32 %v1107, 7
  %v1109 = vsub.s32 %v1106, %v1108
  %v1110 = vrot.slane %v1103, %v1109
  %v1111 = vcombine.high %v827, %v827
  %v1113 = vunpack.c.l.s4 1966171168
  %v1114 = vunpack.c.0.s8 %v1113
  %v1115 = vlaneseq
  %v1116 = vshrl.u32 %v1115, 7
  %v1117 = vsub.s32 %v1114, %v1116
  %v1118 = vrot.slane %v1111, %v1117
  %v1119 = vcombine.high %v842, %v842
  %v1121 = vunpack.c.l.s4 1966171168
  %v1122 = vunpack.c.0.s8 %v1121
  %v1123 = vlaneseq
  %v1124 = vshrl.u32 %v1123, 7
  %v1125 = vsub.s32 %v1122, %v1124
  %v1126 = vrot.slane %v1119, %v1125
  %v1127 = vcombine.high %v857, %v857
  %v1129 = vunpack.c.l.s4 1966171168
  %v1130 = vunpack.c.0.s8 %v1129
  %v1131 = vlaneseq
  %v1132 = vshrl.u32 %v1131, 7
  %v1133 = vsub.s32 %v1130, %v1132
  %v1134 = vrot.slane %v1127, %v1133
  %v1135 = vcombine.high %v872, %v872
  %v1137 = vunpack.c.l.s4 1966171168
  %v1138 = vunpack.c.0.s8 %v1137
  %v1139 = vlaneseq
  %v1140 = vshrl.u32 %v1139, 7
  %v1141 = vsub.s32 %v1138, %v1140
  %v1142 = vrot.slane %v1135, %v1141
  %v1143 = vcombine.high %v887, %v887
  %v1145 = vunpack.c.l.s4 1966171168
  %v1146 = vunpack.c.0.s8 %v1145
  %v1147 = vlaneseq
  %v1148 = vshrl.u32 %v1147, 7
  %v1149 = vsub.s32 %v1146, %v1148
  %v1150 = vrot.slane %v1143, %v1149
  %v1159 = vsel %vm1079, %v1094, 0.0
  %v1160 = vsel %vm1080, %v1102, 0.0
  %v1161 = vsel %vm1081, %v1110, 0.0
  %v1162 = vsel %vm1082, %v1118, 0.0
  %v1163 = vsel %vm1083, %v1126, 0.0
  %v1164 = vsel %vm1084, %v1134, 0.0
  %v1165 = vsel %vm1085, %v1142, 0.0
  %v1166 = vsel %vm1086, %v1150, 0.0
  %v1167 = vadd.f32 %v911, %v1159
  %v1168 = vadd.f32 %v912, %v1160
  %v1169 = vadd.f32 %v913, %v1161
  %v1170 = vadd.f32 %v914, %v1162
  %v1171 = vadd.f32 %v915, %v1163
  %v1172 = vadd.f32 %v916, %v1164
  %v1173 = vadd.f32 %v917, %v1165
  %v1174 = vadd.f32 %v918, %v1166
  %v1175 = vrot.slane %v687, 6
  %v1176 = vrot.slane %v688, 6
  %v1177 = vrot.slane %v689, 6
  %v1178 = vrot.slane %v690, 6
  %v1179 = vrot.slane %v691, 6
  %v1180 = vrot.slane %v692, 6
  %v1181 = vrot.slane %v693, 6
  %v1182 = vrot.slane %v694, 6
  %v1183 = vrot.slane %v695, 6
  %v1184 = vrot.slane %v696, 6
  %v1185 = vrot.slane %v697, 6
  %v1186 = vrot.slane %v698, 6
  %v1187 = vrot.slane %v699, 6
  %v1188 = vrot.slane %v700, 6
  %v1189 = vrot.slane %v701, 6
  %v1190 = vrot.slane %v702, 6
  %v1207 = vsub.f32 %v335, %v1175
  %v1208 = vsub.f32 %v336, %v1176
  %v1209 = vsub.f32 %v337, %v1177
  %v1210 = vsub.f32 %v338, %v1178
  %v1211 = vsub.f32 %v339, %v1179
  %v1212 = vsub.f32 %v340, %v1180
  %v1213 = vsub.f32 %v341, %v1181
  %v1214 = vsub.f32 %v342, %v1182
  %v1215 = vsub.f32 %v343, %v1183
  %v1216 = vsub.f32 %v344, %v1184
  %v1217 = vsub.f32 %v345, %v1185
  %v1218 = vsub.f32 %v346, %v1186
  %v1219 = vsub.f32 %v347, %v1187
  %v1220 = vsub.f32 %v348, %v1188
  %v1221 = vsub.f32 %v349, %v1189
  %v1222 = vsub.f32 %v350, %v1190
  %v1223 = vmul.f32 %v1207, 1.442695
  %v1224 = vpow.pop %v1223
  %v1225 = vmul.f32 %v1208, 1.442695
  %v1226 = vpow.pop %v1225
  %v1227 = vmul.f32 %v1209, 1.442695
  %v1228 = vpow.pop %v1227
  %v1229 = vmul.f32 %v1210, 1.442695
  %v1230 = vpow.pop %v1229
  %v1231 = vmul.f32 %v1211, 1.442695
  %v1232 = vpow.pop %v1231
  %v1233 = vmul.f32 %v1212, 1.442695
  %v1234 = vpow.pop %v1233
  %v1235 = vmul.f32 %v1213, 1.442695
  %v1236 = vpow.pop %v1235
  %v1237 = vmul.f32 %v1214, 1.442695
  %v1238 = vpow.pop %v1237
  %v1239 = vmul.f32 %v1215, 1.442695
  %v1240 = vpow.pop %v1239
  %v1241 = vmul.f32 %v1216, 1.442695
  %v1242 = vpow.pop %v1241
  %v1243 = vmul.f32 %v1217, 1.442695
  %v1244 = vpow.pop %v1243
  %v1245 = vmul.f32 %v1218, 1.442695
  %v1246 = vpow.pop %v1245
  %v1247 = vmul.f32 %v1219, 1.442695
  %v1248 = vpow.pop %v1247
  %v1249 = vmul.f32 %v1220, 1.442695
  %v1250 = vpow.pop %v1249
  %v1251 = vmul.f32 %v1221, 1.442695
  %v1252 = vpow.pop %v1251
  %v1253 = vmul.f32 %v1222, 1.442695
  %v1254 = vpow.pop %v1253
  %v1271 = vrot.slane %v1224, 2
  %v1272 = vrot.slane %v1226, 2
  %v1273 = vrot.slane %v1228, 2
  %v1274 = vrot.slane %v1230, 2
  %v1275 = vrot.slane %v1232, 2
  %v1276 = vrot.slane %v1234, 2
  %v1277 = vrot.slane %v1236, 2
  %v1278 = vrot.slane %v1238, 2
  %v1279 = vrot.slane %v1240, 2
  %v1280 = vrot.slane %v1242, 2
  %v1281 = vrot.slane %v1244, 2
  %v1282 = vrot.slane %v1246, 2
  %v1283 = vrot.slane %v1248, 2
  %v1284 = vrot.slane %v1250, 2
  %v1285 = vrot.slane %v1252, 2
  %v1286 = vrot.slane %v1254, 2
  %v1303 = vadd.f32 %v1063, %v1271
  %v1304 = vadd.f32 %v1064, %v1272
  %v1305 = vadd.f32 %v1065, %v1273
  %v1306 = vadd.f32 %v1066, %v1274
  %v1307 = vadd.f32 %v1067, %v1275
  %v1308 = vadd.f32 %v1068, %v1276
  %v1309 = vadd.f32 %v1069, %v1277
  %v1310 = vadd.f32 %v1070, %v1278
  %v1311 = vadd.f32 %v1071, %v1279
  %v1312 = vadd.f32 %v1072, %v1280
  %v1313 = vadd.f32 %v1073, %v1281
  %v1314 = vadd.f32 %v1074, %v1282
  %v1315 = vadd.f32 %v1075, %v1283
  %v1316 = vadd.f32 %v1076, %v1284
  %v1317 = vadd.f32 %v1077, %v1285
  %v1318 = vadd.f32 %v1078, %v1286
  %vm1319 = vcmp.eq.s32.totalorder %v30, 2
  %vm1320 = vcmp.eq.s32.totalorder %v31, 2
  %vm1321 = vcmp.eq.s32.totalorder %v32, 2
  %vm1322 = vcmp.eq.s32.totalorder %v33, 2
  %vm1323 = vcmp.eq.s32.totalorder %v34, 2
  %vm1324 = vcmp.eq.s32.totalorder %v35, 2
  %vm1325 = vcmp.eq.s32.totalorder %v36, 2
  %vm1326 = vcmp.eq.s32.totalorder %v37, 2
  %v1327 = vcombine.high %v789, %v789
  %v1328 = vcombine.high %v804, %v804
  %v1329 = vcombine.high %v819, %v819
  %v1330 = vcombine.high %v834, %v834
  %v1331 = vcombine.high %v849, %v849
  %v1332 = vcombine.high %v864, %v864
  %v1333 = vcombine.high %v879, %v879
  %v1334 = vcombine.high %v894, %v894
  %v1343 = vsel %vm1319, %v1327, 0.0
  %v1344 = vsel %vm1320, %v1328, 0.0
  %v1345 = vsel %vm1321, %v1329, 0.0
  %v1346 = vsel %vm1322, %v1330, 0.0
  %v1347 = vsel %vm1323, %v1331, 0.0
  %v1348 = vsel %vm1324, %v1332, 0.0
  %v1349 = vsel %vm1325, %v1333, 0.0
  %v1350 = vsel %vm1326, %v1334, 0.0
  %v1351 = vadd.f32 %v1167, %v1343
  %v1352 = vadd.f32 %v1168, %v1344
  %v1353 = vadd.f32 %v1169, %v1345
  %v1354 = vadd.f32 %v1170, %v1346
  %v1355 = vadd.f32 %v1171, %v1347
  %v1356 = vadd.f32 %v1172, %v1348
  %v1357 = vadd.f32 %v1173, %v1349
  %v1358 = vadd.f32 %v1174, %v1350
  %v1359 = vrot.slane %v687, 5
  %v1360 = vrot.slane %v688, 5
  %v1361 = vrot.slane %v689, 5
  %v1362 = vrot.slane %v690, 5
  %v1363 = vrot.slane %v691, 5
  %v1364 = vrot.slane %v692, 5
  %v1365 = vrot.slane %v693, 5
  %v1366 = vrot.slane %v694, 5
  %v1367 = vrot.slane %v695, 5
  %v1368 = vrot.slane %v696, 5
  %v1369 = vrot.slane %v697, 5
  %v1370 = vrot.slane %v698, 5
  %v1371 = vrot.slane %v699, 5
  %v1372 = vrot.slane %v700, 5
  %v1373 = vrot.slane %v701, 5
  %v1374 = vrot.slane %v702, 5
  %v1391 = vsub.f32 %v335, %v1359
  %v1392 = vsub.f32 %v336, %v1360
  %v1393 = vsub.f32 %v337, %v1361
  %v1394 = vsub.f32 %v338, %v1362
  %v1395 = vsub.f32 %v339, %v1363
  %v1396 = vsub.f32 %v340, %v1364
  %v1397 = vsub.f32 %v341, %v1365
  %v1398 = vsub.f32 %v342, %v1366
  %v1399 = vsub.f32 %v343, %v1367
  %v1400 = vsub.f32 %v344, %v1368
  %v1401 = vsub.f32 %v345, %v1369
  %v1402 = vsub.f32 %v346, %v1370
  %v1403 = vsub.f32 %v347, %v1371
  %v1404 = vsub.f32 %v348, %v1372
  %v1405 = vsub.f32 %v349, %v1373
  %v1406 = vsub.f32 %v350, %v1374
  %v1407 = vmul.f32 %v1391, 1.442695
  %v1408 = vpow.pop %v1407
  %v1409 = vmul.f32 %v1392, 1.442695
  %v1410 = vpow.pop %v1409
  %v1411 = vmul.f32 %v1393, 1.442695
  %v1412 = vpow.pop %v1411
  %v1413 = vmul.f32 %v1394, 1.442695
  %v1414 = vpow.pop %v1413
  %v1415 = vmul.f32 %v1395, 1.442695
  %v1416 = vpow.pop %v1415
  %v1417 = vmul.f32 %v1396, 1.442695
  %v1418 = vpow.pop %v1417
  %v1419 = vmul.f32 %v1397, 1.442695
  %v1420 = vpow.pop %v1419
  %v1421 = vmul.f32 %v1398, 1.442695
  %v1422 = vpow.pop %v1421
  %v1423 = vmul.f32 %v1399, 1.442695
  %v1424 = vpow.pop %v1423
  %v1425 = vmul.f32 %v1400, 1.442695
  %v1426 = vpow.pop %v1425
  %v1427 = vmul.f32 %v1401, 1.442695
  %v1428 = vpow.pop %v1427
  %v1429 = vmul.f32 %v1402, 1.442695
  %v1430 = vpow.pop %v1429
  %v1431 = vmul.f32 %v1403, 1.442695
  %v1432 = vpow.pop %v1431
  %v1433 = vmul.f32 %v1404, 1.442695
  %v1434 = vpow.pop %v1433
  %v1435 = vmul.f32 %v1405, 1.442695
  %v1436 = vpow.pop %v1435
  %v1437 = vmul.f32 %v1406, 1.442695
  %v1438 = vpow.pop %v1437
  %v1455 = vrot.slane %v1408, 3
  %v1456 = vrot.slane %v1410, 3
  %v1457 = vrot.slane %v1412, 3
  %v1458 = vrot.slane %v1414, 3
  %v1459 = vrot.slane %v1416, 3
  %v1460 = vrot.slane %v1418, 3
  %v1461 = vrot.slane %v1420, 3
  %v1462 = vrot.slane %v1422, 3
  %v1463 = vrot.slane %v1424, 3
  %v1464 = vrot.slane %v1426, 3
  %v1465 = vrot.slane %v1428, 3
  %v1466 = vrot.slane %v1430, 3
  %v1467 = vrot.slane %v1432, 3
  %v1468 = vrot.slane %v1434, 3
  %v1469 = vrot.slane %v1436, 3
  %v1470 = vrot.slane %v1438, 3
  %v1487 = vadd.f32 %v1303, %v1455
  %v1488 = vadd.f32 %v1304, %v1456
  %v1489 = vadd.f32 %v1305, %v1457
  %v1490 = vadd.f32 %v1306, %v1458
  %v1491 = vadd.f32 %v1307, %v1459
  %v1492 = vadd.f32 %v1308, %v1460
  %v1493 = vadd.f32 %v1309, %v1461
  %v1494 = vadd.f32 %v1310, %v1462
  %v1495 = vadd.f32 %v1311, %v1463
  %v1496 = vadd.f32 %v1312, %v1464
  %v1497 = vadd.f32 %v1313, %v1465
  %v1498 = vadd.f32 %v1314, %v1466
  %v1499 = vadd.f32 %v1315, %v1467
  %v1500 = vadd.f32 %v1316, %v1468
  %v1501 = vadd.f32 %v1317, %v1469
  %v1502 = vadd.f32 %v1318, %v1470
  %vm1503 = vcmp.eq.s32.totalorder %v30, 3
  %vm1504 = vcmp.eq.s32.totalorder %v31, 3
  %vm1505 = vcmp.eq.s32.totalorder %v32, 3
  %vm1506 = vcmp.eq.s32.totalorder %v33, 3
  %vm1507 = vcmp.eq.s32.totalorder %v34, 3
  %vm1508 = vcmp.eq.s32.totalorder %v35, 3
  %vm1509 = vcmp.eq.s32.totalorder %v36, 3
  %vm1510 = vcmp.eq.s32.totalorder %v37, 3
  %v1511 = vcombine.high %v1094, %v1094
  %v1512 = vcombine.high %v1102, %v1102
  %v1513 = vcombine.high %v1110, %v1110
  %v1514 = vcombine.high %v1118, %v1118
  %v1515 = vcombine.high %v1126, %v1126
  %v1516 = vcombine.high %v1134, %v1134
  %v1517 = vcombine.high %v1142, %v1142
  %v1518 = vcombine.high %v1150, %v1150
  %v1527 = vsel %vm1503, %v1511, 0.0
  %v1528 = vsel %vm1504, %v1512, 0.0
  %v1529 = vsel %vm1505, %v1513, 0.0
  %v1530 = vsel %vm1506, %v1514, 0.0
  %v1531 = vsel %vm1507, %v1515, 0.0
  %v1532 = vsel %vm1508, %v1516, 0.0
  %v1533 = vsel %vm1509, %v1517, 0.0
  %v1534 = vsel %vm1510, %v1518, 0.0
  %v1535 = vadd.f32 %v1351, %v1527
  %v1536 = vadd.f32 %v1352, %v1528
  %v1537 = vadd.f32 %v1353, %v1529
  %v1538 = vadd.f32 %v1354, %v1530
  %v1539 = vadd.f32 %v1355, %v1531
  %v1540 = vadd.f32 %v1356, %v1532
  %v1541 = vadd.f32 %v1357, %v1533
  %v1542 = vadd.f32 %v1358, %v1534
  %v1543 = vrot.slane %v687, 4
  %v1544 = vrot.slane %v688, 4
  %v1545 = vrot.slane %v689, 4
  %v1546 = vrot.slane %v690, 4
  %v1547 = vrot.slane %v691, 4
  %v1548 = vrot.slane %v692, 4
  %v1549 = vrot.slane %v693, 4
  %v1550 = vrot.slane %v694, 4
  %v1551 = vrot.slane %v695, 4
  %v1552 = vrot.slane %v696, 4
  %v1553 = vrot.slane %v697, 4
  %v1554 = vrot.slane %v698, 4
  %v1555 = vrot.slane %v699, 4
  %v1556 = vrot.slane %v700, 4
  %v1557 = vrot.slane %v701, 4
  %v1558 = vrot.slane %v702, 4
  %v1575 = vsub.f32 %v335, %v1543
  %v1576 = vsub.f32 %v336, %v1544
  %v1577 = vsub.f32 %v337, %v1545
  %v1578 = vsub.f32 %v338, %v1546
  %v1579 = vsub.f32 %v339, %v1547
  %v1580 = vsub.f32 %v340, %v1548
  %v1581 = vsub.f32 %v341, %v1549
  %v1582 = vsub.f32 %v342, %v1550
  %v1583 = vsub.f32 %v343, %v1551
  %v1584 = vsub.f32 %v344, %v1552
  %v1585 = vsub.f32 %v345, %v1553
  %v1586 = vsub.f32 %v346, %v1554
  %v1587 = vsub.f32 %v347, %v1555
  %v1588 = vsub.f32 %v348, %v1556
  %v1589 = vsub.f32 %v349, %v1557
  %v1590 = vsub.f32 %v350, %v1558
  %v1591 = vmul.f32 %v1575, 1.442695
  %v1592 = vpow.pop %v1591
  %v1593 = vmul.f32 %v1576, 1.442695
  %v1594 = vpow.pop %v1593
  %v1595 = vmul.f32 %v1577, 1.442695
  %v1596 = vpow.pop %v1595
  %v1597 = vmul.f32 %v1578, 1.442695
  %v1598 = vpow.pop %v1597
  %v1599 = vmul.f32 %v1579, 1.442695
  %v1600 = vpow.pop %v1599
  %v1601 = vmul.f32 %v1580, 1.442695
  %v1602 = vpow.pop %v1601
  %v1603 = vmul.f32 %v1581, 1.442695
  %v1604 = vpow.pop %v1603
  %v1605 = vmul.f32 %v1582, 1.442695
  %v1606 = vpow.pop %v1605
  %v1607 = vmul.f32 %v1583, 1.442695
  %v1608 = vpow.pop %v1607
  %v1609 = vmul.f32 %v1584, 1.442695
  %v1610 = vpow.pop %v1609
  %v1611 = vmul.f32 %v1585, 1.442695
  %v1612 = vpow.pop %v1611
  %v1613 = vmul.f32 %v1586, 1.442695
  %v1614 = vpow.pop %v1613
  %v1615 = vmul.f32 %v1587, 1.442695
  %v1616 = vpow.pop %v1615
  %v1617 = vmul.f32 %v1588, 1.442695
  %v1618 = vpow.pop %v1617
  %v1619 = vmul.f32 %v1589, 1.442695
  %v1620 = vpow.pop %v1619
  %v1621 = vmul.f32 %v1590, 1.442695
  %v1622 = vpow.pop %v1621
  %v1639 = vrot.slane %v1592, 4
  %v1640 = vrot.slane %v1594, 4
  %v1641 = vrot.slane %v1596, 4
  %v1642 = vrot.slane %v1598, 4
  %v1643 = vrot.slane %v1600, 4
  %v1644 = vrot.slane %v1602, 4
  %v1645 = vrot.slane %v1604, 4
  %v1646 = vrot.slane %v1606, 4
  %v1647 = vrot.slane %v1608, 4
  %v1648 = vrot.slane %v1610, 4
  %v1649 = vrot.slane %v1612, 4
  %v1650 = vrot.slane %v1614, 4
  %v1651 = vrot.slane %v1616, 4
  %v1652 = vrot.slane %v1618, 4
  %v1653 = vrot.slane %v1620, 4
  %v1654 = vrot.slane %v1622, 4
  %v1671 = vadd.f32 %v1487, %v1639
  %v1672 = vadd.f32 %v1488, %v1640
  %v1673 = vadd.f32 %v1489, %v1641
  %v1674 = vadd.f32 %v1490, %v1642
  %v1675 = vadd.f32 %v1491, %v1643
  %v1676 = vadd.f32 %v1492, %v1644
  %v1677 = vadd.f32 %v1493, %v1645
  %v1678 = vadd.f32 %v1494, %v1646
  %v1679 = vadd.f32 %v1495, %v1647
  %v1680 = vadd.f32 %v1496, %v1648
  %v1681 = vadd.f32 %v1497, %v1649
  %v1682 = vadd.f32 %v1498, %v1650
  %v1683 = vadd.f32 %v1499, %v1651
  %v1684 = vadd.f32 %v1500, %v1652
  %v1685 = vadd.f32 %v1501, %v1653
  %v1686 = vadd.f32 %v1502, %v1654
  %vm1687 = vcmp.eq.s32.totalorder %v30, 4
  %vm1688 = vcmp.eq.s32.totalorder %v31, 4
  %vm1689 = vcmp.eq.s32.totalorder %v32, 4
  %vm1690 = vcmp.eq.s32.totalorder %v33, 4
  %vm1691 = vcmp.eq.s32.totalorder %v34, 4
  %vm1692 = vcmp.eq.s32.totalorder %v35, 4
  %vm1693 = vcmp.eq.s32.totalorder %v36, 4
  %vm1694 = vcmp.eq.s32.totalorder %v37, 4
  %v1695 = vcombine.high %v335, %v336
  %v1697 = vunpack.c.l.s4 1966171168
  %v1698 = vunpack.c.0.s8 %v1697
  %v1699 = vlaneseq
  %v1700 = vshrl.u32 %v1699, 7
  %v1701 = vsub.s32 %v1698, %v1700
  %v1702 = vrot.slane %v1695, %v1701
  %v1704 = vunpack.c.l.s4 1966171168
  %v1705 = vunpack.c.0.s8 %v1704
  %v1706 = vlaneseq
  %v1707 = vshrl.u32 %v1706, 7
  %v1708 = vsub.s32 %v1705, %v1707
  %v1709 = vrot.slane %v1702, %v1708
  %v1710 = vcombine.high %v337, %v338
  %v1712 = vunpack.c.l.s4 1966171168
  %v1713 = vunpack.c.0.s8 %v1712
  %v1714 = vlaneseq
  %v1715 = vshrl.u32 %v1714, 7
  %v1716 = vsub.s32 %v1713, %v1715
  %v1717 = vrot.slane %v1710, %v1716
  %v1719 = vunpack.c.l.s4 1966171168
  %v1720 = vunpack.c.0.s8 %v1719
  %v1721 = vlaneseq
  %v1722 = vshrl.u32 %v1721, 7
  %v1723 = vsub.s32 %v1720, %v1722
  %v1724 = vrot.slane %v1717, %v1723
  %v1725 = vcombine.high %v339, %v340
  %v1727 = vunpack.c.l.s4 1966171168
  %v1728 = vunpack.c.0.s8 %v1727
  %v1729 = vlaneseq
  %v1730 = vshrl.u32 %v1729, 7
  %v1731 = vsub.s32 %v1728, %v1730
  %v1732 = vrot.slane %v1725, %v1731
  %v1734 = vunpack.c.l.s4 1966171168
  %v1735 = vunpack.c.0.s8 %v1734
  %v1736 = vlaneseq
  %v1737 = vshrl.u32 %v1736, 7
  %v1738 = vsub.s32 %v1735, %v1737
  %v1739 = vrot.slane %v1732, %v1738
  %v1740 = vcombine.high %v341, %v342
  %v1742 = vunpack.c.l.s4 1966171168
  %v1743 = vunpack.c.0.s8 %v1742
  %v1744 = vlaneseq
  %v1745 = vshrl.u32 %v1744, 7
  %v1746 = vsub.s32 %v1743, %v1745
  %v1747 = vrot.slane %v1740, %v1746
  %v1749 = vunpack.c.l.s4 1966171168
  %v1750 = vunpack.c.0.s8 %v1749
  %v1751 = vlaneseq
  %v1752 = vshrl.u32 %v1751, 7
  %v1753 = vsub.s32 %v1750, %v1752
  %v1754 = vrot.slane %v1747, %v1753
  %v1755 = vcombine.high %v343, %v344
  %v1757 = vunpack.c.l.s4 1966171168
  %v1758 = vunpack.c.0.s8 %v1757
  %v1759 = vlaneseq
  %v1760 = vshrl.u32 %v1759, 7
  %v1761 = vsub.s32 %v1758, %v1760
  %v1762 = vrot.slane %v1755, %v1761
  %v1764 = vunpack.c.l.s4 1966171168
  %v1765 = vunpack.c.0.s8 %v1764
  %v1766 = vlaneseq
  %v1767 = vshrl.u32 %v1766, 7
  %v1768 = vsub.s32 %v1765, %v1767
  %v1769 = vrot.slane %v1762, %v1768
  %v1770 = vcombine.high %v345, %v346
  %v1772 = vunpack.c.l.s4 1966171168
  %v1773 = vunpack.c.0.s8 %v1772
  %v1774 = vlaneseq
  %v1775 = vshrl.u32 %v1774, 7
  %v1776 = vsub.s32 %v1773, %v1775
  %v1777 = vrot.slane %v1770, %v1776
  %v1779 = vunpack.c.l.s4 1966171168
  %v1780 = vunpack.c.0.s8 %v1779
  %v1781 = vlaneseq
  %v1782 = vshrl.u32 %v1781, 7
  %v1783 = vsub.s32 %v1780, %v1782
  %v1784 = vrot.slane %v1777, %v1783
  %v1785 = vcombine.high %v347, %v348
  %v1787 = vunpack.c.l.s4 1966171168
  %v1788 = vunpack.c.0.s8 %v1787
  %v1789 = vlaneseq
  %v1790 = vshrl.u32 %v1789, 7
  %v1791 = vsub.s32 %v1788, %v1790
  %v1792 = vrot.slane %v1785, %v1791
  %v1794 = vunpack.c.l.s4 1966171168
  %v1795 = vunpack.c.0.s8 %v1794
  %v1796 = vlaneseq
  %v1797 = vshrl.u32 %v1796, 7
  %v1798 = vsub.s32 %v1795, %v1797
  %v1799 = vrot.slane %v1792, %v1798
  %v1800 = vcombine.high %v349, %v350
  %v1802 = vunpack.c.l.s4 1966171168
  %v1803 = vunpack.c.0.s8 %v1802
  %v1804 = vlaneseq
  %v1805 = vshrl.u32 %v1804, 7
  %v1806 = vsub.s32 %v1803, %v1805
  %v1807 = vrot.slane %v1800, %v1806
  %v1809 = vunpack.c.l.s4 1966171168
  %v1810 = vunpack.c.0.s8 %v1809
  %v1811 = vlaneseq
  %v1812 = vshrl.u32 %v1811, 7
  %v1813 = vsub.s32 %v1810, %v1812
  %v1814 = vrot.slane %v1807, %v1813
  %v1823 = vsel %vm1687, %v1709, 0.0
  %v1824 = vsel %vm1688, %v1724, 0.0
  %v1825 = vsel %vm1689, %v1739, 0.0
  %v1826 = vsel %vm1690, %v1754, 0.0
  %v1827 = vsel %vm1691, %v1769, 0.0
  %v1828 = vsel %vm1692, %v1784, 0.0
  %v1829 = vsel %vm1693, %v1799, 0.0
  %v1830 = vsel %vm1694, %v1814, 0.0
  %v1831 = vadd.f32 %v1535, %v1823
  %v1832 = vadd.f32 %v1536, %v1824
  %v1833 = vadd.f32 %v1537, %v1825
  %v1834 = vadd.f32 %v1538, %v1826
  %v1835 = vadd.f32 %v1539, %v1827
  %v1836 = vadd.f32 %v1540, %v1828
  %v1837 = vadd.f32 %v1541, %v1829
  %v1838 = vadd.f32 %v1542, %v1830
  %v1839 = vrot.slane %v687, 3
  %v1840 = vrot.slane %v688, 3
  %v1841 = vrot.slane %v689, 3
  %v1842 = vrot.slane %v690, 3
  %v1843 = vrot.slane %v691, 3
  %v1844 = vrot.slane %v692, 3
  %v1845 = vrot.slane %v693, 3
  %v1846 = vrot.slane %v694, 3
  %v1847 = vrot.slane %v695, 3
  %v1848 = vrot.slane %v696, 3
  %v1849 = vrot.slane %v697, 3
  %v1850 = vrot.slane %v698, 3
  %v1851 = vrot.slane %v699, 3
  %v1852 = vrot.slane %v700, 3
  %v1853 = vrot.slane %v701, 3
  %v1854 = vrot.slane %v702, 3
  %v1871 = vsub.f32 %v335, %v1839
  %v1872 = vsub.f32 %v336, %v1840
  %v1873 = vsub.f32 %v337, %v1841
  %v1874 = vsub.f32 %v338, %v1842
  %v1875 = vsub.f32 %v339, %v1843
  %v1876 = vsub.f32 %v340, %v1844
  %v1877 = vsub.f32 %v341, %v1845
  %v1878 = vsub.f32 %v342, %v1846
  %v1879 = vsub.f32 %v343, %v1847
  %v1880 = vsub.f32 %v344, %v1848
  %v1881 = vsub.f32 %v345, %v1849
  %v1882 = vsub.f32 %v346, %v1850
  %v1883 = vsub.f32 %v347, %v1851
  %v1884 = vsub.f32 %v348, %v1852
  %v1885 = vsub.f32 %v349, %v1853
  %v1886 = vsub.f32 %v350, %v1854
  %v1887 = vmul.f32 %v1871, 1.442695
  %v1888 = vpow.pop %v1887
  %v1889 = vmul.f32 %v1872, 1.442695
  %v1890 = vpow.pop %v1889
  %v1891 = vmul.f32 %v1873, 1.442695
  %v1892 = vpow.pop %v1891
  %v1893 = vmul.f32 %v1874, 1.442695
  %v1894 = vpow.pop %v1893
  %v1895 = vmul.f32 %v1875, 1.442695
  %v1896 = vpow.pop %v1895
  %v1897 = vmul.f32 %v1876, 1.442695
  %v1898 = vpow.pop %v1897
  %v1899 = vmul.f32 %v1877, 1.442695
  %v1900 = vpow.pop %v1899
  %v1901 = vmul.f32 %v1878, 1.442695
  %v1902 = vpow.pop %v1901
  %v1903 = vmul.f32 %v1879, 1.442695
  %v1904 = vpow.pop %v1903
  %v1905 = vmul.f32 %v1880, 1.442695
  %v1906 = vpow.pop %v1905
  %v1907 = vmul.f32 %v1881, 1.442695
  %v1908 = vpow.pop %v1907
  %v1909 = vmul.f32 %v1882, 1.442695
  %v1910 = vpow.pop %v1909
  %v1911 = vmul.f32 %v1883, 1.442695
  %v1912 = vpow.pop %v1911
  %v1913 = vmul.f32 %v1884, 1.442695
  %v1914 = vpow.pop %v1913
  %v1915 = vmul.f32 %v1885, 1.442695
  %v1916 = vpow.pop %v1915
  %v1917 = vmul.f32 %v1886, 1.442695
  %v1918 = vpow.pop %v1917
  %v1935 = vrot.slane %v1888, 5
  %v1936 = vrot.slane %v1890, 5
  %v1937 = vrot.slane %v1892, 5
  %v1938 = vrot.slane %v1894, 5
  %v1939 = vrot.slane %v1896, 5
  %v1940 = vrot.slane %v1898, 5
  %v1941 = vrot.slane %v1900, 5
  %v1942 = vrot.slane %v1902, 5
  %v1943 = vrot.slane %v1904, 5
  %v1944 = vrot.slane %v1906, 5
  %v1945 = vrot.slane %v1908, 5
  %v1946 = vrot.slane %v1910, 5
  %v1947 = vrot.slane %v1912, 5
  %v1948 = vrot.slane %v1914, 5
  %v1949 = vrot.slane %v1916, 5
  %v1950 = vrot.slane %v1918, 5
  %v1967 = vadd.f32 %v1671, %v1935
  %v1968 = vadd.f32 %v1672, %v1936
  %v1969 = vadd.f32 %v1673, %v1937
  %v1970 = vadd.f32 %v1674, %v1938
  %v1971 = vadd.f32 %v1675, %v1939
  %v1972 = vadd.f32 %v1676, %v1940
  %v1973 = vadd.f32 %v1677, %v1941
  %v1974 = vadd.f32 %v1678, %v1942
  %v1975 = vadd.f32 %v1679, %v1943
  %v1976 = vadd.f32 %v1680, %v1944
  %v1977 = vadd.f32 %v1681, %v1945
  %v1978 = vadd.f32 %v1682, %v1946
  %v1979 = vadd.f32 %v1683, %v1947
  %v1980 = vadd.f32 %v1684, %v1948
  %v1981 = vadd.f32 %v1685, %v1949
  %v1982 = vadd.f32 %v1686, %v1950
  %vm1983 = vcmp.eq.s32.totalorder %v30, 5
  %vm1984 = vcmp.eq.s32.totalorder %v31, 5
  %vm1985 = vcmp.eq.s32.totalorder %v32, 5
  %vm1986 = vcmp.eq.s32.totalorder %v33, 5
  %vm1987 = vcmp.eq.s32.totalorder %v34, 5
  %vm1988 = vcmp.eq.s32.totalorder %v35, 5
  %vm1989 = vcmp.eq.s32.totalorder %v36, 5
  %vm1990 = vcmp.eq.s32.totalorder %v37, 5
  %v1991 = vcombine.high %v1702, %v1702
  %v1993 = vunpack.c.l.s4 1966171168
  %v1994 = vunpack.c.0.s8 %v1993
  %v1995 = vlaneseq
  %v1996 = vshrl.u32 %v1995, 7
  %v1997 = vsub.s32 %v1994, %v1996
  %v1998 = vrot.slane %v1991, %v1997
  %v1999 = vcombine.high %v1717, %v1717
  %v2001 = vunpack.c.l.s4 1966171168
  %v2002 = vunpack.c.0.s8 %v2001
  %v2003 = vlaneseq
  %v2004 = vshrl.u32 %v2003, 7
  %v2005 = vsub.s32 %v2002, %v2004
  %v2006 = vrot.slane %v1999, %v2005
  %v2007 = vcombine.high %v1732, %v1732
  %v2009 = vunpack.c.l.s4 1966171168
  %v2010 = vunpack.c.0.s8 %v2009
  %v2011 = vlaneseq
  %v2012 = vshrl.u32 %v2011, 7
  %v2013 = vsub.s32 %v2010, %v2012
  %v2014 = vrot.slane %v2007, %v2013
  %v2015 = vcombine.high %v1747, %v1747
  %v2017 = vunpack.c.l.s4 1966171168
  %v2018 = vunpack.c.0.s8 %v2017
  %v2019 = vlaneseq
  %v2020 = vshrl.u32 %v2019, 7
  %v2021 = vsub.s32 %v2018, %v2020
  %v2022 = vrot.slane %v2015, %v2021
  %v2023 = vcombine.high %v1762, %v1762
  %v2025 = vunpack.c.l.s4 1966171168
  %v2026 = vunpack.c.0.s8 %v2025
  %v2027 = vlaneseq
  %v2028 = vshrl.u32 %v2027, 7
  %v2029 = vsub.s32 %v2026, %v2028
  %v2030 = vrot.slane %v2023, %v2029
  %v2031 = vcombine.high %v1777, %v1777
  %v2033 = vunpack.c.l.s4 1966171168
  %v2034 = vunpack.c.0.s8 %v2033
  %v2035 = vlaneseq
  %v2036 = vshrl.u32 %v2035, 7
  %v2037 = vsub.s32 %v2034, %v2036
  %v2038 = vrot.slane %v2031, %v2037
  %v2039 = vcombine.high %v1792, %v1792
  %v2041 = vunpack.c.l.s4 1966171168
  %v2042 = vunpack.c.0.s8 %v2041
  %v2043 = vlaneseq
  %v2044 = vshrl.u32 %v2043, 7
  %v2045 = vsub.s32 %v2042, %v2044
  %v2046 = vrot.slane %v2039, %v2045
  %v2047 = vcombine.high %v1807, %v1807
  %v2049 = vunpack.c.l.s4 1966171168
  %v2050 = vunpack.c.0.s8 %v2049
  %v2051 = vlaneseq
  %v2052 = vshrl.u32 %v2051, 7
  %v2053 = vsub.s32 %v2050, %v2052
  %v2054 = vrot.slane %v2047, %v2053
  %v2063 = vsel %vm1983, %v1998, 0.0
  %v2064 = vsel %vm1984, %v2006, 0.0
  %v2065 = vsel %vm1985, %v2014, 0.0
  %v2066 = vsel %vm1986, %v2022, 0.0
  %v2067 = vsel %vm1987, %v2030, 0.0
  %v2068 = vsel %vm1988, %v2038, 0.0
  %v2069 = vsel %vm1989, %v2046, 0.0
  %v2070 = vsel %vm1990, %v2054, 0.0
  %v2071 = vadd.f32 %v1831, %v2063
  %v2072 = vadd.f32 %v1832, %v2064
  %v2073 = vadd.f32 %v1833, %v2065
  %v2074 = vadd.f32 %v1834, %v2066
  %v2075 = vadd.f32 %v1835, %v2067
  %v2076 = vadd.f32 %v1836, %v2068
  %v2077 = vadd.f32 %v1837, %v2069
  %v2078 = vadd.f32 %v1838, %v2070
  %v2079 = vrot.slane %v687, 2
  %v2080 = vrot.slane %v688, 2
  %v2081 = vrot.slane %v689, 2
  %v2082 = vrot.slane %v690, 2
  %v2083 = vrot.slane %v691, 2
  %v2084 = vrot.slane %v692, 2
  %v2085 = vrot.slane %v693, 2
  %v2086 = vrot.slane %v694, 2
  %v2087 = vrot.slane %v695, 2
  %v2088 = vrot.slane %v696, 2
  %v2089 = vrot.slane %v697, 2
  %v2090 = vrot.slane %v698, 2
  %v2091 = vrot.slane %v699, 2
  %v2092 = vrot.slane %v700, 2
  %v2093 = vrot.slane %v701, 2
  %v2094 = vrot.slane %v702, 2
  %v2111 = vsub.f32 %v335, %v2079
  %v2112 = vsub.f32 %v336, %v2080
  %v2113 = vsub.f32 %v337, %v2081
  %v2114 = vsub.f32 %v338, %v2082
  %v2115 = vsub.f32 %v339, %v2083
  %v2116 = vsub.f32 %v340, %v2084
  %v2117 = vsub.f32 %v341, %v2085
  %v2118 = vsub.f32 %v342, %v2086
  %v2119 = vsub.f32 %v343, %v2087
  %v2120 = vsub.f32 %v344, %v2088
  %v2121 = vsub.f32 %v345, %v2089
  %v2122 = vsub.f32 %v346, %v2090
  %v2123 = vsub.f32 %v347, %v2091
  %v2124 = vsub.f32 %v348, %v2092
  %v2125 = vsub.f32 %v349, %v2093
  %v2126 = vsub.f32 %v350, %v2094
  %v2127 = vmul.f32 %v2111, 1.442695
  %v2128 = vpow.pop %v2127
  %v2129 = vmul.f32 %v2112, 1.442695
  %v2130 = vpow.pop %v2129
  %v2131 = vmul.f32 %v2113, 1.442695
  %v2132 = vpow.pop %v2131
  %v2133 = vmul.f32 %v2114, 1.442695
  %v2134 = vpow.pop %v2133
  %v2135 = vmul.f32 %v2115, 1.442695
  %v2136 = vpow.pop %v2135
  %v2137 = vmul.f32 %v2116, 1.442695
  %v2138 = vpow.pop %v2137
  %v2139 = vmul.f32 %v2117, 1.442695
  %v2140 = vpow.pop %v2139
  %v2141 = vmul.f32 %v2118, 1.442695
  %v2142 = vpow.pop %v2141
  %v2143 = vmul.f32 %v2119, 1.442695
  %v2144 = vpow.pop %v2143
  %v2145 = vmul.f32 %v2120, 1.442695
  %v2146 = vpow.pop %v2145
  %v2147 = vmul.f32 %v2121, 1.442695
  %v2148 = vpow.pop %v2147
  %v2149 = vmul.f32 %v2122, 1.442695
  %v2150 = vpow.pop %v2149
  %v2151 = vmul.f32 %v2123, 1.442695
  %v2152 = vpow.pop %v2151
  %v2153 = vmul.f32 %v2124, 1.442695
  %v2154 = vpow.pop %v2153
  %v2155 = vmul.f32 %v2125, 1.442695
  %v2156 = vpow.pop %v2155
  %v2157 = vmul.f32 %v2126, 1.442695
  %v2158 = vpow.pop %v2157
  %v2175 = vrot.slane %v2128, 6
  %v2176 = vrot.slane %v2130, 6
  %v2177 = vrot.slane %v2132, 6
  %v2178 = vrot.slane %v2134, 6
  %v2179 = vrot.slane %v2136, 6
  %v2180 = vrot.slane %v2138, 6
  %v2181 = vrot.slane %v2140, 6
  %v2182 = vrot.slane %v2142, 6
  %v2183 = vrot.slane %v2144, 6
  %v2184 = vrot.slane %v2146, 6
  %v2185 = vrot.slane %v2148, 6
  %v2186 = vrot.slane %v2150, 6
  %v2187 = vrot.slane %v2152, 6
  %v2188 = vrot.slane %v2154, 6
  %v2189 = vrot.slane %v2156, 6
  %v2190 = vrot.slane %v2158, 6
  %v2207 = vadd.f32 %v1967, %v2175
  %v2208 = vadd.f32 %v1968, %v2176
  %v2209 = vadd.f32 %v1969, %v2177
  %v2210 = vadd.f32 %v1970, %v2178
  %v2211 = vadd.f32 %v1971, %v2179
  %v2212 = vadd.f32 %v1972, %v2180
  %v2213 = vadd.f32 %v1973, %v2181
  %v2214 = vadd.f32 %v1974, %v2182
  %v2215 = vadd.f32 %v1975, %v2183
  %v2216 = vadd.f32 %v1976, %v2184
  %v2217 = vadd.f32 %v1977, %v2185
  %v2218 = vadd.f32 %v1978, %v2186
  %v2219 = vadd.f32 %v1979, %v2187
  %v2220 = vadd.f32 %v1980, %v2188
  %v2221 = vadd.f32 %v1981, %v2189
  %v2222 = vadd.f32 %v1982, %v2190
  %vm2223 = vcmp.eq.s32.totalorder %v30, 6
  %vm2224 = vcmp.eq.s32.totalorder %v31, 6
  %vm2225 = vcmp.eq.s32.totalorder %v32, 6
  %vm2226 = vcmp.eq.s32.totalorder %v33, 6
  %vm2227 = vcmp.eq.s32.totalorder %v34, 6
  %vm2228 = vcmp.eq.s32.totalorder %v35, 6
  %vm2229 = vcmp.eq.s32.totalorder %v36, 6
  %vm2230 = vcmp.eq.s32.totalorder %v37, 6
  %v2231 = vcombine.high %v1709, %v1709
  %v2232 = vcombine.high %v1724, %v1724
  %v2233 = vcombine.high %v1739, %v1739
  %v2234 = vcombine.high %v1754, %v1754
  %v2235 = vcombine.high %v1769, %v1769
  %v2236 = vcombine.high %v1784, %v1784
  %v2237 = vcombine.high %v1799, %v1799
  %v2238 = vcombine.high %v1814, %v1814
  %v2247 = vsel %vm2223, %v2231, 0.0
  %v2248 = vsel %vm2224, %v2232, 0.0
  %v2249 = vsel %vm2225, %v2233, 0.0
  %v2250 = vsel %vm2226, %v2234, 0.0
  %v2251 = vsel %vm2227, %v2235, 0.0
  %v2252 = vsel %vm2228, %v2236, 0.0
  %v2253 = vsel %vm2229, %v2237, 0.0
  %v2254 = vsel %vm2230, %v2238, 0.0
  %v2255 = vadd.f32 %v2071, %v2247
  %v2256 = vadd.f32 %v2072, %v2248
  %v2257 = vadd.f32 %v2073, %v2249
  %v2258 = vadd.f32 %v2074, %v2250
  %v2259 = vadd.f32 %v2075, %v2251
  %v2260 = vadd.f32 %v2076, %v2252
  %v2261 = vadd.f32 %v2077, %v2253
  %v2262 = vadd.f32 %v2078, %v2254
  %v2263 = vrot.slane %v687, 1
  %v2264 = vrot.slane %v688, 1
  %v2265 = vrot.slane %v689, 1
  %v2266 = vrot.slane %v690, 1
  %v2267 = vrot.slane %v691, 1
  %v2268 = vrot.slane %v692, 1
  %v2269 = vrot.slane %v693, 1
  %v2270 = vrot.slane %v694, 1
  %v2271 = vrot.slane %v695, 1
  %v2272 = vrot.slane %v696, 1
  %v2273 = vrot.slane %v697, 1
  %v2274 = vrot.slane %v698, 1
  %v2275 = vrot.slane %v699, 1
  %v2276 = vrot.slane %v700, 1
  %v2277 = vrot.slane %v701, 1
  %v2278 = vrot.slane %v702, 1
  %v2295 = vsub.f32 %v335, %v2263
  %v2296 = vsub.f32 %v336, %v2264
  %v2297 = vsub.f32 %v337, %v2265
  %v2298 = vsub.f32 %v338, %v2266
  %v2299 = vsub.f32 %v339, %v2267
  %v2300 = vsub.f32 %v340, %v2268
  %v2301 = vsub.f32 %v341, %v2269
  %v2302 = vsub.f32 %v342, %v2270
  %v2303 = vsub.f32 %v343, %v2271
  %v2304 = vsub.f32 %v344, %v2272
  %v2305 = vsub.f32 %v345, %v2273
  %v2306 = vsub.f32 %v346, %v2274
  %v2307 = vsub.f32 %v347, %v2275
  %v2308 = vsub.f32 %v348, %v2276
  %v2309 = vsub.f32 %v349, %v2277
  %v2310 = vsub.f32 %v350, %v2278
  %v2311 = vmul.f32 %v2295, 1.442695
  %v2312 = vpow.pop %v2311
  %v2313 = vmul.f32 %v2296, 1.442695
  %v2314 = vpow.pop %v2313
  %v2315 = vmul.f32 %v2297, 1.442695
  %v2316 = vpow.pop %v2315
  %v2317 = vmul.f32 %v2298, 1.442695
  %v2318 = vpow.pop %v2317
  %v2319 = vmul.f32 %v2299, 1.442695
  %v2320 = vpow.pop %v2319
  %v2321 = vmul.f32 %v2300, 1.442695
  %v2322 = vpow.pop %v2321
  %v2323 = vmul.f32 %v2301, 1.442695
  %v2324 = vpow.pop %v2323
  %v2325 = vmul.f32 %v2302, 1.442695
  %v2326 = vpow.pop %v2325
  %v2327 = vmul.f32 %v2303, 1.442695
  %v2328 = vpow.pop %v2327
  %v2329 = vmul.f32 %v2304, 1.442695
  %v2330 = vpow.pop %v2329
  %v2331 = vmul.f32 %v2305, 1.442695
  %v2332 = vpow.pop %v2331
  %v2333 = vmul.f32 %v2306, 1.442695
  %v2334 = vpow.pop %v2333
  %v2335 = vmul.f32 %v2307, 1.442695
  %v2336 = vpow.pop %v2335
  %v2337 = vmul.f32 %v2308, 1.442695
  %v2338 = vpow.pop %v2337
  %v2339 = vmul.f32 %v2309, 1.442695
  %v2340 = vpow.pop %v2339
  %v2341 = vmul.f32 %v2310, 1.442695
  %v2342 = vpow.pop %v2341
  %v2359 = vrot.slane %v2312, 7
  %v2360 = vrot.slane %v2314, 7
  %v2361 = vrot.slane %v2316, 7
  %v2362 = vrot.slane %v2318, 7
  %v2363 = vrot.slane %v2320, 7
  %v2364 = vrot.slane %v2322, 7
  %v2365 = vrot.slane %v2324, 7
  %v2366 = vrot.slane %v2326, 7
  %v2367 = vrot.slane %v2328, 7
  %v2368 = vrot.slane %v2330, 7
  %v2369 = vrot.slane %v2332, 7
  %v2370 = vrot.slane %v2334, 7
  %v2371 = vrot.slane %v2336, 7
  %v2372 = vrot.slane %v2338, 7
  %v2373 = vrot.slane %v2340, 7
  %v2374 = vrot.slane %v2342, 7
  %v2391 = vadd.f32 %v2207, %v2359
  %v2392 = vadd.f32 %v2208, %v2360
  %v2393 = vadd.f32 %v2209, %v2361
  %v2394 = vadd.f32 %v2210, %v2362
  %v2395 = vadd.f32 %v2211, %v2363
  %v2396 = vadd.f32 %v2212, %v2364
  %v2397 = vadd.f32 %v2213, %v2365
  %v2398 = vadd.f32 %v2214, %v2366
  %v2399 = vadd.f32 %v2215, %v2367
  %v2400 = vadd.f32 %v2216, %v2368
  %v2401 = vadd.f32 %v2217, %v2369
  %v2402 = vadd.f32 %v2218, %v2370
  %v2403 = vadd.f32 %v2219, %v2371
  %v2404 = vadd.f32 %v2220, %v2372
  %v2405 = vadd.f32 %v2221, %v2373
  %v2406 = vadd.f32 %v2222, %v2374
  %vm2407 = vcmp.eq.s32.totalorder %v30, 7
  %vm2408 = vcmp.eq.s32.totalorder %v31, 7
  %vm2409 = vcmp.eq.s32.totalorder %v32, 7
  %vm2410 = vcmp.eq.s32.totalorder %v33, 7
  %vm2411 = vcmp.eq.s32.totalorder %v34, 7
  %vm2412 = vcmp.eq.s32.totalorder %v35, 7
  %vm2413 = vcmp.eq.s32.totalorder %v36, 7
  %vm2414 = vcmp.eq.s32.totalorder %v37, 7
  %v2415 = vcombine.high %v1998, %v1998
  %v2416 = vcombine.high %v2006, %v2006
  %v2417 = vcombine.high %v2014, %v2014
  %v2418 = vcombine.high %v2022, %v2022
  %v2419 = vcombine.high %v2030, %v2030
  %v2420 = vcombine.high %v2038, %v2038
  %v2421 = vcombine.high %v2046, %v2046
  %v2422 = vcombine.high %v2054, %v2054
  %v2431 = vsel %vm2407, %v2415, 0.0
  %v2432 = vsel %vm2408, %v2416, 0.0
  %v2433 = vsel %vm2409, %v2417, 0.0
  %v2434 = vsel %vm2410, %v2418, 0.0
  %v2435 = vsel %vm2411, %v2419, 0.0
  %v2436 = vsel %vm2412, %v2420, 0.0
  %v2437 = vsel %vm2413, %v2421, 0.0
  %v2438 = vsel %vm2414, %v2422, 0.0
  %v2439 = vadd.f32 %v2255, %v2431
  %v2440 = vadd.f32 %v2256, %v2432
  %v2441 = vadd.f32 %v2257, %v2433
  %v2442 = vadd.f32 %v2258, %v2434
  %v2443 = vadd.f32 %v2259, %v2435
  %v2444 = vadd.f32 %v2260, %v2436
  %v2445 = vadd.f32 %v2261, %v2437
  %v2446 = vadd.f32 %v2262, %v2438
  %v2447 = vlog2.pop %v2391
  %v2448 = vmul.f32 %v2447, 0.6931472
  %v2449 = vlog2.pop %v2392
  %v2450 = vmul.f32 %v2449, 0.6931472
  %v2451 = vlog2.pop %v2393
  %v2452 = vmul.f32 %v2451, 0.6931472
  %v2453 = vlog2.pop %v2394
  %v2454 = vmul.f32 %v2453, 0.6931472
  %v2455 = vlog2.pop %v2395
  %v2456 = vmul.f32 %v2455, 0.6931472
  %v2457 = vlog2.pop %v2396
  %v2458 = vmul.f32 %v2457, 0.6931472
  %v2459 = vlog2.pop %v2397
  %v2460 = vmul.f32 %v2459, 0.6931472
  %v2461 = vlog2.pop %v2398
  %v2462 = vmul.f32 %v2461, 0.6931472
  %v2463 = vlog2.pop %v2399
  %v2464 = vmul.f32 %v2463, 0.6931472
  %v2465 = vlog2.pop %v2400
  %v2466 = vmul.f32 %v2465, 0.6931472
  %v2467 = vlog2.pop %v2401
  %v2468 = vmul.f32 %v2467, 0.6931472
  %v2469 = vlog2.pop %v2402
  %v2470 = vmul.f32 %v2469, 0.6931472
  %v2471 = vlog2.pop %v2403
  %v2472 = vmul.f32 %v2471, 0.6931472
  %v2473 = vlog2.pop %v2404
  %v2474 = vmul.f32 %v2473, 0.6931472
  %v2475 = vlog2.pop %v2405
  %v2476 = vmul.f32 %v2475, 0.6931472
  %v2477 = vlog2.pop %v2406
  %v2478 = vmul.f32 %v2477, 0.6931472
  %v2479 = vadd.f32 %v687, %v2448
  %v2480 = vadd.f32 %v688, %v2450
  %v2481 = vadd.f32 %v689, %v2452
  %v2482 = vadd.f32 %v690, %v2454
  %v2483 = vadd.f32 %v691, %v2456
  %v2484 = vadd.f32 %v692, %v2458
  %v2485 = vadd.f32 %v693, %v2460
  %v2486 = vadd.f32 %v694, %v2462
  %v2487 = vadd.f32 %v695, %v2464
  %v2488 = vadd.f32 %v696, %v2466
  %v2489 = vadd.f32 %v697, %v2468
  %v2490 = vadd.f32 %v698, %v2470
  %v2491 = vadd.f32 %v699, %v2472
  %v2492 = vadd.f32 %v700, %v2474
  %v2493 = vadd.f32 %v701, %v2476
  %v2494 = vadd.f32 %v702, %v2478
  %v2503 = vlaneseq
  %v2504 = vshrl.u32 %v2503, 7
  %v2505 = vsub.s32 0, %v2504
  %v2506 = vrot.slane %v2439, %v2505
  %v2507 = vlaneseq
  %v2508 = vshrl.u32 %v2507, 7
  %v2509 = vsub.s32 1, %v2508
  %v2510 = vrot.slane %v2439, %v2509
  %v2511 = vlaneseq
  %v2512 = vshrl.u32 %v2511, 7
  %v2513 = vsub.s32 0, %v2512
  %v2514 = vrot.slane %v2440, %v2513
  %v2515 = vlaneseq
  %v2516 = vshrl.u32 %v2515, 7
  %v2517 = vsub.s32 1, %v2516
  %v2518 = vrot.slane %v2440, %v2517
  %v2519 = vlaneseq
  %v2520 = vshrl.u32 %v2519, 7
  %v2521 = vsub.s32 0, %v2520
  %v2522 = vrot.slane %v2441, %v2521
  %v2523 = vlaneseq
  %v2524 = vshrl.u32 %v2523, 7
  %v2525 = vsub.s32 1, %v2524
  %v2526 = vrot.slane %v2441, %v2525
  %v2527 = vlaneseq
  %v2528 = vshrl.u32 %v2527, 7
  %v2529 = vsub.s32 0, %v2528
  %v2530 = vrot.slane %v2442, %v2529
  %v2531 = vlaneseq
  %v2532 = vshrl.u32 %v2531, 7
  %v2533 = vsub.s32 1, %v2532
  %v2534 = vrot.slane %v2442, %v2533
  %v2535 = vlaneseq
  %v2536 = vshrl.u32 %v2535, 7
  %v2537 = vsub.s32 0, %v2536
  %v2538 = vrot.slane %v2443, %v2537
  %v2539 = vlaneseq
  %v2540 = vshrl.u32 %v2539, 7
  %v2541 = vsub.s32 1, %v2540
  %v2542 = vrot.slane %v2443, %v2541
  %v2543 = vlaneseq
  %v2544 = vshrl.u32 %v2543, 7
  %v2545 = vsub.s32 0, %v2544
  %v2546 = vrot.slane %v2444, %v2545
  %v2547 = vlaneseq
  %v2548 = vshrl.u32 %v2547, 7
  %v2549 = vsub.s32 1, %v2548
  %v2550 = vrot.slane %v2444, %v2549
  %v2551 = vlaneseq
  %v2552 = vshrl.u32 %v2551, 7
  %v2553 = vsub.s32 0, %v2552
  %v2554 = vrot.slane %v2445, %v2553
  %v2555 = vlaneseq
  %v2556 = vshrl.u32 %v2555, 7
  %v2557 = vsub.s32 1, %v2556
  %v2558 = vrot.slane %v2445, %v2557
  %v2559 = vlaneseq
  %v2560 = vshrl.u32 %v2559, 7
  %v2561 = vsub.s32 0, %v2560
  %v2562 = vrot.slane %v2446, %v2561
  %v2563 = vlaneseq
  %v2564 = vshrl.u32 %v2563, 7
  %v2565 = vsub.s32 1, %v2564
  %v2566 = vrot.slane %v2446, %v2565
  %v2583 = vsub.f32 %v2479, %v2506
  %v2584 = vsub.f32 %v2480, %v2510
  %v2585 = vsub.f32 %v2481, %v2514
  %v2586 = vsub.f32 %v2482, %v2518
  %v2587 = vsub.f32 %v2483, %v2522
  %v2588 = vsub.f32 %v2484, %v2526
  %v2589 = vsub.f32 %v2485, %v2530
  %v2590 = vsub.f32 %v2486, %v2534
  %v2591 = vsub.f32 %v2487, %v2538
  %v2592 = vsub.f32 %v2488, %v2542
  %v2593 = vsub.f32 %v2489, %v2546
  %v2594 = vsub.f32 %v2490, %v2550
  %v2595 = vsub.f32 %v2491, %v2554
  %v2596 = vsub.f32 %v2492, %v2558
  %v2597 = vsub.f32 %v2493, %v2562
  %v2598 = vsub.f32 %v2494, %v2566
  %v2599 = vsel %vm38, 1, 0
  %v2600 = vsel %vm39, 1, 0
  %v2601 = vsel %vm40, 1, 0
  %v2602 = vsel %vm41, 1, 0
  %v2603 = vsel %vm42, 1, 0
  %v2604 = vsel %vm43, 1, 0
  %v2605 = vsel %vm44, 1, 0
  %v2606 = vsel %vm45, 1, 0
  %v2607 = vcombine.low %v2599, %v2600
  %v2608 = vcombine.low %v2601, %v2602
  %v2609 = vcombine.low %v2603, %v2604
  %v2610 = vcombine.low %v2605, %v2606
  %v2612 = vunpack.c.l.s4 1966171168
  %v2613 = vunpack.c.0.s8 %v2612
  %v2614 = vlaneseq
  %v2615 = vshrl.u32 %v2614, 7
  %v2616 = vsub.s32 %v2613, %v2615
  %v2617 = vrot.slane %v2607, %v2616
  %v2619 = vunpack.c.l.s4 1966171168
  %v2620 = vunpack.c.0.s8 %v2619
  %v2621 = vlaneseq
  %v2622 = vshrl.u32 %v2621, 7
  %v2623 = vsub.s32 %v2620, %v2622
  %v2624 = vrot.slane %v2608, %v2623
  %v2626 = vunpack.c.l.s4 1966171168
  %v2627 = vunpack.c.0.s8 %v2626
  %v2628 = vlaneseq
  %v2629 = vshrl.u32 %v2628, 7
  %v2630 = vsub.s32 %v2627, %v2629
  %v2631 = vrot.slane %v2609, %v2630
  %v2633 = vunpack.c.l.s4 1966171168
  %v2634 = vunpack.c.0.s8 %v2633
  %v2635 = vlaneseq
  %v2636 = vshrl.u32 %v2635, 7
  %v2637 = vsub.s32 %v2634, %v2636
  %v2638 = vrot.slane %v2610, %v2637
  %v2639 = vcombine.low %v2617, %v2624
  %v2640 = vcombine.high %v2617, %v2624
  %v2641 = vcombine.low %v2631, %v2638
  %v2642 = vcombine.high %v2631, %v2638
  %v2644 = vunpack.c.l.s4 1966171168
  %v2645 = vunpack.c.0.s8 %v2644
  %v2646 = vlaneseq
  %v2647 = vshrl.u32 %v2646, 7
  %v2648 = vsub.s32 %v2645, %v2647
  %v2649 = vrot.slane %v2639, %v2648
  %v2651 = vunpack.c.l.s4 1966171168
  %v2652 = vunpack.c.0.s8 %v2651
  %v2653 = vlaneseq
  %v2654 = vshrl.u32 %v2653, 7
  %v2655 = vsub.s32 %v2652, %v2654
  %v2656 = vrot.slane %v2640, %v2655
  %v2658 = vunpack.c.l.s4 1966171168
  %v2659 = vunpack.c.0.s8 %v2658
  %v2660 = vlaneseq
  %v2661 = vshrl.u32 %v2660, 7
  %v2662 = vsub.s32 %v2659, %v2661
  %v2663 = vrot.slane %v2641, %v2662
  %v2665 = vunpack.c.l.s4 1966171168
  %v2666 = vunpack.c.0.s8 %v2665
  %v2667 = vlaneseq
  %v2668 = vshrl.u32 %v2667, 7
  %v2669 = vsub.s32 %v2666, %v2668
  %v2670 = vrot.slane %v2642, %v2669
  %v2671 = vcombine.low %v2649, %v2663
  %v2672 = vcombine.low %v2656, %v2670
  %v2673 = vadd.s32 %v2671, %v2672
  %v2674 = vand.u32 %v2673, 65535
  %v2675 = vshrl.u32 %v2673, 16
  %v2676 = vcvt.s32.f32 %v2674
  %v2677 = vcvt.s32.f32 %v2675
  %2678 = vadd.xlane.f32.xlu0 %v2676
  %v2679 = vpop.xlane.xlu0 %2678
  %2680 = vadd.xlane.f32.xlu0 %v2677
  %v2681 = vpop.xlane.xlu0 %2680
  %v2682 = vcvt.f32.s32 %v2679
  %v2683 = vcvt.f32.s32 %v2681
  %v2684 = vshll.u32 %v2683, 16
  %v2685 = vadd.s32 %v2684, %v2682
  %v2686 = vcvt.s32.f32 %v2685
  %v2703 = vcombine.low %v221, %v228
  %v2705 = vunpack.c.l.s4 1966171168
  %v2706 = vunpack.c.0.s8 %v2705
  %v2707 = vlaneseq
  %v2708 = vshrl.u32 %v2707, 7
  %v2709 = vsub.s32 %v2706, %v2708
  %v2710 = vrot.slane %v2703, %v2709
  %v2712 = vunpack.c.l.s4 1966171168
  %v2713 = vunpack.c.0.s8 %v2712
  %v2714 = vlaneseq
  %v2715 = vshrl.u32 %v2714, 7
  %v2716 = vsub.s32 %v2713, %v2715
  %v2717 = vrot.slane %v2710, %v2716
  %v2718 = vcombine.low %v235, %v242
  %v2720 = vunpack.c.l.s4 1966171168
  %v2721 = vunpack.c.0.s8 %v2720
  %v2722 = vlaneseq
  %v2723 = vshrl.u32 %v2722, 7
  %v2724 = vsub.s32 %v2721, %v2723
  %v2725 = vrot.slane %v2718, %v2724
  %v2727 = vunpack.c.l.s4 1966171168
  %v2728 = vunpack.c.0.s8 %v2727
  %v2729 = vlaneseq
  %v2730 = vshrl.u32 %v2729, 7
  %v2731 = vsub.s32 %v2728, %v2730
  %v2732 = vrot.slane %v2725, %v2731
  %v2733 = vcombine.low %v249, %v256
  %v2735 = vunpack.c.l.s4 1966171168
  %v2736 = vunpack.c.0.s8 %v2735
  %v2737 = vlaneseq
  %v2738 = vshrl.u32 %v2737, 7
  %v2739 = vsub.s32 %v2736, %v2738
  %v2740 = vrot.slane %v2733, %v2739
  %v2742 = vunpack.c.l.s4 1966171168
  %v2743 = vunpack.c.0.s8 %v2742
  %v2744 = vlaneseq
  %v2745 = vshrl.u32 %v2744, 7
  %v2746 = vsub.s32 %v2743, %v2745
  %v2747 = vrot.slane %v2740, %v2746
  %v2748 = vcombine.low %v263, %v270
  %v2750 = vunpack.c.l.s4 1966171168
  %v2751 = vunpack.c.0.s8 %v2750
  %v2752 = vlaneseq
  %v2753 = vshrl.u32 %v2752, 7
  %v2754 = vsub.s32 %v2751, %v2753
  %v2755 = vrot.slane %v2748, %v2754
  %v2757 = vunpack.c.l.s4 1966171168
  %v2758 = vunpack.c.0.s8 %v2757
  %v2759 = vlaneseq
  %v2760 = vshrl.u32 %v2759, 7
  %v2761 = vsub.s32 %v2758, %v2760
  %v2762 = vrot.slane %v2755, %v2761
  %v2763 = vcombine.low %v277, %v284
  %v2765 = vunpack.c.l.s4 1966171168
  %v2766 = vunpack.c.0.s8 %v2765
  %v2767 = vlaneseq
  %v2768 = vshrl.u32 %v2767, 7
  %v2769 = vsub.s32 %v2766, %v2768
  %v2770 = vrot.slane %v2763, %v2769
  %v2772 = vunpack.c.l.s4 1966171168
  %v2773 = vunpack.c.0.s8 %v2772
  %v2774 = vlaneseq
  %v2775 = vshrl.u32 %v2774, 7
  %v2776 = vsub.s32 %v2773, %v2775
  %v2777 = vrot.slane %v2770, %v2776
  %v2778 = vcombine.low %v291, %v298
  %v2780 = vunpack.c.l.s4 1966171168
  %v2781 = vunpack.c.0.s8 %v2780
  %v2782 = vlaneseq
  %v2783 = vshrl.u32 %v2782, 7
  %v2784 = vsub.s32 %v2781, %v2783
  %v2785 = vrot.slane %v2778, %v2784
  %v2787 = vunpack.c.l.s4 1966171168
  %v2788 = vunpack.c.0.s8 %v2787
  %v2789 = vlaneseq
  %v2790 = vshrl.u32 %v2789, 7
  %v2791 = vsub.s32 %v2788, %v2790
  %v2792 = vrot.slane %v2785, %v2791
  %v2793 = vcombine.low %v305, %v312
  %v2795 = vunpack.c.l.s4 1966171168
  %v2796 = vunpack.c.0.s8 %v2795
  %v2797 = vlaneseq
  %v2798 = vshrl.u32 %v2797, 7
  %v2799 = vsub.s32 %v2796, %v2798
  %v2800 = vrot.slane %v2793, %v2799
  %v2802 = vunpack.c.l.s4 1966171168
  %v2803 = vunpack.c.0.s8 %v2802
  %v2804 = vlaneseq
  %v2805 = vshrl.u32 %v2804, 7
  %v2806 = vsub.s32 %v2803, %v2805
  %v2807 = vrot.slane %v2800, %v2806
  %v2808 = vcombine.low %v319, %v326
  %v2810 = vunpack.c.l.s4 1966171168
  %v2811 = vunpack.c.0.s8 %v2810
  %v2812 = vlaneseq
  %v2813 = vshrl.u32 %v2812, 7
  %v2814 = vsub.s32 %v2811, %v2813
  %v2815 = vrot.slane %v2808, %v2814
  %v2817 = vunpack.c.l.s4 1966171168
  %v2818 = vunpack.c.0.s8 %v2817
  %v2819 = vlaneseq
  %v2820 = vshrl.u32 %v2819, 7
  %v2821 = vsub.s32 %v2818, %v2820
  %v2822 = vrot.slane %v2815, %v2821
  %v2831 = vsel %vm38, %v2717, 0.0
  %v2832 = vsel %vm39, %v2732, 0.0
  %v2833 = vsel %vm40, %v2747, 0.0
  %v2834 = vsel %vm41, %v2762, 0.0
  %v2835 = vsel %vm42, %v2777, 0.0
  %v2836 = vsel %vm43, %v2792, 0.0
  %v2837 = vsel %vm44, %v2807, 0.0
  %v2838 = vsel %vm45, %v2822, 0.0
  %v2847 = vcombine.low %v2831, %v2832
  %v2848 = vcombine.low %v2833, %v2834
  %v2849 = vcombine.low %v2835, %v2836
  %v2850 = vcombine.low %v2837, %v2838
  %v2852 = vunpack.c.l.s4 1966171168
  %v2853 = vunpack.c.0.s8 %v2852
  %v2854 = vlaneseq
  %v2855 = vshrl.u32 %v2854, 7
  %v2856 = vsub.s32 %v2853, %v2855
  %v2857 = vrot.slane %v2847, %v2856
  %v2859 = vunpack.c.l.s4 1966171168
  %v2860 = vunpack.c.0.s8 %v2859
  %v2861 = vlaneseq
  %v2862 = vshrl.u32 %v2861, 7
  %v2863 = vsub.s32 %v2860, %v2862
  %v2864 = vrot.slane %v2848, %v2863
  %v2866 = vunpack.c.l.s4 1966171168
  %v2867 = vunpack.c.0.s8 %v2866
  %v2868 = vlaneseq
  %v2869 = vshrl.u32 %v2868, 7
  %v2870 = vsub.s32 %v2867, %v2869
  %v2871 = vrot.slane %v2849, %v2870
  %v2873 = vunpack.c.l.s4 1966171168
  %v2874 = vunpack.c.0.s8 %v2873
  %v2875 = vlaneseq
  %v2876 = vshrl.u32 %v2875, 7
  %v2877 = vsub.s32 %v2874, %v2876
  %v2878 = vrot.slane %v2850, %v2877
  %v2879 = vcombine.low %v2857, %v2864
  %v2880 = vcombine.high %v2857, %v2864
  %v2881 = vcombine.low %v2871, %v2878
  %v2882 = vcombine.high %v2871, %v2878
  %v2884 = vunpack.c.l.s4 1966171168
  %v2885 = vunpack.c.0.s8 %v2884
  %v2886 = vlaneseq
  %v2887 = vshrl.u32 %v2886, 7
  %v2888 = vsub.s32 %v2885, %v2887
  %v2889 = vrot.slane %v2879, %v2888
  %v2891 = vunpack.c.l.s4 1966171168
  %v2892 = vunpack.c.0.s8 %v2891
  %v2893 = vlaneseq
  %v2894 = vshrl.u32 %v2893, 7
  %v2895 = vsub.s32 %v2892, %v2894
  %v2896 = vrot.slane %v2880, %v2895
  %v2898 = vunpack.c.l.s4 1966171168
  %v2899 = vunpack.c.0.s8 %v2898
  %v2900 = vlaneseq
  %v2901 = vshrl.u32 %v2900, 7
  %v2902 = vsub.s32 %v2899, %v2901
  %v2903 = vrot.slane %v2881, %v2902
  %v2905 = vunpack.c.l.s4 1966171168
  %v2906 = vunpack.c.0.s8 %v2905
  %v2907 = vlaneseq
  %v2908 = vshrl.u32 %v2907, 7
  %v2909 = vsub.s32 %v2906, %v2908
  %v2910 = vrot.slane %v2882, %v2909
  %v2911 = vcombine.low %v2889, %v2903
  %v2912 = vcombine.low %v2896, %v2910
  %v2915 = vadd.f32 %v2911, %v2912
  %2916 = vadd.xlane.f32.xlu0 %v2915
  %v2917 = vpop.xlane.xlu0 %2916
  %vm2918 = vmxor %vm46, 1
  %vm2919 = vmxor %vm47, 1
  %vm2920 = vmxor %vm48, 1
  %vm2921 = vmxor %vm49, 1
  %vm2922 = vmxor %vm50, 1
  %vm2923 = vmxor %vm51, 1
  %vm2924 = vmxor %vm52, 1
  %vm2925 = vmxor %vm53, 1
  %vm2926 = vmor %vm38, %vm2918
  %vm2927 = vmor %vm39, %vm2919
  %vm2928 = vmor %vm40, %vm2920
  %vm2929 = vmor %vm41, %vm2921
  %vm2930 = vmor %vm42, %vm2922
  %vm2931 = vmor %vm43, %vm2923
  %vm2932 = vmor %vm44, %vm2924
  %vm2933 = vmor %vm45, %vm2925
  %v2950 = vcombine.low %v2583, %v2584
  %v2952 = vunpack.c.l.s4 1966171168
  %v2953 = vunpack.c.0.s8 %v2952
  %v2954 = vlaneseq
  %v2955 = vshrl.u32 %v2954, 7
  %v2956 = vsub.s32 %v2953, %v2955
  %v2957 = vrot.slane %v2950, %v2956
  %v2959 = vunpack.c.l.s4 1966171168
  %v2960 = vunpack.c.0.s8 %v2959
  %v2961 = vlaneseq
  %v2962 = vshrl.u32 %v2961, 7
  %v2963 = vsub.s32 %v2960, %v2962
  %v2964 = vrot.slane %v2957, %v2963
  %v2965 = vcombine.low %v2585, %v2586
  %v2967 = vunpack.c.l.s4 1966171168
  %v2968 = vunpack.c.0.s8 %v2967
  %v2969 = vlaneseq
  %v2970 = vshrl.u32 %v2969, 7
  %v2971 = vsub.s32 %v2968, %v2970
  %v2972 = vrot.slane %v2965, %v2971
  %v2974 = vunpack.c.l.s4 1966171168
  %v2975 = vunpack.c.0.s8 %v2974
  %v2976 = vlaneseq
  %v2977 = vshrl.u32 %v2976, 7
  %v2978 = vsub.s32 %v2975, %v2977
  %v2979 = vrot.slane %v2972, %v2978
  %v2980 = vcombine.low %v2587, %v2588
  %v2982 = vunpack.c.l.s4 1966171168
  %v2983 = vunpack.c.0.s8 %v2982
  %v2984 = vlaneseq
  %v2985 = vshrl.u32 %v2984, 7
  %v2986 = vsub.s32 %v2983, %v2985
  %v2987 = vrot.slane %v2980, %v2986
  %v2989 = vunpack.c.l.s4 1966171168
  %v2990 = vunpack.c.0.s8 %v2989
  %v2991 = vlaneseq
  %v2992 = vshrl.u32 %v2991, 7
  %v2993 = vsub.s32 %v2990, %v2992
  %v2994 = vrot.slane %v2987, %v2993
  %v2995 = vcombine.low %v2589, %v2590
  %v2997 = vunpack.c.l.s4 1966171168
  %v2998 = vunpack.c.0.s8 %v2997
  %v2999 = vlaneseq
  %v3000 = vshrl.u32 %v2999, 7
  %v3001 = vsub.s32 %v2998, %v3000
  %v3002 = vrot.slane %v2995, %v3001
  %v3004 = vunpack.c.l.s4 1966171168
  %v3005 = vunpack.c.0.s8 %v3004
  %v3006 = vlaneseq
  %v3007 = vshrl.u32 %v3006, 7
  %v3008 = vsub.s32 %v3005, %v3007
  %v3009 = vrot.slane %v3002, %v3008
  %v3010 = vcombine.low %v2591, %v2592
  %v3012 = vunpack.c.l.s4 1966171168
  %v3013 = vunpack.c.0.s8 %v3012
  %v3014 = vlaneseq
  %v3015 = vshrl.u32 %v3014, 7
  %v3016 = vsub.s32 %v3013, %v3015
  %v3017 = vrot.slane %v3010, %v3016
  %v3019 = vunpack.c.l.s4 1966171168
  %v3020 = vunpack.c.0.s8 %v3019
  %v3021 = vlaneseq
  %v3022 = vshrl.u32 %v3021, 7
  %v3023 = vsub.s32 %v3020, %v3022
  %v3024 = vrot.slane %v3017, %v3023
  %v3025 = vcombine.low %v2593, %v2594
  %v3027 = vunpack.c.l.s4 1966171168
  %v3028 = vunpack.c.0.s8 %v3027
  %v3029 = vlaneseq
  %v3030 = vshrl.u32 %v3029, 7
  %v3031 = vsub.s32 %v3028, %v3030
  %v3032 = vrot.slane %v3025, %v3031
  %v3034 = vunpack.c.l.s4 1966171168
  %v3035 = vunpack.c.0.s8 %v3034
  %v3036 = vlaneseq
  %v3037 = vshrl.u32 %v3036, 7
  %v3038 = vsub.s32 %v3035, %v3037
  %v3039 = vrot.slane %v3032, %v3038
  %v3040 = vcombine.low %v2595, %v2596
  %v3042 = vunpack.c.l.s4 1966171168
  %v3043 = vunpack.c.0.s8 %v3042
  %v3044 = vlaneseq
  %v3045 = vshrl.u32 %v3044, 7
  %v3046 = vsub.s32 %v3043, %v3045
  %v3047 = vrot.slane %v3040, %v3046
  %v3049 = vunpack.c.l.s4 1966171168
  %v3050 = vunpack.c.0.s8 %v3049
  %v3051 = vlaneseq
  %v3052 = vshrl.u32 %v3051, 7
  %v3053 = vsub.s32 %v3050, %v3052
  %v3054 = vrot.slane %v3047, %v3053
  %v3055 = vcombine.low %v2597, %v2598
  %v3057 = vunpack.c.l.s4 1966171168
  %v3058 = vunpack.c.0.s8 %v3057
  %v3059 = vlaneseq
  %v3060 = vshrl.u32 %v3059, 7
  %v3061 = vsub.s32 %v3058, %v3060
  %v3062 = vrot.slane %v3055, %v3061
  %v3064 = vunpack.c.l.s4 1966171168
  %v3065 = vunpack.c.0.s8 %v3064
  %v3066 = vlaneseq
  %v3067 = vshrl.u32 %v3066, 7
  %v3068 = vsub.s32 %v3065, %v3067
  %v3069 = vrot.slane %v3062, %v3068
  %v3078 = vsel %vm2926, 0.0, %v2964
  %v3079 = vsel %vm2927, 0.0, %v2979
  %v3080 = vsel %vm2928, 0.0, %v2994
  %v3081 = vsel %vm2929, 0.0, %v3009
  %v3082 = vsel %vm2930, 0.0, %v3024
  %v3083 = vsel %vm2931, 0.0, %v3039
  %v3084 = vsel %vm2932, 0.0, %v3054
  %v3085 = vsel %vm2933, 0.0, %v3069
  %v3086 = vmax.f32 %v3078, 0.0
  %v3087 = vmax.f32 %v3079, 0.0
  %v3088 = vmax.f32 %v3080, 0.0
  %v3089 = vmax.f32 %v3081, 0.0
  %v3090 = vmax.f32 %v3082, 0.0
  %v3091 = vmax.f32 %v3083, 0.0
  %v3092 = vmax.f32 %v3084, 0.0
  %v3093 = vmax.f32 %v3085, 0.0
  %v3094 = vmul.u32 %v2685, 3
  %vm3095 = vcmp.lt.s32.totalorder %v3094, 255
  %v3096 = vsel %vm3095, %v3094, 255
  %v3105 = vcombine.low %v3086, %v3087
  %v3106 = vcombine.low %v3088, %v3089
  %v3107 = vcombine.low %v3090, %v3091
  %v3108 = vcombine.low %v3092, %v3093
  %v3110 = vunpack.c.l.s4 1966171168
  %v3111 = vunpack.c.0.s8 %v3110
  %v3112 = vlaneseq
  %v3113 = vshrl.u32 %v3112, 7
  %v3114 = vsub.s32 %v3111, %v3113
  %v3115 = vrot.slane %v3105, %v3114
  %v3117 = vunpack.c.l.s4 1966171168
  %v3118 = vunpack.c.0.s8 %v3117
  %v3119 = vlaneseq
  %v3120 = vshrl.u32 %v3119, 7
  %v3121 = vsub.s32 %v3118, %v3120
  %v3122 = vrot.slane %v3106, %v3121
  %v3124 = vunpack.c.l.s4 1966171168
  %v3125 = vunpack.c.0.s8 %v3124
  %v3126 = vlaneseq
  %v3127 = vshrl.u32 %v3126, 7
  %v3128 = vsub.s32 %v3125, %v3127
  %v3129 = vrot.slane %v3107, %v3128
  %v3131 = vunpack.c.l.s4 1966171168
  %v3132 = vunpack.c.0.s8 %v3131
  %v3133 = vlaneseq
  %v3134 = vshrl.u32 %v3133, 7
  %v3135 = vsub.s32 %v3132, %v3134
  %v3136 = vrot.slane %v3108, %v3135
  %v3137 = vcombine.low %v3115, %v3122
  %v3138 = vcombine.high %v3115, %v3122
  %v3139 = vcombine.low %v3129, %v3136
  %v3140 = vcombine.high %v3129, %v3136
  %v3142 = vunpack.c.l.s4 1966171168
  %v3143 = vunpack.c.0.s8 %v3142
  %v3144 = vlaneseq
  %v3145 = vshrl.u32 %v3144, 7
  %v3146 = vsub.s32 %v3143, %v3145
  %v3147 = vrot.slane %v3137, %v3146
  %v3149 = vunpack.c.l.s4 1966171168
  %v3150 = vunpack.c.0.s8 %v3149
  %v3151 = vlaneseq
  %v3152 = vshrl.u32 %v3151, 7
  %v3153 = vsub.s32 %v3150, %v3152
  %v3154 = vrot.slane %v3138, %v3153
  %v3156 = vunpack.c.l.s4 1966171168
  %v3157 = vunpack.c.0.s8 %v3156
  %v3158 = vlaneseq
  %v3159 = vshrl.u32 %v3158, 7
  %v3160 = vsub.s32 %v3157, %v3159
  %v3161 = vrot.slane %v3139, %v3160
  %v3163 = vunpack.c.l.s4 1966171168
  %v3164 = vunpack.c.0.s8 %v3163
  %v3165 = vlaneseq
  %v3166 = vshrl.u32 %v3165, 7
  %v3167 = vsub.s32 %v3164, %v3166
  %v3168 = vrot.slane %v3140, %v3167
  %v3169 = vcombine.low %v3147, %v3161
  %v3170 = vcombine.low %v3154, %v3168
  %v3173 = vmax.f32 %v3169, %v3170
  %3174 = vmax.xlane.f32.xlu0 %v3173
  %v3175 = vpop.xlane.xlu0 %3174
  %v3177 = vadd.s32 %v3175, 1
  %v3178 = vshra.s32 %v3177, 1
  %v3179 = vlaneseq
  %v3180 = vshrl.u32 %v3179, 7
  %v3181 = vsub.s32 0, %v3180
  %v3182 = vrot.slane %v3178, %v3181
  %v3183 = vlaneseq
  %v3184 = vshrl.u32 %v3183, 7
  %v3185 = vsub.s32 1, %v3184
  %v3186 = vrot.slane %v3178, %v3185
  %v3187 = vlaneseq
  %v3188 = vshrl.u32 %v3187, 7
  %v3189 = vsub.s32 2, %v3188
  %v3190 = vrot.slane %v3178, %v3189
  %v3191 = vlaneseq
  %v3192 = vshrl.u32 %v3191, 7
  %v3193 = vsub.s32 3, %v3192
  %v3194 = vrot.slane %v3178, %v3193
  %v3195 = vlaneseq
  %v3196 = vshrl.u32 %v3195, 7
  %v3197 = vsub.s32 4, %v3196
  %v3198 = vrot.slane %v3178, %v3197
  %v3199 = vlaneseq
  %v3200 = vshrl.u32 %v3199, 7
  %v3201 = vsub.s32 5, %v3200
  %v3202 = vrot.slane %v3178, %v3201
  %v3203 = vlaneseq
  %v3204 = vshrl.u32 %v3203, 7
  %v3205 = vsub.s32 6, %v3204
  %v3206 = vrot.slane %v3178, %v3205
  %v3207 = vlaneseq
  %v3208 = vshrl.u32 %v3207, 7
  %v3209 = vsub.s32 7, %v3208
  %v3210 = vrot.slane %v3178, %v3209
  %vm3219 = vcmp.ge.f32.partialorder %v3086, %v3182
  %vm3220 = vcmp.ge.f32.partialorder %v3087, %v3186
  %vm3221 = vcmp.ge.f32.partialorder %v3088, %v3190
  %vm3222 = vcmp.ge.f32.partialorder %v3089, %v3194
  %vm3223 = vcmp.ge.f32.partialorder %v3090, %v3198
  %vm3224 = vcmp.ge.f32.partialorder %v3091, %v3202
  %vm3225 = vcmp.ge.f32.partialorder %v3092, %v3206
  %vm3226 = vcmp.ge.f32.partialorder %v3093, %v3210
  %v3227 = vsel %vm3219, 1, 0
  %v3228 = vsel %vm3220, 1, 0
  %v3229 = vsel %vm3221, 1, 0
  %v3230 = vsel %vm3222, 1, 0
  %v3231 = vsel %vm3223, 1, 0
  %v3232 = vsel %vm3224, 1, 0
  %v3233 = vsel %vm3225, 1, 0
  %v3234 = vsel %vm3226, 1, 0
  %v3235 = vcombine.low %v3227, %v3228
  %v3236 = vcombine.low %v3229, %v3230
  %v3237 = vcombine.low %v3231, %v3232
  %v3238 = vcombine.low %v3233, %v3234
  %v3240 = vunpack.c.l.s4 1966171168
  %v3241 = vunpack.c.0.s8 %v3240
  %v3242 = vlaneseq
  %v3243 = vshrl.u32 %v3242, 7
  %v3244 = vsub.s32 %v3241, %v3243
  %v3245 = vrot.slane %v3235, %v3244
  %v3247 = vunpack.c.l.s4 1966171168
  %v3248 = vunpack.c.0.s8 %v3247
  %v3249 = vlaneseq
  %v3250 = vshrl.u32 %v3249, 7
  %v3251 = vsub.s32 %v3248, %v3250
  %v3252 = vrot.slane %v3236, %v3251
  %v3254 = vunpack.c.l.s4 1966171168
  %v3255 = vunpack.c.0.s8 %v3254
  %v3256 = vlaneseq
  %v3257 = vshrl.u32 %v3256, 7
  %v3258 = vsub.s32 %v3255, %v3257
  %v3259 = vrot.slane %v3237, %v3258
  %v3261 = vunpack.c.l.s4 1966171168
  %v3262 = vunpack.c.0.s8 %v3261
  %v3263 = vlaneseq
  %v3264 = vshrl.u32 %v3263, 7
  %v3265 = vsub.s32 %v3262, %v3264
  %v3266 = vrot.slane %v3238, %v3265
  %v3267 = vcombine.low %v3245, %v3252
  %v3268 = vcombine.high %v3245, %v3252
  %v3269 = vcombine.low %v3259, %v3266
  %v3270 = vcombine.high %v3259, %v3266
  %v3272 = vunpack.c.l.s4 1966171168
  %v3273 = vunpack.c.0.s8 %v3272
  %v3274 = vlaneseq
  %v3275 = vshrl.u32 %v3274, 7
  %v3276 = vsub.s32 %v3273, %v3275
  %v3277 = vrot.slane %v3267, %v3276
  %v3279 = vunpack.c.l.s4 1966171168
  %v3280 = vunpack.c.0.s8 %v3279
  %v3281 = vlaneseq
  %v3282 = vshrl.u32 %v3281, 7
  %v3283 = vsub.s32 %v3280, %v3282
  %v3284 = vrot.slane %v3268, %v3283
  %v3286 = vunpack.c.l.s4 1966171168
  %v3287 = vunpack.c.0.s8 %v3286
  %v3288 = vlaneseq
  %v3289 = vshrl.u32 %v3288, 7
  %v3290 = vsub.s32 %v3287, %v3289
  %v3291 = vrot.slane %v3269, %v3290
  %v3293 = vunpack.c.l.s4 1966171168
  %v3294 = vunpack.c.0.s8 %v3293
  %v3295 = vlaneseq
  %v3296 = vshrl.u32 %v3295, 7
  %v3297 = vsub.s32 %v3294, %v3296
  %v3298 = vrot.slane %v3270, %v3297
  %v3299 = vcombine.low %v3277, %v3291
  %v3300 = vcombine.low %v3284, %v3298
  %v3301 = vadd.s32 %v3299, %v3300
  %v3302 = vand.u32 %v3301, 65535
  %v3303 = vshrl.u32 %v3301, 16
  %v3304 = vcvt.s32.f32 %v3302
  %v3305 = vcvt.s32.f32 %v3303
  %3306 = vadd.xlane.f32.xlu0 %v3304
  %v3307 = vpop.xlane.xlu0 %3306
  %3308 = vadd.xlane.f32.xlu0 %v3305
  %v3309 = vpop.xlane.xlu0 %3308
  %v3310 = vcvt.f32.s32 %v3307
  %v3311 = vcvt.f32.s32 %v3309
  %v3312 = vshll.u32 %v3311, 16
  %v3313 = vadd.s32 %v3312, %v3310
  %vm3314 = vcmp.ge.s32.totalorder %v3313, %v3096
  %v3315 = vsel %vm3314, %v3178, 0
  %v3316 = vsub.s32 %v3178, 1
  %v3317 = vsel %vm3314, %v3175, %v3316
  %v3318 = vsub.s32 %v3317, %v3315
  %v3319 = vadd.s32 %v3318, 1
  %v3320 = vshra.s32 %v3319, 1
  %v3321 = vadd.s32 %v3315, %v3320
  %v3322 = vlaneseq
  %v3323 = vshrl.u32 %v3322, 7
  %v3324 = vsub.s32 0, %v3323
  %v3325 = vrot.slane %v3321, %v3324
  %v3326 = vlaneseq
  %v3327 = vshrl.u32 %v3326, 7
  %v3328 = vsub.s32 1, %v3327
  %v3329 = vrot.slane %v3321, %v3328
  %v3330 = vlaneseq
  %v3331 = vshrl.u32 %v3330, 7
  %v3332 = vsub.s32 2, %v3331
  %v3333 = vrot.slane %v3321, %v3332
  %v3334 = vlaneseq
  %v3335 = vshrl.u32 %v3334, 7
  %v3336 = vsub.s32 3, %v3335
  %v3337 = vrot.slane %v3321, %v3336
  %v3338 = vlaneseq
  %v3339 = vshrl.u32 %v3338, 7
  %v3340 = vsub.s32 4, %v3339
  %v3341 = vrot.slane %v3321, %v3340
  %v3342 = vlaneseq
  %v3343 = vshrl.u32 %v3342, 7
  %v3344 = vsub.s32 5, %v3343
  %v3345 = vrot.slane %v3321, %v3344
  %v3346 = vlaneseq
  %v3347 = vshrl.u32 %v3346, 7
  %v3348 = vsub.s32 6, %v3347
  %v3349 = vrot.slane %v3321, %v3348
  %v3350 = vlaneseq
  %v3351 = vshrl.u32 %v3350, 7
  %v3352 = vsub.s32 7, %v3351
  %v3353 = vrot.slane %v3321, %v3352
  %vm3362 = vcmp.ge.f32.partialorder %v3086, %v3325
  %vm3363 = vcmp.ge.f32.partialorder %v3087, %v3329
  %vm3364 = vcmp.ge.f32.partialorder %v3088, %v3333
  %vm3365 = vcmp.ge.f32.partialorder %v3089, %v3337
  %vm3366 = vcmp.ge.f32.partialorder %v3090, %v3341
  %vm3367 = vcmp.ge.f32.partialorder %v3091, %v3345
  %vm3368 = vcmp.ge.f32.partialorder %v3092, %v3349
  %vm3369 = vcmp.ge.f32.partialorder %v3093, %v3353
  %v3370 = vsel %vm3362, 1, 0
  %v3371 = vsel %vm3363, 1, 0
  %v3372 = vsel %vm3364, 1, 0
  %v3373 = vsel %vm3365, 1, 0
  %v3374 = vsel %vm3366, 1, 0
  %v3375 = vsel %vm3367, 1, 0
  %v3376 = vsel %vm3368, 1, 0
  %v3377 = vsel %vm3369, 1, 0
  %v3378 = vcombine.low %v3370, %v3371
  %v3379 = vcombine.low %v3372, %v3373
  %v3380 = vcombine.low %v3374, %v3375
  %v3381 = vcombine.low %v3376, %v3377
  %v3383 = vunpack.c.l.s4 1966171168
  %v3384 = vunpack.c.0.s8 %v3383
  %v3385 = vlaneseq
  %v3386 = vshrl.u32 %v3385, 7
  %v3387 = vsub.s32 %v3384, %v3386
  %v3388 = vrot.slane %v3378, %v3387
  %v3390 = vunpack.c.l.s4 1966171168
  %v3391 = vunpack.c.0.s8 %v3390
  %v3392 = vlaneseq
  %v3393 = vshrl.u32 %v3392, 7
  %v3394 = vsub.s32 %v3391, %v3393
  %v3395 = vrot.slane %v3379, %v3394
  %v3397 = vunpack.c.l.s4 1966171168
  %v3398 = vunpack.c.0.s8 %v3397
  %v3399 = vlaneseq
  %v3400 = vshrl.u32 %v3399, 7
  %v3401 = vsub.s32 %v3398, %v3400
  %v3402 = vrot.slane %v3380, %v3401
  %v3404 = vunpack.c.l.s4 1966171168
  %v3405 = vunpack.c.0.s8 %v3404
  %v3406 = vlaneseq
  %v3407 = vshrl.u32 %v3406, 7
  %v3408 = vsub.s32 %v3405, %v3407
  %v3409 = vrot.slane %v3381, %v3408
  %v3410 = vcombine.low %v3388, %v3395
  %v3411 = vcombine.high %v3388, %v3395
  %v3412 = vcombine.low %v3402, %v3409
  %v3413 = vcombine.high %v3402, %v3409
  %v3415 = vunpack.c.l.s4 1966171168
  %v3416 = vunpack.c.0.s8 %v3415
  %v3417 = vlaneseq
  %v3418 = vshrl.u32 %v3417, 7
  %v3419 = vsub.s32 %v3416, %v3418
  %v3420 = vrot.slane %v3410, %v3419
  %v3422 = vunpack.c.l.s4 1966171168
  %v3423 = vunpack.c.0.s8 %v3422
  %v3424 = vlaneseq
  %v3425 = vshrl.u32 %v3424, 7
  %v3426 = vsub.s32 %v3423, %v3425
  %v3427 = vrot.slane %v3411, %v3426
  %v3429 = vunpack.c.l.s4 1966171168
  %v3430 = vunpack.c.0.s8 %v3429
  %v3431 = vlaneseq
  %v3432 = vshrl.u32 %v3431, 7
  %v3433 = vsub.s32 %v3430, %v3432
  %v3434 = vrot.slane %v3412, %v3433
  %v3436 = vunpack.c.l.s4 1966171168
  %v3437 = vunpack.c.0.s8 %v3436
  %v3438 = vlaneseq
  %v3439 = vshrl.u32 %v3438, 7
  %v3440 = vsub.s32 %v3437, %v3439
  %v3441 = vrot.slane %v3413, %v3440
  %v3442 = vcombine.low %v3420, %v3434
  %v3443 = vcombine.low %v3427, %v3441
  %v3444 = vadd.s32 %v3442, %v3443
  %v3445 = vand.u32 %v3444, 65535
  %v3446 = vshrl.u32 %v3444, 16
  %v3447 = vcvt.s32.f32 %v3445
  %v3448 = vcvt.s32.f32 %v3446
  %3449 = vadd.xlane.f32.xlu0 %v3447
  %v3450 = vpop.xlane.xlu0 %3449
  %3451 = vadd.xlane.f32.xlu0 %v3448
  %v3452 = vpop.xlane.xlu0 %3451
  %v3453 = vcvt.f32.s32 %v3450
  %v3454 = vcvt.f32.s32 %v3452
  %v3455 = vshll.u32 %v3454, 16
  %v3456 = vadd.s32 %v3455, %v3453
  %vm3457 = vcmp.ge.s32.totalorder %v3456, %v3096
  %v3458 = vsel %vm3457, %v3321, %v3315
  %v3459 = vsub.s32 %v3321, 1
  %v3460 = vsel %vm3457, %v3317, %v3459
  %v3461 = vsub.s32 %v3460, %v3458
  %v3462 = vadd.s32 %v3461, 1
  %v3463 = vshra.s32 %v3462, 1
  %v3464 = vadd.s32 %v3458, %v3463
  %v3465 = vlaneseq
  %v3466 = vshrl.u32 %v3465, 7
  %v3467 = vsub.s32 0, %v3466
  %v3468 = vrot.slane %v3464, %v3467
  %v3469 = vlaneseq
  %v3470 = vshrl.u32 %v3469, 7
  %v3471 = vsub.s32 1, %v3470
  %v3472 = vrot.slane %v3464, %v3471
  %v3473 = vlaneseq
  %v3474 = vshrl.u32 %v3473, 7
  %v3475 = vsub.s32 2, %v3474
  %v3476 = vrot.slane %v3464, %v3475
  %v3477 = vlaneseq
  %v3478 = vshrl.u32 %v3477, 7
  %v3479 = vsub.s32 3, %v3478
  %v3480 = vrot.slane %v3464, %v3479
  %v3481 = vlaneseq
  %v3482 = vshrl.u32 %v3481, 7
  %v3483 = vsub.s32 4, %v3482
  %v3484 = vrot.slane %v3464, %v3483
  %v3485 = vlaneseq
  %v3486 = vshrl.u32 %v3485, 7
  %v3487 = vsub.s32 5, %v3486
  %v3488 = vrot.slane %v3464, %v3487
  %v3489 = vlaneseq
  %v3490 = vshrl.u32 %v3489, 7
  %v3491 = vsub.s32 6, %v3490
  %v3492 = vrot.slane %v3464, %v3491
  %v3493 = vlaneseq
  %v3494 = vshrl.u32 %v3493, 7
  %v3495 = vsub.s32 7, %v3494
  %v3496 = vrot.slane %v3464, %v3495
  %vm3505 = vcmp.ge.f32.partialorder %v3086, %v3468
  %vm3506 = vcmp.ge.f32.partialorder %v3087, %v3472
  %vm3507 = vcmp.ge.f32.partialorder %v3088, %v3476
  %vm3508 = vcmp.ge.f32.partialorder %v3089, %v3480
  %vm3509 = vcmp.ge.f32.partialorder %v3090, %v3484
  %vm3510 = vcmp.ge.f32.partialorder %v3091, %v3488
  %vm3511 = vcmp.ge.f32.partialorder %v3092, %v3492
  %vm3512 = vcmp.ge.f32.partialorder %v3093, %v3496
  %v3513 = vsel %vm3505, 1, 0
  %v3514 = vsel %vm3506, 1, 0
  %v3515 = vsel %vm3507, 1, 0
  %v3516 = vsel %vm3508, 1, 0
  %v3517 = vsel %vm3509, 1, 0
  %v3518 = vsel %vm3510, 1, 0
  %v3519 = vsel %vm3511, 1, 0
  %v3520 = vsel %vm3512, 1, 0
  %v3521 = vcombine.low %v3513, %v3514
  %v3522 = vcombine.low %v3515, %v3516
  %v3523 = vcombine.low %v3517, %v3518
  %v3524 = vcombine.low %v3519, %v3520
  %v3526 = vunpack.c.l.s4 1966171168
  %v3527 = vunpack.c.0.s8 %v3526
  %v3528 = vlaneseq
  %v3529 = vshrl.u32 %v3528, 7
  %v3530 = vsub.s32 %v3527, %v3529
  %v3531 = vrot.slane %v3521, %v3530
  %v3533 = vunpack.c.l.s4 1966171168
  %v3534 = vunpack.c.0.s8 %v3533
  %v3535 = vlaneseq
  %v3536 = vshrl.u32 %v3535, 7
  %v3537 = vsub.s32 %v3534, %v3536
  %v3538 = vrot.slane %v3522, %v3537
  %v3540 = vunpack.c.l.s4 1966171168
  %v3541 = vunpack.c.0.s8 %v3540
  %v3542 = vlaneseq
  %v3543 = vshrl.u32 %v3542, 7
  %v3544 = vsub.s32 %v3541, %v3543
  %v3545 = vrot.slane %v3523, %v3544
  %v3547 = vunpack.c.l.s4 1966171168
  %v3548 = vunpack.c.0.s8 %v3547
  %v3549 = vlaneseq
  %v3550 = vshrl.u32 %v3549, 7
  %v3551 = vsub.s32 %v3548, %v3550
  %v3552 = vrot.slane %v3524, %v3551
  %v3553 = vcombine.low %v3531, %v3538
  %v3554 = vcombine.high %v3531, %v3538
  %v3555 = vcombine.low %v3545, %v3552
  %v3556 = vcombine.high %v3545, %v3552
  %v3558 = vunpack.c.l.s4 1966171168
  %v3559 = vunpack.c.0.s8 %v3558
  %v3560 = vlaneseq
  %v3561 = vshrl.u32 %v3560, 7
  %v3562 = vsub.s32 %v3559, %v3561
  %v3563 = vrot.slane %v3553, %v3562
  %v3565 = vunpack.c.l.s4 1966171168
  %v3566 = vunpack.c.0.s8 %v3565
  %v3567 = vlaneseq
  %v3568 = vshrl.u32 %v3567, 7
  %v3569 = vsub.s32 %v3566, %v3568
  %v3570 = vrot.slane %v3554, %v3569
  %v3572 = vunpack.c.l.s4 1966171168
  %v3573 = vunpack.c.0.s8 %v3572
  %v3574 = vlaneseq
  %v3575 = vshrl.u32 %v3574, 7
  %v3576 = vsub.s32 %v3573, %v3575
  %v3577 = vrot.slane %v3555, %v3576
  %v3579 = vunpack.c.l.s4 1966171168
  %v3580 = vunpack.c.0.s8 %v3579
  %v3581 = vlaneseq
  %v3582 = vshrl.u32 %v3581, 7
  %v3583 = vsub.s32 %v3580, %v3582
  %v3584 = vrot.slane %v3556, %v3583
  %v3585 = vcombine.low %v3563, %v3577
  %v3586 = vcombine.low %v3570, %v3584
  %v3587 = vadd.s32 %v3585, %v3586
  %v3588 = vand.u32 %v3587, 65535
  %v3589 = vshrl.u32 %v3587, 16
  %v3590 = vcvt.s32.f32 %v3588
  %v3591 = vcvt.s32.f32 %v3589
  %3592 = vadd.xlane.f32.xlu0 %v3590
  %v3593 = vpop.xlane.xlu0 %3592
  %3594 = vadd.xlane.f32.xlu0 %v3591
  %v3595 = vpop.xlane.xlu0 %3594
  %v3596 = vcvt.f32.s32 %v3593
  %v3597 = vcvt.f32.s32 %v3595
  %v3598 = vshll.u32 %v3597, 16
  %v3599 = vadd.s32 %v3598, %v3596
  %vm3600 = vcmp.ge.s32.totalorder %v3599, %v3096
  %v3601 = vsel %vm3600, %v3464, %v3458
  %v3602 = vsub.s32 %v3464, 1
  %v3603 = vsel %vm3600, %v3460, %v3602
  %v3604 = vsub.s32 %v3603, %v3601
  %v3605 = vadd.s32 %v3604, 1
  %v3606 = vshra.s32 %v3605, 1
  %v3607 = vadd.s32 %v3601, %v3606
  %v3608 = vlaneseq
  %v3609 = vshrl.u32 %v3608, 7
  %v3610 = vsub.s32 0, %v3609
  %v3611 = vrot.slane %v3607, %v3610
  %v3612 = vlaneseq
  %v3613 = vshrl.u32 %v3612, 7
  %v3614 = vsub.s32 1, %v3613
  %v3615 = vrot.slane %v3607, %v3614
  %v3616 = vlaneseq
  %v3617 = vshrl.u32 %v3616, 7
  %v3618 = vsub.s32 2, %v3617
  %v3619 = vrot.slane %v3607, %v3618
  %v3620 = vlaneseq
  %v3621 = vshrl.u32 %v3620, 7
  %v3622 = vsub.s32 3, %v3621
  %v3623 = vrot.slane %v3607, %v3622
  %v3624 = vlaneseq
  %v3625 = vshrl.u32 %v3624, 7
  %v3626 = vsub.s32 4, %v3625
  %v3627 = vrot.slane %v3607, %v3626
  %v3628 = vlaneseq
  %v3629 = vshrl.u32 %v3628, 7
  %v3630 = vsub.s32 5, %v3629
  %v3631 = vrot.slane %v3607, %v3630
  %v3632 = vlaneseq
  %v3633 = vshrl.u32 %v3632, 7
  %v3634 = vsub.s32 6, %v3633
  %v3635 = vrot.slane %v3607, %v3634
  %v3636 = vlaneseq
  %v3637 = vshrl.u32 %v3636, 7
  %v3638 = vsub.s32 7, %v3637
  %v3639 = vrot.slane %v3607, %v3638
  %vm3648 = vcmp.ge.f32.partialorder %v3086, %v3611
  %vm3649 = vcmp.ge.f32.partialorder %v3087, %v3615
  %vm3650 = vcmp.ge.f32.partialorder %v3088, %v3619
  %vm3651 = vcmp.ge.f32.partialorder %v3089, %v3623
  %vm3652 = vcmp.ge.f32.partialorder %v3090, %v3627
  %vm3653 = vcmp.ge.f32.partialorder %v3091, %v3631
  %vm3654 = vcmp.ge.f32.partialorder %v3092, %v3635
  %vm3655 = vcmp.ge.f32.partialorder %v3093, %v3639
  %v3656 = vsel %vm3648, 1, 0
  %v3657 = vsel %vm3649, 1, 0
  %v3658 = vsel %vm3650, 1, 0
  %v3659 = vsel %vm3651, 1, 0
  %v3660 = vsel %vm3652, 1, 0
  %v3661 = vsel %vm3653, 1, 0
  %v3662 = vsel %vm3654, 1, 0
  %v3663 = vsel %vm3655, 1, 0
  %v3664 = vcombine.low %v3656, %v3657
  %v3665 = vcombine.low %v3658, %v3659
  %v3666 = vcombine.low %v3660, %v3661
  %v3667 = vcombine.low %v3662, %v3663
  %v3669 = vunpack.c.l.s4 1966171168
  %v3670 = vunpack.c.0.s8 %v3669
  %v3671 = vlaneseq
  %v3672 = vshrl.u32 %v3671, 7
  %v3673 = vsub.s32 %v3670, %v3672
  %v3674 = vrot.slane %v3664, %v3673
  %v3676 = vunpack.c.l.s4 1966171168
  %v3677 = vunpack.c.0.s8 %v3676
  %v3678 = vlaneseq
  %v3679 = vshrl.u32 %v3678, 7
  %v3680 = vsub.s32 %v3677, %v3679
  %v3681 = vrot.slane %v3665, %v3680
  %v3683 = vunpack.c.l.s4 1966171168
  %v3684 = vunpack.c.0.s8 %v3683
  %v3685 = vlaneseq
  %v3686 = vshrl.u32 %v3685, 7
  %v3687 = vsub.s32 %v3684, %v3686
  %v3688 = vrot.slane %v3666, %v3687
  %v3690 = vunpack.c.l.s4 1966171168
  %v3691 = vunpack.c.0.s8 %v3690
  %v3692 = vlaneseq
  %v3693 = vshrl.u32 %v3692, 7
  %v3694 = vsub.s32 %v3691, %v3693
  %v3695 = vrot.slane %v3667, %v3694
  %v3696 = vcombine.low %v3674, %v3681
  %v3697 = vcombine.high %v3674, %v3681
  %v3698 = vcombine.low %v3688, %v3695
  %v3699 = vcombine.high %v3688, %v3695
  %v3701 = vunpack.c.l.s4 1966171168
  %v3702 = vunpack.c.0.s8 %v3701
  %v3703 = vlaneseq
  %v3704 = vshrl.u32 %v3703, 7
  %v3705 = vsub.s32 %v3702, %v3704
  %v3706 = vrot.slane %v3696, %v3705
  %v3708 = vunpack.c.l.s4 1966171168
  %v3709 = vunpack.c.0.s8 %v3708
  %v3710 = vlaneseq
  %v3711 = vshrl.u32 %v3710, 7
  %v3712 = vsub.s32 %v3709, %v3711
  %v3713 = vrot.slane %v3697, %v3712
  %v3715 = vunpack.c.l.s4 1966171168
  %v3716 = vunpack.c.0.s8 %v3715
  %v3717 = vlaneseq
  %v3718 = vshrl.u32 %v3717, 7
  %v3719 = vsub.s32 %v3716, %v3718
  %v3720 = vrot.slane %v3698, %v3719
  %v3722 = vunpack.c.l.s4 1966171168
  %v3723 = vunpack.c.0.s8 %v3722
  %v3724 = vlaneseq
  %v3725 = vshrl.u32 %v3724, 7
  %v3726 = vsub.s32 %v3723, %v3725
  %v3727 = vrot.slane %v3699, %v3726
  %v3728 = vcombine.low %v3706, %v3720
  %v3729 = vcombine.low %v3713, %v3727
  %v3730 = vadd.s32 %v3728, %v3729
  %v3731 = vand.u32 %v3730, 65535
  %v3732 = vshrl.u32 %v3730, 16
  %v3733 = vcvt.s32.f32 %v3731
  %v3734 = vcvt.s32.f32 %v3732
  %3735 = vadd.xlane.f32.xlu0 %v3733
  %v3736 = vpop.xlane.xlu0 %3735
  %3737 = vadd.xlane.f32.xlu0 %v3734
  %v3738 = vpop.xlane.xlu0 %3737
  %v3739 = vcvt.f32.s32 %v3736
  %v3740 = vcvt.f32.s32 %v3738
  %v3741 = vshll.u32 %v3740, 16
  %v3742 = vadd.s32 %v3741, %v3739
  %vm3743 = vcmp.ge.s32.totalorder %v3742, %v3096
  %v3744 = vsel %vm3743, %v3607, %v3601
  %v3745 = vsub.s32 %v3607, 1
  %v3746 = vsel %vm3743, %v3603, %v3745
  %v3747 = vsub.s32 %v3746, %v3744
  %v3748 = vadd.s32 %v3747, 1
  %v3749 = vshra.s32 %v3748, 1
  %v3750 = vadd.s32 %v3744, %v3749
  %v3751 = vlaneseq
  %v3752 = vshrl.u32 %v3751, 7
  %v3753 = vsub.s32 0, %v3752
  %v3754 = vrot.slane %v3750, %v3753
  %v3755 = vlaneseq
  %v3756 = vshrl.u32 %v3755, 7
  %v3757 = vsub.s32 1, %v3756
  %v3758 = vrot.slane %v3750, %v3757
  %v3759 = vlaneseq
  %v3760 = vshrl.u32 %v3759, 7
  %v3761 = vsub.s32 2, %v3760
  %v3762 = vrot.slane %v3750, %v3761
  %v3763 = vlaneseq
  %v3764 = vshrl.u32 %v3763, 7
  %v3765 = vsub.s32 3, %v3764
  %v3766 = vrot.slane %v3750, %v3765
  %v3767 = vlaneseq
  %v3768 = vshrl.u32 %v3767, 7
  %v3769 = vsub.s32 4, %v3768
  %v3770 = vrot.slane %v3750, %v3769
  %v3771 = vlaneseq
  %v3772 = vshrl.u32 %v3771, 7
  %v3773 = vsub.s32 5, %v3772
  %v3774 = vrot.slane %v3750, %v3773
  %v3775 = vlaneseq
  %v3776 = vshrl.u32 %v3775, 7
  %v3777 = vsub.s32 6, %v3776
  %v3778 = vrot.slane %v3750, %v3777
  %v3779 = vlaneseq
  %v3780 = vshrl.u32 %v3779, 7
  %v3781 = vsub.s32 7, %v3780
  %v3782 = vrot.slane %v3750, %v3781
  %vm3791 = vcmp.ge.f32.partialorder %v3086, %v3754
  %vm3792 = vcmp.ge.f32.partialorder %v3087, %v3758
  %vm3793 = vcmp.ge.f32.partialorder %v3088, %v3762
  %vm3794 = vcmp.ge.f32.partialorder %v3089, %v3766
  %vm3795 = vcmp.ge.f32.partialorder %v3090, %v3770
  %vm3796 = vcmp.ge.f32.partialorder %v3091, %v3774
  %vm3797 = vcmp.ge.f32.partialorder %v3092, %v3778
  %vm3798 = vcmp.ge.f32.partialorder %v3093, %v3782
  %v3799 = vsel %vm3791, 1, 0
  %v3800 = vsel %vm3792, 1, 0
  %v3801 = vsel %vm3793, 1, 0
  %v3802 = vsel %vm3794, 1, 0
  %v3803 = vsel %vm3795, 1, 0
  %v3804 = vsel %vm3796, 1, 0
  %v3805 = vsel %vm3797, 1, 0
  %v3806 = vsel %vm3798, 1, 0
  %v3807 = vcombine.low %v3799, %v3800
  %v3808 = vcombine.low %v3801, %v3802
  %v3809 = vcombine.low %v3803, %v3804
  %v3810 = vcombine.low %v3805, %v3806
  %v3812 = vunpack.c.l.s4 1966171168
  %v3813 = vunpack.c.0.s8 %v3812
  %v3814 = vlaneseq
  %v3815 = vshrl.u32 %v3814, 7
  %v3816 = vsub.s32 %v3813, %v3815
  %v3817 = vrot.slane %v3807, %v3816
  %v3819 = vunpack.c.l.s4 1966171168
  %v3820 = vunpack.c.0.s8 %v3819
  %v3821 = vlaneseq
  %v3822 = vshrl.u32 %v3821, 7
  %v3823 = vsub.s32 %v3820, %v3822
  %v3824 = vrot.slane %v3808, %v3823
  %v3826 = vunpack.c.l.s4 1966171168
  %v3827 = vunpack.c.0.s8 %v3826
  %v3828 = vlaneseq
  %v3829 = vshrl.u32 %v3828, 7
  %v3830 = vsub.s32 %v3827, %v3829
  %v3831 = vrot.slane %v3809, %v3830
  %v3833 = vunpack.c.l.s4 1966171168
  %v3834 = vunpack.c.0.s8 %v3833
  %v3835 = vlaneseq
  %v3836 = vshrl.u32 %v3835, 7
  %v3837 = vsub.s32 %v3834, %v3836
  %v3838 = vrot.slane %v3810, %v3837
  %v3839 = vcombine.low %v3817, %v3824
  %v3840 = vcombine.high %v3817, %v3824
  %v3841 = vcombine.low %v3831, %v3838
  %v3842 = vcombine.high %v3831, %v3838
  %v3844 = vunpack.c.l.s4 1966171168
  %v3845 = vunpack.c.0.s8 %v3844
  %v3846 = vlaneseq
  %v3847 = vshrl.u32 %v3846, 7
  %v3848 = vsub.s32 %v3845, %v3847
  %v3849 = vrot.slane %v3839, %v3848
  %v3851 = vunpack.c.l.s4 1966171168
  %v3852 = vunpack.c.0.s8 %v3851
  %v3853 = vlaneseq
  %v3854 = vshrl.u32 %v3853, 7
  %v3855 = vsub.s32 %v3852, %v3854
  %v3856 = vrot.slane %v3840, %v3855
  %v3858 = vunpack.c.l.s4 1966171168
  %v3859 = vunpack.c.0.s8 %v3858
  %v3860 = vlaneseq
  %v3861 = vshrl.u32 %v3860, 7
  %v3862 = vsub.s32 %v3859, %v3861
  %v3863 = vrot.slane %v3841, %v3862
  %v3865 = vunpack.c.l.s4 1966171168
  %v3866 = vunpack.c.0.s8 %v3865
  %v3867 = vlaneseq
  %v3868 = vshrl.u32 %v3867, 7
  %v3869 = vsub.s32 %v3866, %v3868
  %v3870 = vrot.slane %v3842, %v3869
  %v3871 = vcombine.low %v3849, %v3863
  %v3872 = vcombine.low %v3856, %v3870
  %v3873 = vadd.s32 %v3871, %v3872
  %v3874 = vand.u32 %v3873, 65535
  %v3875 = vshrl.u32 %v3873, 16
  %v3876 = vcvt.s32.f32 %v3874
  %v3877 = vcvt.s32.f32 %v3875
  %3878 = vadd.xlane.f32.xlu0 %v3876
  %v3879 = vpop.xlane.xlu0 %3878
  %3880 = vadd.xlane.f32.xlu0 %v3877
  %v3881 = vpop.xlane.xlu0 %3880
  %v3882 = vcvt.f32.s32 %v3879
  %v3883 = vcvt.f32.s32 %v3881
  %v3884 = vshll.u32 %v3883, 16
  %v3885 = vadd.s32 %v3884, %v3882
  %vm3886 = vcmp.ge.s32.totalorder %v3885, %v3096
  %v3887 = vsel %vm3886, %v3750, %v3744
  %v3888 = vsub.s32 %v3750, 1
  %v3889 = vsel %vm3886, %v3746, %v3888
  %v3890 = vsub.s32 %v3889, %v3887
  %v3891 = vadd.s32 %v3890, 1
  %v3892 = vshra.s32 %v3891, 1
  %v3893 = vadd.s32 %v3887, %v3892
  %v3894 = vlaneseq
  %v3895 = vshrl.u32 %v3894, 7
  %v3896 = vsub.s32 0, %v3895
  %v3897 = vrot.slane %v3893, %v3896
  %v3898 = vlaneseq
  %v3899 = vshrl.u32 %v3898, 7
  %v3900 = vsub.s32 1, %v3899
  %v3901 = vrot.slane %v3893, %v3900
  %v3902 = vlaneseq
  %v3903 = vshrl.u32 %v3902, 7
  %v3904 = vsub.s32 2, %v3903
  %v3905 = vrot.slane %v3893, %v3904
  %v3906 = vlaneseq
  %v3907 = vshrl.u32 %v3906, 7
  %v3908 = vsub.s32 3, %v3907
  %v3909 = vrot.slane %v3893, %v3908
  %v3910 = vlaneseq
  %v3911 = vshrl.u32 %v3910, 7
  %v3912 = vsub.s32 4, %v3911
  %v3913 = vrot.slane %v3893, %v3912
  %v3914 = vlaneseq
  %v3915 = vshrl.u32 %v3914, 7
  %v3916 = vsub.s32 5, %v3915
  %v3917 = vrot.slane %v3893, %v3916
  %v3918 = vlaneseq
  %v3919 = vshrl.u32 %v3918, 7
  %v3920 = vsub.s32 6, %v3919
  %v3921 = vrot.slane %v3893, %v3920
  %v3922 = vlaneseq
  %v3923 = vshrl.u32 %v3922, 7
  %v3924 = vsub.s32 7, %v3923
  %v3925 = vrot.slane %v3893, %v3924
  %vm3934 = vcmp.ge.f32.partialorder %v3086, %v3897
  %vm3935 = vcmp.ge.f32.partialorder %v3087, %v3901
  %vm3936 = vcmp.ge.f32.partialorder %v3088, %v3905
  %vm3937 = vcmp.ge.f32.partialorder %v3089, %v3909
  %vm3938 = vcmp.ge.f32.partialorder %v3090, %v3913
  %vm3939 = vcmp.ge.f32.partialorder %v3091, %v3917
  %vm3940 = vcmp.ge.f32.partialorder %v3092, %v3921
  %vm3941 = vcmp.ge.f32.partialorder %v3093, %v3925
  %v3942 = vsel %vm3934, 1, 0
  %v3943 = vsel %vm3935, 1, 0
  %v3944 = vsel %vm3936, 1, 0
  %v3945 = vsel %vm3937, 1, 0
  %v3946 = vsel %vm3938, 1, 0
  %v3947 = vsel %vm3939, 1, 0
  %v3948 = vsel %vm3940, 1, 0
  %v3949 = vsel %vm3941, 1, 0
  %v3950 = vcombine.low %v3942, %v3943
  %v3951 = vcombine.low %v3944, %v3945
  %v3952 = vcombine.low %v3946, %v3947
  %v3953 = vcombine.low %v3948, %v3949
  %v3955 = vunpack.c.l.s4 1966171168
  %v3956 = vunpack.c.0.s8 %v3955
  %v3957 = vlaneseq
  %v3958 = vshrl.u32 %v3957, 7
  %v3959 = vsub.s32 %v3956, %v3958
  %v3960 = vrot.slane %v3950, %v3959
  %v3962 = vunpack.c.l.s4 1966171168
  %v3963 = vunpack.c.0.s8 %v3962
  %v3964 = vlaneseq
  %v3965 = vshrl.u32 %v3964, 7
  %v3966 = vsub.s32 %v3963, %v3965
  %v3967 = vrot.slane %v3951, %v3966
  %v3969 = vunpack.c.l.s4 1966171168
  %v3970 = vunpack.c.0.s8 %v3969
  %v3971 = vlaneseq
  %v3972 = vshrl.u32 %v3971, 7
  %v3973 = vsub.s32 %v3970, %v3972
  %v3974 = vrot.slane %v3952, %v3973
  %v3976 = vunpack.c.l.s4 1966171168
  %v3977 = vunpack.c.0.s8 %v3976
  %v3978 = vlaneseq
  %v3979 = vshrl.u32 %v3978, 7
  %v3980 = vsub.s32 %v3977, %v3979
  %v3981 = vrot.slane %v3953, %v3980
  %v3982 = vcombine.low %v3960, %v3967
  %v3983 = vcombine.high %v3960, %v3967
  %v3984 = vcombine.low %v3974, %v3981
  %v3985 = vcombine.high %v3974, %v3981
  %v3987 = vunpack.c.l.s4 1966171168
  %v3988 = vunpack.c.0.s8 %v3987
  %v3989 = vlaneseq
  %v3990 = vshrl.u32 %v3989, 7
  %v3991 = vsub.s32 %v3988, %v3990
  %v3992 = vrot.slane %v3982, %v3991
  %v3994 = vunpack.c.l.s4 1966171168
  %v3995 = vunpack.c.0.s8 %v3994
  %v3996 = vlaneseq
  %v3997 = vshrl.u32 %v3996, 7
  %v3998 = vsub.s32 %v3995, %v3997
  %v3999 = vrot.slane %v3983, %v3998
  %v4001 = vunpack.c.l.s4 1966171168
  %v4002 = vunpack.c.0.s8 %v4001
  %v4003 = vlaneseq
  %v4004 = vshrl.u32 %v4003, 7
  %v4005 = vsub.s32 %v4002, %v4004
  %v4006 = vrot.slane %v3984, %v4005
  %v4008 = vunpack.c.l.s4 1966171168
  %v4009 = vunpack.c.0.s8 %v4008
  %v4010 = vlaneseq
  %v4011 = vshrl.u32 %v4010, 7
  %v4012 = vsub.s32 %v4009, %v4011
  %v4013 = vrot.slane %v3985, %v4012
  %v4014 = vcombine.low %v3992, %v4006
  %v4015 = vcombine.low %v3999, %v4013
  %v4016 = vadd.s32 %v4014, %v4015
  %v4017 = vand.u32 %v4016, 65535
  %v4018 = vshrl.u32 %v4016, 16
  %v4019 = vcvt.s32.f32 %v4017
  %v4020 = vcvt.s32.f32 %v4018
  %4021 = vadd.xlane.f32.xlu0 %v4019
  %v4022 = vpop.xlane.xlu0 %4021
  %4023 = vadd.xlane.f32.xlu0 %v4020
  %v4024 = vpop.xlane.xlu0 %4023
  %v4025 = vcvt.f32.s32 %v4022
  %v4026 = vcvt.f32.s32 %v4024
  %v4027 = vshll.u32 %v4026, 16
  %v4028 = vadd.s32 %v4027, %v4025
  %vm4029 = vcmp.ge.s32.totalorder %v4028, %v3096
  %v4030 = vsel %vm4029, %v3893, %v3887
  %v4031 = vsub.s32 %v3893, 1
  %v4032 = vsel %vm4029, %v3889, %v4031
  %v4033 = vsub.s32 %v4032, %v4030
  %v4034 = vadd.s32 %v4033, 1
  %v4035 = vshra.s32 %v4034, 1
  %v4036 = vadd.s32 %v4030, %v4035
  %v4037 = vlaneseq
  %v4038 = vshrl.u32 %v4037, 7
  %v4039 = vsub.s32 0, %v4038
  %v4040 = vrot.slane %v4036, %v4039
  %v4041 = vlaneseq
  %v4042 = vshrl.u32 %v4041, 7
  %v4043 = vsub.s32 1, %v4042
  %v4044 = vrot.slane %v4036, %v4043
  %v4045 = vlaneseq
  %v4046 = vshrl.u32 %v4045, 7
  %v4047 = vsub.s32 2, %v4046
  %v4048 = vrot.slane %v4036, %v4047
  %v4049 = vlaneseq
  %v4050 = vshrl.u32 %v4049, 7
  %v4051 = vsub.s32 3, %v4050
  %v4052 = vrot.slane %v4036, %v4051
  %v4053 = vlaneseq
  %v4054 = vshrl.u32 %v4053, 7
  %v4055 = vsub.s32 4, %v4054
  %v4056 = vrot.slane %v4036, %v4055
  %v4057 = vlaneseq
  %v4058 = vshrl.u32 %v4057, 7
  %v4059 = vsub.s32 5, %v4058
  %v4060 = vrot.slane %v4036, %v4059
  %v4061 = vlaneseq
  %v4062 = vshrl.u32 %v4061, 7
  %v4063 = vsub.s32 6, %v4062
  %v4064 = vrot.slane %v4036, %v4063
  %v4065 = vlaneseq
  %v4066 = vshrl.u32 %v4065, 7
  %v4067 = vsub.s32 7, %v4066
  %v4068 = vrot.slane %v4036, %v4067
  %vm4077 = vcmp.ge.f32.partialorder %v3086, %v4040
  %vm4078 = vcmp.ge.f32.partialorder %v3087, %v4044
  %vm4079 = vcmp.ge.f32.partialorder %v3088, %v4048
  %vm4080 = vcmp.ge.f32.partialorder %v3089, %v4052
  %vm4081 = vcmp.ge.f32.partialorder %v3090, %v4056
  %vm4082 = vcmp.ge.f32.partialorder %v3091, %v4060
  %vm4083 = vcmp.ge.f32.partialorder %v3092, %v4064
  %vm4084 = vcmp.ge.f32.partialorder %v3093, %v4068
  %v4085 = vsel %vm4077, 1, 0
  %v4086 = vsel %vm4078, 1, 0
  %v4087 = vsel %vm4079, 1, 0
  %v4088 = vsel %vm4080, 1, 0
  %v4089 = vsel %vm4081, 1, 0
  %v4090 = vsel %vm4082, 1, 0
  %v4091 = vsel %vm4083, 1, 0
  %v4092 = vsel %vm4084, 1, 0
  %v4093 = vcombine.low %v4085, %v4086
  %v4094 = vcombine.low %v4087, %v4088
  %v4095 = vcombine.low %v4089, %v4090
  %v4096 = vcombine.low %v4091, %v4092
  %v4098 = vunpack.c.l.s4 1966171168
  %v4099 = vunpack.c.0.s8 %v4098
  %v4100 = vlaneseq
  %v4101 = vshrl.u32 %v4100, 7
  %v4102 = vsub.s32 %v4099, %v4101
  %v4103 = vrot.slane %v4093, %v4102
  %v4105 = vunpack.c.l.s4 1966171168
  %v4106 = vunpack.c.0.s8 %v4105
  %v4107 = vlaneseq
  %v4108 = vshrl.u32 %v4107, 7
  %v4109 = vsub.s32 %v4106, %v4108
  %v4110 = vrot.slane %v4094, %v4109
  %v4112 = vunpack.c.l.s4 1966171168
  %v4113 = vunpack.c.0.s8 %v4112
  %v4114 = vlaneseq
  %v4115 = vshrl.u32 %v4114, 7
  %v4116 = vsub.s32 %v4113, %v4115
  %v4117 = vrot.slane %v4095, %v4116
  %v4119 = vunpack.c.l.s4 1966171168
  %v4120 = vunpack.c.0.s8 %v4119
  %v4121 = vlaneseq
  %v4122 = vshrl.u32 %v4121, 7
  %v4123 = vsub.s32 %v4120, %v4122
  %v4124 = vrot.slane %v4096, %v4123
  %v4125 = vcombine.low %v4103, %v4110
  %v4126 = vcombine.high %v4103, %v4110
  %v4127 = vcombine.low %v4117, %v4124
  %v4128 = vcombine.high %v4117, %v4124
  %v4130 = vunpack.c.l.s4 1966171168
  %v4131 = vunpack.c.0.s8 %v4130
  %v4132 = vlaneseq
  %v4133 = vshrl.u32 %v4132, 7
  %v4134 = vsub.s32 %v4131, %v4133
  %v4135 = vrot.slane %v4125, %v4134
  %v4137 = vunpack.c.l.s4 1966171168
  %v4138 = vunpack.c.0.s8 %v4137
  %v4139 = vlaneseq
  %v4140 = vshrl.u32 %v4139, 7
  %v4141 = vsub.s32 %v4138, %v4140
  %v4142 = vrot.slane %v4126, %v4141
  %v4144 = vunpack.c.l.s4 1966171168
  %v4145 = vunpack.c.0.s8 %v4144
  %v4146 = vlaneseq
  %v4147 = vshrl.u32 %v4146, 7
  %v4148 = vsub.s32 %v4145, %v4147
  %v4149 = vrot.slane %v4127, %v4148
  %v4151 = vunpack.c.l.s4 1966171168
  %v4152 = vunpack.c.0.s8 %v4151
  %v4153 = vlaneseq
  %v4154 = vshrl.u32 %v4153, 7
  %v4155 = vsub.s32 %v4152, %v4154
  %v4156 = vrot.slane %v4128, %v4155
  %v4157 = vcombine.low %v4135, %v4149
  %v4158 = vcombine.low %v4142, %v4156
  %v4159 = vadd.s32 %v4157, %v4158
  %v4160 = vand.u32 %v4159, 65535
  %v4161 = vshrl.u32 %v4159, 16
  %v4162 = vcvt.s32.f32 %v4160
  %v4163 = vcvt.s32.f32 %v4161
  %4164 = vadd.xlane.f32.xlu0 %v4162
  %v4165 = vpop.xlane.xlu0 %4164
  %4166 = vadd.xlane.f32.xlu0 %v4163
  %v4167 = vpop.xlane.xlu0 %4166
  %v4168 = vcvt.f32.s32 %v4165
  %v4169 = vcvt.f32.s32 %v4167
  %v4170 = vshll.u32 %v4169, 16
  %v4171 = vadd.s32 %v4170, %v4168
  %vm4172 = vcmp.ge.s32.totalorder %v4171, %v3096
  %v4173 = vsel %vm4172, %v4036, %v4030
  %v4174 = vsub.s32 %v4036, 1
  %v4175 = vsel %vm4172, %v4032, %v4174
  %v4176 = vsub.s32 %v4175, %v4173
  %v4177 = vadd.s32 %v4176, 1
  %v4178 = vshra.s32 %v4177, 1
  %v4179 = vadd.s32 %v4173, %v4178
  %v4180 = vlaneseq
  %v4181 = vshrl.u32 %v4180, 7
  %v4182 = vsub.s32 0, %v4181
  %v4183 = vrot.slane %v4179, %v4182
  %v4184 = vlaneseq
  %v4185 = vshrl.u32 %v4184, 7
  %v4186 = vsub.s32 1, %v4185
  %v4187 = vrot.slane %v4179, %v4186
  %v4188 = vlaneseq
  %v4189 = vshrl.u32 %v4188, 7
  %v4190 = vsub.s32 2, %v4189
  %v4191 = vrot.slane %v4179, %v4190
  %v4192 = vlaneseq
  %v4193 = vshrl.u32 %v4192, 7
  %v4194 = vsub.s32 3, %v4193
  %v4195 = vrot.slane %v4179, %v4194
  %v4196 = vlaneseq
  %v4197 = vshrl.u32 %v4196, 7
  %v4198 = vsub.s32 4, %v4197
  %v4199 = vrot.slane %v4179, %v4198
  %v4200 = vlaneseq
  %v4201 = vshrl.u32 %v4200, 7
  %v4202 = vsub.s32 5, %v4201
  %v4203 = vrot.slane %v4179, %v4202
  %v4204 = vlaneseq
  %v4205 = vshrl.u32 %v4204, 7
  %v4206 = vsub.s32 6, %v4205
  %v4207 = vrot.slane %v4179, %v4206
  %v4208 = vlaneseq
  %v4209 = vshrl.u32 %v4208, 7
  %v4210 = vsub.s32 7, %v4209
  %v4211 = vrot.slane %v4179, %v4210
  %vm4220 = vcmp.ge.f32.partialorder %v3086, %v4183
  %vm4221 = vcmp.ge.f32.partialorder %v3087, %v4187
  %vm4222 = vcmp.ge.f32.partialorder %v3088, %v4191
  %vm4223 = vcmp.ge.f32.partialorder %v3089, %v4195
  %vm4224 = vcmp.ge.f32.partialorder %v3090, %v4199
  %vm4225 = vcmp.ge.f32.partialorder %v3091, %v4203
  %vm4226 = vcmp.ge.f32.partialorder %v3092, %v4207
  %vm4227 = vcmp.ge.f32.partialorder %v3093, %v4211
  %v4228 = vsel %vm4220, 1, 0
  %v4229 = vsel %vm4221, 1, 0
  %v4230 = vsel %vm4222, 1, 0
  %v4231 = vsel %vm4223, 1, 0
  %v4232 = vsel %vm4224, 1, 0
  %v4233 = vsel %vm4225, 1, 0
  %v4234 = vsel %vm4226, 1, 0
  %v4235 = vsel %vm4227, 1, 0
  %v4236 = vcombine.low %v4228, %v4229
  %v4237 = vcombine.low %v4230, %v4231
  %v4238 = vcombine.low %v4232, %v4233
  %v4239 = vcombine.low %v4234, %v4235
  %v4241 = vunpack.c.l.s4 1966171168
  %v4242 = vunpack.c.0.s8 %v4241
  %v4243 = vlaneseq
  %v4244 = vshrl.u32 %v4243, 7
  %v4245 = vsub.s32 %v4242, %v4244
  %v4246 = vrot.slane %v4236, %v4245
  %v4248 = vunpack.c.l.s4 1966171168
  %v4249 = vunpack.c.0.s8 %v4248
  %v4250 = vlaneseq
  %v4251 = vshrl.u32 %v4250, 7
  %v4252 = vsub.s32 %v4249, %v4251
  %v4253 = vrot.slane %v4237, %v4252
  %v4255 = vunpack.c.l.s4 1966171168
  %v4256 = vunpack.c.0.s8 %v4255
  %v4257 = vlaneseq
  %v4258 = vshrl.u32 %v4257, 7
  %v4259 = vsub.s32 %v4256, %v4258
  %v4260 = vrot.slane %v4238, %v4259
  %v4262 = vunpack.c.l.s4 1966171168
  %v4263 = vunpack.c.0.s8 %v4262
  %v4264 = vlaneseq
  %v4265 = vshrl.u32 %v4264, 7
  %v4266 = vsub.s32 %v4263, %v4265
  %v4267 = vrot.slane %v4239, %v4266
  %v4268 = vcombine.low %v4246, %v4253
  %v4269 = vcombine.high %v4246, %v4253
  %v4270 = vcombine.low %v4260, %v4267
  %v4271 = vcombine.high %v4260, %v4267
  %v4273 = vunpack.c.l.s4 1966171168
  %v4274 = vunpack.c.0.s8 %v4273
  %v4275 = vlaneseq
  %v4276 = vshrl.u32 %v4275, 7
  %v4277 = vsub.s32 %v4274, %v4276
  %v4278 = vrot.slane %v4268, %v4277
  %v4280 = vunpack.c.l.s4 1966171168
  %v4281 = vunpack.c.0.s8 %v4280
  %v4282 = vlaneseq
  %v4283 = vshrl.u32 %v4282, 7
  %v4284 = vsub.s32 %v4281, %v4283
  %v4285 = vrot.slane %v4269, %v4284
  %v4287 = vunpack.c.l.s4 1966171168
  %v4288 = vunpack.c.0.s8 %v4287
  %v4289 = vlaneseq
  %v4290 = vshrl.u32 %v4289, 7
  %v4291 = vsub.s32 %v4288, %v4290
  %v4292 = vrot.slane %v4270, %v4291
  %v4294 = vunpack.c.l.s4 1966171168
  %v4295 = vunpack.c.0.s8 %v4294
  %v4296 = vlaneseq
  %v4297 = vshrl.u32 %v4296, 7
  %v4298 = vsub.s32 %v4295, %v4297
  %v4299 = vrot.slane %v4271, %v4298
  %v4300 = vcombine.low %v4278, %v4292
  %v4301 = vcombine.low %v4285, %v4299
  %v4302 = vadd.s32 %v4300, %v4301
  %v4303 = vand.u32 %v4302, 65535
  %v4304 = vshrl.u32 %v4302, 16
  %v4305 = vcvt.s32.f32 %v4303
  %v4306 = vcvt.s32.f32 %v4304
  %4307 = vadd.xlane.f32.xlu0 %v4305
  %v4308 = vpop.xlane.xlu0 %4307
  %4309 = vadd.xlane.f32.xlu0 %v4306
  %v4310 = vpop.xlane.xlu0 %4309
  %v4311 = vcvt.f32.s32 %v4308
  %v4312 = vcvt.f32.s32 %v4310
  %v4313 = vshll.u32 %v4312, 16
  %v4314 = vadd.s32 %v4313, %v4311
  %vm4315 = vcmp.ge.s32.totalorder %v4314, %v3096
  %v4316 = vsel %vm4315, %v4179, %v4173
  %v4317 = vsub.s32 %v4179, 1
  %v4318 = vsel %vm4315, %v4175, %v4317
  %v4319 = vsub.s32 %v4318, %v4316
  %v4320 = vadd.s32 %v4319, 1
  %v4321 = vshra.s32 %v4320, 1
  %v4322 = vadd.s32 %v4316, %v4321
  %v4323 = vlaneseq
  %v4324 = vshrl.u32 %v4323, 7
  %v4325 = vsub.s32 0, %v4324
  %v4326 = vrot.slane %v4322, %v4325
  %v4327 = vlaneseq
  %v4328 = vshrl.u32 %v4327, 7
  %v4329 = vsub.s32 1, %v4328
  %v4330 = vrot.slane %v4322, %v4329
  %v4331 = vlaneseq
  %v4332 = vshrl.u32 %v4331, 7
  %v4333 = vsub.s32 2, %v4332
  %v4334 = vrot.slane %v4322, %v4333
  %v4335 = vlaneseq
  %v4336 = vshrl.u32 %v4335, 7
  %v4337 = vsub.s32 3, %v4336
  %v4338 = vrot.slane %v4322, %v4337
  %v4339 = vlaneseq
  %v4340 = vshrl.u32 %v4339, 7
  %v4341 = vsub.s32 4, %v4340
  %v4342 = vrot.slane %v4322, %v4341
  %v4343 = vlaneseq
  %v4344 = vshrl.u32 %v4343, 7
  %v4345 = vsub.s32 5, %v4344
  %v4346 = vrot.slane %v4322, %v4345
  %v4347 = vlaneseq
  %v4348 = vshrl.u32 %v4347, 7
  %v4349 = vsub.s32 6, %v4348
  %v4350 = vrot.slane %v4322, %v4349
  %v4351 = vlaneseq
  %v4352 = vshrl.u32 %v4351, 7
  %v4353 = vsub.s32 7, %v4352
  %v4354 = vrot.slane %v4322, %v4353
  %vm4363 = vcmp.ge.f32.partialorder %v3086, %v4326
  %vm4364 = vcmp.ge.f32.partialorder %v3087, %v4330
  %vm4365 = vcmp.ge.f32.partialorder %v3088, %v4334
  %vm4366 = vcmp.ge.f32.partialorder %v3089, %v4338
  %vm4367 = vcmp.ge.f32.partialorder %v3090, %v4342
  %vm4368 = vcmp.ge.f32.partialorder %v3091, %v4346
  %vm4369 = vcmp.ge.f32.partialorder %v3092, %v4350
  %vm4370 = vcmp.ge.f32.partialorder %v3093, %v4354
  %v4371 = vsel %vm4363, 1, 0
  %v4372 = vsel %vm4364, 1, 0
  %v4373 = vsel %vm4365, 1, 0
  %v4374 = vsel %vm4366, 1, 0
  %v4375 = vsel %vm4367, 1, 0
  %v4376 = vsel %vm4368, 1, 0
  %v4377 = vsel %vm4369, 1, 0
  %v4378 = vsel %vm4370, 1, 0
  %v4379 = vcombine.low %v4371, %v4372
  %v4380 = vcombine.low %v4373, %v4374
  %v4381 = vcombine.low %v4375, %v4376
  %v4382 = vcombine.low %v4377, %v4378
  %v4384 = vunpack.c.l.s4 1966171168
  %v4385 = vunpack.c.0.s8 %v4384
  %v4386 = vlaneseq
  %v4387 = vshrl.u32 %v4386, 7
  %v4388 = vsub.s32 %v4385, %v4387
  %v4389 = vrot.slane %v4379, %v4388
  %v4391 = vunpack.c.l.s4 1966171168
  %v4392 = vunpack.c.0.s8 %v4391
  %v4393 = vlaneseq
  %v4394 = vshrl.u32 %v4393, 7
  %v4395 = vsub.s32 %v4392, %v4394
  %v4396 = vrot.slane %v4380, %v4395
  %v4398 = vunpack.c.l.s4 1966171168
  %v4399 = vunpack.c.0.s8 %v4398
  %v4400 = vlaneseq
  %v4401 = vshrl.u32 %v4400, 7
  %v4402 = vsub.s32 %v4399, %v4401
  %v4403 = vrot.slane %v4381, %v4402
  %v4405 = vunpack.c.l.s4 1966171168
  %v4406 = vunpack.c.0.s8 %v4405
  %v4407 = vlaneseq
  %v4408 = vshrl.u32 %v4407, 7
  %v4409 = vsub.s32 %v4406, %v4408
  %v4410 = vrot.slane %v4382, %v4409
  %v4411 = vcombine.low %v4389, %v4396
  %v4412 = vcombine.high %v4389, %v4396
  %v4413 = vcombine.low %v4403, %v4410
  %v4414 = vcombine.high %v4403, %v4410
  %v4416 = vunpack.c.l.s4 1966171168
  %v4417 = vunpack.c.0.s8 %v4416
  %v4418 = vlaneseq
  %v4419 = vshrl.u32 %v4418, 7
  %v4420 = vsub.s32 %v4417, %v4419
  %v4421 = vrot.slane %v4411, %v4420
  %v4423 = vunpack.c.l.s4 1966171168
  %v4424 = vunpack.c.0.s8 %v4423
  %v4425 = vlaneseq
  %v4426 = vshrl.u32 %v4425, 7
  %v4427 = vsub.s32 %v4424, %v4426
  %v4428 = vrot.slane %v4412, %v4427
  %v4430 = vunpack.c.l.s4 1966171168
  %v4431 = vunpack.c.0.s8 %v4430
  %v4432 = vlaneseq
  %v4433 = vshrl.u32 %v4432, 7
  %v4434 = vsub.s32 %v4431, %v4433
  %v4435 = vrot.slane %v4413, %v4434
  %v4437 = vunpack.c.l.s4 1966171168
  %v4438 = vunpack.c.0.s8 %v4437
  %v4439 = vlaneseq
  %v4440 = vshrl.u32 %v4439, 7
  %v4441 = vsub.s32 %v4438, %v4440
  %v4442 = vrot.slane %v4414, %v4441
  %v4443 = vcombine.low %v4421, %v4435
  %v4444 = vcombine.low %v4428, %v4442
  %v4445 = vadd.s32 %v4443, %v4444
  %v4446 = vand.u32 %v4445, 65535
  %v4447 = vshrl.u32 %v4445, 16
  %v4448 = vcvt.s32.f32 %v4446
  %v4449 = vcvt.s32.f32 %v4447
  %4450 = vadd.xlane.f32.xlu0 %v4448
  %v4451 = vpop.xlane.xlu0 %4450
  %4452 = vadd.xlane.f32.xlu0 %v4449
  %v4453 = vpop.xlane.xlu0 %4452
  %v4454 = vcvt.f32.s32 %v4451
  %v4455 = vcvt.f32.s32 %v4453
  %v4456 = vshll.u32 %v4455, 16
  %v4457 = vadd.s32 %v4456, %v4454
  %vm4458 = vcmp.ge.s32.totalorder %v4457, %v3096
  %v4459 = vsel %vm4458, %v4322, %v4316
  %v4460 = vsub.s32 %v4322, 1
  %v4461 = vsel %vm4458, %v4318, %v4460
  %v4462 = vsub.s32 %v4461, %v4459
  %v4463 = vadd.s32 %v4462, 1
  %v4464 = vshra.s32 %v4463, 1
  %v4465 = vadd.s32 %v4459, %v4464
  %v4466 = vlaneseq
  %v4467 = vshrl.u32 %v4466, 7
  %v4468 = vsub.s32 0, %v4467
  %v4469 = vrot.slane %v4465, %v4468
  %v4470 = vlaneseq
  %v4471 = vshrl.u32 %v4470, 7
  %v4472 = vsub.s32 1, %v4471
  %v4473 = vrot.slane %v4465, %v4472
  %v4474 = vlaneseq
  %v4475 = vshrl.u32 %v4474, 7
  %v4476 = vsub.s32 2, %v4475
  %v4477 = vrot.slane %v4465, %v4476
  %v4478 = vlaneseq
  %v4479 = vshrl.u32 %v4478, 7
  %v4480 = vsub.s32 3, %v4479
  %v4481 = vrot.slane %v4465, %v4480
  %v4482 = vlaneseq
  %v4483 = vshrl.u32 %v4482, 7
  %v4484 = vsub.s32 4, %v4483
  %v4485 = vrot.slane %v4465, %v4484
  %v4486 = vlaneseq
  %v4487 = vshrl.u32 %v4486, 7
  %v4488 = vsub.s32 5, %v4487
  %v4489 = vrot.slane %v4465, %v4488
  %v4490 = vlaneseq
  %v4491 = vshrl.u32 %v4490, 7
  %v4492 = vsub.s32 6, %v4491
  %v4493 = vrot.slane %v4465, %v4492
  %v4494 = vlaneseq
  %v4495 = vshrl.u32 %v4494, 7
  %v4496 = vsub.s32 7, %v4495
  %v4497 = vrot.slane %v4465, %v4496
  %vm4506 = vcmp.ge.f32.partialorder %v3086, %v4469
  %vm4507 = vcmp.ge.f32.partialorder %v3087, %v4473
  %vm4508 = vcmp.ge.f32.partialorder %v3088, %v4477
  %vm4509 = vcmp.ge.f32.partialorder %v3089, %v4481
  %vm4510 = vcmp.ge.f32.partialorder %v3090, %v4485
  %vm4511 = vcmp.ge.f32.partialorder %v3091, %v4489
  %vm4512 = vcmp.ge.f32.partialorder %v3092, %v4493
  %vm4513 = vcmp.ge.f32.partialorder %v3093, %v4497
  %v4514 = vsel %vm4506, 1, 0
  %v4515 = vsel %vm4507, 1, 0
  %v4516 = vsel %vm4508, 1, 0
  %v4517 = vsel %vm4509, 1, 0
  %v4518 = vsel %vm4510, 1, 0
  %v4519 = vsel %vm4511, 1, 0
  %v4520 = vsel %vm4512, 1, 0
  %v4521 = vsel %vm4513, 1, 0
  %v4522 = vcombine.low %v4514, %v4515
  %v4523 = vcombine.low %v4516, %v4517
  %v4524 = vcombine.low %v4518, %v4519
  %v4525 = vcombine.low %v4520, %v4521
  %v4527 = vunpack.c.l.s4 1966171168
  %v4528 = vunpack.c.0.s8 %v4527
  %v4529 = vlaneseq
  %v4530 = vshrl.u32 %v4529, 7
  %v4531 = vsub.s32 %v4528, %v4530
  %v4532 = vrot.slane %v4522, %v4531
  %v4534 = vunpack.c.l.s4 1966171168
  %v4535 = vunpack.c.0.s8 %v4534
  %v4536 = vlaneseq
  %v4537 = vshrl.u32 %v4536, 7
  %v4538 = vsub.s32 %v4535, %v4537
  %v4539 = vrot.slane %v4523, %v4538
  %v4541 = vunpack.c.l.s4 1966171168
  %v4542 = vunpack.c.0.s8 %v4541
  %v4543 = vlaneseq
  %v4544 = vshrl.u32 %v4543, 7
  %v4545 = vsub.s32 %v4542, %v4544
  %v4546 = vrot.slane %v4524, %v4545
  %v4548 = vunpack.c.l.s4 1966171168
  %v4549 = vunpack.c.0.s8 %v4548
  %v4550 = vlaneseq
  %v4551 = vshrl.u32 %v4550, 7
  %v4552 = vsub.s32 %v4549, %v4551
  %v4553 = vrot.slane %v4525, %v4552
  %v4554 = vcombine.low %v4532, %v4539
  %v4555 = vcombine.high %v4532, %v4539
  %v4556 = vcombine.low %v4546, %v4553
  %v4557 = vcombine.high %v4546, %v4553
  %v4559 = vunpack.c.l.s4 1966171168
  %v4560 = vunpack.c.0.s8 %v4559
  %v4561 = vlaneseq
  %v4562 = vshrl.u32 %v4561, 7
  %v4563 = vsub.s32 %v4560, %v4562
  %v4564 = vrot.slane %v4554, %v4563
  %v4566 = vunpack.c.l.s4 1966171168
  %v4567 = vunpack.c.0.s8 %v4566
  %v4568 = vlaneseq
  %v4569 = vshrl.u32 %v4568, 7
  %v4570 = vsub.s32 %v4567, %v4569
  %v4571 = vrot.slane %v4555, %v4570
  %v4573 = vunpack.c.l.s4 1966171168
  %v4574 = vunpack.c.0.s8 %v4573
  %v4575 = vlaneseq
  %v4576 = vshrl.u32 %v4575, 7
  %v4577 = vsub.s32 %v4574, %v4576
  %v4578 = vrot.slane %v4556, %v4577
  %v4580 = vunpack.c.l.s4 1966171168
  %v4581 = vunpack.c.0.s8 %v4580
  %v4582 = vlaneseq
  %v4583 = vshrl.u32 %v4582, 7
  %v4584 = vsub.s32 %v4581, %v4583
  %v4585 = vrot.slane %v4557, %v4584
  %v4586 = vcombine.low %v4564, %v4578
  %v4587 = vcombine.low %v4571, %v4585
  %v4588 = vadd.s32 %v4586, %v4587
  %v4589 = vand.u32 %v4588, 65535
  %v4590 = vshrl.u32 %v4588, 16
  %v4591 = vcvt.s32.f32 %v4589
  %v4592 = vcvt.s32.f32 %v4590
  %4593 = vadd.xlane.f32.xlu0 %v4591
  %v4594 = vpop.xlane.xlu0 %4593
  %4595 = vadd.xlane.f32.xlu0 %v4592
  %v4596 = vpop.xlane.xlu0 %4595
  %v4597 = vcvt.f32.s32 %v4594
  %v4598 = vcvt.f32.s32 %v4596
  %v4599 = vshll.u32 %v4598, 16
  %v4600 = vadd.s32 %v4599, %v4597
  %vm4601 = vcmp.ge.s32.totalorder %v4600, %v3096
  %v4602 = vsel %vm4601, %v4465, %v4459
  %v4603 = vsub.s32 %v4465, 1
  %v4604 = vsel %vm4601, %v4461, %v4603
  %v4605 = vsub.s32 %v4604, %v4602
  %v4606 = vadd.s32 %v4605, 1
  %v4607 = vshra.s32 %v4606, 1
  %v4608 = vadd.s32 %v4602, %v4607
  %v4609 = vlaneseq
  %v4610 = vshrl.u32 %v4609, 7
  %v4611 = vsub.s32 0, %v4610
  %v4612 = vrot.slane %v4608, %v4611
  %v4613 = vlaneseq
  %v4614 = vshrl.u32 %v4613, 7
  %v4615 = vsub.s32 1, %v4614
  %v4616 = vrot.slane %v4608, %v4615
  %v4617 = vlaneseq
  %v4618 = vshrl.u32 %v4617, 7
  %v4619 = vsub.s32 2, %v4618
  %v4620 = vrot.slane %v4608, %v4619
  %v4621 = vlaneseq
  %v4622 = vshrl.u32 %v4621, 7
  %v4623 = vsub.s32 3, %v4622
  %v4624 = vrot.slane %v4608, %v4623
  %v4625 = vlaneseq
  %v4626 = vshrl.u32 %v4625, 7
  %v4627 = vsub.s32 4, %v4626
  %v4628 = vrot.slane %v4608, %v4627
  %v4629 = vlaneseq
  %v4630 = vshrl.u32 %v4629, 7
  %v4631 = vsub.s32 5, %v4630
  %v4632 = vrot.slane %v4608, %v4631
  %v4633 = vlaneseq
  %v4634 = vshrl.u32 %v4633, 7
  %v4635 = vsub.s32 6, %v4634
  %v4636 = vrot.slane %v4608, %v4635
  %v4637 = vlaneseq
  %v4638 = vshrl.u32 %v4637, 7
  %v4639 = vsub.s32 7, %v4638
  %v4640 = vrot.slane %v4608, %v4639
  %vm4649 = vcmp.ge.f32.partialorder %v3086, %v4612
  %vm4650 = vcmp.ge.f32.partialorder %v3087, %v4616
  %vm4651 = vcmp.ge.f32.partialorder %v3088, %v4620
  %vm4652 = vcmp.ge.f32.partialorder %v3089, %v4624
  %vm4653 = vcmp.ge.f32.partialorder %v3090, %v4628
  %vm4654 = vcmp.ge.f32.partialorder %v3091, %v4632
  %vm4655 = vcmp.ge.f32.partialorder %v3092, %v4636
  %vm4656 = vcmp.ge.f32.partialorder %v3093, %v4640
  %v4657 = vsel %vm4649, 1, 0
  %v4658 = vsel %vm4650, 1, 0
  %v4659 = vsel %vm4651, 1, 0
  %v4660 = vsel %vm4652, 1, 0
  %v4661 = vsel %vm4653, 1, 0
  %v4662 = vsel %vm4654, 1, 0
  %v4663 = vsel %vm4655, 1, 0
  %v4664 = vsel %vm4656, 1, 0
  %v4665 = vcombine.low %v4657, %v4658
  %v4666 = vcombine.low %v4659, %v4660
  %v4667 = vcombine.low %v4661, %v4662
  %v4668 = vcombine.low %v4663, %v4664
  %v4670 = vunpack.c.l.s4 1966171168
  %v4671 = vunpack.c.0.s8 %v4670
  %v4672 = vlaneseq
  %v4673 = vshrl.u32 %v4672, 7
  %v4674 = vsub.s32 %v4671, %v4673
  %v4675 = vrot.slane %v4665, %v4674
  %v4677 = vunpack.c.l.s4 1966171168
  %v4678 = vunpack.c.0.s8 %v4677
  %v4679 = vlaneseq
  %v4680 = vshrl.u32 %v4679, 7
  %v4681 = vsub.s32 %v4678, %v4680
  %v4682 = vrot.slane %v4666, %v4681
  %v4684 = vunpack.c.l.s4 1966171168
  %v4685 = vunpack.c.0.s8 %v4684
  %v4686 = vlaneseq
  %v4687 = vshrl.u32 %v4686, 7
  %v4688 = vsub.s32 %v4685, %v4687
  %v4689 = vrot.slane %v4667, %v4688
  %v4691 = vunpack.c.l.s4 1966171168
  %v4692 = vunpack.c.0.s8 %v4691
  %v4693 = vlaneseq
  %v4694 = vshrl.u32 %v4693, 7
  %v4695 = vsub.s32 %v4692, %v4694
  %v4696 = vrot.slane %v4668, %v4695
  %v4697 = vcombine.low %v4675, %v4682
  %v4698 = vcombine.high %v4675, %v4682
  %v4699 = vcombine.low %v4689, %v4696
  %v4700 = vcombine.high %v4689, %v4696
  %v4702 = vunpack.c.l.s4 1966171168
  %v4703 = vunpack.c.0.s8 %v4702
  %v4704 = vlaneseq
  %v4705 = vshrl.u32 %v4704, 7
  %v4706 = vsub.s32 %v4703, %v4705
  %v4707 = vrot.slane %v4697, %v4706
  %v4709 = vunpack.c.l.s4 1966171168
  %v4710 = vunpack.c.0.s8 %v4709
  %v4711 = vlaneseq
  %v4712 = vshrl.u32 %v4711, 7
  %v4713 = vsub.s32 %v4710, %v4712
  %v4714 = vrot.slane %v4698, %v4713
  %v4716 = vunpack.c.l.s4 1966171168
  %v4717 = vunpack.c.0.s8 %v4716
  %v4718 = vlaneseq
  %v4719 = vshrl.u32 %v4718, 7
  %v4720 = vsub.s32 %v4717, %v4719
  %v4721 = vrot.slane %v4699, %v4720
  %v4723 = vunpack.c.l.s4 1966171168
  %v4724 = vunpack.c.0.s8 %v4723
  %v4725 = vlaneseq
  %v4726 = vshrl.u32 %v4725, 7
  %v4727 = vsub.s32 %v4724, %v4726
  %v4728 = vrot.slane %v4700, %v4727
  %v4729 = vcombine.low %v4707, %v4721
  %v4730 = vcombine.low %v4714, %v4728
  %v4731 = vadd.s32 %v4729, %v4730
  %v4732 = vand.u32 %v4731, 65535
  %v4733 = vshrl.u32 %v4731, 16
  %v4734 = vcvt.s32.f32 %v4732
  %v4735 = vcvt.s32.f32 %v4733
  %4736 = vadd.xlane.f32.xlu0 %v4734
  %v4737 = vpop.xlane.xlu0 %4736
  %4738 = vadd.xlane.f32.xlu0 %v4735
  %v4739 = vpop.xlane.xlu0 %4738
  %v4740 = vcvt.f32.s32 %v4737
  %v4741 = vcvt.f32.s32 %v4739
  %v4742 = vshll.u32 %v4741, 16
  %v4743 = vadd.s32 %v4742, %v4740
  %vm4744 = vcmp.ge.s32.totalorder %v4743, %v3096
  %v4745 = vsel %vm4744, %v4608, %v4602
  %v4746 = vsub.s32 %v4608, 1
  %v4747 = vsel %vm4744, %v4604, %v4746
  %v4748 = vsub.s32 %v4747, %v4745
  %v4749 = vadd.s32 %v4748, 1
  %v4750 = vshra.s32 %v4749, 1
  %v4751 = vadd.s32 %v4745, %v4750
  %v4752 = vlaneseq
  %v4753 = vshrl.u32 %v4752, 7
  %v4754 = vsub.s32 0, %v4753
  %v4755 = vrot.slane %v4751, %v4754
  %v4756 = vlaneseq
  %v4757 = vshrl.u32 %v4756, 7
  %v4758 = vsub.s32 1, %v4757
  %v4759 = vrot.slane %v4751, %v4758
  %v4760 = vlaneseq
  %v4761 = vshrl.u32 %v4760, 7
  %v4762 = vsub.s32 2, %v4761
  %v4763 = vrot.slane %v4751, %v4762
  %v4764 = vlaneseq
  %v4765 = vshrl.u32 %v4764, 7
  %v4766 = vsub.s32 3, %v4765
  %v4767 = vrot.slane %v4751, %v4766
  %v4768 = vlaneseq
  %v4769 = vshrl.u32 %v4768, 7
  %v4770 = vsub.s32 4, %v4769
  %v4771 = vrot.slane %v4751, %v4770
  %v4772 = vlaneseq
  %v4773 = vshrl.u32 %v4772, 7
  %v4774 = vsub.s32 5, %v4773
  %v4775 = vrot.slane %v4751, %v4774
  %v4776 = vlaneseq
  %v4777 = vshrl.u32 %v4776, 7
  %v4778 = vsub.s32 6, %v4777
  %v4779 = vrot.slane %v4751, %v4778
  %v4780 = vlaneseq
  %v4781 = vshrl.u32 %v4780, 7
  %v4782 = vsub.s32 7, %v4781
  %v4783 = vrot.slane %v4751, %v4782
  %vm4792 = vcmp.ge.f32.partialorder %v3086, %v4755
  %vm4793 = vcmp.ge.f32.partialorder %v3087, %v4759
  %vm4794 = vcmp.ge.f32.partialorder %v3088, %v4763
  %vm4795 = vcmp.ge.f32.partialorder %v3089, %v4767
  %vm4796 = vcmp.ge.f32.partialorder %v3090, %v4771
  %vm4797 = vcmp.ge.f32.partialorder %v3091, %v4775
  %vm4798 = vcmp.ge.f32.partialorder %v3092, %v4779
  %vm4799 = vcmp.ge.f32.partialorder %v3093, %v4783
  %v4800 = vsel %vm4792, 1, 0
  %v4801 = vsel %vm4793, 1, 0
  %v4802 = vsel %vm4794, 1, 0
  %v4803 = vsel %vm4795, 1, 0
  %v4804 = vsel %vm4796, 1, 0
  %v4805 = vsel %vm4797, 1, 0
  %v4806 = vsel %vm4798, 1, 0
  %v4807 = vsel %vm4799, 1, 0
  %v4808 = vcombine.low %v4800, %v4801
  %v4809 = vcombine.low %v4802, %v4803
  %v4810 = vcombine.low %v4804, %v4805
  %v4811 = vcombine.low %v4806, %v4807
  %v4813 = vunpack.c.l.s4 1966171168
  %v4814 = vunpack.c.0.s8 %v4813
  %v4815 = vlaneseq
  %v4816 = vshrl.u32 %v4815, 7
  %v4817 = vsub.s32 %v4814, %v4816
  %v4818 = vrot.slane %v4808, %v4817
  %v4820 = vunpack.c.l.s4 1966171168
  %v4821 = vunpack.c.0.s8 %v4820
  %v4822 = vlaneseq
  %v4823 = vshrl.u32 %v4822, 7
  %v4824 = vsub.s32 %v4821, %v4823
  %v4825 = vrot.slane %v4809, %v4824
  %v4827 = vunpack.c.l.s4 1966171168
  %v4828 = vunpack.c.0.s8 %v4827
  %v4829 = vlaneseq
  %v4830 = vshrl.u32 %v4829, 7
  %v4831 = vsub.s32 %v4828, %v4830
  %v4832 = vrot.slane %v4810, %v4831
  %v4834 = vunpack.c.l.s4 1966171168
  %v4835 = vunpack.c.0.s8 %v4834
  %v4836 = vlaneseq
  %v4837 = vshrl.u32 %v4836, 7
  %v4838 = vsub.s32 %v4835, %v4837
  %v4839 = vrot.slane %v4811, %v4838
  %v4840 = vcombine.low %v4818, %v4825
  %v4841 = vcombine.high %v4818, %v4825
  %v4842 = vcombine.low %v4832, %v4839
  %v4843 = vcombine.high %v4832, %v4839
  %v4845 = vunpack.c.l.s4 1966171168
  %v4846 = vunpack.c.0.s8 %v4845
  %v4847 = vlaneseq
  %v4848 = vshrl.u32 %v4847, 7
  %v4849 = vsub.s32 %v4846, %v4848
  %v4850 = vrot.slane %v4840, %v4849
  %v4852 = vunpack.c.l.s4 1966171168
  %v4853 = vunpack.c.0.s8 %v4852
  %v4854 = vlaneseq
  %v4855 = vshrl.u32 %v4854, 7
  %v4856 = vsub.s32 %v4853, %v4855
  %v4857 = vrot.slane %v4841, %v4856
  %v4859 = vunpack.c.l.s4 1966171168
  %v4860 = vunpack.c.0.s8 %v4859
  %v4861 = vlaneseq
  %v4862 = vshrl.u32 %v4861, 7
  %v4863 = vsub.s32 %v4860, %v4862
  %v4864 = vrot.slane %v4842, %v4863
  %v4866 = vunpack.c.l.s4 1966171168
  %v4867 = vunpack.c.0.s8 %v4866
  %v4868 = vlaneseq
  %v4869 = vshrl.u32 %v4868, 7
  %v4870 = vsub.s32 %v4867, %v4869
  %v4871 = vrot.slane %v4843, %v4870
  %v4872 = vcombine.low %v4850, %v4864
  %v4873 = vcombine.low %v4857, %v4871
  %v4874 = vadd.s32 %v4872, %v4873
  %v4875 = vand.u32 %v4874, 65535
  %v4876 = vshrl.u32 %v4874, 16
  %v4877 = vcvt.s32.f32 %v4875
  %v4878 = vcvt.s32.f32 %v4876
  %4879 = vadd.xlane.f32.xlu0 %v4877
  %v4880 = vpop.xlane.xlu0 %4879
  %4881 = vadd.xlane.f32.xlu0 %v4878
  %v4882 = vpop.xlane.xlu0 %4881
  %v4883 = vcvt.f32.s32 %v4880
  %v4884 = vcvt.f32.s32 %v4882
  %v4885 = vshll.u32 %v4884, 16
  %v4886 = vadd.s32 %v4885, %v4883
  %vm4887 = vcmp.ge.s32.totalorder %v4886, %v3096
  %v4888 = vsel %vm4887, %v4751, %v4745
  %v4889 = vsub.s32 %v4751, 1
  %v4890 = vsel %vm4887, %v4747, %v4889
  %v4891 = vsub.s32 %v4890, %v4888
  %v4892 = vadd.s32 %v4891, 1
  %v4893 = vshra.s32 %v4892, 1
  %v4894 = vadd.s32 %v4888, %v4893
  %v4895 = vlaneseq
  %v4896 = vshrl.u32 %v4895, 7
  %v4897 = vsub.s32 0, %v4896
  %v4898 = vrot.slane %v4894, %v4897
  %v4899 = vlaneseq
  %v4900 = vshrl.u32 %v4899, 7
  %v4901 = vsub.s32 1, %v4900
  %v4902 = vrot.slane %v4894, %v4901
  %v4903 = vlaneseq
  %v4904 = vshrl.u32 %v4903, 7
  %v4905 = vsub.s32 2, %v4904
  %v4906 = vrot.slane %v4894, %v4905
  %v4907 = vlaneseq
  %v4908 = vshrl.u32 %v4907, 7
  %v4909 = vsub.s32 3, %v4908
  %v4910 = vrot.slane %v4894, %v4909
  %v4911 = vlaneseq
  %v4912 = vshrl.u32 %v4911, 7
  %v4913 = vsub.s32 4, %v4912
  %v4914 = vrot.slane %v4894, %v4913
  %v4915 = vlaneseq
  %v4916 = vshrl.u32 %v4915, 7
  %v4917 = vsub.s32 5, %v4916
  %v4918 = vrot.slane %v4894, %v4917
  %v4919 = vlaneseq
  %v4920 = vshrl.u32 %v4919, 7
  %v4921 = vsub.s32 6, %v4920
  %v4922 = vrot.slane %v4894, %v4921
  %v4923 = vlaneseq
  %v4924 = vshrl.u32 %v4923, 7
  %v4925 = vsub.s32 7, %v4924
  %v4926 = vrot.slane %v4894, %v4925
  %vm4935 = vcmp.ge.f32.partialorder %v3086, %v4898
  %vm4936 = vcmp.ge.f32.partialorder %v3087, %v4902
  %vm4937 = vcmp.ge.f32.partialorder %v3088, %v4906
  %vm4938 = vcmp.ge.f32.partialorder %v3089, %v4910
  %vm4939 = vcmp.ge.f32.partialorder %v3090, %v4914
  %vm4940 = vcmp.ge.f32.partialorder %v3091, %v4918
  %vm4941 = vcmp.ge.f32.partialorder %v3092, %v4922
  %vm4942 = vcmp.ge.f32.partialorder %v3093, %v4926
  %v4943 = vsel %vm4935, 1, 0
  %v4944 = vsel %vm4936, 1, 0
  %v4945 = vsel %vm4937, 1, 0
  %v4946 = vsel %vm4938, 1, 0
  %v4947 = vsel %vm4939, 1, 0
  %v4948 = vsel %vm4940, 1, 0
  %v4949 = vsel %vm4941, 1, 0
  %v4950 = vsel %vm4942, 1, 0
  %v4951 = vcombine.low %v4943, %v4944
  %v4952 = vcombine.low %v4945, %v4946
  %v4953 = vcombine.low %v4947, %v4948
  %v4954 = vcombine.low %v4949, %v4950
  %v4956 = vunpack.c.l.s4 1966171168
  %v4957 = vunpack.c.0.s8 %v4956
  %v4958 = vlaneseq
  %v4959 = vshrl.u32 %v4958, 7
  %v4960 = vsub.s32 %v4957, %v4959
  %v4961 = vrot.slane %v4951, %v4960
  %v4963 = vunpack.c.l.s4 1966171168
  %v4964 = vunpack.c.0.s8 %v4963
  %v4965 = vlaneseq
  %v4966 = vshrl.u32 %v4965, 7
  %v4967 = vsub.s32 %v4964, %v4966
  %v4968 = vrot.slane %v4952, %v4967
  %v4970 = vunpack.c.l.s4 1966171168
  %v4971 = vunpack.c.0.s8 %v4970
  %v4972 = vlaneseq
  %v4973 = vshrl.u32 %v4972, 7
  %v4974 = vsub.s32 %v4971, %v4973
  %v4975 = vrot.slane %v4953, %v4974
  %v4977 = vunpack.c.l.s4 1966171168
  %v4978 = vunpack.c.0.s8 %v4977
  %v4979 = vlaneseq
  %v4980 = vshrl.u32 %v4979, 7
  %v4981 = vsub.s32 %v4978, %v4980
  %v4982 = vrot.slane %v4954, %v4981
  %v4983 = vcombine.low %v4961, %v4968
  %v4984 = vcombine.high %v4961, %v4968
  %v4985 = vcombine.low %v4975, %v4982
  %v4986 = vcombine.high %v4975, %v4982
  %v4988 = vunpack.c.l.s4 1966171168
  %v4989 = vunpack.c.0.s8 %v4988
  %v4990 = vlaneseq
  %v4991 = vshrl.u32 %v4990, 7
  %v4992 = vsub.s32 %v4989, %v4991
  %v4993 = vrot.slane %v4983, %v4992
  %v4995 = vunpack.c.l.s4 1966171168
  %v4996 = vunpack.c.0.s8 %v4995
  %v4997 = vlaneseq
  %v4998 = vshrl.u32 %v4997, 7
  %v4999 = vsub.s32 %v4996, %v4998
  %v5000 = vrot.slane %v4984, %v4999
  %v5002 = vunpack.c.l.s4 1966171168
  %v5003 = vunpack.c.0.s8 %v5002
  %v5004 = vlaneseq
  %v5005 = vshrl.u32 %v5004, 7
  %v5006 = vsub.s32 %v5003, %v5005
  %v5007 = vrot.slane %v4985, %v5006
  %v5009 = vunpack.c.l.s4 1966171168
  %v5010 = vunpack.c.0.s8 %v5009
  %v5011 = vlaneseq
  %v5012 = vshrl.u32 %v5011, 7
  %v5013 = vsub.s32 %v5010, %v5012
  %v5014 = vrot.slane %v4986, %v5013
  %v5015 = vcombine.low %v4993, %v5007
  %v5016 = vcombine.low %v5000, %v5014
  %v5017 = vadd.s32 %v5015, %v5016
  %v5018 = vand.u32 %v5017, 65535
  %v5019 = vshrl.u32 %v5017, 16
  %v5020 = vcvt.s32.f32 %v5018
  %v5021 = vcvt.s32.f32 %v5019
  %5022 = vadd.xlane.f32.xlu0 %v5020
  %v5023 = vpop.xlane.xlu0 %5022
  %5024 = vadd.xlane.f32.xlu0 %v5021
  %v5025 = vpop.xlane.xlu0 %5024
  %v5026 = vcvt.f32.s32 %v5023
  %v5027 = vcvt.f32.s32 %v5025
  %v5028 = vshll.u32 %v5027, 16
  %v5029 = vadd.s32 %v5028, %v5026
  %vm5030 = vcmp.ge.s32.totalorder %v5029, %v3096
  %v5031 = vsel %vm5030, %v4894, %v4888
  %v5032 = vsub.s32 %v4894, 1
  %v5033 = vsel %vm5030, %v4890, %v5032
  %v5034 = vsub.s32 %v5033, %v5031
  %v5035 = vadd.s32 %v5034, 1
  %v5036 = vshra.s32 %v5035, 1
  %v5037 = vadd.s32 %v5031, %v5036
  %v5038 = vlaneseq
  %v5039 = vshrl.u32 %v5038, 7
  %v5040 = vsub.s32 0, %v5039
  %v5041 = vrot.slane %v5037, %v5040
  %v5042 = vlaneseq
  %v5043 = vshrl.u32 %v5042, 7
  %v5044 = vsub.s32 1, %v5043
  %v5045 = vrot.slane %v5037, %v5044
  %v5046 = vlaneseq
  %v5047 = vshrl.u32 %v5046, 7
  %v5048 = vsub.s32 2, %v5047
  %v5049 = vrot.slane %v5037, %v5048
  %v5050 = vlaneseq
  %v5051 = vshrl.u32 %v5050, 7
  %v5052 = vsub.s32 3, %v5051
  %v5053 = vrot.slane %v5037, %v5052
  %v5054 = vlaneseq
  %v5055 = vshrl.u32 %v5054, 7
  %v5056 = vsub.s32 4, %v5055
  %v5057 = vrot.slane %v5037, %v5056
  %v5058 = vlaneseq
  %v5059 = vshrl.u32 %v5058, 7
  %v5060 = vsub.s32 5, %v5059
  %v5061 = vrot.slane %v5037, %v5060
  %v5062 = vlaneseq
  %v5063 = vshrl.u32 %v5062, 7
  %v5064 = vsub.s32 6, %v5063
  %v5065 = vrot.slane %v5037, %v5064
  %v5066 = vlaneseq
  %v5067 = vshrl.u32 %v5066, 7
  %v5068 = vsub.s32 7, %v5067
  %v5069 = vrot.slane %v5037, %v5068
  %vm5078 = vcmp.ge.f32.partialorder %v3086, %v5041
  %vm5079 = vcmp.ge.f32.partialorder %v3087, %v5045
  %vm5080 = vcmp.ge.f32.partialorder %v3088, %v5049
  %vm5081 = vcmp.ge.f32.partialorder %v3089, %v5053
  %vm5082 = vcmp.ge.f32.partialorder %v3090, %v5057
  %vm5083 = vcmp.ge.f32.partialorder %v3091, %v5061
  %vm5084 = vcmp.ge.f32.partialorder %v3092, %v5065
  %vm5085 = vcmp.ge.f32.partialorder %v3093, %v5069
  %v5086 = vsel %vm5078, 1, 0
  %v5087 = vsel %vm5079, 1, 0
  %v5088 = vsel %vm5080, 1, 0
  %v5089 = vsel %vm5081, 1, 0
  %v5090 = vsel %vm5082, 1, 0
  %v5091 = vsel %vm5083, 1, 0
  %v5092 = vsel %vm5084, 1, 0
  %v5093 = vsel %vm5085, 1, 0
  %v5094 = vcombine.low %v5086, %v5087
  %v5095 = vcombine.low %v5088, %v5089
  %v5096 = vcombine.low %v5090, %v5091
  %v5097 = vcombine.low %v5092, %v5093
  %v5099 = vunpack.c.l.s4 1966171168
  %v5100 = vunpack.c.0.s8 %v5099
  %v5101 = vlaneseq
  %v5102 = vshrl.u32 %v5101, 7
  %v5103 = vsub.s32 %v5100, %v5102
  %v5104 = vrot.slane %v5094, %v5103
  %v5106 = vunpack.c.l.s4 1966171168
  %v5107 = vunpack.c.0.s8 %v5106
  %v5108 = vlaneseq
  %v5109 = vshrl.u32 %v5108, 7
  %v5110 = vsub.s32 %v5107, %v5109
  %v5111 = vrot.slane %v5095, %v5110
  %v5113 = vunpack.c.l.s4 1966171168
  %v5114 = vunpack.c.0.s8 %v5113
  %v5115 = vlaneseq
  %v5116 = vshrl.u32 %v5115, 7
  %v5117 = vsub.s32 %v5114, %v5116
  %v5118 = vrot.slane %v5096, %v5117
  %v5120 = vunpack.c.l.s4 1966171168
  %v5121 = vunpack.c.0.s8 %v5120
  %v5122 = vlaneseq
  %v5123 = vshrl.u32 %v5122, 7
  %v5124 = vsub.s32 %v5121, %v5123
  %v5125 = vrot.slane %v5097, %v5124
  %v5126 = vcombine.low %v5104, %v5111
  %v5127 = vcombine.high %v5104, %v5111
  %v5128 = vcombine.low %v5118, %v5125
  %v5129 = vcombine.high %v5118, %v5125
  %v5131 = vunpack.c.l.s4 1966171168
  %v5132 = vunpack.c.0.s8 %v5131
  %v5133 = vlaneseq
  %v5134 = vshrl.u32 %v5133, 7
  %v5135 = vsub.s32 %v5132, %v5134
  %v5136 = vrot.slane %v5126, %v5135
  %v5138 = vunpack.c.l.s4 1966171168
  %v5139 = vunpack.c.0.s8 %v5138
  %v5140 = vlaneseq
  %v5141 = vshrl.u32 %v5140, 7
  %v5142 = vsub.s32 %v5139, %v5141
  %v5143 = vrot.slane %v5127, %v5142
  %v5145 = vunpack.c.l.s4 1966171168
  %v5146 = vunpack.c.0.s8 %v5145
  %v5147 = vlaneseq
  %v5148 = vshrl.u32 %v5147, 7
  %v5149 = vsub.s32 %v5146, %v5148
  %v5150 = vrot.slane %v5128, %v5149
  %v5152 = vunpack.c.l.s4 1966171168
  %v5153 = vunpack.c.0.s8 %v5152
  %v5154 = vlaneseq
  %v5155 = vshrl.u32 %v5154, 7
  %v5156 = vsub.s32 %v5153, %v5155
  %v5157 = vrot.slane %v5129, %v5156
  %v5158 = vcombine.low %v5136, %v5150
  %v5159 = vcombine.low %v5143, %v5157
  %v5160 = vadd.s32 %v5158, %v5159
  %v5161 = vand.u32 %v5160, 65535
  %v5162 = vshrl.u32 %v5160, 16
  %v5163 = vcvt.s32.f32 %v5161
  %v5164 = vcvt.s32.f32 %v5162
  %5165 = vadd.xlane.f32.xlu0 %v5163
  %v5166 = vpop.xlane.xlu0 %5165
  %5167 = vadd.xlane.f32.xlu0 %v5164
  %v5168 = vpop.xlane.xlu0 %5167
  %v5169 = vcvt.f32.s32 %v5166
  %v5170 = vcvt.f32.s32 %v5168
  %v5171 = vshll.u32 %v5170, 16
  %v5172 = vadd.s32 %v5171, %v5169
  %vm5173 = vcmp.ge.s32.totalorder %v5172, %v3096
  %v5174 = vsel %vm5173, %v5037, %v5031
  %v5175 = vsub.s32 %v5037, 1
  %v5176 = vsel %vm5173, %v5033, %v5175
  %v5177 = vsub.s32 %v5176, %v5174
  %v5178 = vadd.s32 %v5177, 1
  %v5179 = vshra.s32 %v5178, 1
  %v5180 = vadd.s32 %v5174, %v5179
  %v5181 = vlaneseq
  %v5182 = vshrl.u32 %v5181, 7
  %v5183 = vsub.s32 0, %v5182
  %v5184 = vrot.slane %v5180, %v5183
  %v5185 = vlaneseq
  %v5186 = vshrl.u32 %v5185, 7
  %v5187 = vsub.s32 1, %v5186
  %v5188 = vrot.slane %v5180, %v5187
  %v5189 = vlaneseq
  %v5190 = vshrl.u32 %v5189, 7
  %v5191 = vsub.s32 2, %v5190
  %v5192 = vrot.slane %v5180, %v5191
  %v5193 = vlaneseq
  %v5194 = vshrl.u32 %v5193, 7
  %v5195 = vsub.s32 3, %v5194
  %v5196 = vrot.slane %v5180, %v5195
  %v5197 = vlaneseq
  %v5198 = vshrl.u32 %v5197, 7
  %v5199 = vsub.s32 4, %v5198
  %v5200 = vrot.slane %v5180, %v5199
  %v5201 = vlaneseq
  %v5202 = vshrl.u32 %v5201, 7
  %v5203 = vsub.s32 5, %v5202
  %v5204 = vrot.slane %v5180, %v5203
  %v5205 = vlaneseq
  %v5206 = vshrl.u32 %v5205, 7
  %v5207 = vsub.s32 6, %v5206
  %v5208 = vrot.slane %v5180, %v5207
  %v5209 = vlaneseq
  %v5210 = vshrl.u32 %v5209, 7
  %v5211 = vsub.s32 7, %v5210
  %v5212 = vrot.slane %v5180, %v5211
  %vm5221 = vcmp.ge.f32.partialorder %v3086, %v5184
  %vm5222 = vcmp.ge.f32.partialorder %v3087, %v5188
  %vm5223 = vcmp.ge.f32.partialorder %v3088, %v5192
  %vm5224 = vcmp.ge.f32.partialorder %v3089, %v5196
  %vm5225 = vcmp.ge.f32.partialorder %v3090, %v5200
  %vm5226 = vcmp.ge.f32.partialorder %v3091, %v5204
  %vm5227 = vcmp.ge.f32.partialorder %v3092, %v5208
  %vm5228 = vcmp.ge.f32.partialorder %v3093, %v5212
  %v5229 = vsel %vm5221, 1, 0
  %v5230 = vsel %vm5222, 1, 0
  %v5231 = vsel %vm5223, 1, 0
  %v5232 = vsel %vm5224, 1, 0
  %v5233 = vsel %vm5225, 1, 0
  %v5234 = vsel %vm5226, 1, 0
  %v5235 = vsel %vm5227, 1, 0
  %v5236 = vsel %vm5228, 1, 0
  %v5237 = vcombine.low %v5229, %v5230
  %v5238 = vcombine.low %v5231, %v5232
  %v5239 = vcombine.low %v5233, %v5234
  %v5240 = vcombine.low %v5235, %v5236
  %v5242 = vunpack.c.l.s4 1966171168
  %v5243 = vunpack.c.0.s8 %v5242
  %v5244 = vlaneseq
  %v5245 = vshrl.u32 %v5244, 7
  %v5246 = vsub.s32 %v5243, %v5245
  %v5247 = vrot.slane %v5237, %v5246
  %v5249 = vunpack.c.l.s4 1966171168
  %v5250 = vunpack.c.0.s8 %v5249
  %v5251 = vlaneseq
  %v5252 = vshrl.u32 %v5251, 7
  %v5253 = vsub.s32 %v5250, %v5252
  %v5254 = vrot.slane %v5238, %v5253
  %v5256 = vunpack.c.l.s4 1966171168
  %v5257 = vunpack.c.0.s8 %v5256
  %v5258 = vlaneseq
  %v5259 = vshrl.u32 %v5258, 7
  %v5260 = vsub.s32 %v5257, %v5259
  %v5261 = vrot.slane %v5239, %v5260
  %v5263 = vunpack.c.l.s4 1966171168
  %v5264 = vunpack.c.0.s8 %v5263
  %v5265 = vlaneseq
  %v5266 = vshrl.u32 %v5265, 7
  %v5267 = vsub.s32 %v5264, %v5266
  %v5268 = vrot.slane %v5240, %v5267
  %v5269 = vcombine.low %v5247, %v5254
  %v5270 = vcombine.high %v5247, %v5254
  %v5271 = vcombine.low %v5261, %v5268
  %v5272 = vcombine.high %v5261, %v5268
  %v5274 = vunpack.c.l.s4 1966171168
  %v5275 = vunpack.c.0.s8 %v5274
  %v5276 = vlaneseq
  %v5277 = vshrl.u32 %v5276, 7
  %v5278 = vsub.s32 %v5275, %v5277
  %v5279 = vrot.slane %v5269, %v5278
  %v5281 = vunpack.c.l.s4 1966171168
  %v5282 = vunpack.c.0.s8 %v5281
  %v5283 = vlaneseq
  %v5284 = vshrl.u32 %v5283, 7
  %v5285 = vsub.s32 %v5282, %v5284
  %v5286 = vrot.slane %v5270, %v5285
  %v5288 = vunpack.c.l.s4 1966171168
  %v5289 = vunpack.c.0.s8 %v5288
  %v5290 = vlaneseq
  %v5291 = vshrl.u32 %v5290, 7
  %v5292 = vsub.s32 %v5289, %v5291
  %v5293 = vrot.slane %v5271, %v5292
  %v5295 = vunpack.c.l.s4 1966171168
  %v5296 = vunpack.c.0.s8 %v5295
  %v5297 = vlaneseq
  %v5298 = vshrl.u32 %v5297, 7
  %v5299 = vsub.s32 %v5296, %v5298
  %v5300 = vrot.slane %v5272, %v5299
  %v5301 = vcombine.low %v5279, %v5293
  %v5302 = vcombine.low %v5286, %v5300
  %v5303 = vadd.s32 %v5301, %v5302
  %v5304 = vand.u32 %v5303, 65535
  %v5305 = vshrl.u32 %v5303, 16
  %v5306 = vcvt.s32.f32 %v5304
  %v5307 = vcvt.s32.f32 %v5305
  %5308 = vadd.xlane.f32.xlu0 %v5306
  %v5309 = vpop.xlane.xlu0 %5308
  %5310 = vadd.xlane.f32.xlu0 %v5307
  %v5311 = vpop.xlane.xlu0 %5310
  %v5312 = vcvt.f32.s32 %v5309
  %v5313 = vcvt.f32.s32 %v5311
  %v5314 = vshll.u32 %v5313, 16
  %v5315 = vadd.s32 %v5314, %v5312
  %vm5316 = vcmp.ge.s32.totalorder %v5315, %v3096
  %v5317 = vsel %vm5316, %v5180, %v5174
  %v5318 = vsub.s32 %v5180, 1
  %v5319 = vsel %vm5316, %v5176, %v5318
  %v5320 = vsub.s32 %v5319, %v5317
  %v5321 = vadd.s32 %v5320, 1
  %v5322 = vshra.s32 %v5321, 1
  %v5323 = vadd.s32 %v5317, %v5322
  %v5324 = vlaneseq
  %v5325 = vshrl.u32 %v5324, 7
  %v5326 = vsub.s32 0, %v5325
  %v5327 = vrot.slane %v5323, %v5326
  %v5328 = vlaneseq
  %v5329 = vshrl.u32 %v5328, 7
  %v5330 = vsub.s32 1, %v5329
  %v5331 = vrot.slane %v5323, %v5330
  %v5332 = vlaneseq
  %v5333 = vshrl.u32 %v5332, 7
  %v5334 = vsub.s32 2, %v5333
  %v5335 = vrot.slane %v5323, %v5334
  %v5336 = vlaneseq
  %v5337 = vshrl.u32 %v5336, 7
  %v5338 = vsub.s32 3, %v5337
  %v5339 = vrot.slane %v5323, %v5338
  %v5340 = vlaneseq
  %v5341 = vshrl.u32 %v5340, 7
  %v5342 = vsub.s32 4, %v5341
  %v5343 = vrot.slane %v5323, %v5342
  %v5344 = vlaneseq
  %v5345 = vshrl.u32 %v5344, 7
  %v5346 = vsub.s32 5, %v5345
  %v5347 = vrot.slane %v5323, %v5346
  %v5348 = vlaneseq
  %v5349 = vshrl.u32 %v5348, 7
  %v5350 = vsub.s32 6, %v5349
  %v5351 = vrot.slane %v5323, %v5350
  %v5352 = vlaneseq
  %v5353 = vshrl.u32 %v5352, 7
  %v5354 = vsub.s32 7, %v5353
  %v5355 = vrot.slane %v5323, %v5354
  %vm5364 = vcmp.ge.f32.partialorder %v3086, %v5327
  %vm5365 = vcmp.ge.f32.partialorder %v3087, %v5331
  %vm5366 = vcmp.ge.f32.partialorder %v3088, %v5335
  %vm5367 = vcmp.ge.f32.partialorder %v3089, %v5339
  %vm5368 = vcmp.ge.f32.partialorder %v3090, %v5343
  %vm5369 = vcmp.ge.f32.partialorder %v3091, %v5347
  %vm5370 = vcmp.ge.f32.partialorder %v3092, %v5351
  %vm5371 = vcmp.ge.f32.partialorder %v3093, %v5355
  %v5372 = vsel %vm5364, 1, 0
  %v5373 = vsel %vm5365, 1, 0
  %v5374 = vsel %vm5366, 1, 0
  %v5375 = vsel %vm5367, 1, 0
  %v5376 = vsel %vm5368, 1, 0
  %v5377 = vsel %vm5369, 1, 0
  %v5378 = vsel %vm5370, 1, 0
  %v5379 = vsel %vm5371, 1, 0
  %v5380 = vcombine.low %v5372, %v5373
  %v5381 = vcombine.low %v5374, %v5375
  %v5382 = vcombine.low %v5376, %v5377
  %v5383 = vcombine.low %v5378, %v5379
  %v5385 = vunpack.c.l.s4 1966171168
  %v5386 = vunpack.c.0.s8 %v5385
  %v5387 = vlaneseq
  %v5388 = vshrl.u32 %v5387, 7
  %v5389 = vsub.s32 %v5386, %v5388
  %v5390 = vrot.slane %v5380, %v5389
  %v5392 = vunpack.c.l.s4 1966171168
  %v5393 = vunpack.c.0.s8 %v5392
  %v5394 = vlaneseq
  %v5395 = vshrl.u32 %v5394, 7
  %v5396 = vsub.s32 %v5393, %v5395
  %v5397 = vrot.slane %v5381, %v5396
  %v5399 = vunpack.c.l.s4 1966171168
  %v5400 = vunpack.c.0.s8 %v5399
  %v5401 = vlaneseq
  %v5402 = vshrl.u32 %v5401, 7
  %v5403 = vsub.s32 %v5400, %v5402
  %v5404 = vrot.slane %v5382, %v5403
  %v5406 = vunpack.c.l.s4 1966171168
  %v5407 = vunpack.c.0.s8 %v5406
  %v5408 = vlaneseq
  %v5409 = vshrl.u32 %v5408, 7
  %v5410 = vsub.s32 %v5407, %v5409
  %v5411 = vrot.slane %v5383, %v5410
  %v5412 = vcombine.low %v5390, %v5397
  %v5413 = vcombine.high %v5390, %v5397
  %v5414 = vcombine.low %v5404, %v5411
  %v5415 = vcombine.high %v5404, %v5411
  %v5417 = vunpack.c.l.s4 1966171168
  %v5418 = vunpack.c.0.s8 %v5417
  %v5419 = vlaneseq
  %v5420 = vshrl.u32 %v5419, 7
  %v5421 = vsub.s32 %v5418, %v5420
  %v5422 = vrot.slane %v5412, %v5421
  %v5424 = vunpack.c.l.s4 1966171168
  %v5425 = vunpack.c.0.s8 %v5424
  %v5426 = vlaneseq
  %v5427 = vshrl.u32 %v5426, 7
  %v5428 = vsub.s32 %v5425, %v5427
  %v5429 = vrot.slane %v5413, %v5428
  %v5431 = vunpack.c.l.s4 1966171168
  %v5432 = vunpack.c.0.s8 %v5431
  %v5433 = vlaneseq
  %v5434 = vshrl.u32 %v5433, 7
  %v5435 = vsub.s32 %v5432, %v5434
  %v5436 = vrot.slane %v5414, %v5435
  %v5438 = vunpack.c.l.s4 1966171168
  %v5439 = vunpack.c.0.s8 %v5438
  %v5440 = vlaneseq
  %v5441 = vshrl.u32 %v5440, 7
  %v5442 = vsub.s32 %v5439, %v5441
  %v5443 = vrot.slane %v5415, %v5442
  %v5444 = vcombine.low %v5422, %v5436
  %v5445 = vcombine.low %v5429, %v5443
  %v5446 = vadd.s32 %v5444, %v5445
  %v5447 = vand.u32 %v5446, 65535
  %v5448 = vshrl.u32 %v5446, 16
  %v5449 = vcvt.s32.f32 %v5447
  %v5450 = vcvt.s32.f32 %v5448
  %5451 = vadd.xlane.f32.xlu0 %v5449
  %v5452 = vpop.xlane.xlu0 %5451
  %5453 = vadd.xlane.f32.xlu0 %v5450
  %v5454 = vpop.xlane.xlu0 %5453
  %v5455 = vcvt.f32.s32 %v5452
  %v5456 = vcvt.f32.s32 %v5454
  %v5457 = vshll.u32 %v5456, 16
  %v5458 = vadd.s32 %v5457, %v5455
  %vm5459 = vcmp.ge.s32.totalorder %v5458, %v3096
  %v5460 = vsel %vm5459, %v5323, %v5317
  %v5461 = vsub.s32 %v5323, 1
  %v5462 = vsel %vm5459, %v5319, %v5461
  %v5463 = vsub.s32 %v5462, %v5460
  %v5464 = vadd.s32 %v5463, 1
  %v5465 = vshra.s32 %v5464, 1
  %v5466 = vadd.s32 %v5460, %v5465
  %v5467 = vlaneseq
  %v5468 = vshrl.u32 %v5467, 7
  %v5469 = vsub.s32 0, %v5468
  %v5470 = vrot.slane %v5466, %v5469
  %v5471 = vlaneseq
  %v5472 = vshrl.u32 %v5471, 7
  %v5473 = vsub.s32 1, %v5472
  %v5474 = vrot.slane %v5466, %v5473
  %v5475 = vlaneseq
  %v5476 = vshrl.u32 %v5475, 7
  %v5477 = vsub.s32 2, %v5476
  %v5478 = vrot.slane %v5466, %v5477
  %v5479 = vlaneseq
  %v5480 = vshrl.u32 %v5479, 7
  %v5481 = vsub.s32 3, %v5480
  %v5482 = vrot.slane %v5466, %v5481
  %v5483 = vlaneseq
  %v5484 = vshrl.u32 %v5483, 7
  %v5485 = vsub.s32 4, %v5484
  %v5486 = vrot.slane %v5466, %v5485
  %v5487 = vlaneseq
  %v5488 = vshrl.u32 %v5487, 7
  %v5489 = vsub.s32 5, %v5488
  %v5490 = vrot.slane %v5466, %v5489
  %v5491 = vlaneseq
  %v5492 = vshrl.u32 %v5491, 7
  %v5493 = vsub.s32 6, %v5492
  %v5494 = vrot.slane %v5466, %v5493
  %v5495 = vlaneseq
  %v5496 = vshrl.u32 %v5495, 7
  %v5497 = vsub.s32 7, %v5496
  %v5498 = vrot.slane %v5466, %v5497
  %vm5507 = vcmp.ge.f32.partialorder %v3086, %v5470
  %vm5508 = vcmp.ge.f32.partialorder %v3087, %v5474
  %vm5509 = vcmp.ge.f32.partialorder %v3088, %v5478
  %vm5510 = vcmp.ge.f32.partialorder %v3089, %v5482
  %vm5511 = vcmp.ge.f32.partialorder %v3090, %v5486
  %vm5512 = vcmp.ge.f32.partialorder %v3091, %v5490
  %vm5513 = vcmp.ge.f32.partialorder %v3092, %v5494
  %vm5514 = vcmp.ge.f32.partialorder %v3093, %v5498
  %v5515 = vsel %vm5507, 1, 0
  %v5516 = vsel %vm5508, 1, 0
  %v5517 = vsel %vm5509, 1, 0
  %v5518 = vsel %vm5510, 1, 0
  %v5519 = vsel %vm5511, 1, 0
  %v5520 = vsel %vm5512, 1, 0
  %v5521 = vsel %vm5513, 1, 0
  %v5522 = vsel %vm5514, 1, 0
  %v5523 = vcombine.low %v5515, %v5516
  %v5524 = vcombine.low %v5517, %v5518
  %v5525 = vcombine.low %v5519, %v5520
  %v5526 = vcombine.low %v5521, %v5522
  %v5528 = vunpack.c.l.s4 1966171168
  %v5529 = vunpack.c.0.s8 %v5528
  %v5530 = vlaneseq
  %v5531 = vshrl.u32 %v5530, 7
  %v5532 = vsub.s32 %v5529, %v5531
  %v5533 = vrot.slane %v5523, %v5532
  %v5535 = vunpack.c.l.s4 1966171168
  %v5536 = vunpack.c.0.s8 %v5535
  %v5537 = vlaneseq
  %v5538 = vshrl.u32 %v5537, 7
  %v5539 = vsub.s32 %v5536, %v5538
  %v5540 = vrot.slane %v5524, %v5539
  %v5542 = vunpack.c.l.s4 1966171168
  %v5543 = vunpack.c.0.s8 %v5542
  %v5544 = vlaneseq
  %v5545 = vshrl.u32 %v5544, 7
  %v5546 = vsub.s32 %v5543, %v5545
  %v5547 = vrot.slane %v5525, %v5546
  %v5549 = vunpack.c.l.s4 1966171168
  %v5550 = vunpack.c.0.s8 %v5549
  %v5551 = vlaneseq
  %v5552 = vshrl.u32 %v5551, 7
  %v5553 = vsub.s32 %v5550, %v5552
  %v5554 = vrot.slane %v5526, %v5553
  %v5555 = vcombine.low %v5533, %v5540
  %v5556 = vcombine.high %v5533, %v5540
  %v5557 = vcombine.low %v5547, %v5554
  %v5558 = vcombine.high %v5547, %v5554
  %v5560 = vunpack.c.l.s4 1966171168
  %v5561 = vunpack.c.0.s8 %v5560
  %v5562 = vlaneseq
  %v5563 = vshrl.u32 %v5562, 7
  %v5564 = vsub.s32 %v5561, %v5563
  %v5565 = vrot.slane %v5555, %v5564
  %v5567 = vunpack.c.l.s4 1966171168
  %v5568 = vunpack.c.0.s8 %v5567
  %v5569 = vlaneseq
  %v5570 = vshrl.u32 %v5569, 7
  %v5571 = vsub.s32 %v5568, %v5570
  %v5572 = vrot.slane %v5556, %v5571
  %v5574 = vunpack.c.l.s4 1966171168
  %v5575 = vunpack.c.0.s8 %v5574
  %v5576 = vlaneseq
  %v5577 = vshrl.u32 %v5576, 7
  %v5578 = vsub.s32 %v5575, %v5577
  %v5579 = vrot.slane %v5557, %v5578
  %v5581 = vunpack.c.l.s4 1966171168
  %v5582 = vunpack.c.0.s8 %v5581
  %v5583 = vlaneseq
  %v5584 = vshrl.u32 %v5583, 7
  %v5585 = vsub.s32 %v5582, %v5584
  %v5586 = vrot.slane %v5558, %v5585
  %v5587 = vcombine.low %v5565, %v5579
  %v5588 = vcombine.low %v5572, %v5586
  %v5589 = vadd.s32 %v5587, %v5588
  %v5590 = vand.u32 %v5589, 65535
  %v5591 = vshrl.u32 %v5589, 16
  %v5592 = vcvt.s32.f32 %v5590
  %v5593 = vcvt.s32.f32 %v5591
  %5594 = vadd.xlane.f32.xlu0 %v5592
  %v5595 = vpop.xlane.xlu0 %5594
  %5596 = vadd.xlane.f32.xlu0 %v5593
  %v5597 = vpop.xlane.xlu0 %5596
  %v5598 = vcvt.f32.s32 %v5595
  %v5599 = vcvt.f32.s32 %v5597
  %v5600 = vshll.u32 %v5599, 16
  %v5601 = vadd.s32 %v5600, %v5598
  %vm5602 = vcmp.ge.s32.totalorder %v5601, %v3096
  %v5603 = vsel %vm5602, %v5466, %v5460
  %v5604 = vsub.s32 %v5466, 1
  %v5605 = vsel %vm5602, %v5462, %v5604
  %v5606 = vsub.s32 %v5605, %v5603
  %v5607 = vadd.s32 %v5606, 1
  %v5608 = vshra.s32 %v5607, 1
  %v5609 = vadd.s32 %v5603, %v5608
  %v5610 = vlaneseq
  %v5611 = vshrl.u32 %v5610, 7
  %v5612 = vsub.s32 0, %v5611
  %v5613 = vrot.slane %v5609, %v5612
  %v5614 = vlaneseq
  %v5615 = vshrl.u32 %v5614, 7
  %v5616 = vsub.s32 1, %v5615
  %v5617 = vrot.slane %v5609, %v5616
  %v5618 = vlaneseq
  %v5619 = vshrl.u32 %v5618, 7
  %v5620 = vsub.s32 2, %v5619
  %v5621 = vrot.slane %v5609, %v5620
  %v5622 = vlaneseq
  %v5623 = vshrl.u32 %v5622, 7
  %v5624 = vsub.s32 3, %v5623
  %v5625 = vrot.slane %v5609, %v5624
  %v5626 = vlaneseq
  %v5627 = vshrl.u32 %v5626, 7
  %v5628 = vsub.s32 4, %v5627
  %v5629 = vrot.slane %v5609, %v5628
  %v5630 = vlaneseq
  %v5631 = vshrl.u32 %v5630, 7
  %v5632 = vsub.s32 5, %v5631
  %v5633 = vrot.slane %v5609, %v5632
  %v5634 = vlaneseq
  %v5635 = vshrl.u32 %v5634, 7
  %v5636 = vsub.s32 6, %v5635
  %v5637 = vrot.slane %v5609, %v5636
  %v5638 = vlaneseq
  %v5639 = vshrl.u32 %v5638, 7
  %v5640 = vsub.s32 7, %v5639
  %v5641 = vrot.slane %v5609, %v5640
  %vm5650 = vcmp.ge.f32.partialorder %v3086, %v5613
  %vm5651 = vcmp.ge.f32.partialorder %v3087, %v5617
  %vm5652 = vcmp.ge.f32.partialorder %v3088, %v5621
  %vm5653 = vcmp.ge.f32.partialorder %v3089, %v5625
  %vm5654 = vcmp.ge.f32.partialorder %v3090, %v5629
  %vm5655 = vcmp.ge.f32.partialorder %v3091, %v5633
  %vm5656 = vcmp.ge.f32.partialorder %v3092, %v5637
  %vm5657 = vcmp.ge.f32.partialorder %v3093, %v5641
  %v5658 = vsel %vm5650, 1, 0
  %v5659 = vsel %vm5651, 1, 0
  %v5660 = vsel %vm5652, 1, 0
  %v5661 = vsel %vm5653, 1, 0
  %v5662 = vsel %vm5654, 1, 0
  %v5663 = vsel %vm5655, 1, 0
  %v5664 = vsel %vm5656, 1, 0
  %v5665 = vsel %vm5657, 1, 0
  %v5666 = vcombine.low %v5658, %v5659
  %v5667 = vcombine.low %v5660, %v5661
  %v5668 = vcombine.low %v5662, %v5663
  %v5669 = vcombine.low %v5664, %v5665
  %v5671 = vunpack.c.l.s4 1966171168
  %v5672 = vunpack.c.0.s8 %v5671
  %v5673 = vlaneseq
  %v5674 = vshrl.u32 %v5673, 7
  %v5675 = vsub.s32 %v5672, %v5674
  %v5676 = vrot.slane %v5666, %v5675
  %v5678 = vunpack.c.l.s4 1966171168
  %v5679 = vunpack.c.0.s8 %v5678
  %v5680 = vlaneseq
  %v5681 = vshrl.u32 %v5680, 7
  %v5682 = vsub.s32 %v5679, %v5681
  %v5683 = vrot.slane %v5667, %v5682
  %v5685 = vunpack.c.l.s4 1966171168
  %v5686 = vunpack.c.0.s8 %v5685
  %v5687 = vlaneseq
  %v5688 = vshrl.u32 %v5687, 7
  %v5689 = vsub.s32 %v5686, %v5688
  %v5690 = vrot.slane %v5668, %v5689
  %v5692 = vunpack.c.l.s4 1966171168
  %v5693 = vunpack.c.0.s8 %v5692
  %v5694 = vlaneseq
  %v5695 = vshrl.u32 %v5694, 7
  %v5696 = vsub.s32 %v5693, %v5695
  %v5697 = vrot.slane %v5669, %v5696
  %v5698 = vcombine.low %v5676, %v5683
  %v5699 = vcombine.high %v5676, %v5683
  %v5700 = vcombine.low %v5690, %v5697
  %v5701 = vcombine.high %v5690, %v5697
  %v5703 = vunpack.c.l.s4 1966171168
  %v5704 = vunpack.c.0.s8 %v5703
  %v5705 = vlaneseq
  %v5706 = vshrl.u32 %v5705, 7
  %v5707 = vsub.s32 %v5704, %v5706
  %v5708 = vrot.slane %v5698, %v5707
  %v5710 = vunpack.c.l.s4 1966171168
  %v5711 = vunpack.c.0.s8 %v5710
  %v5712 = vlaneseq
  %v5713 = vshrl.u32 %v5712, 7
  %v5714 = vsub.s32 %v5711, %v5713
  %v5715 = vrot.slane %v5699, %v5714
  %v5717 = vunpack.c.l.s4 1966171168
  %v5718 = vunpack.c.0.s8 %v5717
  %v5719 = vlaneseq
  %v5720 = vshrl.u32 %v5719, 7
  %v5721 = vsub.s32 %v5718, %v5720
  %v5722 = vrot.slane %v5700, %v5721
  %v5724 = vunpack.c.l.s4 1966171168
  %v5725 = vunpack.c.0.s8 %v5724
  %v5726 = vlaneseq
  %v5727 = vshrl.u32 %v5726, 7
  %v5728 = vsub.s32 %v5725, %v5727
  %v5729 = vrot.slane %v5701, %v5728
  %v5730 = vcombine.low %v5708, %v5722
  %v5731 = vcombine.low %v5715, %v5729
  %v5732 = vadd.s32 %v5730, %v5731
  %v5733 = vand.u32 %v5732, 65535
  %v5734 = vshrl.u32 %v5732, 16
  %v5735 = vcvt.s32.f32 %v5733
  %v5736 = vcvt.s32.f32 %v5734
  %5737 = vadd.xlane.f32.xlu0 %v5735
  %v5738 = vpop.xlane.xlu0 %5737
  %5739 = vadd.xlane.f32.xlu0 %v5736
  %v5740 = vpop.xlane.xlu0 %5739
  %v5741 = vcvt.f32.s32 %v5738
  %v5742 = vcvt.f32.s32 %v5740
  %v5743 = vshll.u32 %v5742, 16
  %v5744 = vadd.s32 %v5743, %v5741
  %vm5745 = vcmp.ge.s32.totalorder %v5744, %v3096
  %v5746 = vsel %vm5745, %v5609, %v5603
  %v5747 = vsub.s32 %v5609, 1
  %v5748 = vsel %vm5745, %v5605, %v5747
  %v5749 = vsub.s32 %v5748, %v5746
  %v5750 = vadd.s32 %v5749, 1
  %v5751 = vshra.s32 %v5750, 1
  %v5752 = vadd.s32 %v5746, %v5751
  %v5753 = vlaneseq
  %v5754 = vshrl.u32 %v5753, 7
  %v5755 = vsub.s32 0, %v5754
  %v5756 = vrot.slane %v5752, %v5755
  %v5757 = vlaneseq
  %v5758 = vshrl.u32 %v5757, 7
  %v5759 = vsub.s32 1, %v5758
  %v5760 = vrot.slane %v5752, %v5759
  %v5761 = vlaneseq
  %v5762 = vshrl.u32 %v5761, 7
  %v5763 = vsub.s32 2, %v5762
  %v5764 = vrot.slane %v5752, %v5763
  %v5765 = vlaneseq
  %v5766 = vshrl.u32 %v5765, 7
  %v5767 = vsub.s32 3, %v5766
  %v5768 = vrot.slane %v5752, %v5767
  %v5769 = vlaneseq
  %v5770 = vshrl.u32 %v5769, 7
  %v5771 = vsub.s32 4, %v5770
  %v5772 = vrot.slane %v5752, %v5771
  %v5773 = vlaneseq
  %v5774 = vshrl.u32 %v5773, 7
  %v5775 = vsub.s32 5, %v5774
  %v5776 = vrot.slane %v5752, %v5775
  %v5777 = vlaneseq
  %v5778 = vshrl.u32 %v5777, 7
  %v5779 = vsub.s32 6, %v5778
  %v5780 = vrot.slane %v5752, %v5779
  %v5781 = vlaneseq
  %v5782 = vshrl.u32 %v5781, 7
  %v5783 = vsub.s32 7, %v5782
  %v5784 = vrot.slane %v5752, %v5783
  %vm5793 = vcmp.ge.f32.partialorder %v3086, %v5756
  %vm5794 = vcmp.ge.f32.partialorder %v3087, %v5760
  %vm5795 = vcmp.ge.f32.partialorder %v3088, %v5764
  %vm5796 = vcmp.ge.f32.partialorder %v3089, %v5768
  %vm5797 = vcmp.ge.f32.partialorder %v3090, %v5772
  %vm5798 = vcmp.ge.f32.partialorder %v3091, %v5776
  %vm5799 = vcmp.ge.f32.partialorder %v3092, %v5780
  %vm5800 = vcmp.ge.f32.partialorder %v3093, %v5784
  %v5801 = vsel %vm5793, 1, 0
  %v5802 = vsel %vm5794, 1, 0
  %v5803 = vsel %vm5795, 1, 0
  %v5804 = vsel %vm5796, 1, 0
  %v5805 = vsel %vm5797, 1, 0
  %v5806 = vsel %vm5798, 1, 0
  %v5807 = vsel %vm5799, 1, 0
  %v5808 = vsel %vm5800, 1, 0
  %v5809 = vcombine.low %v5801, %v5802
  %v5810 = vcombine.low %v5803, %v5804
  %v5811 = vcombine.low %v5805, %v5806
  %v5812 = vcombine.low %v5807, %v5808
  %v5814 = vunpack.c.l.s4 1966171168
  %v5815 = vunpack.c.0.s8 %v5814
  %v5816 = vlaneseq
  %v5817 = vshrl.u32 %v5816, 7
  %v5818 = vsub.s32 %v5815, %v5817
  %v5819 = vrot.slane %v5809, %v5818
  %v5821 = vunpack.c.l.s4 1966171168
  %v5822 = vunpack.c.0.s8 %v5821
  %v5823 = vlaneseq
  %v5824 = vshrl.u32 %v5823, 7
  %v5825 = vsub.s32 %v5822, %v5824
  %v5826 = vrot.slane %v5810, %v5825
  %v5828 = vunpack.c.l.s4 1966171168
  %v5829 = vunpack.c.0.s8 %v5828
  %v5830 = vlaneseq
  %v5831 = vshrl.u32 %v5830, 7
  %v5832 = vsub.s32 %v5829, %v5831
  %v5833 = vrot.slane %v5811, %v5832
  %v5835 = vunpack.c.l.s4 1966171168
  %v5836 = vunpack.c.0.s8 %v5835
  %v5837 = vlaneseq
  %v5838 = vshrl.u32 %v5837, 7
  %v5839 = vsub.s32 %v5836, %v5838
  %v5840 = vrot.slane %v5812, %v5839
  %v5841 = vcombine.low %v5819, %v5826
  %v5842 = vcombine.high %v5819, %v5826
  %v5843 = vcombine.low %v5833, %v5840
  %v5844 = vcombine.high %v5833, %v5840
  %v5846 = vunpack.c.l.s4 1966171168
  %v5847 = vunpack.c.0.s8 %v5846
  %v5848 = vlaneseq
  %v5849 = vshrl.u32 %v5848, 7
  %v5850 = vsub.s32 %v5847, %v5849
  %v5851 = vrot.slane %v5841, %v5850
  %v5853 = vunpack.c.l.s4 1966171168
  %v5854 = vunpack.c.0.s8 %v5853
  %v5855 = vlaneseq
  %v5856 = vshrl.u32 %v5855, 7
  %v5857 = vsub.s32 %v5854, %v5856
  %v5858 = vrot.slane %v5842, %v5857
  %v5860 = vunpack.c.l.s4 1966171168
  %v5861 = vunpack.c.0.s8 %v5860
  %v5862 = vlaneseq
  %v5863 = vshrl.u32 %v5862, 7
  %v5864 = vsub.s32 %v5861, %v5863
  %v5865 = vrot.slane %v5843, %v5864
  %v5867 = vunpack.c.l.s4 1966171168
  %v5868 = vunpack.c.0.s8 %v5867
  %v5869 = vlaneseq
  %v5870 = vshrl.u32 %v5869, 7
  %v5871 = vsub.s32 %v5868, %v5870
  %v5872 = vrot.slane %v5844, %v5871
  %v5873 = vcombine.low %v5851, %v5865
  %v5874 = vcombine.low %v5858, %v5872
  %v5875 = vadd.s32 %v5873, %v5874
  %v5876 = vand.u32 %v5875, 65535
  %v5877 = vshrl.u32 %v5875, 16
  %v5878 = vcvt.s32.f32 %v5876
  %v5879 = vcvt.s32.f32 %v5877
  %5880 = vadd.xlane.f32.xlu0 %v5878
  %v5881 = vpop.xlane.xlu0 %5880
  %5882 = vadd.xlane.f32.xlu0 %v5879
  %v5883 = vpop.xlane.xlu0 %5882
  %v5884 = vcvt.f32.s32 %v5881
  %v5885 = vcvt.f32.s32 %v5883
  %v5886 = vshll.u32 %v5885, 16
  %v5887 = vadd.s32 %v5886, %v5884
  %vm5888 = vcmp.ge.s32.totalorder %v5887, %v3096
  %v5889 = vsel %vm5888, %v5752, %v5746
  %v5890 = vsub.s32 %v5752, 1
  %v5891 = vsel %vm5888, %v5748, %v5890
  %v5892 = vsub.s32 %v5891, %v5889
  %v5893 = vadd.s32 %v5892, 1
  %v5894 = vshra.s32 %v5893, 1
  %v5895 = vadd.s32 %v5889, %v5894
  %v5896 = vlaneseq
  %v5897 = vshrl.u32 %v5896, 7
  %v5898 = vsub.s32 0, %v5897
  %v5899 = vrot.slane %v5895, %v5898
  %v5900 = vlaneseq
  %v5901 = vshrl.u32 %v5900, 7
  %v5902 = vsub.s32 1, %v5901
  %v5903 = vrot.slane %v5895, %v5902
  %v5904 = vlaneseq
  %v5905 = vshrl.u32 %v5904, 7
  %v5906 = vsub.s32 2, %v5905
  %v5907 = vrot.slane %v5895, %v5906
  %v5908 = vlaneseq
  %v5909 = vshrl.u32 %v5908, 7
  %v5910 = vsub.s32 3, %v5909
  %v5911 = vrot.slane %v5895, %v5910
  %v5912 = vlaneseq
  %v5913 = vshrl.u32 %v5912, 7
  %v5914 = vsub.s32 4, %v5913
  %v5915 = vrot.slane %v5895, %v5914
  %v5916 = vlaneseq
  %v5917 = vshrl.u32 %v5916, 7
  %v5918 = vsub.s32 5, %v5917
  %v5919 = vrot.slane %v5895, %v5918
  %v5920 = vlaneseq
  %v5921 = vshrl.u32 %v5920, 7
  %v5922 = vsub.s32 6, %v5921
  %v5923 = vrot.slane %v5895, %v5922
  %v5924 = vlaneseq
  %v5925 = vshrl.u32 %v5924, 7
  %v5926 = vsub.s32 7, %v5925
  %v5927 = vrot.slane %v5895, %v5926
  %vm5936 = vcmp.ge.f32.partialorder %v3086, %v5899
  %vm5937 = vcmp.ge.f32.partialorder %v3087, %v5903
  %vm5938 = vcmp.ge.f32.partialorder %v3088, %v5907
  %vm5939 = vcmp.ge.f32.partialorder %v3089, %v5911
  %vm5940 = vcmp.ge.f32.partialorder %v3090, %v5915
  %vm5941 = vcmp.ge.f32.partialorder %v3091, %v5919
  %vm5942 = vcmp.ge.f32.partialorder %v3092, %v5923
  %vm5943 = vcmp.ge.f32.partialorder %v3093, %v5927
  %v5944 = vsel %vm5936, 1, 0
  %v5945 = vsel %vm5937, 1, 0
  %v5946 = vsel %vm5938, 1, 0
  %v5947 = vsel %vm5939, 1, 0
  %v5948 = vsel %vm5940, 1, 0
  %v5949 = vsel %vm5941, 1, 0
  %v5950 = vsel %vm5942, 1, 0
  %v5951 = vsel %vm5943, 1, 0
  %v5952 = vcombine.low %v5944, %v5945
  %v5953 = vcombine.low %v5946, %v5947
  %v5954 = vcombine.low %v5948, %v5949
  %v5955 = vcombine.low %v5950, %v5951
  %v5957 = vunpack.c.l.s4 1966171168
  %v5958 = vunpack.c.0.s8 %v5957
  %v5959 = vlaneseq
  %v5960 = vshrl.u32 %v5959, 7
  %v5961 = vsub.s32 %v5958, %v5960
  %v5962 = vrot.slane %v5952, %v5961
  %v5964 = vunpack.c.l.s4 1966171168
  %v5965 = vunpack.c.0.s8 %v5964
  %v5966 = vlaneseq
  %v5967 = vshrl.u32 %v5966, 7
  %v5968 = vsub.s32 %v5965, %v5967
  %v5969 = vrot.slane %v5953, %v5968
  %v5971 = vunpack.c.l.s4 1966171168
  %v5972 = vunpack.c.0.s8 %v5971
  %v5973 = vlaneseq
  %v5974 = vshrl.u32 %v5973, 7
  %v5975 = vsub.s32 %v5972, %v5974
  %v5976 = vrot.slane %v5954, %v5975
  %v5978 = vunpack.c.l.s4 1966171168
  %v5979 = vunpack.c.0.s8 %v5978
  %v5980 = vlaneseq
  %v5981 = vshrl.u32 %v5980, 7
  %v5982 = vsub.s32 %v5979, %v5981
  %v5983 = vrot.slane %v5955, %v5982
  %v5984 = vcombine.low %v5962, %v5969
  %v5985 = vcombine.high %v5962, %v5969
  %v5986 = vcombine.low %v5976, %v5983
  %v5987 = vcombine.high %v5976, %v5983
  %v5989 = vunpack.c.l.s4 1966171168
  %v5990 = vunpack.c.0.s8 %v5989
  %v5991 = vlaneseq
  %v5992 = vshrl.u32 %v5991, 7
  %v5993 = vsub.s32 %v5990, %v5992
  %v5994 = vrot.slane %v5984, %v5993
  %v5996 = vunpack.c.l.s4 1966171168
  %v5997 = vunpack.c.0.s8 %v5996
  %v5998 = vlaneseq
  %v5999 = vshrl.u32 %v5998, 7
  %v6000 = vsub.s32 %v5997, %v5999
  %v6001 = vrot.slane %v5985, %v6000
  %v6003 = vunpack.c.l.s4 1966171168
  %v6004 = vunpack.c.0.s8 %v6003
  %v6005 = vlaneseq
  %v6006 = vshrl.u32 %v6005, 7
  %v6007 = vsub.s32 %v6004, %v6006
  %v6008 = vrot.slane %v5986, %v6007
  %v6010 = vunpack.c.l.s4 1966171168
  %v6011 = vunpack.c.0.s8 %v6010
  %v6012 = vlaneseq
  %v6013 = vshrl.u32 %v6012, 7
  %v6014 = vsub.s32 %v6011, %v6013
  %v6015 = vrot.slane %v5987, %v6014
  %v6016 = vcombine.low %v5994, %v6008
  %v6017 = vcombine.low %v6001, %v6015
  %v6018 = vadd.s32 %v6016, %v6017
  %v6019 = vand.u32 %v6018, 65535
  %v6020 = vshrl.u32 %v6018, 16
  %v6021 = vcvt.s32.f32 %v6019
  %v6022 = vcvt.s32.f32 %v6020
  %6023 = vadd.xlane.f32.xlu0 %v6021
  %v6024 = vpop.xlane.xlu0 %6023
  %6025 = vadd.xlane.f32.xlu0 %v6022
  %v6026 = vpop.xlane.xlu0 %6025
  %v6027 = vcvt.f32.s32 %v6024
  %v6028 = vcvt.f32.s32 %v6026
  %v6029 = vshll.u32 %v6028, 16
  %v6030 = vadd.s32 %v6029, %v6027
  %vm6031 = vcmp.ge.s32.totalorder %v6030, %v3096
  %v6032 = vsel %vm6031, %v5895, %v5889
  %v6033 = vsub.s32 %v5895, 1
  %v6034 = vsel %vm6031, %v5891, %v6033
  %v6035 = vsub.s32 %v6034, %v6032
  %v6036 = vadd.s32 %v6035, 1
  %v6037 = vshra.s32 %v6036, 1
  %v6038 = vadd.s32 %v6032, %v6037
  %v6039 = vlaneseq
  %v6040 = vshrl.u32 %v6039, 7
  %v6041 = vsub.s32 0, %v6040
  %v6042 = vrot.slane %v6038, %v6041
  %v6043 = vlaneseq
  %v6044 = vshrl.u32 %v6043, 7
  %v6045 = vsub.s32 1, %v6044
  %v6046 = vrot.slane %v6038, %v6045
  %v6047 = vlaneseq
  %v6048 = vshrl.u32 %v6047, 7
  %v6049 = vsub.s32 2, %v6048
  %v6050 = vrot.slane %v6038, %v6049
  %v6051 = vlaneseq
  %v6052 = vshrl.u32 %v6051, 7
  %v6053 = vsub.s32 3, %v6052
  %v6054 = vrot.slane %v6038, %v6053
  %v6055 = vlaneseq
  %v6056 = vshrl.u32 %v6055, 7
  %v6057 = vsub.s32 4, %v6056
  %v6058 = vrot.slane %v6038, %v6057
  %v6059 = vlaneseq
  %v6060 = vshrl.u32 %v6059, 7
  %v6061 = vsub.s32 5, %v6060
  %v6062 = vrot.slane %v6038, %v6061
  %v6063 = vlaneseq
  %v6064 = vshrl.u32 %v6063, 7
  %v6065 = vsub.s32 6, %v6064
  %v6066 = vrot.slane %v6038, %v6065
  %v6067 = vlaneseq
  %v6068 = vshrl.u32 %v6067, 7
  %v6069 = vsub.s32 7, %v6068
  %v6070 = vrot.slane %v6038, %v6069
  %vm6079 = vcmp.ge.f32.partialorder %v3086, %v6042
  %vm6080 = vcmp.ge.f32.partialorder %v3087, %v6046
  %vm6081 = vcmp.ge.f32.partialorder %v3088, %v6050
  %vm6082 = vcmp.ge.f32.partialorder %v3089, %v6054
  %vm6083 = vcmp.ge.f32.partialorder %v3090, %v6058
  %vm6084 = vcmp.ge.f32.partialorder %v3091, %v6062
  %vm6085 = vcmp.ge.f32.partialorder %v3092, %v6066
  %vm6086 = vcmp.ge.f32.partialorder %v3093, %v6070
  %v6087 = vsel %vm6079, 1, 0
  %v6088 = vsel %vm6080, 1, 0
  %v6089 = vsel %vm6081, 1, 0
  %v6090 = vsel %vm6082, 1, 0
  %v6091 = vsel %vm6083, 1, 0
  %v6092 = vsel %vm6084, 1, 0
  %v6093 = vsel %vm6085, 1, 0
  %v6094 = vsel %vm6086, 1, 0
  %v6095 = vcombine.low %v6087, %v6088
  %v6096 = vcombine.low %v6089, %v6090
  %v6097 = vcombine.low %v6091, %v6092
  %v6098 = vcombine.low %v6093, %v6094
  %v6100 = vunpack.c.l.s4 1966171168
  %v6101 = vunpack.c.0.s8 %v6100
  %v6102 = vlaneseq
  %v6103 = vshrl.u32 %v6102, 7
  %v6104 = vsub.s32 %v6101, %v6103
  %v6105 = vrot.slane %v6095, %v6104
  %v6107 = vunpack.c.l.s4 1966171168
  %v6108 = vunpack.c.0.s8 %v6107
  %v6109 = vlaneseq
  %v6110 = vshrl.u32 %v6109, 7
  %v6111 = vsub.s32 %v6108, %v6110
  %v6112 = vrot.slane %v6096, %v6111
  %v6114 = vunpack.c.l.s4 1966171168
  %v6115 = vunpack.c.0.s8 %v6114
  %v6116 = vlaneseq
  %v6117 = vshrl.u32 %v6116, 7
  %v6118 = vsub.s32 %v6115, %v6117
  %v6119 = vrot.slane %v6097, %v6118
  %v6121 = vunpack.c.l.s4 1966171168
  %v6122 = vunpack.c.0.s8 %v6121
  %v6123 = vlaneseq
  %v6124 = vshrl.u32 %v6123, 7
  %v6125 = vsub.s32 %v6122, %v6124
  %v6126 = vrot.slane %v6098, %v6125
  %v6127 = vcombine.low %v6105, %v6112
  %v6128 = vcombine.high %v6105, %v6112
  %v6129 = vcombine.low %v6119, %v6126
  %v6130 = vcombine.high %v6119, %v6126
  %v6132 = vunpack.c.l.s4 1966171168
  %v6133 = vunpack.c.0.s8 %v6132
  %v6134 = vlaneseq
  %v6135 = vshrl.u32 %v6134, 7
  %v6136 = vsub.s32 %v6133, %v6135
  %v6137 = vrot.slane %v6127, %v6136
  %v6139 = vunpack.c.l.s4 1966171168
  %v6140 = vunpack.c.0.s8 %v6139
  %v6141 = vlaneseq
  %v6142 = vshrl.u32 %v6141, 7
  %v6143 = vsub.s32 %v6140, %v6142
  %v6144 = vrot.slane %v6128, %v6143
  %v6146 = vunpack.c.l.s4 1966171168
  %v6147 = vunpack.c.0.s8 %v6146
  %v6148 = vlaneseq
  %v6149 = vshrl.u32 %v6148, 7
  %v6150 = vsub.s32 %v6147, %v6149
  %v6151 = vrot.slane %v6129, %v6150
  %v6153 = vunpack.c.l.s4 1966171168
  %v6154 = vunpack.c.0.s8 %v6153
  %v6155 = vlaneseq
  %v6156 = vshrl.u32 %v6155, 7
  %v6157 = vsub.s32 %v6154, %v6156
  %v6158 = vrot.slane %v6130, %v6157
  %v6159 = vcombine.low %v6137, %v6151
  %v6160 = vcombine.low %v6144, %v6158
  %v6161 = vadd.s32 %v6159, %v6160
  %v6162 = vand.u32 %v6161, 65535
  %v6163 = vshrl.u32 %v6161, 16
  %v6164 = vcvt.s32.f32 %v6162
  %v6165 = vcvt.s32.f32 %v6163
  %6166 = vadd.xlane.f32.xlu0 %v6164
  %v6167 = vpop.xlane.xlu0 %6166
  %6168 = vadd.xlane.f32.xlu0 %v6165
  %v6169 = vpop.xlane.xlu0 %6168
  %v6170 = vcvt.f32.s32 %v6167
  %v6171 = vcvt.f32.s32 %v6169
  %v6172 = vshll.u32 %v6171, 16
  %v6173 = vadd.s32 %v6172, %v6170
  %vm6174 = vcmp.ge.s32.totalorder %v6173, %v3096
  %v6175 = vsel %vm6174, %v6038, %v6032
  %v6176 = vsub.s32 %v6038, 1
  %v6177 = vsel %vm6174, %v6034, %v6176
  %v6178 = vsub.s32 %v6177, %v6175
  %v6179 = vadd.s32 %v6178, 1
  %v6180 = vshra.s32 %v6179, 1
  %v6181 = vadd.s32 %v6175, %v6180
  %v6182 = vlaneseq
  %v6183 = vshrl.u32 %v6182, 7
  %v6184 = vsub.s32 0, %v6183
  %v6185 = vrot.slane %v6181, %v6184
  %v6186 = vlaneseq
  %v6187 = vshrl.u32 %v6186, 7
  %v6188 = vsub.s32 1, %v6187
  %v6189 = vrot.slane %v6181, %v6188
  %v6190 = vlaneseq
  %v6191 = vshrl.u32 %v6190, 7
  %v6192 = vsub.s32 2, %v6191
  %v6193 = vrot.slane %v6181, %v6192
  %v6194 = vlaneseq
  %v6195 = vshrl.u32 %v6194, 7
  %v6196 = vsub.s32 3, %v6195
  %v6197 = vrot.slane %v6181, %v6196
  %v6198 = vlaneseq
  %v6199 = vshrl.u32 %v6198, 7
  %v6200 = vsub.s32 4, %v6199
  %v6201 = vrot.slane %v6181, %v6200
  %v6202 = vlaneseq
  %v6203 = vshrl.u32 %v6202, 7
  %v6204 = vsub.s32 5, %v6203
  %v6205 = vrot.slane %v6181, %v6204
  %v6206 = vlaneseq
  %v6207 = vshrl.u32 %v6206, 7
  %v6208 = vsub.s32 6, %v6207
  %v6209 = vrot.slane %v6181, %v6208
  %v6210 = vlaneseq
  %v6211 = vshrl.u32 %v6210, 7
  %v6212 = vsub.s32 7, %v6211
  %v6213 = vrot.slane %v6181, %v6212
  %vm6222 = vcmp.ge.f32.partialorder %v3086, %v6185
  %vm6223 = vcmp.ge.f32.partialorder %v3087, %v6189
  %vm6224 = vcmp.ge.f32.partialorder %v3088, %v6193
  %vm6225 = vcmp.ge.f32.partialorder %v3089, %v6197
  %vm6226 = vcmp.ge.f32.partialorder %v3090, %v6201
  %vm6227 = vcmp.ge.f32.partialorder %v3091, %v6205
  %vm6228 = vcmp.ge.f32.partialorder %v3092, %v6209
  %vm6229 = vcmp.ge.f32.partialorder %v3093, %v6213
  %v6230 = vsel %vm6222, 1, 0
  %v6231 = vsel %vm6223, 1, 0
  %v6232 = vsel %vm6224, 1, 0
  %v6233 = vsel %vm6225, 1, 0
  %v6234 = vsel %vm6226, 1, 0
  %v6235 = vsel %vm6227, 1, 0
  %v6236 = vsel %vm6228, 1, 0
  %v6237 = vsel %vm6229, 1, 0
  %v6238 = vcombine.low %v6230, %v6231
  %v6239 = vcombine.low %v6232, %v6233
  %v6240 = vcombine.low %v6234, %v6235
  %v6241 = vcombine.low %v6236, %v6237
  %v6243 = vunpack.c.l.s4 1966171168
  %v6244 = vunpack.c.0.s8 %v6243
  %v6245 = vlaneseq
  %v6246 = vshrl.u32 %v6245, 7
  %v6247 = vsub.s32 %v6244, %v6246
  %v6248 = vrot.slane %v6238, %v6247
  %v6250 = vunpack.c.l.s4 1966171168
  %v6251 = vunpack.c.0.s8 %v6250
  %v6252 = vlaneseq
  %v6253 = vshrl.u32 %v6252, 7
  %v6254 = vsub.s32 %v6251, %v6253
  %v6255 = vrot.slane %v6239, %v6254
  %v6257 = vunpack.c.l.s4 1966171168
  %v6258 = vunpack.c.0.s8 %v6257
  %v6259 = vlaneseq
  %v6260 = vshrl.u32 %v6259, 7
  %v6261 = vsub.s32 %v6258, %v6260
  %v6262 = vrot.slane %v6240, %v6261
  %v6264 = vunpack.c.l.s4 1966171168
  %v6265 = vunpack.c.0.s8 %v6264
  %v6266 = vlaneseq
  %v6267 = vshrl.u32 %v6266, 7
  %v6268 = vsub.s32 %v6265, %v6267
  %v6269 = vrot.slane %v6241, %v6268
  %v6270 = vcombine.low %v6248, %v6255
  %v6271 = vcombine.high %v6248, %v6255
  %v6272 = vcombine.low %v6262, %v6269
  %v6273 = vcombine.high %v6262, %v6269
  %v6275 = vunpack.c.l.s4 1966171168
  %v6276 = vunpack.c.0.s8 %v6275
  %v6277 = vlaneseq
  %v6278 = vshrl.u32 %v6277, 7
  %v6279 = vsub.s32 %v6276, %v6278
  %v6280 = vrot.slane %v6270, %v6279
  %v6282 = vunpack.c.l.s4 1966171168
  %v6283 = vunpack.c.0.s8 %v6282
  %v6284 = vlaneseq
  %v6285 = vshrl.u32 %v6284, 7
  %v6286 = vsub.s32 %v6283, %v6285
  %v6287 = vrot.slane %v6271, %v6286
  %v6289 = vunpack.c.l.s4 1966171168
  %v6290 = vunpack.c.0.s8 %v6289
  %v6291 = vlaneseq
  %v6292 = vshrl.u32 %v6291, 7
  %v6293 = vsub.s32 %v6290, %v6292
  %v6294 = vrot.slane %v6272, %v6293
  %v6296 = vunpack.c.l.s4 1966171168
  %v6297 = vunpack.c.0.s8 %v6296
  %v6298 = vlaneseq
  %v6299 = vshrl.u32 %v6298, 7
  %v6300 = vsub.s32 %v6297, %v6299
  %v6301 = vrot.slane %v6273, %v6300
  %v6302 = vcombine.low %v6280, %v6294
  %v6303 = vcombine.low %v6287, %v6301
  %v6304 = vadd.s32 %v6302, %v6303
  %v6305 = vand.u32 %v6304, 65535
  %v6306 = vshrl.u32 %v6304, 16
  %v6307 = vcvt.s32.f32 %v6305
  %v6308 = vcvt.s32.f32 %v6306
  %6309 = vadd.xlane.f32.xlu0 %v6307
  %v6310 = vpop.xlane.xlu0 %6309
  %6311 = vadd.xlane.f32.xlu0 %v6308
  %v6312 = vpop.xlane.xlu0 %6311
  %v6313 = vcvt.f32.s32 %v6310
  %v6314 = vcvt.f32.s32 %v6312
  %v6315 = vshll.u32 %v6314, 16
  %v6316 = vadd.s32 %v6315, %v6313
  %vm6317 = vcmp.ge.s32.totalorder %v6316, %v3096
  %v6318 = vsel %vm6317, %v6181, %v6175
  %v6319 = vsub.s32 %v6181, 1
  %v6320 = vsel %vm6317, %v6177, %v6319
  %v6321 = vsub.s32 %v6320, %v6318
  %v6322 = vadd.s32 %v6321, 1
  %v6323 = vshra.s32 %v6322, 1
  %v6324 = vadd.s32 %v6318, %v6323
  %v6325 = vlaneseq
  %v6326 = vshrl.u32 %v6325, 7
  %v6327 = vsub.s32 0, %v6326
  %v6328 = vrot.slane %v6324, %v6327
  %v6329 = vlaneseq
  %v6330 = vshrl.u32 %v6329, 7
  %v6331 = vsub.s32 1, %v6330
  %v6332 = vrot.slane %v6324, %v6331
  %v6333 = vlaneseq
  %v6334 = vshrl.u32 %v6333, 7
  %v6335 = vsub.s32 2, %v6334
  %v6336 = vrot.slane %v6324, %v6335
  %v6337 = vlaneseq
  %v6338 = vshrl.u32 %v6337, 7
  %v6339 = vsub.s32 3, %v6338
  %v6340 = vrot.slane %v6324, %v6339
  %v6341 = vlaneseq
  %v6342 = vshrl.u32 %v6341, 7
  %v6343 = vsub.s32 4, %v6342
  %v6344 = vrot.slane %v6324, %v6343
  %v6345 = vlaneseq
  %v6346 = vshrl.u32 %v6345, 7
  %v6347 = vsub.s32 5, %v6346
  %v6348 = vrot.slane %v6324, %v6347
  %v6349 = vlaneseq
  %v6350 = vshrl.u32 %v6349, 7
  %v6351 = vsub.s32 6, %v6350
  %v6352 = vrot.slane %v6324, %v6351
  %v6353 = vlaneseq
  %v6354 = vshrl.u32 %v6353, 7
  %v6355 = vsub.s32 7, %v6354
  %v6356 = vrot.slane %v6324, %v6355
  %vm6365 = vcmp.ge.f32.partialorder %v3086, %v6328
  %vm6366 = vcmp.ge.f32.partialorder %v3087, %v6332
  %vm6367 = vcmp.ge.f32.partialorder %v3088, %v6336
  %vm6368 = vcmp.ge.f32.partialorder %v3089, %v6340
  %vm6369 = vcmp.ge.f32.partialorder %v3090, %v6344
  %vm6370 = vcmp.ge.f32.partialorder %v3091, %v6348
  %vm6371 = vcmp.ge.f32.partialorder %v3092, %v6352
  %vm6372 = vcmp.ge.f32.partialorder %v3093, %v6356
  %v6373 = vsel %vm6365, 1, 0
  %v6374 = vsel %vm6366, 1, 0
  %v6375 = vsel %vm6367, 1, 0
  %v6376 = vsel %vm6368, 1, 0
  %v6377 = vsel %vm6369, 1, 0
  %v6378 = vsel %vm6370, 1, 0
  %v6379 = vsel %vm6371, 1, 0
  %v6380 = vsel %vm6372, 1, 0
  %v6381 = vcombine.low %v6373, %v6374
  %v6382 = vcombine.low %v6375, %v6376
  %v6383 = vcombine.low %v6377, %v6378
  %v6384 = vcombine.low %v6379, %v6380
  %v6386 = vunpack.c.l.s4 1966171168
  %v6387 = vunpack.c.0.s8 %v6386
  %v6388 = vlaneseq
  %v6389 = vshrl.u32 %v6388, 7
  %v6390 = vsub.s32 %v6387, %v6389
  %v6391 = vrot.slane %v6381, %v6390
  %v6393 = vunpack.c.l.s4 1966171168
  %v6394 = vunpack.c.0.s8 %v6393
  %v6395 = vlaneseq
  %v6396 = vshrl.u32 %v6395, 7
  %v6397 = vsub.s32 %v6394, %v6396
  %v6398 = vrot.slane %v6382, %v6397
  %v6400 = vunpack.c.l.s4 1966171168
  %v6401 = vunpack.c.0.s8 %v6400
  %v6402 = vlaneseq
  %v6403 = vshrl.u32 %v6402, 7
  %v6404 = vsub.s32 %v6401, %v6403
  %v6405 = vrot.slane %v6383, %v6404
  %v6407 = vunpack.c.l.s4 1966171168
  %v6408 = vunpack.c.0.s8 %v6407
  %v6409 = vlaneseq
  %v6410 = vshrl.u32 %v6409, 7
  %v6411 = vsub.s32 %v6408, %v6410
  %v6412 = vrot.slane %v6384, %v6411
  %v6413 = vcombine.low %v6391, %v6398
  %v6414 = vcombine.high %v6391, %v6398
  %v6415 = vcombine.low %v6405, %v6412
  %v6416 = vcombine.high %v6405, %v6412
  %v6418 = vunpack.c.l.s4 1966171168
  %v6419 = vunpack.c.0.s8 %v6418
  %v6420 = vlaneseq
  %v6421 = vshrl.u32 %v6420, 7
  %v6422 = vsub.s32 %v6419, %v6421
  %v6423 = vrot.slane %v6413, %v6422
  %v6425 = vunpack.c.l.s4 1966171168
  %v6426 = vunpack.c.0.s8 %v6425
  %v6427 = vlaneseq
  %v6428 = vshrl.u32 %v6427, 7
  %v6429 = vsub.s32 %v6426, %v6428
  %v6430 = vrot.slane %v6414, %v6429
  %v6432 = vunpack.c.l.s4 1966171168
  %v6433 = vunpack.c.0.s8 %v6432
  %v6434 = vlaneseq
  %v6435 = vshrl.u32 %v6434, 7
  %v6436 = vsub.s32 %v6433, %v6435
  %v6437 = vrot.slane %v6415, %v6436
  %v6439 = vunpack.c.l.s4 1966171168
  %v6440 = vunpack.c.0.s8 %v6439
  %v6441 = vlaneseq
  %v6442 = vshrl.u32 %v6441, 7
  %v6443 = vsub.s32 %v6440, %v6442
  %v6444 = vrot.slane %v6416, %v6443
  %v6445 = vcombine.low %v6423, %v6437
  %v6446 = vcombine.low %v6430, %v6444
  %v6447 = vadd.s32 %v6445, %v6446
  %v6448 = vand.u32 %v6447, 65535
  %v6449 = vshrl.u32 %v6447, 16
  %v6450 = vcvt.s32.f32 %v6448
  %v6451 = vcvt.s32.f32 %v6449
  %6452 = vadd.xlane.f32.xlu0 %v6450
  %v6453 = vpop.xlane.xlu0 %6452
  %6454 = vadd.xlane.f32.xlu0 %v6451
  %v6455 = vpop.xlane.xlu0 %6454
  %v6456 = vcvt.f32.s32 %v6453
  %v6457 = vcvt.f32.s32 %v6455
  %v6458 = vshll.u32 %v6457, 16
  %v6459 = vadd.s32 %v6458, %v6456
  %vm6460 = vcmp.ge.s32.totalorder %v6459, %v3096
  %v6461 = vsel %vm6460, %v6324, %v6318
  %v6462 = vsub.s32 %v6324, 1
  %v6463 = vsel %vm6460, %v6320, %v6462
  %v6464 = vsub.s32 %v6463, %v6461
  %v6465 = vadd.s32 %v6464, 1
  %v6466 = vshra.s32 %v6465, 1
  %v6467 = vadd.s32 %v6461, %v6466
  %v6468 = vlaneseq
  %v6469 = vshrl.u32 %v6468, 7
  %v6470 = vsub.s32 0, %v6469
  %v6471 = vrot.slane %v6467, %v6470
  %v6472 = vlaneseq
  %v6473 = vshrl.u32 %v6472, 7
  %v6474 = vsub.s32 1, %v6473
  %v6475 = vrot.slane %v6467, %v6474
  %v6476 = vlaneseq
  %v6477 = vshrl.u32 %v6476, 7
  %v6478 = vsub.s32 2, %v6477
  %v6479 = vrot.slane %v6467, %v6478
  %v6480 = vlaneseq
  %v6481 = vshrl.u32 %v6480, 7
  %v6482 = vsub.s32 3, %v6481
  %v6483 = vrot.slane %v6467, %v6482
  %v6484 = vlaneseq
  %v6485 = vshrl.u32 %v6484, 7
  %v6486 = vsub.s32 4, %v6485
  %v6487 = vrot.slane %v6467, %v6486
  %v6488 = vlaneseq
  %v6489 = vshrl.u32 %v6488, 7
  %v6490 = vsub.s32 5, %v6489
  %v6491 = vrot.slane %v6467, %v6490
  %v6492 = vlaneseq
  %v6493 = vshrl.u32 %v6492, 7
  %v6494 = vsub.s32 6, %v6493
  %v6495 = vrot.slane %v6467, %v6494
  %v6496 = vlaneseq
  %v6497 = vshrl.u32 %v6496, 7
  %v6498 = vsub.s32 7, %v6497
  %v6499 = vrot.slane %v6467, %v6498
  %vm6508 = vcmp.ge.f32.partialorder %v3086, %v6471
  %vm6509 = vcmp.ge.f32.partialorder %v3087, %v6475
  %vm6510 = vcmp.ge.f32.partialorder %v3088, %v6479
  %vm6511 = vcmp.ge.f32.partialorder %v3089, %v6483
  %vm6512 = vcmp.ge.f32.partialorder %v3090, %v6487
  %vm6513 = vcmp.ge.f32.partialorder %v3091, %v6491
  %vm6514 = vcmp.ge.f32.partialorder %v3092, %v6495
  %vm6515 = vcmp.ge.f32.partialorder %v3093, %v6499
  %v6516 = vsel %vm6508, 1, 0
  %v6517 = vsel %vm6509, 1, 0
  %v6518 = vsel %vm6510, 1, 0
  %v6519 = vsel %vm6511, 1, 0
  %v6520 = vsel %vm6512, 1, 0
  %v6521 = vsel %vm6513, 1, 0
  %v6522 = vsel %vm6514, 1, 0
  %v6523 = vsel %vm6515, 1, 0
  %v6524 = vcombine.low %v6516, %v6517
  %v6525 = vcombine.low %v6518, %v6519
  %v6526 = vcombine.low %v6520, %v6521
  %v6527 = vcombine.low %v6522, %v6523
  %v6529 = vunpack.c.l.s4 1966171168
  %v6530 = vunpack.c.0.s8 %v6529
  %v6531 = vlaneseq
  %v6532 = vshrl.u32 %v6531, 7
  %v6533 = vsub.s32 %v6530, %v6532
  %v6534 = vrot.slane %v6524, %v6533
  %v6536 = vunpack.c.l.s4 1966171168
  %v6537 = vunpack.c.0.s8 %v6536
  %v6538 = vlaneseq
  %v6539 = vshrl.u32 %v6538, 7
  %v6540 = vsub.s32 %v6537, %v6539
  %v6541 = vrot.slane %v6525, %v6540
  %v6543 = vunpack.c.l.s4 1966171168
  %v6544 = vunpack.c.0.s8 %v6543
  %v6545 = vlaneseq
  %v6546 = vshrl.u32 %v6545, 7
  %v6547 = vsub.s32 %v6544, %v6546
  %v6548 = vrot.slane %v6526, %v6547
  %v6550 = vunpack.c.l.s4 1966171168
  %v6551 = vunpack.c.0.s8 %v6550
  %v6552 = vlaneseq
  %v6553 = vshrl.u32 %v6552, 7
  %v6554 = vsub.s32 %v6551, %v6553
  %v6555 = vrot.slane %v6527, %v6554
  %v6556 = vcombine.low %v6534, %v6541
  %v6557 = vcombine.high %v6534, %v6541
  %v6558 = vcombine.low %v6548, %v6555
  %v6559 = vcombine.high %v6548, %v6555
  %v6561 = vunpack.c.l.s4 1966171168
  %v6562 = vunpack.c.0.s8 %v6561
  %v6563 = vlaneseq
  %v6564 = vshrl.u32 %v6563, 7
  %v6565 = vsub.s32 %v6562, %v6564
  %v6566 = vrot.slane %v6556, %v6565
  %v6568 = vunpack.c.l.s4 1966171168
  %v6569 = vunpack.c.0.s8 %v6568
  %v6570 = vlaneseq
  %v6571 = vshrl.u32 %v6570, 7
  %v6572 = vsub.s32 %v6569, %v6571
  %v6573 = vrot.slane %v6557, %v6572
  %v6575 = vunpack.c.l.s4 1966171168
  %v6576 = vunpack.c.0.s8 %v6575
  %v6577 = vlaneseq
  %v6578 = vshrl.u32 %v6577, 7
  %v6579 = vsub.s32 %v6576, %v6578
  %v6580 = vrot.slane %v6558, %v6579
  %v6582 = vunpack.c.l.s4 1966171168
  %v6583 = vunpack.c.0.s8 %v6582
  %v6584 = vlaneseq
  %v6585 = vshrl.u32 %v6584, 7
  %v6586 = vsub.s32 %v6583, %v6585
  %v6587 = vrot.slane %v6559, %v6586
  %v6588 = vcombine.low %v6566, %v6580
  %v6589 = vcombine.low %v6573, %v6587
  %v6590 = vadd.s32 %v6588, %v6589
  %v6591 = vand.u32 %v6590, 65535
  %v6592 = vshrl.u32 %v6590, 16
  %v6593 = vcvt.s32.f32 %v6591
  %v6594 = vcvt.s32.f32 %v6592
  %6595 = vadd.xlane.f32.xlu0 %v6593
  %v6596 = vpop.xlane.xlu0 %6595
  %6597 = vadd.xlane.f32.xlu0 %v6594
  %v6598 = vpop.xlane.xlu0 %6597
  %v6599 = vcvt.f32.s32 %v6596
  %v6600 = vcvt.f32.s32 %v6598
  %v6601 = vshll.u32 %v6600, 16
  %v6602 = vadd.s32 %v6601, %v6599
  %vm6603 = vcmp.ge.s32.totalorder %v6602, %v3096
  %v6604 = vsel %vm6603, %v6467, %v6461
  %v6605 = vsub.s32 %v6467, 1
  %v6606 = vsel %vm6603, %v6463, %v6605
  %v6607 = vsub.s32 %v6606, %v6604
  %v6608 = vadd.s32 %v6607, 1
  %v6609 = vshra.s32 %v6608, 1
  %v6610 = vadd.s32 %v6604, %v6609
  %v6611 = vlaneseq
  %v6612 = vshrl.u32 %v6611, 7
  %v6613 = vsub.s32 0, %v6612
  %v6614 = vrot.slane %v6610, %v6613
  %v6615 = vlaneseq
  %v6616 = vshrl.u32 %v6615, 7
  %v6617 = vsub.s32 1, %v6616
  %v6618 = vrot.slane %v6610, %v6617
  %v6619 = vlaneseq
  %v6620 = vshrl.u32 %v6619, 7
  %v6621 = vsub.s32 2, %v6620
  %v6622 = vrot.slane %v6610, %v6621
  %v6623 = vlaneseq
  %v6624 = vshrl.u32 %v6623, 7
  %v6625 = vsub.s32 3, %v6624
  %v6626 = vrot.slane %v6610, %v6625
  %v6627 = vlaneseq
  %v6628 = vshrl.u32 %v6627, 7
  %v6629 = vsub.s32 4, %v6628
  %v6630 = vrot.slane %v6610, %v6629
  %v6631 = vlaneseq
  %v6632 = vshrl.u32 %v6631, 7
  %v6633 = vsub.s32 5, %v6632
  %v6634 = vrot.slane %v6610, %v6633
  %v6635 = vlaneseq
  %v6636 = vshrl.u32 %v6635, 7
  %v6637 = vsub.s32 6, %v6636
  %v6638 = vrot.slane %v6610, %v6637
  %v6639 = vlaneseq
  %v6640 = vshrl.u32 %v6639, 7
  %v6641 = vsub.s32 7, %v6640
  %v6642 = vrot.slane %v6610, %v6641
  %vm6651 = vcmp.ge.f32.partialorder %v3086, %v6614
  %vm6652 = vcmp.ge.f32.partialorder %v3087, %v6618
  %vm6653 = vcmp.ge.f32.partialorder %v3088, %v6622
  %vm6654 = vcmp.ge.f32.partialorder %v3089, %v6626
  %vm6655 = vcmp.ge.f32.partialorder %v3090, %v6630
  %vm6656 = vcmp.ge.f32.partialorder %v3091, %v6634
  %vm6657 = vcmp.ge.f32.partialorder %v3092, %v6638
  %vm6658 = vcmp.ge.f32.partialorder %v3093, %v6642
  %v6659 = vsel %vm6651, 1, 0
  %v6660 = vsel %vm6652, 1, 0
  %v6661 = vsel %vm6653, 1, 0
  %v6662 = vsel %vm6654, 1, 0
  %v6663 = vsel %vm6655, 1, 0
  %v6664 = vsel %vm6656, 1, 0
  %v6665 = vsel %vm6657, 1, 0
  %v6666 = vsel %vm6658, 1, 0
  %v6667 = vcombine.low %v6659, %v6660
  %v6668 = vcombine.low %v6661, %v6662
  %v6669 = vcombine.low %v6663, %v6664
  %v6670 = vcombine.low %v6665, %v6666
  %v6672 = vunpack.c.l.s4 1966171168
  %v6673 = vunpack.c.0.s8 %v6672
  %v6674 = vlaneseq
  %v6675 = vshrl.u32 %v6674, 7
  %v6676 = vsub.s32 %v6673, %v6675
  %v6677 = vrot.slane %v6667, %v6676
  %v6679 = vunpack.c.l.s4 1966171168
  %v6680 = vunpack.c.0.s8 %v6679
  %v6681 = vlaneseq
  %v6682 = vshrl.u32 %v6681, 7
  %v6683 = vsub.s32 %v6680, %v6682
  %v6684 = vrot.slane %v6668, %v6683
  %v6686 = vunpack.c.l.s4 1966171168
  %v6687 = vunpack.c.0.s8 %v6686
  %v6688 = vlaneseq
  %v6689 = vshrl.u32 %v6688, 7
  %v6690 = vsub.s32 %v6687, %v6689
  %v6691 = vrot.slane %v6669, %v6690
  %v6693 = vunpack.c.l.s4 1966171168
  %v6694 = vunpack.c.0.s8 %v6693
  %v6695 = vlaneseq
  %v6696 = vshrl.u32 %v6695, 7
  %v6697 = vsub.s32 %v6694, %v6696
  %v6698 = vrot.slane %v6670, %v6697
  %v6699 = vcombine.low %v6677, %v6684
  %v6700 = vcombine.high %v6677, %v6684
  %v6701 = vcombine.low %v6691, %v6698
  %v6702 = vcombine.high %v6691, %v6698
  %v6704 = vunpack.c.l.s4 1966171168
  %v6705 = vunpack.c.0.s8 %v6704
  %v6706 = vlaneseq
  %v6707 = vshrl.u32 %v6706, 7
  %v6708 = vsub.s32 %v6705, %v6707
  %v6709 = vrot.slane %v6699, %v6708
  %v6711 = vunpack.c.l.s4 1966171168
  %v6712 = vunpack.c.0.s8 %v6711
  %v6713 = vlaneseq
  %v6714 = vshrl.u32 %v6713, 7
  %v6715 = vsub.s32 %v6712, %v6714
  %v6716 = vrot.slane %v6700, %v6715
  %v6718 = vunpack.c.l.s4 1966171168
  %v6719 = vunpack.c.0.s8 %v6718
  %v6720 = vlaneseq
  %v6721 = vshrl.u32 %v6720, 7
  %v6722 = vsub.s32 %v6719, %v6721
  %v6723 = vrot.slane %v6701, %v6722
  %v6725 = vunpack.c.l.s4 1966171168
  %v6726 = vunpack.c.0.s8 %v6725
  %v6727 = vlaneseq
  %v6728 = vshrl.u32 %v6727, 7
  %v6729 = vsub.s32 %v6726, %v6728
  %v6730 = vrot.slane %v6702, %v6729
  %v6731 = vcombine.low %v6709, %v6723
  %v6732 = vcombine.low %v6716, %v6730
  %v6733 = vadd.s32 %v6731, %v6732
  %v6734 = vand.u32 %v6733, 65535
  %v6735 = vshrl.u32 %v6733, 16
  %v6736 = vcvt.s32.f32 %v6734
  %v6737 = vcvt.s32.f32 %v6735
  %6738 = vadd.xlane.f32.xlu0 %v6736
  %v6739 = vpop.xlane.xlu0 %6738
  %6740 = vadd.xlane.f32.xlu0 %v6737
  %v6741 = vpop.xlane.xlu0 %6740
  %v6742 = vcvt.f32.s32 %v6739
  %v6743 = vcvt.f32.s32 %v6741
  %v6744 = vshll.u32 %v6743, 16
  %v6745 = vadd.s32 %v6744, %v6742
  %vm6746 = vcmp.ge.s32.totalorder %v6745, %v3096
  %v6747 = vsel %vm6746, %v6610, %v6604
  %v6748 = vsub.s32 %v6610, 1
  %v6749 = vsel %vm6746, %v6606, %v6748
  %v6750 = vsub.s32 %v6749, %v6747
  %v6751 = vadd.s32 %v6750, 1
  %v6752 = vshra.s32 %v6751, 1
  %v6753 = vadd.s32 %v6747, %v6752
  %v6754 = vlaneseq
  %v6755 = vshrl.u32 %v6754, 7
  %v6756 = vsub.s32 0, %v6755
  %v6757 = vrot.slane %v6753, %v6756
  %v6758 = vlaneseq
  %v6759 = vshrl.u32 %v6758, 7
  %v6760 = vsub.s32 1, %v6759
  %v6761 = vrot.slane %v6753, %v6760
  %v6762 = vlaneseq
  %v6763 = vshrl.u32 %v6762, 7
  %v6764 = vsub.s32 2, %v6763
  %v6765 = vrot.slane %v6753, %v6764
  %v6766 = vlaneseq
  %v6767 = vshrl.u32 %v6766, 7
  %v6768 = vsub.s32 3, %v6767
  %v6769 = vrot.slane %v6753, %v6768
  %v6770 = vlaneseq
  %v6771 = vshrl.u32 %v6770, 7
  %v6772 = vsub.s32 4, %v6771
  %v6773 = vrot.slane %v6753, %v6772
  %v6774 = vlaneseq
  %v6775 = vshrl.u32 %v6774, 7
  %v6776 = vsub.s32 5, %v6775
  %v6777 = vrot.slane %v6753, %v6776
  %v6778 = vlaneseq
  %v6779 = vshrl.u32 %v6778, 7
  %v6780 = vsub.s32 6, %v6779
  %v6781 = vrot.slane %v6753, %v6780
  %v6782 = vlaneseq
  %v6783 = vshrl.u32 %v6782, 7
  %v6784 = vsub.s32 7, %v6783
  %v6785 = vrot.slane %v6753, %v6784
  %vm6794 = vcmp.ge.f32.partialorder %v3086, %v6757
  %vm6795 = vcmp.ge.f32.partialorder %v3087, %v6761
  %vm6796 = vcmp.ge.f32.partialorder %v3088, %v6765
  %vm6797 = vcmp.ge.f32.partialorder %v3089, %v6769
  %vm6798 = vcmp.ge.f32.partialorder %v3090, %v6773
  %vm6799 = vcmp.ge.f32.partialorder %v3091, %v6777
  %vm6800 = vcmp.ge.f32.partialorder %v3092, %v6781
  %vm6801 = vcmp.ge.f32.partialorder %v3093, %v6785
  %v6802 = vsel %vm6794, 1, 0
  %v6803 = vsel %vm6795, 1, 0
  %v6804 = vsel %vm6796, 1, 0
  %v6805 = vsel %vm6797, 1, 0
  %v6806 = vsel %vm6798, 1, 0
  %v6807 = vsel %vm6799, 1, 0
  %v6808 = vsel %vm6800, 1, 0
  %v6809 = vsel %vm6801, 1, 0
  %v6810 = vcombine.low %v6802, %v6803
  %v6811 = vcombine.low %v6804, %v6805
  %v6812 = vcombine.low %v6806, %v6807
  %v6813 = vcombine.low %v6808, %v6809
  %v6815 = vunpack.c.l.s4 1966171168
  %v6816 = vunpack.c.0.s8 %v6815
  %v6817 = vlaneseq
  %v6818 = vshrl.u32 %v6817, 7
  %v6819 = vsub.s32 %v6816, %v6818
  %v6820 = vrot.slane %v6810, %v6819
  %v6822 = vunpack.c.l.s4 1966171168
  %v6823 = vunpack.c.0.s8 %v6822
  %v6824 = vlaneseq
  %v6825 = vshrl.u32 %v6824, 7
  %v6826 = vsub.s32 %v6823, %v6825
  %v6827 = vrot.slane %v6811, %v6826
  %v6829 = vunpack.c.l.s4 1966171168
  %v6830 = vunpack.c.0.s8 %v6829
  %v6831 = vlaneseq
  %v6832 = vshrl.u32 %v6831, 7
  %v6833 = vsub.s32 %v6830, %v6832
  %v6834 = vrot.slane %v6812, %v6833
  %v6836 = vunpack.c.l.s4 1966171168
  %v6837 = vunpack.c.0.s8 %v6836
  %v6838 = vlaneseq
  %v6839 = vshrl.u32 %v6838, 7
  %v6840 = vsub.s32 %v6837, %v6839
  %v6841 = vrot.slane %v6813, %v6840
  %v6842 = vcombine.low %v6820, %v6827
  %v6843 = vcombine.high %v6820, %v6827
  %v6844 = vcombine.low %v6834, %v6841
  %v6845 = vcombine.high %v6834, %v6841
  %v6847 = vunpack.c.l.s4 1966171168
  %v6848 = vunpack.c.0.s8 %v6847
  %v6849 = vlaneseq
  %v6850 = vshrl.u32 %v6849, 7
  %v6851 = vsub.s32 %v6848, %v6850
  %v6852 = vrot.slane %v6842, %v6851
  %v6854 = vunpack.c.l.s4 1966171168
  %v6855 = vunpack.c.0.s8 %v6854
  %v6856 = vlaneseq
  %v6857 = vshrl.u32 %v6856, 7
  %v6858 = vsub.s32 %v6855, %v6857
  %v6859 = vrot.slane %v6843, %v6858
  %v6861 = vunpack.c.l.s4 1966171168
  %v6862 = vunpack.c.0.s8 %v6861
  %v6863 = vlaneseq
  %v6864 = vshrl.u32 %v6863, 7
  %v6865 = vsub.s32 %v6862, %v6864
  %v6866 = vrot.slane %v6844, %v6865
  %v6868 = vunpack.c.l.s4 1966171168
  %v6869 = vunpack.c.0.s8 %v6868
  %v6870 = vlaneseq
  %v6871 = vshrl.u32 %v6870, 7
  %v6872 = vsub.s32 %v6869, %v6871
  %v6873 = vrot.slane %v6845, %v6872
  %v6874 = vcombine.low %v6852, %v6866
  %v6875 = vcombine.low %v6859, %v6873
  %v6876 = vadd.s32 %v6874, %v6875
  %v6877 = vand.u32 %v6876, 65535
  %v6878 = vshrl.u32 %v6876, 16
  %v6879 = vcvt.s32.f32 %v6877
  %v6880 = vcvt.s32.f32 %v6878
  %6881 = vadd.xlane.f32.xlu0 %v6879
  %v6882 = vpop.xlane.xlu0 %6881
  %6883 = vadd.xlane.f32.xlu0 %v6880
  %v6884 = vpop.xlane.xlu0 %6883
  %v6885 = vcvt.f32.s32 %v6882
  %v6886 = vcvt.f32.s32 %v6884
  %v6887 = vshll.u32 %v6886, 16
  %v6888 = vadd.s32 %v6887, %v6885
  %vm6889 = vcmp.ge.s32.totalorder %v6888, %v3096
  %v6890 = vsel %vm6889, %v6753, %v6747
  %v6891 = vsub.s32 %v6753, 1
  %v6892 = vsel %vm6889, %v6749, %v6891
  %v6893 = vsub.s32 %v6892, %v6890
  %v6894 = vadd.s32 %v6893, 1
  %v6895 = vshra.s32 %v6894, 1
  %v6896 = vadd.s32 %v6890, %v6895
  %v6897 = vlaneseq
  %v6898 = vshrl.u32 %v6897, 7
  %v6899 = vsub.s32 0, %v6898
  %v6900 = vrot.slane %v6896, %v6899
  %v6901 = vlaneseq
  %v6902 = vshrl.u32 %v6901, 7
  %v6903 = vsub.s32 1, %v6902
  %v6904 = vrot.slane %v6896, %v6903
  %v6905 = vlaneseq
  %v6906 = vshrl.u32 %v6905, 7
  %v6907 = vsub.s32 2, %v6906
  %v6908 = vrot.slane %v6896, %v6907
  %v6909 = vlaneseq
  %v6910 = vshrl.u32 %v6909, 7
  %v6911 = vsub.s32 3, %v6910
  %v6912 = vrot.slane %v6896, %v6911
  %v6913 = vlaneseq
  %v6914 = vshrl.u32 %v6913, 7
  %v6915 = vsub.s32 4, %v6914
  %v6916 = vrot.slane %v6896, %v6915
  %v6917 = vlaneseq
  %v6918 = vshrl.u32 %v6917, 7
  %v6919 = vsub.s32 5, %v6918
  %v6920 = vrot.slane %v6896, %v6919
  %v6921 = vlaneseq
  %v6922 = vshrl.u32 %v6921, 7
  %v6923 = vsub.s32 6, %v6922
  %v6924 = vrot.slane %v6896, %v6923
  %v6925 = vlaneseq
  %v6926 = vshrl.u32 %v6925, 7
  %v6927 = vsub.s32 7, %v6926
  %v6928 = vrot.slane %v6896, %v6927
  %vm6937 = vcmp.ge.f32.partialorder %v3086, %v6900
  %vm6938 = vcmp.ge.f32.partialorder %v3087, %v6904
  %vm6939 = vcmp.ge.f32.partialorder %v3088, %v6908
  %vm6940 = vcmp.ge.f32.partialorder %v3089, %v6912
  %vm6941 = vcmp.ge.f32.partialorder %v3090, %v6916
  %vm6942 = vcmp.ge.f32.partialorder %v3091, %v6920
  %vm6943 = vcmp.ge.f32.partialorder %v3092, %v6924
  %vm6944 = vcmp.ge.f32.partialorder %v3093, %v6928
  %v6945 = vsel %vm6937, 1, 0
  %v6946 = vsel %vm6938, 1, 0
  %v6947 = vsel %vm6939, 1, 0
  %v6948 = vsel %vm6940, 1, 0
  %v6949 = vsel %vm6941, 1, 0
  %v6950 = vsel %vm6942, 1, 0
  %v6951 = vsel %vm6943, 1, 0
  %v6952 = vsel %vm6944, 1, 0
  %v6953 = vcombine.low %v6945, %v6946
  %v6954 = vcombine.low %v6947, %v6948
  %v6955 = vcombine.low %v6949, %v6950
  %v6956 = vcombine.low %v6951, %v6952
  %v6958 = vunpack.c.l.s4 1966171168
  %v6959 = vunpack.c.0.s8 %v6958
  %v6960 = vlaneseq
  %v6961 = vshrl.u32 %v6960, 7
  %v6962 = vsub.s32 %v6959, %v6961
  %v6963 = vrot.slane %v6953, %v6962
  %v6965 = vunpack.c.l.s4 1966171168
  %v6966 = vunpack.c.0.s8 %v6965
  %v6967 = vlaneseq
  %v6968 = vshrl.u32 %v6967, 7
  %v6969 = vsub.s32 %v6966, %v6968
  %v6970 = vrot.slane %v6954, %v6969
  %v6972 = vunpack.c.l.s4 1966171168
  %v6973 = vunpack.c.0.s8 %v6972
  %v6974 = vlaneseq
  %v6975 = vshrl.u32 %v6974, 7
  %v6976 = vsub.s32 %v6973, %v6975
  %v6977 = vrot.slane %v6955, %v6976
  %v6979 = vunpack.c.l.s4 1966171168
  %v6980 = vunpack.c.0.s8 %v6979
  %v6981 = vlaneseq
  %v6982 = vshrl.u32 %v6981, 7
  %v6983 = vsub.s32 %v6980, %v6982
  %v6984 = vrot.slane %v6956, %v6983
  %v6985 = vcombine.low %v6963, %v6970
  %v6986 = vcombine.high %v6963, %v6970
  %v6987 = vcombine.low %v6977, %v6984
  %v6988 = vcombine.high %v6977, %v6984
  %v6990 = vunpack.c.l.s4 1966171168
  %v6991 = vunpack.c.0.s8 %v6990
  %v6992 = vlaneseq
  %v6993 = vshrl.u32 %v6992, 7
  %v6994 = vsub.s32 %v6991, %v6993
  %v6995 = vrot.slane %v6985, %v6994
  %v6997 = vunpack.c.l.s4 1966171168
  %v6998 = vunpack.c.0.s8 %v6997
  %v6999 = vlaneseq
  %v7000 = vshrl.u32 %v6999, 7
  %v7001 = vsub.s32 %v6998, %v7000
  %v7002 = vrot.slane %v6986, %v7001
  %v7004 = vunpack.c.l.s4 1966171168
  %v7005 = vunpack.c.0.s8 %v7004
  %v7006 = vlaneseq
  %v7007 = vshrl.u32 %v7006, 7
  %v7008 = vsub.s32 %v7005, %v7007
  %v7009 = vrot.slane %v6987, %v7008
  %v7011 = vunpack.c.l.s4 1966171168
  %v7012 = vunpack.c.0.s8 %v7011
  %v7013 = vlaneseq
  %v7014 = vshrl.u32 %v7013, 7
  %v7015 = vsub.s32 %v7012, %v7014
  %v7016 = vrot.slane %v6988, %v7015
  %v7017 = vcombine.low %v6995, %v7009
  %v7018 = vcombine.low %v7002, %v7016
  %v7019 = vadd.s32 %v7017, %v7018
  %v7020 = vand.u32 %v7019, 65535
  %v7021 = vshrl.u32 %v7019, 16
  %v7022 = vcvt.s32.f32 %v7020
  %v7023 = vcvt.s32.f32 %v7021
  %7024 = vadd.xlane.f32.xlu0 %v7022
  %v7025 = vpop.xlane.xlu0 %7024
  %7026 = vadd.xlane.f32.xlu0 %v7023
  %v7027 = vpop.xlane.xlu0 %7026
  %v7028 = vcvt.f32.s32 %v7025
  %v7029 = vcvt.f32.s32 %v7027
  %v7030 = vshll.u32 %v7029, 16
  %v7031 = vadd.s32 %v7030, %v7028
  %vm7032 = vcmp.ge.s32.totalorder %v7031, %v3096
  %v7033 = vsel %vm7032, %v6896, %v6890
  %v7034 = vsub.s32 %v6896, 1
  %v7035 = vsel %vm7032, %v6892, %v7034
  %v7036 = vsub.s32 %v7035, %v7033
  %v7037 = vadd.s32 %v7036, 1
  %v7038 = vshra.s32 %v7037, 1
  %v7039 = vadd.s32 %v7033, %v7038
  %v7040 = vlaneseq
  %v7041 = vshrl.u32 %v7040, 7
  %v7042 = vsub.s32 0, %v7041
  %v7043 = vrot.slane %v7039, %v7042
  %v7044 = vlaneseq
  %v7045 = vshrl.u32 %v7044, 7
  %v7046 = vsub.s32 1, %v7045
  %v7047 = vrot.slane %v7039, %v7046
  %v7048 = vlaneseq
  %v7049 = vshrl.u32 %v7048, 7
  %v7050 = vsub.s32 2, %v7049
  %v7051 = vrot.slane %v7039, %v7050
  %v7052 = vlaneseq
  %v7053 = vshrl.u32 %v7052, 7
  %v7054 = vsub.s32 3, %v7053
  %v7055 = vrot.slane %v7039, %v7054
  %v7056 = vlaneseq
  %v7057 = vshrl.u32 %v7056, 7
  %v7058 = vsub.s32 4, %v7057
  %v7059 = vrot.slane %v7039, %v7058
  %v7060 = vlaneseq
  %v7061 = vshrl.u32 %v7060, 7
  %v7062 = vsub.s32 5, %v7061
  %v7063 = vrot.slane %v7039, %v7062
  %v7064 = vlaneseq
  %v7065 = vshrl.u32 %v7064, 7
  %v7066 = vsub.s32 6, %v7065
  %v7067 = vrot.slane %v7039, %v7066
  %v7068 = vlaneseq
  %v7069 = vshrl.u32 %v7068, 7
  %v7070 = vsub.s32 7, %v7069
  %v7071 = vrot.slane %v7039, %v7070
  %vm7080 = vcmp.ge.f32.partialorder %v3086, %v7043
  %vm7081 = vcmp.ge.f32.partialorder %v3087, %v7047
  %vm7082 = vcmp.ge.f32.partialorder %v3088, %v7051
  %vm7083 = vcmp.ge.f32.partialorder %v3089, %v7055
  %vm7084 = vcmp.ge.f32.partialorder %v3090, %v7059
  %vm7085 = vcmp.ge.f32.partialorder %v3091, %v7063
  %vm7086 = vcmp.ge.f32.partialorder %v3092, %v7067
  %vm7087 = vcmp.ge.f32.partialorder %v3093, %v7071
  %v7088 = vsel %vm7080, 1, 0
  %v7089 = vsel %vm7081, 1, 0
  %v7090 = vsel %vm7082, 1, 0
  %v7091 = vsel %vm7083, 1, 0
  %v7092 = vsel %vm7084, 1, 0
  %v7093 = vsel %vm7085, 1, 0
  %v7094 = vsel %vm7086, 1, 0
  %v7095 = vsel %vm7087, 1, 0
  %v7096 = vcombine.low %v7088, %v7089
  %v7097 = vcombine.low %v7090, %v7091
  %v7098 = vcombine.low %v7092, %v7093
  %v7099 = vcombine.low %v7094, %v7095
  %v7101 = vunpack.c.l.s4 1966171168
  %v7102 = vunpack.c.0.s8 %v7101
  %v7103 = vlaneseq
  %v7104 = vshrl.u32 %v7103, 7
  %v7105 = vsub.s32 %v7102, %v7104
  %v7106 = vrot.slane %v7096, %v7105
  %v7108 = vunpack.c.l.s4 1966171168
  %v7109 = vunpack.c.0.s8 %v7108
  %v7110 = vlaneseq
  %v7111 = vshrl.u32 %v7110, 7
  %v7112 = vsub.s32 %v7109, %v7111
  %v7113 = vrot.slane %v7097, %v7112
  %v7115 = vunpack.c.l.s4 1966171168
  %v7116 = vunpack.c.0.s8 %v7115
  %v7117 = vlaneseq
  %v7118 = vshrl.u32 %v7117, 7
  %v7119 = vsub.s32 %v7116, %v7118
  %v7120 = vrot.slane %v7098, %v7119
  %v7122 = vunpack.c.l.s4 1966171168
  %v7123 = vunpack.c.0.s8 %v7122
  %v7124 = vlaneseq
  %v7125 = vshrl.u32 %v7124, 7
  %v7126 = vsub.s32 %v7123, %v7125
  %v7127 = vrot.slane %v7099, %v7126
  %v7128 = vcombine.low %v7106, %v7113
  %v7129 = vcombine.high %v7106, %v7113
  %v7130 = vcombine.low %v7120, %v7127
  %v7131 = vcombine.high %v7120, %v7127
  %v7133 = vunpack.c.l.s4 1966171168
  %v7134 = vunpack.c.0.s8 %v7133
  %v7135 = vlaneseq
  %v7136 = vshrl.u32 %v7135, 7
  %v7137 = vsub.s32 %v7134, %v7136
  %v7138 = vrot.slane %v7128, %v7137
  %v7140 = vunpack.c.l.s4 1966171168
  %v7141 = vunpack.c.0.s8 %v7140
  %v7142 = vlaneseq
  %v7143 = vshrl.u32 %v7142, 7
  %v7144 = vsub.s32 %v7141, %v7143
  %v7145 = vrot.slane %v7129, %v7144
  %v7147 = vunpack.c.l.s4 1966171168
  %v7148 = vunpack.c.0.s8 %v7147
  %v7149 = vlaneseq
  %v7150 = vshrl.u32 %v7149, 7
  %v7151 = vsub.s32 %v7148, %v7150
  %v7152 = vrot.slane %v7130, %v7151
  %v7154 = vunpack.c.l.s4 1966171168
  %v7155 = vunpack.c.0.s8 %v7154
  %v7156 = vlaneseq
  %v7157 = vshrl.u32 %v7156, 7
  %v7158 = vsub.s32 %v7155, %v7157
  %v7159 = vrot.slane %v7131, %v7158
  %v7160 = vcombine.low %v7138, %v7152
  %v7161 = vcombine.low %v7145, %v7159
  %v7162 = vadd.s32 %v7160, %v7161
  %v7163 = vand.u32 %v7162, 65535
  %v7164 = vshrl.u32 %v7162, 16
  %v7165 = vcvt.s32.f32 %v7163
  %v7166 = vcvt.s32.f32 %v7164
  %7167 = vadd.xlane.f32.xlu0 %v7165
  %v7168 = vpop.xlane.xlu0 %7167
  %7169 = vadd.xlane.f32.xlu0 %v7166
  %v7170 = vpop.xlane.xlu0 %7169
  %v7171 = vcvt.f32.s32 %v7168
  %v7172 = vcvt.f32.s32 %v7170
  %v7173 = vshll.u32 %v7172, 16
  %v7174 = vadd.s32 %v7173, %v7171
  %vm7175 = vcmp.ge.s32.totalorder %v7174, %v3096
  %v7176 = vsel %vm7175, %v7039, %v7033
  %v7177 = vsub.s32 %v7039, 1
  %v7178 = vsel %vm7175, %v7035, %v7177
  %v7179 = vsub.s32 %v7178, %v7176
  %v7180 = vadd.s32 %v7179, 1
  %v7181 = vshra.s32 %v7180, 1
  %v7182 = vadd.s32 %v7176, %v7181
  %v7183 = vlaneseq
  %v7184 = vshrl.u32 %v7183, 7
  %v7185 = vsub.s32 0, %v7184
  %v7186 = vrot.slane %v7182, %v7185
  %v7187 = vlaneseq
  %v7188 = vshrl.u32 %v7187, 7
  %v7189 = vsub.s32 1, %v7188
  %v7190 = vrot.slane %v7182, %v7189
  %v7191 = vlaneseq
  %v7192 = vshrl.u32 %v7191, 7
  %v7193 = vsub.s32 2, %v7192
  %v7194 = vrot.slane %v7182, %v7193
  %v7195 = vlaneseq
  %v7196 = vshrl.u32 %v7195, 7
  %v7197 = vsub.s32 3, %v7196
  %v7198 = vrot.slane %v7182, %v7197
  %v7199 = vlaneseq
  %v7200 = vshrl.u32 %v7199, 7
  %v7201 = vsub.s32 4, %v7200
  %v7202 = vrot.slane %v7182, %v7201
  %v7203 = vlaneseq
  %v7204 = vshrl.u32 %v7203, 7
  %v7205 = vsub.s32 5, %v7204
  %v7206 = vrot.slane %v7182, %v7205
  %v7207 = vlaneseq
  %v7208 = vshrl.u32 %v7207, 7
  %v7209 = vsub.s32 6, %v7208
  %v7210 = vrot.slane %v7182, %v7209
  %v7211 = vlaneseq
  %v7212 = vshrl.u32 %v7211, 7
  %v7213 = vsub.s32 7, %v7212
  %v7214 = vrot.slane %v7182, %v7213
  %vm7223 = vcmp.ge.f32.partialorder %v3086, %v7186
  %vm7224 = vcmp.ge.f32.partialorder %v3087, %v7190
  %vm7225 = vcmp.ge.f32.partialorder %v3088, %v7194
  %vm7226 = vcmp.ge.f32.partialorder %v3089, %v7198
  %vm7227 = vcmp.ge.f32.partialorder %v3090, %v7202
  %vm7228 = vcmp.ge.f32.partialorder %v3091, %v7206
  %vm7229 = vcmp.ge.f32.partialorder %v3092, %v7210
  %vm7230 = vcmp.ge.f32.partialorder %v3093, %v7214
  %v7231 = vsel %vm7223, 1, 0
  %v7232 = vsel %vm7224, 1, 0
  %v7233 = vsel %vm7225, 1, 0
  %v7234 = vsel %vm7226, 1, 0
  %v7235 = vsel %vm7227, 1, 0
  %v7236 = vsel %vm7228, 1, 0
  %v7237 = vsel %vm7229, 1, 0
  %v7238 = vsel %vm7230, 1, 0
  %v7239 = vcombine.low %v7231, %v7232
  %v7240 = vcombine.low %v7233, %v7234
  %v7241 = vcombine.low %v7235, %v7236
  %v7242 = vcombine.low %v7237, %v7238
  %v7244 = vunpack.c.l.s4 1966171168
  %v7245 = vunpack.c.0.s8 %v7244
  %v7246 = vlaneseq
  %v7247 = vshrl.u32 %v7246, 7
  %v7248 = vsub.s32 %v7245, %v7247
  %v7249 = vrot.slane %v7239, %v7248
  %v7251 = vunpack.c.l.s4 1966171168
  %v7252 = vunpack.c.0.s8 %v7251
  %v7253 = vlaneseq
  %v7254 = vshrl.u32 %v7253, 7
  %v7255 = vsub.s32 %v7252, %v7254
  %v7256 = vrot.slane %v7240, %v7255
  %v7258 = vunpack.c.l.s4 1966171168
  %v7259 = vunpack.c.0.s8 %v7258
  %v7260 = vlaneseq
  %v7261 = vshrl.u32 %v7260, 7
  %v7262 = vsub.s32 %v7259, %v7261
  %v7263 = vrot.slane %v7241, %v7262
  %v7265 = vunpack.c.l.s4 1966171168
  %v7266 = vunpack.c.0.s8 %v7265
  %v7267 = vlaneseq
  %v7268 = vshrl.u32 %v7267, 7
  %v7269 = vsub.s32 %v7266, %v7268
  %v7270 = vrot.slane %v7242, %v7269
  %v7271 = vcombine.low %v7249, %v7256
  %v7272 = vcombine.high %v7249, %v7256
  %v7273 = vcombine.low %v7263, %v7270
  %v7274 = vcombine.high %v7263, %v7270
  %v7276 = vunpack.c.l.s4 1966171168
  %v7277 = vunpack.c.0.s8 %v7276
  %v7278 = vlaneseq
  %v7279 = vshrl.u32 %v7278, 7
  %v7280 = vsub.s32 %v7277, %v7279
  %v7281 = vrot.slane %v7271, %v7280
  %v7283 = vunpack.c.l.s4 1966171168
  %v7284 = vunpack.c.0.s8 %v7283
  %v7285 = vlaneseq
  %v7286 = vshrl.u32 %v7285, 7
  %v7287 = vsub.s32 %v7284, %v7286
  %v7288 = vrot.slane %v7272, %v7287
  %v7290 = vunpack.c.l.s4 1966171168
  %v7291 = vunpack.c.0.s8 %v7290
  %v7292 = vlaneseq
  %v7293 = vshrl.u32 %v7292, 7
  %v7294 = vsub.s32 %v7291, %v7293
  %v7295 = vrot.slane %v7273, %v7294
  %v7297 = vunpack.c.l.s4 1966171168
  %v7298 = vunpack.c.0.s8 %v7297
  %v7299 = vlaneseq
  %v7300 = vshrl.u32 %v7299, 7
  %v7301 = vsub.s32 %v7298, %v7300
  %v7302 = vrot.slane %v7274, %v7301
  %v7303 = vcombine.low %v7281, %v7295
  %v7304 = vcombine.low %v7288, %v7302
  %v7305 = vadd.s32 %v7303, %v7304
  %v7306 = vand.u32 %v7305, 65535
  %v7307 = vshrl.u32 %v7305, 16
  %v7308 = vcvt.s32.f32 %v7306
  %v7309 = vcvt.s32.f32 %v7307
  %7310 = vadd.xlane.f32.xlu0 %v7308
  %v7311 = vpop.xlane.xlu0 %7310
  %7312 = vadd.xlane.f32.xlu0 %v7309
  %v7313 = vpop.xlane.xlu0 %7312
  %v7314 = vcvt.f32.s32 %v7311
  %v7315 = vcvt.f32.s32 %v7313
  %v7316 = vshll.u32 %v7315, 16
  %v7317 = vadd.s32 %v7316, %v7314
  %vm7318 = vcmp.ge.s32.totalorder %v7317, %v3096
  %v7319 = vsel %vm7318, %v7182, %v7176
  %v7320 = vsub.s32 %v7182, 1
  %v7321 = vsel %vm7318, %v7178, %v7320
  %v7322 = vsub.s32 %v7321, %v7319
  %v7323 = vadd.s32 %v7322, 1
  %v7324 = vshra.s32 %v7323, 1
  %v7325 = vadd.s32 %v7319, %v7324
  %v7326 = vlaneseq
  %v7327 = vshrl.u32 %v7326, 7
  %v7328 = vsub.s32 0, %v7327
  %v7329 = vrot.slane %v7325, %v7328
  %v7330 = vlaneseq
  %v7331 = vshrl.u32 %v7330, 7
  %v7332 = vsub.s32 1, %v7331
  %v7333 = vrot.slane %v7325, %v7332
  %v7334 = vlaneseq
  %v7335 = vshrl.u32 %v7334, 7
  %v7336 = vsub.s32 2, %v7335
  %v7337 = vrot.slane %v7325, %v7336
  %v7338 = vlaneseq
  %v7339 = vshrl.u32 %v7338, 7
  %v7340 = vsub.s32 3, %v7339
  %v7341 = vrot.slane %v7325, %v7340
  %v7342 = vlaneseq
  %v7343 = vshrl.u32 %v7342, 7
  %v7344 = vsub.s32 4, %v7343
  %v7345 = vrot.slane %v7325, %v7344
  %v7346 = vlaneseq
  %v7347 = vshrl.u32 %v7346, 7
  %v7348 = vsub.s32 5, %v7347
  %v7349 = vrot.slane %v7325, %v7348
  %v7350 = vlaneseq
  %v7351 = vshrl.u32 %v7350, 7
  %v7352 = vsub.s32 6, %v7351
  %v7353 = vrot.slane %v7325, %v7352
  %v7354 = vlaneseq
  %v7355 = vshrl.u32 %v7354, 7
  %v7356 = vsub.s32 7, %v7355
  %v7357 = vrot.slane %v7325, %v7356
  %vm7366 = vcmp.ge.f32.partialorder %v3086, %v7329
  %vm7367 = vcmp.ge.f32.partialorder %v3087, %v7333
  %vm7368 = vcmp.ge.f32.partialorder %v3088, %v7337
  %vm7369 = vcmp.ge.f32.partialorder %v3089, %v7341
  %vm7370 = vcmp.ge.f32.partialorder %v3090, %v7345
  %vm7371 = vcmp.ge.f32.partialorder %v3091, %v7349
  %vm7372 = vcmp.ge.f32.partialorder %v3092, %v7353
  %vm7373 = vcmp.ge.f32.partialorder %v3093, %v7357
  %v7374 = vsel %vm7366, 1, 0
  %v7375 = vsel %vm7367, 1, 0
  %v7376 = vsel %vm7368, 1, 0
  %v7377 = vsel %vm7369, 1, 0
  %v7378 = vsel %vm7370, 1, 0
  %v7379 = vsel %vm7371, 1, 0
  %v7380 = vsel %vm7372, 1, 0
  %v7381 = vsel %vm7373, 1, 0
  %v7382 = vcombine.low %v7374, %v7375
  %v7383 = vcombine.low %v7376, %v7377
  %v7384 = vcombine.low %v7378, %v7379
  %v7385 = vcombine.low %v7380, %v7381
  %v7387 = vunpack.c.l.s4 1966171168
  %v7388 = vunpack.c.0.s8 %v7387
  %v7389 = vlaneseq
  %v7390 = vshrl.u32 %v7389, 7
  %v7391 = vsub.s32 %v7388, %v7390
  %v7392 = vrot.slane %v7382, %v7391
  %v7394 = vunpack.c.l.s4 1966171168
  %v7395 = vunpack.c.0.s8 %v7394
  %v7396 = vlaneseq
  %v7397 = vshrl.u32 %v7396, 7
  %v7398 = vsub.s32 %v7395, %v7397
  %v7399 = vrot.slane %v7383, %v7398
  %v7401 = vunpack.c.l.s4 1966171168
  %v7402 = vunpack.c.0.s8 %v7401
  %v7403 = vlaneseq
  %v7404 = vshrl.u32 %v7403, 7
  %v7405 = vsub.s32 %v7402, %v7404
  %v7406 = vrot.slane %v7384, %v7405
  %v7408 = vunpack.c.l.s4 1966171168
  %v7409 = vunpack.c.0.s8 %v7408
  %v7410 = vlaneseq
  %v7411 = vshrl.u32 %v7410, 7
  %v7412 = vsub.s32 %v7409, %v7411
  %v7413 = vrot.slane %v7385, %v7412
  %v7414 = vcombine.low %v7392, %v7399
  %v7415 = vcombine.high %v7392, %v7399
  %v7416 = vcombine.low %v7406, %v7413
  %v7417 = vcombine.high %v7406, %v7413
  %v7419 = vunpack.c.l.s4 1966171168
  %v7420 = vunpack.c.0.s8 %v7419
  %v7421 = vlaneseq
  %v7422 = vshrl.u32 %v7421, 7
  %v7423 = vsub.s32 %v7420, %v7422
  %v7424 = vrot.slane %v7414, %v7423
  %v7426 = vunpack.c.l.s4 1966171168
  %v7427 = vunpack.c.0.s8 %v7426
  %v7428 = vlaneseq
  %v7429 = vshrl.u32 %v7428, 7
  %v7430 = vsub.s32 %v7427, %v7429
  %v7431 = vrot.slane %v7415, %v7430
  %v7433 = vunpack.c.l.s4 1966171168
  %v7434 = vunpack.c.0.s8 %v7433
  %v7435 = vlaneseq
  %v7436 = vshrl.u32 %v7435, 7
  %v7437 = vsub.s32 %v7434, %v7436
  %v7438 = vrot.slane %v7416, %v7437
  %v7440 = vunpack.c.l.s4 1966171168
  %v7441 = vunpack.c.0.s8 %v7440
  %v7442 = vlaneseq
  %v7443 = vshrl.u32 %v7442, 7
  %v7444 = vsub.s32 %v7441, %v7443
  %v7445 = vrot.slane %v7417, %v7444
  %v7446 = vcombine.low %v7424, %v7438
  %v7447 = vcombine.low %v7431, %v7445
  %v7448 = vadd.s32 %v7446, %v7447
  %v7449 = vand.u32 %v7448, 65535
  %v7450 = vshrl.u32 %v7448, 16
  %v7451 = vcvt.s32.f32 %v7449
  %v7452 = vcvt.s32.f32 %v7450
  %7453 = vadd.xlane.f32.xlu0 %v7451
  %v7454 = vpop.xlane.xlu0 %7453
  %7455 = vadd.xlane.f32.xlu0 %v7452
  %v7456 = vpop.xlane.xlu0 %7455
  %v7457 = vcvt.f32.s32 %v7454
  %v7458 = vcvt.f32.s32 %v7456
  %v7459 = vshll.u32 %v7458, 16
  %v7460 = vadd.s32 %v7459, %v7457
  %vm7461 = vcmp.ge.s32.totalorder %v7460, %v3096
  %v7462 = vsel %vm7461, %v7325, %v7319
  %v7463 = vsub.s32 %v7325, 1
  %v7464 = vsel %vm7461, %v7321, %v7463
  %v7465 = vsub.s32 %v7464, %v7462
  %v7466 = vadd.s32 %v7465, 1
  %v7467 = vshra.s32 %v7466, 1
  %v7468 = vadd.s32 %v7462, %v7467
  %v7469 = vlaneseq
  %v7470 = vshrl.u32 %v7469, 7
  %v7471 = vsub.s32 0, %v7470
  %v7472 = vrot.slane %v7468, %v7471
  %v7473 = vlaneseq
  %v7474 = vshrl.u32 %v7473, 7
  %v7475 = vsub.s32 1, %v7474
  %v7476 = vrot.slane %v7468, %v7475
  %v7477 = vlaneseq
  %v7478 = vshrl.u32 %v7477, 7
  %v7479 = vsub.s32 2, %v7478
  %v7480 = vrot.slane %v7468, %v7479
  %v7481 = vlaneseq
  %v7482 = vshrl.u32 %v7481, 7
  %v7483 = vsub.s32 3, %v7482
  %v7484 = vrot.slane %v7468, %v7483
  %v7485 = vlaneseq
  %v7486 = vshrl.u32 %v7485, 7
  %v7487 = vsub.s32 4, %v7486
  %v7488 = vrot.slane %v7468, %v7487
  %v7489 = vlaneseq
  %v7490 = vshrl.u32 %v7489, 7
  %v7491 = vsub.s32 5, %v7490
  %v7492 = vrot.slane %v7468, %v7491
  %v7493 = vlaneseq
  %v7494 = vshrl.u32 %v7493, 7
  %v7495 = vsub.s32 6, %v7494
  %v7496 = vrot.slane %v7468, %v7495
  %v7497 = vlaneseq
  %v7498 = vshrl.u32 %v7497, 7
  %v7499 = vsub.s32 7, %v7498
  %v7500 = vrot.slane %v7468, %v7499
  %vm7509 = vcmp.ge.f32.partialorder %v3086, %v7472
  %vm7510 = vcmp.ge.f32.partialorder %v3087, %v7476
  %vm7511 = vcmp.ge.f32.partialorder %v3088, %v7480
  %vm7512 = vcmp.ge.f32.partialorder %v3089, %v7484
  %vm7513 = vcmp.ge.f32.partialorder %v3090, %v7488
  %vm7514 = vcmp.ge.f32.partialorder %v3091, %v7492
  %vm7515 = vcmp.ge.f32.partialorder %v3092, %v7496
  %vm7516 = vcmp.ge.f32.partialorder %v3093, %v7500
  %v7517 = vsel %vm7509, 1, 0
  %v7518 = vsel %vm7510, 1, 0
  %v7519 = vsel %vm7511, 1, 0
  %v7520 = vsel %vm7512, 1, 0
  %v7521 = vsel %vm7513, 1, 0
  %v7522 = vsel %vm7514, 1, 0
  %v7523 = vsel %vm7515, 1, 0
  %v7524 = vsel %vm7516, 1, 0
  %v7525 = vcombine.low %v7517, %v7518
  %v7526 = vcombine.low %v7519, %v7520
  %v7527 = vcombine.low %v7521, %v7522
  %v7528 = vcombine.low %v7523, %v7524
  %v7530 = vunpack.c.l.s4 1966171168
  %v7531 = vunpack.c.0.s8 %v7530
  %v7532 = vlaneseq
  %v7533 = vshrl.u32 %v7532, 7
  %v7534 = vsub.s32 %v7531, %v7533
  %v7535 = vrot.slane %v7525, %v7534
  %v7537 = vunpack.c.l.s4 1966171168
  %v7538 = vunpack.c.0.s8 %v7537
  %v7539 = vlaneseq
  %v7540 = vshrl.u32 %v7539, 7
  %v7541 = vsub.s32 %v7538, %v7540
  %v7542 = vrot.slane %v7526, %v7541
  %v7544 = vunpack.c.l.s4 1966171168
  %v7545 = vunpack.c.0.s8 %v7544
  %v7546 = vlaneseq
  %v7547 = vshrl.u32 %v7546, 7
  %v7548 = vsub.s32 %v7545, %v7547
  %v7549 = vrot.slane %v7527, %v7548
  %v7551 = vunpack.c.l.s4 1966171168
  %v7552 = vunpack.c.0.s8 %v7551
  %v7553 = vlaneseq
  %v7554 = vshrl.u32 %v7553, 7
  %v7555 = vsub.s32 %v7552, %v7554
  %v7556 = vrot.slane %v7528, %v7555
  %v7557 = vcombine.low %v7535, %v7542
  %v7558 = vcombine.high %v7535, %v7542
  %v7559 = vcombine.low %v7549, %v7556
  %v7560 = vcombine.high %v7549, %v7556
  %v7562 = vunpack.c.l.s4 1966171168
  %v7563 = vunpack.c.0.s8 %v7562
  %v7564 = vlaneseq
  %v7565 = vshrl.u32 %v7564, 7
  %v7566 = vsub.s32 %v7563, %v7565
  %v7567 = vrot.slane %v7557, %v7566
  %v7569 = vunpack.c.l.s4 1966171168
  %v7570 = vunpack.c.0.s8 %v7569
  %v7571 = vlaneseq
  %v7572 = vshrl.u32 %v7571, 7
  %v7573 = vsub.s32 %v7570, %v7572
  %v7574 = vrot.slane %v7558, %v7573
  %v7576 = vunpack.c.l.s4 1966171168
  %v7577 = vunpack.c.0.s8 %v7576
  %v7578 = vlaneseq
  %v7579 = vshrl.u32 %v7578, 7
  %v7580 = vsub.s32 %v7577, %v7579
  %v7581 = vrot.slane %v7559, %v7580
  %v7583 = vunpack.c.l.s4 1966171168
  %v7584 = vunpack.c.0.s8 %v7583
  %v7585 = vlaneseq
  %v7586 = vshrl.u32 %v7585, 7
  %v7587 = vsub.s32 %v7584, %v7586
  %v7588 = vrot.slane %v7560, %v7587
  %v7589 = vcombine.low %v7567, %v7581
  %v7590 = vcombine.low %v7574, %v7588
  %v7591 = vadd.s32 %v7589, %v7590
  %v7592 = vand.u32 %v7591, 65535
  %v7593 = vshrl.u32 %v7591, 16
  %v7594 = vcvt.s32.f32 %v7592
  %v7595 = vcvt.s32.f32 %v7593
  %7596 = vadd.xlane.f32.xlu0 %v7594
  %v7597 = vpop.xlane.xlu0 %7596
  %7598 = vadd.xlane.f32.xlu0 %v7595
  %v7599 = vpop.xlane.xlu0 %7598
  %v7600 = vcvt.f32.s32 %v7597
  %v7601 = vcvt.f32.s32 %v7599
  %v7602 = vshll.u32 %v7601, 16
  %v7603 = vadd.s32 %v7602, %v7600
  %vm7604 = vcmp.ge.s32.totalorder %v7603, %v3096
  %v7605 = vsel %vm7604, %v7468, %v7462
  %v7607 = vlaneseq
  %v7608 = vshrl.u32 %v7607, 7
  %v7609 = vsub.s32 0, %v7608
  %v7610 = vrot.slane %v7605, %v7609
  %v7611 = vlaneseq
  %v7612 = vshrl.u32 %v7611, 7
  %v7613 = vsub.s32 1, %v7612
  %v7614 = vrot.slane %v7605, %v7613
  %v7615 = vlaneseq
  %v7616 = vshrl.u32 %v7615, 7
  %v7617 = vsub.s32 2, %v7616
  %v7618 = vrot.slane %v7605, %v7617
  %v7619 = vlaneseq
  %v7620 = vshrl.u32 %v7619, 7
  %v7621 = vsub.s32 3, %v7620
  %v7622 = vrot.slane %v7605, %v7621
  %v7623 = vlaneseq
  %v7624 = vshrl.u32 %v7623, 7
  %v7625 = vsub.s32 4, %v7624
  %v7626 = vrot.slane %v7605, %v7625
  %v7627 = vlaneseq
  %v7628 = vshrl.u32 %v7627, 7
  %v7629 = vsub.s32 5, %v7628
  %v7630 = vrot.slane %v7605, %v7629
  %v7631 = vlaneseq
  %v7632 = vshrl.u32 %v7631, 7
  %v7633 = vsub.s32 6, %v7632
  %v7634 = vrot.slane %v7605, %v7633
  %v7635 = vlaneseq
  %v7636 = vshrl.u32 %v7635, 7
  %v7637 = vsub.s32 7, %v7636
  %v7638 = vrot.slane %v7605, %v7637
  %vm7647 = vcmp.gt.f32.partialorder %v3086, %v7610
  %vm7648 = vcmp.gt.f32.partialorder %v3087, %v7614
  %vm7649 = vcmp.gt.f32.partialorder %v3088, %v7618
  %vm7650 = vcmp.gt.f32.partialorder %v3089, %v7622
  %vm7651 = vcmp.gt.f32.partialorder %v3090, %v7626
  %vm7652 = vcmp.gt.f32.partialorder %v3091, %v7630
  %vm7653 = vcmp.gt.f32.partialorder %v3092, %v7634
  %vm7654 = vcmp.gt.f32.partialorder %v3093, %v7638
  %v7655 = vsel %vm7647, 1, 0
  %v7656 = vsel %vm7648, 1, 0
  %v7657 = vsel %vm7649, 1, 0
  %v7658 = vsel %vm7650, 1, 0
  %v7659 = vsel %vm7651, 1, 0
  %v7660 = vsel %vm7652, 1, 0
  %v7661 = vsel %vm7653, 1, 0
  %v7662 = vsel %vm7654, 1, 0
  %v7663 = vcvt.s32.f32 %v7655
  %v7664 = vcvt.s32.f32 %v7656
  %v7665 = vcvt.s32.f32 %v7657
  %v7666 = vcvt.s32.f32 %v7658
  %v7667 = vcvt.s32.f32 %v7659
  %v7668 = vcvt.s32.f32 %v7660
  %v7669 = vcvt.s32.f32 %v7661
  %v7670 = vcvt.s32.f32 %v7662
  %v7679 = vcombine.low %v7663, %v7664
  %v7680 = vcombine.low %v7665, %v7666
  %v7681 = vcombine.low %v7667, %v7668
  %v7682 = vcombine.low %v7669, %v7670
  %v7684 = vunpack.c.l.s4 1966171168
  %v7685 = vunpack.c.0.s8 %v7684
  %v7686 = vlaneseq
  %v7687 = vshrl.u32 %v7686, 7
  %v7688 = vsub.s32 %v7685, %v7687
  %v7689 = vrot.slane %v7679, %v7688
  %v7691 = vunpack.c.l.s4 1966171168
  %v7692 = vunpack.c.0.s8 %v7691
  %v7693 = vlaneseq
  %v7694 = vshrl.u32 %v7693, 7
  %v7695 = vsub.s32 %v7692, %v7694
  %v7696 = vrot.slane %v7680, %v7695
  %v7698 = vunpack.c.l.s4 1966171168
  %v7699 = vunpack.c.0.s8 %v7698
  %v7700 = vlaneseq
  %v7701 = vshrl.u32 %v7700, 7
  %v7702 = vsub.s32 %v7699, %v7701
  %v7703 = vrot.slane %v7681, %v7702
  %v7705 = vunpack.c.l.s4 1966171168
  %v7706 = vunpack.c.0.s8 %v7705
  %v7707 = vlaneseq
  %v7708 = vshrl.u32 %v7707, 7
  %v7709 = vsub.s32 %v7706, %v7708
  %v7710 = vrot.slane %v7682, %v7709
  %v7711 = vcombine.low %v7689, %v7696
  %v7712 = vcombine.high %v7689, %v7696
  %v7713 = vcombine.low %v7703, %v7710
  %v7714 = vcombine.high %v7703, %v7710
  %v7716 = vunpack.c.l.s4 1966171168
  %v7717 = vunpack.c.0.s8 %v7716
  %v7718 = vlaneseq
  %v7719 = vshrl.u32 %v7718, 7
  %v7720 = vsub.s32 %v7717, %v7719
  %v7721 = vrot.slane %v7711, %v7720
  %v7723 = vunpack.c.l.s4 1966171168
  %v7724 = vunpack.c.0.s8 %v7723
  %v7725 = vlaneseq
  %v7726 = vshrl.u32 %v7725, 7
  %v7727 = vsub.s32 %v7724, %v7726
  %v7728 = vrot.slane %v7712, %v7727
  %v7730 = vunpack.c.l.s4 1966171168
  %v7731 = vunpack.c.0.s8 %v7730
  %v7732 = vlaneseq
  %v7733 = vshrl.u32 %v7732, 7
  %v7734 = vsub.s32 %v7731, %v7733
  %v7735 = vrot.slane %v7713, %v7734
  %v7737 = vunpack.c.l.s4 1966171168
  %v7738 = vunpack.c.0.s8 %v7737
  %v7739 = vlaneseq
  %v7740 = vshrl.u32 %v7739, 7
  %v7741 = vsub.s32 %v7738, %v7740
  %v7742 = vrot.slane %v7714, %v7741
  %v7743 = vcombine.low %v7721, %v7735
  %v7744 = vcombine.low %v7728, %v7742
  %v7747 = vadd.f32 %v7743, %v7744
  %7748 = vadd.xlane.f32.xlu0 %v7747
  %v7749 = vpop.xlane.xlu0 %7748
  %v7750 = vsel %vm7647, %v3086, 0.0
  %v7751 = vsel %vm7648, %v3087, 0.0
  %v7752 = vsel %vm7649, %v3088, 0.0
  %v7753 = vsel %vm7650, %v3089, 0.0
  %v7754 = vsel %vm7651, %v3090, 0.0
  %v7755 = vsel %vm7652, %v3091, 0.0
  %v7756 = vsel %vm7653, %v3092, 0.0
  %v7757 = vsel %vm7654, %v3093, 0.0
  %v7766 = vcombine.low %v7750, %v7751
  %v7767 = vcombine.low %v7752, %v7753
  %v7768 = vcombine.low %v7754, %v7755
  %v7769 = vcombine.low %v7756, %v7757
  %v7771 = vunpack.c.l.s4 1966171168
  %v7772 = vunpack.c.0.s8 %v7771
  %v7773 = vlaneseq
  %v7774 = vshrl.u32 %v7773, 7
  %v7775 = vsub.s32 %v7772, %v7774
  %v7776 = vrot.slane %v7766, %v7775
  %v7778 = vunpack.c.l.s4 1966171168
  %v7779 = vunpack.c.0.s8 %v7778
  %v7780 = vlaneseq
  %v7781 = vshrl.u32 %v7780, 7
  %v7782 = vsub.s32 %v7779, %v7781
  %v7783 = vrot.slane %v7767, %v7782
  %v7785 = vunpack.c.l.s4 1966171168
  %v7786 = vunpack.c.0.s8 %v7785
  %v7787 = vlaneseq
  %v7788 = vshrl.u32 %v7787, 7
  %v7789 = vsub.s32 %v7786, %v7788
  %v7790 = vrot.slane %v7768, %v7789
  %v7792 = vunpack.c.l.s4 1966171168
  %v7793 = vunpack.c.0.s8 %v7792
  %v7794 = vlaneseq
  %v7795 = vshrl.u32 %v7794, 7
  %v7796 = vsub.s32 %v7793, %v7795
  %v7797 = vrot.slane %v7769, %v7796
  %v7798 = vcombine.low %v7776, %v7783
  %v7799 = vcombine.high %v7776, %v7783
  %v7800 = vcombine.low %v7790, %v7797
  %v7801 = vcombine.high %v7790, %v7797
  %v7803 = vunpack.c.l.s4 1966171168
  %v7804 = vunpack.c.0.s8 %v7803
  %v7805 = vlaneseq
  %v7806 = vshrl.u32 %v7805, 7
  %v7807 = vsub.s32 %v7804, %v7806
  %v7808 = vrot.slane %v7798, %v7807
  %v7810 = vunpack.c.l.s4 1966171168
  %v7811 = vunpack.c.0.s8 %v7810
  %v7812 = vlaneseq
  %v7813 = vshrl.u32 %v7812, 7
  %v7814 = vsub.s32 %v7811, %v7813
  %v7815 = vrot.slane %v7799, %v7814
  %v7817 = vunpack.c.l.s4 1966171168
  %v7818 = vunpack.c.0.s8 %v7817
  %v7819 = vlaneseq
  %v7820 = vshrl.u32 %v7819, 7
  %v7821 = vsub.s32 %v7818, %v7820
  %v7822 = vrot.slane %v7800, %v7821
  %v7824 = vunpack.c.l.s4 1966171168
  %v7825 = vunpack.c.0.s8 %v7824
  %v7826 = vlaneseq
  %v7827 = vshrl.u32 %v7826, 7
  %v7828 = vsub.s32 %v7825, %v7827
  %v7829 = vrot.slane %v7801, %v7828
  %v7830 = vcombine.low %v7808, %v7822
  %v7831 = vcombine.low %v7815, %v7829
  %v7834 = vadd.f32 %v7830, %v7831
  %7835 = vadd.xlane.f32.xlu0 %v7834
  %v7836 = vpop.xlane.xlu0 %7835
  %v7837 = vcvt.s32.f32 %v3096
  %v7838 = vsub.f32 %v7837, %v7749
  %v7839 = vmul.f32 %v7605, %v7838
  %v7840 = vadd.f32 %v7836, %v7839
  %v7841 = vsel %vm38, %v2964, 0.0
  %v7842 = vsel %vm39, %v2979, 0.0
  %v7843 = vsel %vm40, %v2994, 0.0
  %v7844 = vsel %vm41, %v3009, 0.0
  %v7845 = vsel %vm42, %v3024, 0.0
  %v7846 = vsel %vm43, %v3039, 0.0
  %v7847 = vsel %vm44, %v3054, 0.0
  %v7848 = vsel %vm45, %v3069, 0.0
  %v7857 = vcombine.low %v7841, %v7842
  %v7858 = vcombine.low %v7843, %v7844
  %v7859 = vcombine.low %v7845, %v7846
  %v7860 = vcombine.low %v7847, %v7848
  %v7862 = vunpack.c.l.s4 1966171168
  %v7863 = vunpack.c.0.s8 %v7862
  %v7864 = vlaneseq
  %v7865 = vshrl.u32 %v7864, 7
  %v7866 = vsub.s32 %v7863, %v7865
  %v7867 = vrot.slane %v7857, %v7866
  %v7869 = vunpack.c.l.s4 1966171168
  %v7870 = vunpack.c.0.s8 %v7869
  %v7871 = vlaneseq
  %v7872 = vshrl.u32 %v7871, 7
  %v7873 = vsub.s32 %v7870, %v7872
  %v7874 = vrot.slane %v7858, %v7873
  %v7876 = vunpack.c.l.s4 1966171168
  %v7877 = vunpack.c.0.s8 %v7876
  %v7878 = vlaneseq
  %v7879 = vshrl.u32 %v7878, 7
  %v7880 = vsub.s32 %v7877, %v7879
  %v7881 = vrot.slane %v7859, %v7880
  %v7883 = vunpack.c.l.s4 1966171168
  %v7884 = vunpack.c.0.s8 %v7883
  %v7885 = vlaneseq
  %v7886 = vshrl.u32 %v7885, 7
  %v7887 = vsub.s32 %v7884, %v7886
  %v7888 = vrot.slane %v7860, %v7887
  %v7889 = vcombine.low %v7867, %v7874
  %v7890 = vcombine.high %v7867, %v7874
  %v7891 = vcombine.low %v7881, %v7888
  %v7892 = vcombine.high %v7881, %v7888
  %v7894 = vunpack.c.l.s4 1966171168
  %v7895 = vunpack.c.0.s8 %v7894
  %v7896 = vlaneseq
  %v7897 = vshrl.u32 %v7896, 7
  %v7898 = vsub.s32 %v7895, %v7897
  %v7899 = vrot.slane %v7889, %v7898
  %v7901 = vunpack.c.l.s4 1966171168
  %v7902 = vunpack.c.0.s8 %v7901
  %v7903 = vlaneseq
  %v7904 = vshrl.u32 %v7903, 7
  %v7905 = vsub.s32 %v7902, %v7904
  %v7906 = vrot.slane %v7890, %v7905
  %v7908 = vunpack.c.l.s4 1966171168
  %v7909 = vunpack.c.0.s8 %v7908
  %v7910 = vlaneseq
  %v7911 = vshrl.u32 %v7910, 7
  %v7912 = vsub.s32 %v7909, %v7911
  %v7913 = vrot.slane %v7891, %v7912
  %v7915 = vunpack.c.l.s4 1966171168
  %v7916 = vunpack.c.0.s8 %v7915
  %v7917 = vlaneseq
  %v7918 = vshrl.u32 %v7917, 7
  %v7919 = vsub.s32 %v7916, %v7918
  %v7920 = vrot.slane %v7892, %v7919
  %v7921 = vcombine.low %v7899, %v7913
  %v7922 = vcombine.low %v7906, %v7920
  %v7925 = vadd.f32 %v7921, %v7922
  %7926 = vadd.xlane.f32.xlu0 %v7925
  %v7927 = vpop.xlane.xlu0 %7926
  %v7928 = vadd.f32 %v7927, %v7840
  %v7929 = vmax.f32 %v2686, 1.0
  %v7930 = vrcp.pop %v7929
  %vm7931 = vcmp.gt.f32.partialorder %v2686, 0.0
  %v7932 = vadd.f32 %v2917, %v7928
  %v7933 = vmul.f32 %v7932, %v7930
  %v7934 = vsel %vm7931, %v7933, 0.0
  %vm7935 = vcmask 7168
  %v7936 = vsel %vm7935, %v2686, %v2917
  %vm7937 = vcmask 15360
  %v7938 = vsel %vm7937, %v7936, %v7928
  %vm7939 = vcmask 23552
  %v7940 = vsel %vm7939, %v7938, %v7934
  %vm7941 = vcmask 31744
  %v7942 = vsel %vm7941, %v7940, 0.0
  %v7943 = vlaneseq
  %v7944 = vshrl.u32 %v7943, 7
  %v7945 = vsub.s32 0, %v7944
  %v7946 = vrot.slane %v7942, %v7945
  %7948 = vbcast.lane.b32.xlu0 %v7946, 256
  %v7949 = vpop.permute.xlu0 %7948
  %v7950 = vlaneseq
  %v7951 = vshrl.u32 %v7950, 7
  %v7952 = vsub.s32 1, %v7951
  %v7953 = vrot.slane %v7942, %v7952
  %7955 = vbcast.lane.b32.xlu0 %v7953, 256
  %v7956 = vpop.permute.xlu0 %7955
  %v7957 = vlaneseq
  %v7958 = vshrl.u32 %v7957, 7
  %v7959 = vsub.s32 2, %v7958
  %v7960 = vrot.slane %v7942, %v7959
  %7962 = vbcast.lane.b32.xlu0 %v7960, 256
  %v7963 = vpop.permute.xlu0 %7962
  %v7964 = vlaneseq
  %v7965 = vshrl.u32 %v7964, 7
  %v7966 = vsub.s32 3, %v7965
  %v7967 = vrot.slane %v7942, %v7966
  %7969 = vbcast.lane.b32.xlu0 %v7967, 256
  %v7970 = vpop.permute.xlu0 %7969
  %v7971 = vlaneseq
  %v7972 = vshrl.u32 %v7971, 7
  %v7973 = vsub.s32 4, %v7972
  %v7974 = vrot.slane %v7942, %v7973
  %7976 = vbcast.lane.b32.xlu0 %v7974, 256
  %v7977 = vpop.permute.xlu0 %7976
  %v7978 = vlaneseq
  %v7979 = vshrl.u32 %v7978, 7
  %v7980 = vsub.s32 5, %v7979
  %v7981 = vrot.slane %v7942, %v7980
  %7983 = vbcast.lane.b32.xlu0 %v7981, 256
  %v7984 = vpop.permute.xlu0 %7983
  %v7985 = vlaneseq
  %v7986 = vshrl.u32 %v7985, 7
  %v7987 = vsub.s32 6, %v7986
  %v7988 = vrot.slane %v7942, %v7987
  %7990 = vbcast.lane.b32.xlu0 %v7988, 256
  %v7991 = vpop.permute.xlu0 %7990
  %v7992 = vlaneseq
  %v7993 = vshrl.u32 %v7992, 7
  %v7994 = vsub.s32 7, %v7993
  %v7995 = vrot.slane %v7942, %v7994
  %7997 = vbcast.lane.b32.xlu0 %v7995, 256
  %v7998 = vpop.permute.xlu0 %7997
  %7999 = vst [vmem:[%s3] sm:$0xff] %v7949
  %8000 = vst [vmem:[%s3 + $0x8] sm:$0xff] %v7956
  %8001 = vst [vmem:[%s3 + $0x10] sm:$0xff] %v7963
  %8002 = vst [vmem:[%s3 + $0x18] sm:$0xff] %v7970
  %8003 = vst [vmem:[%s3 + $0x20] sm:$0xff] %v7977
  %8004 = vst [vmem:[%s3 + $0x28] sm:$0xff] %v7984
  %8005 = vst [vmem:[%s3 + $0x30] sm:$0xff] %v7991
  %8006 = vst [vmem:[%s3 + $0x38] sm:$0xff] %v7998
  // Predicated region
  $region14: #{multibox_loss.1} parent=0 // pred_check
    _
  $region15: #{multibox_loss.1} parent=0 // pred_check_branch
    %8008 = sbr.rel (0) target = $region17
  $region16: #{multibox_loss.1} parent=0 // pred_region
    _
  $region17: #{multibox_loss.1} parent=0 // pred_fallthru
    _
  // Predicated region
  $region18: #{multibox_loss.1} parent=0 // pred_check
    _
  $region19: #{multibox_loss.1} parent=0 // pred_check_branch
    %8010 = sbr.rel (0) target = $region21
  $region20: #{multibox_loss.1} parent=0 // pred_region
    _
  $region21: #{multibox_loss.1} parent=0 // pred_fallthru
    _

</llo_original>
